<compile_context>
chip_gen: v5e
topology: v5e:2x2
jax: 0.10.0
libtpu: 0.0.40
codegen_flags: <defaults>
</compile_context>

<pallas_src>
import numpy as np
import jax
import jax.numpy as jnp
from jax.experimental import pallas as pl
from jax.experimental.pallas import tpu as pltpu

OUT_HW = 64  # target spatial size of F.interpolate


# ----------------------------------------------------------------------------
# Trace-time constants: bilinear interpolation operators (NumPy, no XLA scatters)
# ----------------------------------------------------------------------------
def bilinear_matrix_np(in_size, out_size):
    """[out, in] row-interpolation matrix matching PyTorch
    F.interpolate(mode='bilinear', align_corners=False): out = R @ x."""
    scale = in_size / out_size
    o = np.arange(out_size, dtype=np.float64)
    src = np.maximum(scale * (o + 0.5) - 0.5, 0.0)
    i0 = np.minimum(np.floor(src).astype(np.int64), in_size - 1)
    i1 = np.minimum(i0 + 1, in_size - 1)
    w1 = src - i0
    w0 = 1.0 - w1
    r = np.zeros((out_size, in_size), dtype=np.float64)
    rows = np.arange(out_size)
    np.add.at(r, (rows, i0), w0)
    np.add.at(r, (rows, i1), w1)
    return r.astype(np.float32)


def kron_bilinear_T_np(hin, win, out_hw):
    """R^T of the fused 2-D bilinear operator, shape [hin*win, out_hw*out_hw]:
    (X flattened row-major over (h,w)) @ R^T == flattened bilinear resize."""
    rh = bilinear_matrix_np(hin, out_hw)          # [out, hin]
    rw = bilinear_matrix_np(win, out_hw)          # [out, win]
    r = np.kron(rh, rw)                           # [out*out, hin*win]
    return np.ascontiguousarray(r.T)              # [hin*win, out*out]


# ----------------------------------------------------------------------------
# Pallas kernel: fused 1x1 conv + bilinear resize, channels-first, per batch
# ----------------------------------------------------------------------------
def _fused_conv_resize_kernel(x_ref, w_ref, b_ref, rT_ref, o_ref):
    # x: [1, Cin, S], w: [Cout, Cin], b: [Cout, 1], rT: [S, N], o: [1, Cout, N]
    y = jnp.dot(w_ref[...], x_ref[0], preferred_element_type=jnp.float32)
    y = y + b_ref[...]                                  # bias broadcast over S
    o_ref[0] = jnp.dot(
        y, rT_ref[...], preferred_element_type=jnp.float32
    ).astype(o_ref.dtype)


def fused_conv1x1_resize(x_cf, w, bias, r_t, *, vmem_limit_bytes=48 * 1024 * 1024):
    """x_cf: [B, Cin, S]; w: [Cout, Cin]; bias: [Cout]; r_t: [S, N].
    Returns [B, Cout, N] with out[b] = (w @ x_cf[b] + bias[:, None]) @ r_t."""
    bsz, cin, s = x_cf.shape
    cout = w.shape[0]
    n = r_t.shape[1]
    # Note: for very large feature maps, the S (=Hf*Wf) axis can be tiled with
    # a second ("arbitrary") grid dim + an f32 accumulator; not needed here.
    return pl.pallas_call(
        _fused_conv_resize_kernel,
        out_shape=jax.ShapeDtypeStruct((bsz, cout, n), jnp.float32),
        grid=(bsz,),
        in_specs=[
            pl.BlockSpec((1, cin, s), lambda b: (b, 0, 0)),   # per-batch feature
            pl.BlockSpec((cout, cin), lambda b: (0, 0)),      # resident weights
            pl.BlockSpec((cout, 1), lambda b: (0, 0)),        # resident bias
            pl.BlockSpec((s, n), lambda b: (0, 0)),           # resident kron(R)ᵀ
        ],
        out_specs=pl.BlockSpec((1, cout, n), lambda b: (b, 0, 0)),
        compiler_params=pltpu.CompilerParams(
            dimension_semantics=("parallel",),   # batches shard across TCs (v7x)
            vmem_limit_bytes=vmem_limit_bytes,
        ),
    )(x_cf, w, bias.reshape(cout, 1), r_t)


# ----------------------------------------------------------------------------
# Forward pass
# ----------------------------------------------------------------------------
@jax.jit
def modified_pixelnerf_forward(feature_nchw, target_rgb_nchw, conv_w, conv_b):
    """feature: [B, 512, Hf, Wf], target_rgb: [B, 3, Hr, Wr],
    conv_w: [128, 512] (PyTorch [out,in,1,1] squeezed), conv_b: [128].
    Returns NCHW [B, 131, 64, 64]."""
    b, cin, hf, wf = feature_nchw.shape
    _, _, hr, wr = target_rgb_nchw.shape
    cout = conv_w.shape[0]

    # Feature branch: fused conv1x1 + bilinear(64,64) in one Pallas call.
    r_feat_t = jnp.asarray(kron_bilinear_T_np(hf, wf, OUT_HW))   # [Hf*Wf, 4096]
    feat64 = fused_conv1x1_resize(
        feature_nchw.reshape(b, cin, hf * wf), conv_w, conv_b, r_feat_t)
    feat64 = feat64.reshape(b, cout, OUT_HW, OUT_HW)             # [B,128,64,64]

    # RGB branch: tiny -> plain XLA separable resize, channels-first.
    rh = jnp.asarray(bilinear_matrix_np(hr, OUT_HW))
    rw = jnp.asarray(bilinear_matrix_np(wr, OUT_HW))
    hp = jax.lax.Precision.HIGHEST
    rgb64 = jnp.einsum('oh,bchw->bcow', rh, target_rgb_nchw, precision=hp)
    rgb64 = jnp.einsum('pw,bcow->bcop', rw, rgb64, precision=hp)  # [B,3,64,64]

    # cat along channels (rgb first, matching torch.cat((rgb_map, feat), dim=1))
    return jnp.concatenate([rgb64, feat64], axis=1)               # [B,131,64,64]


# ----------------------------------------------------------------------------
if __name__ == "__main__":
    key = jax.random.PRNGKey(0)
    k_feat, k_rgb, k_w, k_b = jax.random.split(key, 4)

    B, Hf, Wf = 2, 16, 16
    Hr, Wr = 32, 32

    feature = jax.random.normal(k_feat, (B, 512, Hf, Wf), dtype=jnp.float32)
    target_rgb = jax.random.normal(k_rgb, (B, 3, Hr, Wr), dtype=jnp.float32)

    # Deterministic synthetic Conv2d(512 -> 128, k=1) parameters.
    conv_w = 0.02 * jax.random.normal(k_w, (128, 512), dtype=jnp.float32)
    conv_b = 0.02 * jax.random.normal(k_b, (128,), dtype=jnp.float32)

    out = modified_pixelnerf_forward(feature, target_rgb, conv_w, conv_b)
    out = jax.block_until_ready(out)
    assert out.shape == (B, 3 + 128, OUT_HW, OUT_HW), out.shape
    assert out.dtype == jnp.float32

    # Pure-JAX reference (same interpolation operators, highest precision).
    def ref_forward(feat, rgb, w, bb):
        hp = jax.lax.Precision.HIGHEST
        y = jnp.einsum('oc,bchw->bohw', w, feat, precision=hp)
        y = y + bb[None, :, None, None]
        rh_f = jnp.asarray(bilinear_matrix_np(Hf, OUT_HW))
        rw_f = jnp.asarray(bilinear_matrix_np(Wf, OUT_HW))
        f64 = jnp.einsum('oh,bchw->bcow', rh_f, y, precision=hp)
        f64 = jnp.einsum('pw,bcow->bcop', rw_f, f64, precision=hp)
        rh_r = jnp.asarray(bilinear_matrix_np(Hr, OUT_HW))
        rw_r = jnp.asarray(bilinear_matrix_np(Wr, OUT_HW))
        r64 = jnp.einsum('oh,bchw->bcow', rh_r, rgb, precision=hp)
        r64 = jnp.einsum('pw,bcow->bcop', rw_r, r64, precision=hp)
        return jnp.concatenate([r64, f64], axis=1)

    ref = jax.block_until_ready(ref_forward(feature, target_rgb, conv_w, conv_b))
    max_err = float(jnp.max(jnp.abs(out - ref)))
    assert max_err < 5e-2, f"max abs error vs reference: {max_err}"

    print("KERNEL_OK")
</pallas_src>

<mosaic_0001>
module attributes {stable_mosaic.version = 11 : i64} {
  func.func @_fused_conv_resize_kernel(%arg0: i32, %arg1: memref<1x512x256xf32, #tpu.memory_space<vmem>>, %arg2: memref<128x512xf32, #tpu.memory_space<vmem>>, %arg3: memref<128x1xf32, #tpu.memory_space<vmem>>, %arg4: memref<256x4096xf32, #tpu.memory_space<vmem>>, %arg5: memref<1x128x4096xf32, #tpu.memory_space<vmem>>) attributes {dimension_semantics = [#tpu.dimension_semantics<parallel>], iteration_bounds = array<i64: 2>, scalar_prefetch = 0 : i64, scratch_operands = 0 : i64, tpu.core_type = #tpu.core_type<tc>, window_params = [{transform_indices = @transform_0, window_bounds = array<i64: 1, 512, 256>}, {pipeline_mode = #tpu.pipeline_mode<synchronous>, transform_indices = @transform_1, window_bounds = array<i64: 128, 512>}, {pipeline_mode = #tpu.pipeline_mode<synchronous>, transform_indices = @transform_2, window_bounds = array<i64: 128, 1>}, {pipeline_mode = #tpu.pipeline_mode<synchronous>, transform_indices = @transform_3, window_bounds = array<i64: 256, 4096>}, {transform_indices = @transform_4, window_bounds = array<i64: 1, 128, 4096>}]} {
    %c0 = arith.constant 0 : index
    %c0_0 = arith.constant 0 : index
    %0 = vector.load %arg2[%c0, %c0_0] : memref<128x512xf32, #tpu.memory_space<vmem>>, vector<128x512xf32>
    %c0_1 = arith.constant 0 : index
    %c0_2 = arith.constant 0 : index
    %c0_3 = arith.constant 0 : index
    %1 = vector.load %arg1[%c0_1, %c0_2, %c0_3] : memref<1x512x256xf32, #tpu.memory_space<vmem>>, vector<1x512x256xf32>
    %2 = vector.shape_cast %1 : vector<1x512x256xf32> to vector<512x256xf32>
    %cst = arith.constant dense<0.000000e+00> : vector<128x256xf32>
    %3 = tpu.matmul %0, %2, %cst {dimension_numbers = #tpu.dot_dimension_numbers<[1], [0], [0], [1], [0, 0, 1, 1], [], []>} : vector<128x512xf32>, vector<512x256xf32>, vector<128x256xf32> -> vector<128x256xf32>
    %c0_4 = arith.constant 0 : index
    %c0_5 = arith.constant 0 : index
    %4 = vector.load %arg3[%c0_4, %c0_5] : memref<128x1xf32, #tpu.memory_space<vmem>>, vector<128x1xf32>
    %5 = vector.broadcast %4 : vector<128x1xf32> to vector<128x256xf32>
    %6 = arith.addf %3, %5 : vector<128x256xf32>
    %c0_6 = arith.constant 0 : index
    %c0_7 = arith.constant 0 : index
    %7 = vector.load %arg4[%c0_6, %c0_7] : memref<256x4096xf32, #tpu.memory_space<vmem>>, vector<256x4096xf32>
    %cst_8 = arith.constant dense<0.000000e+00> : vector<128x4096xf32>
    %8 = tpu.matmul %6, %7, %cst_8 {dimension_numbers = #tpu.dot_dimension_numbers<[1], [0], [0], [1], [0, 0, 1, 1], [], []>} : vector<128x256xf32>, vector<256x4096xf32>, vector<128x4096xf32> -> vector<128x4096xf32>
    %c0_9 = arith.constant 0 : index
    %c0_10 = arith.constant 0 : index
    %c0_11 = arith.constant 0 : index
    %9 = vector.load %arg5[%c0_9, %c0_10, %c0_11] : memref<1x128x4096xf32, #tpu.memory_space<vmem>>, vector<1x128x4096xf32>
    %10 = vector.shape_cast %9 : vector<1x128x4096xf32> to vector<128x4096xf32>
    %11 = vector.shape_cast %8 : vector<128x4096xf32> to vector<1x128x4096xf32>
    tpu.vector_store %arg5[%c0_9, %c0_10, %c0_11], %11 {strides = array<i32>} : memref<1x128x4096xf32, #tpu.memory_space<vmem>>, vector<1x128x4096xf32>,
    return
  }
  func.func @transform_0(%arg0: i32) -> (i32, i32, i32) {
    %c0_i32 = arith.constant 0 : i32
    %c0_i32_0 = arith.constant 0 : i32
    %c0_i32_1 = arith.constant 0 : i32
    return %arg0, %c0_i32, %c0_i32_0 : i32, i32, i32
  }
  func.func @transform_1(%arg0: i32) -> (i32, i32) {
    %c0_i32 = arith.constant 0 : i32
    %c0_i32_0 = arith.constant 0 : i32
    %c0_i32_1 = arith.constant 0 : i32
    return %c0_i32, %c0_i32_0 : i32, i32
  }
  func.func @transform_2(%arg0: i32) -> (i32, i32) {
    %c0_i32 = arith.constant 0 : i32
    %c0_i32_0 = arith.constant 0 : i32
    %c0_i32_1 = arith.constant 0 : i32
    return %c0_i32, %c0_i32_0 : i32, i32
  }
  func.func @transform_3(%arg0: i32) -> (i32, i32) {
    %c0_i32 = arith.constant 0 : i32
    %c0_i32_0 = arith.constant 0 : i32
    %c0_i32_1 = arith.constant 0 : i32
    return %c0_i32, %c0_i32_0 : i32, i32
  }
  func.func @transform_4(%arg0: i32) -> (i32, i32, i32) {
    %c0_i32 = arith.constant 0 : i32
    %c0_i32_0 = arith.constant 0 : i32
    %c0_i32_1 = arith.constant 0 : i32
    return %arg0, %c0_i32, %c0_i32_0 : i32, i32, i32
  }
}

</mosaic_0001>

<llo_original>
// kernel: modified_pixelnerf_forward.1
$region0: #{modified_pixelnerf_forward.1}
  #allocation0 [shape = 'u32[]', space=smem, size = 0x4, offset = 0x4, fixed_abs, tag = 'smem constant byte address 0x4 - core index']
  #allocation1 [shape = 'u32[72,128]{1,0:T(1,128)}', space=vmem, size = 0x9000, scoped, tag = 'internal scratch']
  %s0 = inlined_call_operand.vmem [shape: f32[2,512,256], index: 0, kind: input, shape index: {}]
  %s1 = inlined_call_operand.hbm [shape: f32[128,512], index: 1, kind: input, shape index: {}]
  %s2 = inlined_call_operand.vmem [shape: f32[128,1], index: 2, kind: input, shape index: {}]
  %s3 = inlined_call_operand.hbm [shape: f32[256,4096], index: 3, kind: input, shape index: {}]
  %s4 = inlined_call_operand.vmem [shape: f32[2,128,4096], index: 4, kind: output, shape index: {}]
  %s5 = sld [smem:[#allocation0]]
  $region57: #{modified_pixelnerf_forward.1} parent=0
    _
  %s7 = ssub.s32 1, %s5
  %s8 = scalar_select 0, %s7, %s5
  $region1: #{modified_pixelnerf_forward.1} parent=0
    #allocation2 [shape = 'u8[262144]{0}', space=vmem, size = 0x40000, scoped, tag = 'input window, operand 1, single buffered']
    #allocation3 [shape = 's32[2]{0}', space=sflag, size = 0x8, scoped, tag = 'scoped memory for modified_pixelnerf_forward.1']
    #allocation4 [shape = 'u8[4194304]{0}', space=vmem, size = 0x400000, scoped, tag = 'input window, operand 3, single buffered']
    #allocation5 [shape = 's32[1]{0}', space=sflag, size = 0x4, scoped, tag = 'scoped memory for modified_pixelnerf_forward.1']
    %9 = vsyncpa [#allocation3], 0
    %10 = vsyncpa [#allocation5], 0
    loop: start=0, step=1, limit=4
    $region2: #{modified_pixelnerf_forward.1} parent=1 // loop_pre_header
      _
    $region3: #{modified_pixelnerf_forward.1} parent=1 // loop_header
      %s12 = sphi 0, %s16
      %p13 = scmp.ge.s32.totalorder %s12, 4
      %s22 = sphi 0, %s24
      %s25 = sphi 0, %s22
      %s26 = sphi 0, %s25
      %s42 = sphi 0, %s26
      %s46 = sphi 0, %s46
      %s48 = sphi 0, %s46
      %s49 = sphi 0, %s48
      %s63 = sphi 0, %s49
      %s67 = sphi 0, %s67
      %s69 = sphi 0, %s67
      %s70 = sphi 0, %s69
      %s84 = sphi 0, %s70
      %s88 = sphi 0, %s88
      %s90 = sphi 0, %s88
      %s91 = sphi 0, %s90
      %s105 = sphi 0, %s91
      %s111 = sphi 0, %s113
      %s114 = sphi 0, %s111
      %s115 = sphi 0, %s114
      %s131 = sphi 0, %s115
    $region4: #{modified_pixelnerf_forward.1} parent=1 // loop_header_branch
      %15 = sbr.rel (%p13) target = $region8
    $region5: #{modified_pixelnerf_forward.1} parent=1 // loop_body
      %s17 = ssub.s32 %s12, 1
      %s18 = ssub.s32 %s12, 2
      %s19 = sadd.s32 %s12, 1
      %s20 = ssub.s32 %s12, %s19
      %p21 = scmp.eq.s32.totalorder %s20, 0
      %s23 = sadd.s32 %s22, 1
      %s24 = scalar_select %p21, %s22, %s23
      %p27 = pneg %p21
      %p28 = scmp.eq.s32.totalorder %s12, 1
      %p29 = por %p27, %p28
      %p30 = scmp.ne.s32.totalorder %s22, %s25
      %p31 = scmp.eq.s32.totalorder %s12, 0
      %p32 = por %p30, %p31
      %p33 = scmp.ne.s32.totalorder %s22, %s25
      %p34 = scmp.eq.s32.totalorder %s17, 1
      %p35 = por %p33, %p34
      %p36 = scmp.ne.s32.totalorder %s25, %s26
      %p37 = scmp.eq.s32.totalorder %s17, 0
      %p38 = por %p36, %p37
      %p39 = scmp.ne.s32.totalorder %s25, %s26
      %p40 = scmp.eq.s32.totalorder %s18, 1
      %p41 = por %p39, %p40
      %p43 = scmp.ne.s32.totalorder %s26, %s42
      %p44 = scmp.eq.s32.totalorder %s18, 0
      %p45 = por %p43, %p44
      %s47 = sadd.s32 %s46, 1
      %p50 = scmp.eq.s32.totalorder %s12, 1
      %p51 = scmp.ne.s32.totalorder %s46, %s48
      %p52 = scmp.eq.s32.totalorder %s12, 0
      %p53 = por %p51, %p52
      %p54 = scmp.ne.s32.totalorder %s46, %s48
      %p55 = scmp.eq.s32.totalorder %s17, 1
      %p56 = por %p54, %p55
      %p57 = scmp.ne.s32.totalorder %s48, %s49
      %p58 = scmp.eq.s32.totalorder %s17, 0
      %p59 = por %p57, %p58
      %p60 = scmp.ne.s32.totalorder %s48, %s49
      %p61 = scmp.eq.s32.totalorder %s18, 1
      %p62 = por %p60, %p61
      %p64 = scmp.ne.s32.totalorder %s49, %s63
      %p65 = scmp.eq.s32.totalorder %s18, 0
      %p66 = por %p64, %p65
      %s68 = sadd.s32 %s67, 1
      %p71 = scmp.eq.s32.totalorder %s12, 1
      %p72 = scmp.ne.s32.totalorder %s67, %s69
      %p73 = scmp.eq.s32.totalorder %s12, 0
      %p74 = por %p72, %p73
      %p75 = scmp.ne.s32.totalorder %s67, %s69
      %p76 = scmp.eq.s32.totalorder %s17, 1
      %p77 = por %p75, %p76
      %p78 = scmp.ne.s32.totalorder %s69, %s70
      %p79 = scmp.eq.s32.totalorder %s17, 0
      %p80 = por %p78, %p79
      %p81 = scmp.ne.s32.totalorder %s69, %s70
      %p82 = scmp.eq.s32.totalorder %s18, 1
      %p83 = por %p81, %p82
      %p85 = scmp.ne.s32.totalorder %s70, %s84
      %p86 = scmp.eq.s32.totalorder %s18, 0
      %p87 = por %p85, %p86
      %s89 = sadd.s32 %s88, 1
      %p92 = scmp.eq.s32.totalorder %s12, 1
      %p93 = scmp.ne.s32.totalorder %s88, %s90
      %p94 = scmp.eq.s32.totalorder %s12, 0
      %p95 = por %p93, %p94
      %p96 = scmp.ne.s32.totalorder %s88, %s90
      %p97 = scmp.eq.s32.totalorder %s17, 1
      %p98 = por %p96, %p97
      %p99 = scmp.ne.s32.totalorder %s90, %s91
      %p100 = scmp.eq.s32.totalorder %s17, 0
      %p101 = por %p99, %p100
      %p102 = scmp.ne.s32.totalorder %s90, %s91
      %p103 = scmp.eq.s32.totalorder %s18, 1
      %p104 = por %p102, %p103
      %p106 = scmp.ne.s32.totalorder %s91, %s105
      %p107 = scmp.eq.s32.totalorder %s18, 0
      %p108 = por %p106, %p107
      %s109 = ssub.s32 %s12, %s19
      %p110 = scmp.eq.s32.totalorder %s109, 0
      %s112 = sadd.s32 %s111, 1
      %s113 = scalar_select %p110, %s111, %s112
      %p116 = pneg %p110
      %p117 = scmp.eq.s32.totalorder %s12, 1
      %p118 = por %p116, %p117
      %p119 = scmp.ne.s32.totalorder %s111, %s114
      %p120 = scmp.eq.s32.totalorder %s12, 0
      %p121 = por %p119, %p120
      %p122 = scmp.ne.s32.totalorder %s111, %s114
      %p123 = scmp.eq.s32.totalorder %s17, 1
      %p124 = por %p122, %p123
      %p125 = scmp.ne.s32.totalorder %s114, %s115
      %p126 = scmp.eq.s32.totalorder %s17, 0
      %p127 = por %p125, %p126
      %p128 = scmp.ne.s32.totalorder %s114, %s115
      %p129 = scmp.eq.s32.totalorder %s18, 1
      %p130 = por %p128, %p129
      %p132 = scmp.ne.s32.totalorder %s115, %s131
      %p133 = scmp.eq.s32.totalorder %s18, 0
      %p134 = por %p132, %p133
      %p135 = scmp.le.s32.totalorder 1, %s12
      %p136 = scmp.lt.s32.totalorder %s12, 3
      %p137 = pnand %p135, %p136
      %p138 = pneg %p137
      // Predicated region
      $region9: #{modified_pixelnerf_forward.1} parent=5 // pred_check
        _
      $region10: #{modified_pixelnerf_forward.1} parent=5 // pred_check_branch
        %140 = sbr.rel (%p137) target = $region12
      $region11: #{modified_pixelnerf_forward.1} parent=5 // pred_region
        %s141 = ssub.s32 %s12, 1
        // Predicated region
        $region13: #{modified_pixelnerf_forward.1} parent=11 // pred_check
          %p142 = pneg %p59
        $region14: #{modified_pixelnerf_forward.1} parent=11 // pred_check_branch
          %144 = sbr.rel (%p142) target = $region16
        $region15: #{modified_pixelnerf_forward.1} parent=11 // pred_region
          %146 = vsyncadd [#allocation3], 0
          %s147 = sshll.u32 %s1, 4
          %s148 = int_to_ptr.hbm [resolvable:$true] %s147
          %s149 = sshll.u32 [#allocation2], 4
          %s150 = int_to_ptr.vmem [resolvable:$true] %s149
          %155 = dma.hbm_to_vmem [thread:$0]  %s148, 8192, %s150, [#allocation3], 512, 512, 32
        $region16: #{modified_pixelnerf_forward.1} parent=11 // pred_fallthru
          _
        // Predicated region
        $region17: #{modified_pixelnerf_forward.1} parent=11 // pred_check
          %p156 = pneg %p80
        $region18: #{modified_pixelnerf_forward.1} parent=11 // pred_check_branch
          %158 = sbr.rel (%p156) target = $region20
        $region19: #{modified_pixelnerf_forward.1} parent=11 // pred_region
          _
        $region20: #{modified_pixelnerf_forward.1} parent=11 // pred_fallthru
          _
        // Predicated region
        $region21: #{modified_pixelnerf_forward.1} parent=11 // pred_check
          %p159 = pneg %p101
        $region22: #{modified_pixelnerf_forward.1} parent=11 // pred_check_branch
          %161 = sbr.rel (%p159) target = $region24
        $region23: #{modified_pixelnerf_forward.1} parent=11 // pred_region
          %163 = vsyncadd [#allocation5], 0
          %s164 = sshll.u32 %s3, 4
          %s165 = int_to_ptr.hbm [resolvable:$true] %s164
          %s166 = sshll.u32 [#allocation4], 4
          %s167 = int_to_ptr.vmem [resolvable:$true] %s166
          %172 = dma.hbm_to_vmem [thread:$0]  %s165, 131072, %s167, [#allocation5], 4096, 4096, 256
        $region24: #{modified_pixelnerf_forward.1} parent=11 // pred_fallthru
          _
      $region12: #{modified_pixelnerf_forward.1} parent=5 // pred_fallthru
        _
      %p173 = scmp.lt.s32.totalorder %s12, 2
      // Predicated region
      $region25: #{modified_pixelnerf_forward.1} parent=5 // pred_check
        %p174 = pneg %p173
      $region26: #{modified_pixelnerf_forward.1} parent=5 // pred_check_branch
        %176 = sbr.rel (%p174) target = $region28
      $region27: #{modified_pixelnerf_forward.1} parent=5 // pred_region
        // Predicated region
        $region29: #{modified_pixelnerf_forward.1} parent=27 // pred_check
          %p177 = pneg %p32
        $region30: #{modified_pixelnerf_forward.1} parent=27 // pred_check_branch
          %179 = sbr.rel (%p177) target = $region32
        $region31: #{modified_pixelnerf_forward.1} parent=27 // pred_region
          %p180 = scmp.lt.s32.totalorder %s12, 1
          %s181 = scalar_select %p180, %s12, 1
          %s182 = smul.addr %s181, 128
          %s183 = smul.addr %s182, 8
          %s184 = scalar_lea.vmem %s0, %s183
        $region32: #{modified_pixelnerf_forward.1} parent=27 // pred_fallthru
          _
      $region28: #{modified_pixelnerf_forward.1} parent=5 // pred_fallthru
        _
      %p185 = scmp.le.s32.totalorder 1, %s12
      %p186 = scmp.lt.s32.totalorder %s12, 3
      %p187 = pnand %p185, %p186
      %p188 = pneg %p187
      // Predicated region
      $region33: #{modified_pixelnerf_forward.1} parent=5 // pred_check
        _
      $region34: #{modified_pixelnerf_forward.1} parent=5 // pred_check_branch
        %190 = sbr.rel (%p187) target = $region36
      $region35: #{modified_pixelnerf_forward.1} parent=5 // pred_region
        %s191 = ssub.s32 %s12, 1
        // Predicated region
        $region37: #{modified_pixelnerf_forward.1} parent=35 // pred_check
          %p192 = pneg %p59
        $region38: #{modified_pixelnerf_forward.1} parent=35 // pred_check_branch
          %194 = sbr.rel (%p192) target = $region40
        $region39: #{modified_pixelnerf_forward.1} parent=35 // pred_region
          %196 = dma.done [#allocation3], 8192
        $region40: #{modified_pixelnerf_forward.1} parent=35 // pred_fallthru
          _
        // Predicated region
        $region41: #{modified_pixelnerf_forward.1} parent=35 // pred_check
          %p197 = pneg %p101
        $region42: #{modified_pixelnerf_forward.1} parent=35 // pred_check_branch
          %199 = sbr.rel (%p197) target = $region44
        $region43: #{modified_pixelnerf_forward.1} parent=35 // pred_region
          %201 = dma.done [#allocation5], 131072
        $region44: #{modified_pixelnerf_forward.1} parent=35 // pred_fallthru
          _
        %p202 = scmp.lt.s32.totalorder %s17, 1
        %s203 = scalar_select %p202, %s17, 1
        %s204 = smul.addr %s203, 128
        %s205 = smul.addr %s204, 8
        %s206 = scalar_lea.vmem %s0, %s205
        %p207 = pneg %p38
        %p208 = pneg %p35
        %p209 = pneg %p59
        %p210 = pneg %p56
        %p211 = pneg %p80
        %p212 = pneg %p77
        %p213 = pneg %p101
        %p214 = pneg %p98
        %p215 = pneg %p127
        %p216 = pneg %p124
        %p217 = scmp.lt.s32.totalorder %s17, 1
        %s218 = scalar_select %p217, %s17, 1
        %s219 = smul.addr %s218, 512
        %s220 = smul.addr %s219, 8
        %s221 = scalar_lea.vmem %s4, %s220
        %p222 = scmp.lt.s32.totalorder %s17, 1
        %s223 = scalar_select %p222, %s17, 1
        %s224 = smul.addr %s223, 128
        %s225 = smul.addr %s224, 8
        %s226 = scalar_lea.vmem %s0, %s225
        %p227 = scmp.lt.s32.totalorder %s17, 1
        %s228 = scalar_select %p227, %s17, 1
        %s229 = smul.addr %s228, 512
        %s230 = smul.addr %s229, 8
        %s231 = scalar_lea.vmem %s4, %s230
        %v232 = vld [vmem:[#allocation2] sm:$0xff]
        %v233 = vld [vmem:[#allocation2 + $0x8] sm:$0xff]
        %v234 = vld [vmem:[#allocation2 + $0x10] sm:$0xff]
        %v235 = vld [vmem:[#allocation2 + $0x18] sm:$0xff]
        %v236 = vld [vmem:[#allocation2 + $0x20] sm:$0xff]
        %v237 = vld [vmem:[#allocation2 + $0x28] sm:$0xff]
        %v238 = vld [vmem:[#allocation2 + $0x30] sm:$0xff]
        %v239 = vld [vmem:[#allocation2 + $0x38] sm:$0xff]
        %v240 = vld [vmem:[#allocation2 + $0x40] sm:$0xff]
        %v241 = vld [vmem:[#allocation2 + $0x48] sm:$0xff]
        %v242 = vld [vmem:[#allocation2 + $0x50] sm:$0xff]
        %v243 = vld [vmem:[#allocation2 + $0x58] sm:$0xff]
        %v244 = vld [vmem:[#allocation2 + $0x60] sm:$0xff]
        %v245 = vld [vmem:[#allocation2 + $0x68] sm:$0xff]
        %v246 = vld [vmem:[#allocation2 + $0x70] sm:$0xff]
        %v247 = vld [vmem:[#allocation2 + $0x78] sm:$0xff]
        %v248 = vld [vmem:[#allocation2 + $0x80] sm:$0xff]
        %v249 = vld [vmem:[#allocation2 + $0x88] sm:$0xff]
        %v250 = vld [vmem:[#allocation2 + $0x90] sm:$0xff]
        %v251 = vld [vmem:[#allocation2 + $0x98] sm:$0xff]
        %v252 = vld [vmem:[#allocation2 + $0xa0] sm:$0xff]
        %v253 = vld [vmem:[#allocation2 + $0xa8] sm:$0xff]
        %v254 = vld [vmem:[#allocation2 + $0xb0] sm:$0xff]
        %v255 = vld [vmem:[#allocation2 + $0xb8] sm:$0xff]
        %v256 = vld [vmem:[#allocation2 + $0xc0] sm:$0xff]
        %v257 = vld [vmem:[#allocation2 + $0xc8] sm:$0xff]
        %v258 = vld [vmem:[#allocation2 + $0xd0] sm:$0xff]
        %v259 = vld [vmem:[#allocation2 + $0xd8] sm:$0xff]
        %v260 = vld [vmem:[#allocation2 + $0xe0] sm:$0xff]
        %v261 = vld [vmem:[#allocation2 + $0xe8] sm:$0xff]
        %v262 = vld [vmem:[#allocation2 + $0xf0] sm:$0xff]
        %v263 = vld [vmem:[#allocation2 + $0xf8] sm:$0xff]
        %v264 = vld [vmem:[#allocation2 + $0x100] sm:$0xff]
        %v265 = vld [vmem:[#allocation2 + $0x108] sm:$0xff]
        %v266 = vld [vmem:[#allocation2 + $0x110] sm:$0xff]
        %v267 = vld [vmem:[#allocation2 + $0x118] sm:$0xff]
        %v268 = vld [vmem:[#allocation2 + $0x120] sm:$0xff]
        %v269 = vld [vmem:[#allocation2 + $0x128] sm:$0xff]
        %v270 = vld [vmem:[#allocation2 + $0x130] sm:$0xff]
        %v271 = vld [vmem:[#allocation2 + $0x138] sm:$0xff]
        %v272 = vld [vmem:[#allocation2 + $0x140] sm:$0xff]
        %v273 = vld [vmem:[#allocation2 + $0x148] sm:$0xff]
        %v274 = vld [vmem:[#allocation2 + $0x150] sm:$0xff]
        %v275 = vld [vmem:[#allocation2 + $0x158] sm:$0xff]
        %v276 = vld [vmem:[#allocation2 + $0x160] sm:$0xff]
        %v277 = vld [vmem:[#allocation2 + $0x168] sm:$0xff]
        %v278 = vld [vmem:[#allocation2 + $0x170] sm:$0xff]
        %v279 = vld [vmem:[#allocation2 + $0x178] sm:$0xff]
        %v280 = vld [vmem:[#allocation2 + $0x180] sm:$0xff]
        %v281 = vld [vmem:[#allocation2 + $0x188] sm:$0xff]
        %v282 = vld [vmem:[#allocation2 + $0x190] sm:$0xff]
        %v283 = vld [vmem:[#allocation2 + $0x198] sm:$0xff]
        %v284 = vld [vmem:[#allocation2 + $0x1a0] sm:$0xff]
        %v285 = vld [vmem:[#allocation2 + $0x1a8] sm:$0xff]
        %v286 = vld [vmem:[#allocation2 + $0x1b0] sm:$0xff]
        %v287 = vld [vmem:[#allocation2 + $0x1b8] sm:$0xff]
        %v288 = vld [vmem:[#allocation2 + $0x1c0] sm:$0xff]
        %v289 = vld [vmem:[#allocation2 + $0x1c8] sm:$0xff]
        %v290 = vld [vmem:[#allocation2 + $0x1d0] sm:$0xff]
        %v291 = vld [vmem:[#allocation2 + $0x1d8] sm:$0xff]
        %v292 = vld [vmem:[#allocation2 + $0x1e0] sm:$0xff]
        %v293 = vld [vmem:[#allocation2 + $0x1e8] sm:$0xff]
        %v294 = vld [vmem:[#allocation2 + $0x1f0] sm:$0xff]
        %v295 = vld [vmem:[#allocation2 + $0x1f8] sm:$0xff]
        %v296 = vld [vmem:[%s226] sm:$0xff]
        %v297 = vld [vmem:[%s226 + $0x8] sm:$0xff]
        %v298 = vld [vmem:[%s226 + $0x10] sm:$0xff]
        %v299 = vld [vmem:[%s226 + $0x18] sm:$0xff]
        %v300 = vld [vmem:[%s226 + $0x20] sm:$0xff]
        %v301 = vld [vmem:[%s226 + $0x28] sm:$0xff]
        %v302 = vld [vmem:[%s226 + $0x30] sm:$0xff]
        %v303 = vld [vmem:[%s226 + $0x38] sm:$0xff]
        %v304 = vld [vmem:[%s226 + $0x40] sm:$0xff]
        %v305 = vld [vmem:[%s226 + $0x48] sm:$0xff]
        %v306 = vld [vmem:[%s226 + $0x50] sm:$0xff]
        %v307 = vld [vmem:[%s226 + $0x58] sm:$0xff]
        %v308 = vld [vmem:[%s226 + $0x60] sm:$0xff]
        %v309 = vld [vmem:[%s226 + $0x68] sm:$0xff]
        %v310 = vld [vmem:[%s226 + $0x70] sm:$0xff]
        %v311 = vld [vmem:[%s226 + $0x78] sm:$0xff]
        %v312 = vld [vmem:[%s226 + $0x80] sm:$0xff]
        %v313 = vld [vmem:[%s226 + $0x88] sm:$0xff]
        %v314 = vld [vmem:[%s226 + $0x90] sm:$0xff]
        %v315 = vld [vmem:[%s226 + $0x98] sm:$0xff]
        %v316 = vld [vmem:[%s226 + $0xa0] sm:$0xff]
        %v317 = vld [vmem:[%s226 + $0xa8] sm:$0xff]
        %v318 = vld [vmem:[%s226 + $0xb0] sm:$0xff]
        %v319 = vld [vmem:[%s226 + $0xb8] sm:$0xff]
        %v320 = vld [vmem:[%s226 + $0xc0] sm:$0xff]
        %v321 = vld [vmem:[%s226 + $0xc8] sm:$0xff]
        %v322 = vld [vmem:[%s226 + $0xd0] sm:$0xff]
        %v323 = vld [vmem:[%s226 + $0xd8] sm:$0xff]
        %v324 = vld [vmem:[%s226 + $0xe0] sm:$0xff]
        %v325 = vld [vmem:[%s226 + $0xe8] sm:$0xff]
        %v326 = vld [vmem:[%s226 + $0xf0] sm:$0xff]
        %v327 = vld [vmem:[%s226 + $0xf8] sm:$0xff]
        %v328 = vld [vmem:[%s226 + $0x100] sm:$0xff]
        %v329 = vld [vmem:[%s226 + $0x108] sm:$0xff]
        %v330 = vld [vmem:[%s226 + $0x110] sm:$0xff]
        %v331 = vld [vmem:[%s226 + $0x118] sm:$0xff]
        %v332 = vld [vmem:[%s226 + $0x120] sm:$0xff]
        %v333 = vld [vmem:[%s226 + $0x128] sm:$0xff]
        %v334 = vld [vmem:[%s226 + $0x130] sm:$0xff]
        %v335 = vld [vmem:[%s226 + $0x138] sm:$0xff]
        %v336 = vld [vmem:[%s226 + $0x140] sm:$0xff]
        %v337 = vld [vmem:[%s226 + $0x148] sm:$0xff]
        %v338 = vld [vmem:[%s226 + $0x150] sm:$0xff]
        %v339 = vld [vmem:[%s226 + $0x158] sm:$0xff]
        %v340 = vld [vmem:[%s226 + $0x160] sm:$0xff]
        %v341 = vld [vmem:[%s226 + $0x168] sm:$0xff]
        %v342 = vld [vmem:[%s226 + $0x170] sm:$0xff]
        %v343 = vld [vmem:[%s226 + $0x178] sm:$0xff]
        %v344 = vld [vmem:[%s226 + $0x180] sm:$0xff]
        %v345 = vld [vmem:[%s226 + $0x188] sm:$0xff]
        %v346 = vld [vmem:[%s226 + $0x190] sm:$0xff]
        %v347 = vld [vmem:[%s226 + $0x198] sm:$0xff]
        %v348 = vld [vmem:[%s226 + $0x1a0] sm:$0xff]
        %v349 = vld [vmem:[%s226 + $0x1a8] sm:$0xff]
        %v350 = vld [vmem:[%s226 + $0x1b0] sm:$0xff]
        %v351 = vld [vmem:[%s226 + $0x1b8] sm:$0xff]
        %v352 = vld [vmem:[%s226 + $0x1c0] sm:$0xff]
        %v353 = vld [vmem:[%s226 + $0x1c8] sm:$0xff]
        %v354 = vld [vmem:[%s226 + $0x1d0] sm:$0xff]
        %v355 = vld [vmem:[%s226 + $0x1d8] sm:$0xff]
        %v356 = vld [vmem:[%s226 + $0x1e0] sm:$0xff]
        %v357 = vld [vmem:[%s226 + $0x1e8] sm:$0xff]
        %v358 = vld [vmem:[%s226 + $0x1f0] sm:$0xff]
        %v359 = vld [vmem:[%s226 + $0x1f8] sm:$0xff]
        %v360 = vld [vmem:[%s226 + $0x200] sm:$0xff]
        %v361 = vld [vmem:[%s226 + $0x208] sm:$0xff]
        %v362 = vld [vmem:[%s226 + $0x210] sm:$0xff]
        %v363 = vld [vmem:[%s226 + $0x218] sm:$0xff]
        %v364 = vld [vmem:[%s226 + $0x220] sm:$0xff]
        %v365 = vld [vmem:[%s226 + $0x228] sm:$0xff]
        %v366 = vld [vmem:[%s226 + $0x230] sm:$0xff]
        %v367 = vld [vmem:[%s226 + $0x238] sm:$0xff]
        %v368 = vld [vmem:[%s226 + $0x240] sm:$0xff]
        %v369 = vld [vmem:[%s226 + $0x248] sm:$0xff]
        %v370 = vld [vmem:[%s226 + $0x250] sm:$0xff]
        %v371 = vld [vmem:[%s226 + $0x258] sm:$0xff]
        %v372 = vld [vmem:[%s226 + $0x260] sm:$0xff]
        %v373 = vld [vmem:[%s226 + $0x268] sm:$0xff]
        %v374 = vld [vmem:[%s226 + $0x270] sm:$0xff]
        %v375 = vld [vmem:[%s226 + $0x278] sm:$0xff]
        %v376 = vld [vmem:[%s226 + $0x280] sm:$0xff]
        %v377 = vld [vmem:[%s226 + $0x288] sm:$0xff]
        %v378 = vld [vmem:[%s226 + $0x290] sm:$0xff]
        %v379 = vld [vmem:[%s226 + $0x298] sm:$0xff]
        %v380 = vld [vmem:[%s226 + $0x2a0] sm:$0xff]
        %v381 = vld [vmem:[%s226 + $0x2a8] sm:$0xff]
        %v382 = vld [vmem:[%s226 + $0x2b0] sm:$0xff]
        %v383 = vld [vmem:[%s226 + $0x2b8] sm:$0xff]
        %v384 = vld [vmem:[%s226 + $0x2c0] sm:$0xff]
        %v385 = vld [vmem:[%s226 + $0x2c8] sm:$0xff]
        %v386 = vld [vmem:[%s226 + $0x2d0] sm:$0xff]
        %v387 = vld [vmem:[%s226 + $0x2d8] sm:$0xff]
        %v388 = vld [vmem:[%s226 + $0x2e0] sm:$0xff]
        %v389 = vld [vmem:[%s226 + $0x2e8] sm:$0xff]
        %v390 = vld [vmem:[%s226 + $0x2f0] sm:$0xff]
        %v391 = vld [vmem:[%s226 + $0x2f8] sm:$0xff]
        %v392 = vld [vmem:[%s226 + $0x300] sm:$0xff]
        %v393 = vld [vmem:[%s226 + $0x308] sm:$0xff]
        %v394 = vld [vmem:[%s226 + $0x310] sm:$0xff]
        %v395 = vld [vmem:[%s226 + $0x318] sm:$0xff]
        %v396 = vld [vmem:[%s226 + $0x320] sm:$0xff]
        %v397 = vld [vmem:[%s226 + $0x328] sm:$0xff]
        %v398 = vld [vmem:[%s226 + $0x330] sm:$0xff]
        %v399 = vld [vmem:[%s226 + $0x338] sm:$0xff]
        %v400 = vld [vmem:[%s226 + $0x340] sm:$0xff]
        %v401 = vld [vmem:[%s226 + $0x348] sm:$0xff]
        %v402 = vld [vmem:[%s226 + $0x350] sm:$0xff]
        %v403 = vld [vmem:[%s226 + $0x358] sm:$0xff]
        %v404 = vld [vmem:[%s226 + $0x360] sm:$0xff]
        %v405 = vld [vmem:[%s226 + $0x368] sm:$0xff]
        %v406 = vld [vmem:[%s226 + $0x370] sm:$0xff]
        %v407 = vld [vmem:[%s226 + $0x378] sm:$0xff]
        %v408 = vld [vmem:[%s226 + $0x380] sm:$0xff]
        %v409 = vld [vmem:[%s226 + $0x388] sm:$0xff]
        %v410 = vld [vmem:[%s226 + $0x390] sm:$0xff]
        %v411 = vld [vmem:[%s226 + $0x398] sm:$0xff]
        %v412 = vld [vmem:[%s226 + $0x3a0] sm:$0xff]
        %v413 = vld [vmem:[%s226 + $0x3a8] sm:$0xff]
        %v414 = vld [vmem:[%s226 + $0x3b0] sm:$0xff]
        %v415 = vld [vmem:[%s226 + $0x3b8] sm:$0xff]
        %v416 = vld [vmem:[%s226 + $0x3c0] sm:$0xff]
        %v417 = vld [vmem:[%s226 + $0x3c8] sm:$0xff]
        %v418 = vld [vmem:[%s226 + $0x3d0] sm:$0xff]
        %v419 = vld [vmem:[%s226 + $0x3d8] sm:$0xff]
        %v420 = vld [vmem:[%s226 + $0x3e0] sm:$0xff]
        %v421 = vld [vmem:[%s226 + $0x3e8] sm:$0xff]
        %v422 = vld [vmem:[%s226 + $0x3f0] sm:$0xff]
        %v423 = vld [vmem:[%s226 + $0x3f8] sm:$0xff]
        %v424 = vld [vmem:[%s2] sm:$0xff]
        %v425 = vld [vmem:[%s2 + $0x8] sm:$0xff]
        %v426 = vld [vmem:[%s2 + $0x10] sm:$0xff]
        %v427 = vld [vmem:[%s2 + $0x18] sm:$0xff]
        %v428 = vld [vmem:[%s2 + $0x20] sm:$0xff]
        %v429 = vld [vmem:[%s2 + $0x28] sm:$0xff]
        %v430 = vld [vmem:[%s2 + $0x30] sm:$0xff]
        %v431 = vld [vmem:[%s2 + $0x38] sm:$0xff]
        %v432 = vld [vmem:[%s2 + $0x40] sm:$0xff]
        %v433 = vld [vmem:[%s2 + $0x48] sm:$0xff]
        %v434 = vld [vmem:[%s2 + $0x50] sm:$0xff]
        %v435 = vld [vmem:[%s2 + $0x58] sm:$0xff]
        %v436 = vld [vmem:[%s2 + $0x60] sm:$0xff]
        %v437 = vld [vmem:[%s2 + $0x68] sm:$0xff]
        %v438 = vld [vmem:[%s2 + $0x70] sm:$0xff]
        %v439 = vld [vmem:[%s2 + $0x78] sm:$0xff]
        %441 = vset.pattern.permute.xlu0 0
        %442 = vperm.xlu0 %441, %v424
        %v443 = vpop.permute.xlu0 %442
        %446 = vset.pattern.permute.xlu0 0
        %447 = vperm.xlu0 %446, %v425
        %v448 = vpop.permute.xlu0 %447
        %451 = vset.pattern.permute.xlu0 0
        %452 = vperm.xlu0 %451, %v426
        %v453 = vpop.permute.xlu0 %452
        %456 = vset.pattern.permute.xlu0 0
        %457 = vperm.xlu0 %456, %v427
        %v458 = vpop.permute.xlu0 %457
        %461 = vset.pattern.permute.xlu0 0
        %462 = vperm.xlu0 %461, %v428
        %v463 = vpop.permute.xlu0 %462
        %466 = vset.pattern.permute.xlu0 0
        %467 = vperm.xlu0 %466, %v429
        %v468 = vpop.permute.xlu0 %467
        %471 = vset.pattern.permute.xlu0 0
        %472 = vperm.xlu0 %471, %v430
        %v473 = vpop.permute.xlu0 %472
        %476 = vset.pattern.permute.xlu0 0
        %477 = vperm.xlu0 %476, %v431
        %v478 = vpop.permute.xlu0 %477
        %481 = vset.pattern.permute.xlu0 0
        %482 = vperm.xlu0 %481, %v432
        %v483 = vpop.permute.xlu0 %482
        %486 = vset.pattern.permute.xlu0 0
        %487 = vperm.xlu0 %486, %v433
        %v488 = vpop.permute.xlu0 %487
        %491 = vset.pattern.permute.xlu0 0
        %492 = vperm.xlu0 %491, %v434
        %v493 = vpop.permute.xlu0 %492
        %496 = vset.pattern.permute.xlu0 0
        %497 = vperm.xlu0 %496, %v435
        %v498 = vpop.permute.xlu0 %497
        %501 = vset.pattern.permute.xlu0 0
        %502 = vperm.xlu0 %501, %v436
        %v503 = vpop.permute.xlu0 %502
        %506 = vset.pattern.permute.xlu0 0
        %507 = vperm.xlu0 %506, %v437
        %v508 = vpop.permute.xlu0 %507
        %511 = vset.pattern.permute.xlu0 0
        %512 = vperm.xlu0 %511, %v438
        %v513 = vpop.permute.xlu0 %512
        %516 = vset.pattern.permute.xlu0 0
        %517 = vperm.xlu0 %516, %v439
        %v518 = vpop.permute.xlu0 %517
        %520 = vmatpush.msra.mxu0 %v326
        %521 = vmatpush.msra.mxu0 %v324
        %522 = vmatpush.msra.mxu0 %v322
        %523 = vmatpush.msra.mxu0 %v320
        %524 = vmatpush.msra.mxu0 %v318
        %525 = vmatpush.msra.mxu0 %v316
        %526 = vmatpush.msra.mxu0 %v314
        %527 = vmatpush.msra.mxu0 %v312
        %528 = vmatpush.msra.mxu0 %v310
        %529 = vmatpush.msra.mxu0 %v308
        %530 = vmatpush.msra.mxu0 %v306
        %531 = vmatpush.msra.mxu0 %v304
        %532 = vmatpush.msra.mxu0 %v302
        %533 = vmatpush.msra.mxu0 %v300
        %534 = vmatpush.msra.mxu0 %v298
        %535 = vmatpush.msra.mxu0 %v296
        %536 = vmatmul.f32.gmra.mxu0 %v232
        %v537 = vpop.f32.mrf.mxu0
        %v538 = vadd.f32 %v443, %v537
        %539 = vmatmul.f32.gmra.mxu0 %v236
        %v540 = vpop.f32.mrf.mxu0
        %v541 = vadd.f32 %v448, %v540
        %542 = vmatmul.f32.gmra.mxu0 %v240
        %v543 = vpop.f32.mrf.mxu0
        %v544 = vadd.f32 %v453, %v543
        %545 = vmatmul.f32.gmra.mxu0 %v244
        %v546 = vpop.f32.mrf.mxu0
        %v547 = vadd.f32 %v458, %v546
        %548 = vmatmul.f32.gmra.mxu0 %v248
        %v549 = vpop.f32.mrf.mxu0
        %v550 = vadd.f32 %v463, %v549
        %551 = vmatmul.f32.gmra.mxu0 %v252
        %v552 = vpop.f32.mrf.mxu0
        %v553 = vadd.f32 %v468, %v552
        %554 = vmatmul.f32.gmra.mxu0 %v256
        %v555 = vpop.f32.mrf.mxu0
        %v556 = vadd.f32 %v473, %v555
        %557 = vmatmul.f32.gmra.mxu0 %v260
        %v558 = vpop.f32.mrf.mxu0
        %v559 = vadd.f32 %v478, %v558
        %560 = vmatmul.f32.gmra.mxu0 %v264
        %v561 = vpop.f32.mrf.mxu0
        %v562 = vadd.f32 %v483, %v561
        %563 = vmatmul.f32.gmra.mxu0 %v268
        %v564 = vpop.f32.mrf.mxu0
        %v565 = vadd.f32 %v488, %v564
        %566 = vmatmul.f32.gmra.mxu0 %v272
        %v567 = vpop.f32.mrf.mxu0
        %v568 = vadd.f32 %v493, %v567
        %569 = vmatmul.f32.gmra.mxu0 %v276
        %v570 = vpop.f32.mrf.mxu0
        %v571 = vadd.f32 %v498, %v570
        %572 = vmatmul.f32.gmra.mxu0 %v280
        %v573 = vpop.f32.mrf.mxu0
        %v574 = vadd.f32 %v503, %v573
        %575 = vmatmul.f32.gmra.mxu0 %v284
        %v576 = vpop.f32.mrf.mxu0
        %v577 = vadd.f32 %v508, %v576
        %578 = vmatmul.f32.gmra.mxu0 %v288
        %v579 = vpop.f32.mrf.mxu0
        %v580 = vadd.f32 %v513, %v579
        %581 = vmatmul.f32.gmra.mxu0 %v292
        %v582 = vpop.f32.mrf.mxu0
        %v583 = vadd.f32 %v518, %v582
        %584 = vdwg.mxu0
        %585 = vmatpush.msra.mxu0 %v358
        %586 = vmatpush.msra.mxu0 %v356
        %587 = vmatpush.msra.mxu0 %v354
        %588 = vmatpush.msra.mxu0 %v352
        %589 = vmatpush.msra.mxu0 %v350
        %590 = vmatpush.msra.mxu0 %v348
        %591 = vmatpush.msra.mxu0 %v346
        %592 = vmatpush.msra.mxu0 %v344
        %593 = vmatpush.msra.mxu0 %v342
        %594 = vmatpush.msra.mxu0 %v340
        %595 = vmatpush.msra.mxu0 %v338
        %596 = vmatpush.msra.mxu0 %v336
        %597 = vmatpush.msra.mxu0 %v334
        %598 = vmatpush.msra.mxu0 %v332
        %599 = vmatpush.msra.mxu0 %v330
        %600 = vmatpush.msra.mxu0 %v328
        %601 = vmatmul.f32.gmra.mxu0 %v233
        %v602 = vpop.f32.mrf.mxu0
        %v603 = vadd.f32 %v538, %v602
        %604 = vmatmul.f32.gmra.mxu0 %v237
        %v605 = vpop.f32.mrf.mxu0
        %v606 = vadd.f32 %v541, %v605
        %607 = vmatmul.f32.gmra.mxu0 %v241
        %v608 = vpop.f32.mrf.mxu0
        %v609 = vadd.f32 %v544, %v608
        %610 = vmatmul.f32.gmra.mxu0 %v245
        %v611 = vpop.f32.mrf.mxu0
        %v612 = vadd.f32 %v547, %v611
        %613 = vmatmul.f32.gmra.mxu0 %v249
        %v614 = vpop.f32.mrf.mxu0
        %v615 = vadd.f32 %v550, %v614
        %616 = vmatmul.f32.gmra.mxu0 %v253
        %v617 = vpop.f32.mrf.mxu0
        %v618 = vadd.f32 %v553, %v617
        %619 = vmatmul.f32.gmra.mxu0 %v257
        %v620 = vpop.f32.mrf.mxu0
        %v621 = vadd.f32 %v556, %v620
        %622 = vmatmul.f32.gmra.mxu0 %v261
        %v623 = vpop.f32.mrf.mxu0
        %v624 = vadd.f32 %v559, %v623
        %625 = vmatmul.f32.gmra.mxu0 %v265
        %v626 = vpop.f32.mrf.mxu0
        %v627 = vadd.f32 %v562, %v626
        %628 = vmatmul.f32.gmra.mxu0 %v269
        %v629 = vpop.f32.mrf.mxu0
        %v630 = vadd.f32 %v565, %v629
        %631 = vmatmul.f32.gmra.mxu0 %v273
        %v632 = vpop.f32.mrf.mxu0
        %v633 = vadd.f32 %v568, %v632
        %634 = vmatmul.f32.gmra.mxu0 %v277
        %v635 = vpop.f32.mrf.mxu0
        %v636 = vadd.f32 %v571, %v635
        %637 = vmatmul.f32.gmra.mxu0 %v281
        %v638 = vpop.f32.mrf.mxu0
        %v639 = vadd.f32 %v574, %v638
        %640 = vmatmul.f32.gmra.mxu0 %v285
        %v641 = vpop.f32.mrf.mxu0
        %v642 = vadd.f32 %v577, %v641
        %643 = vmatmul.f32.gmra.mxu0 %v289
        %v644 = vpop.f32.mrf.mxu0
        %v645 = vadd.f32 %v580, %v644
        %646 = vmatmul.f32.gmra.mxu0 %v293
        %v647 = vpop.f32.mrf.mxu0
        %v648 = vadd.f32 %v583, %v647
        %649 = vdwg.mxu0
        %650 = vmatpush.msra.mxu0 %v390
        %651 = vmatpush.msra.mxu0 %v388
        %652 = vmatpush.msra.mxu0 %v386
        %653 = vmatpush.msra.mxu0 %v384
        %654 = vmatpush.msra.mxu0 %v382
        %655 = vmatpush.msra.mxu0 %v380
        %656 = vmatpush.msra.mxu0 %v378
        %657 = vmatpush.msra.mxu0 %v376
        %658 = vmatpush.msra.mxu0 %v374
        %659 = vmatpush.msra.mxu0 %v372
        %660 = vmatpush.msra.mxu0 %v370
        %661 = vmatpush.msra.mxu0 %v368
        %662 = vmatpush.msra.mxu0 %v366
        %663 = vmatpush.msra.mxu0 %v364
        %664 = vmatpush.msra.mxu0 %v362
        %665 = vmatpush.msra.mxu0 %v360
        %666 = vmatmul.f32.gmra.mxu0 %v234
        %v667 = vpop.f32.mrf.mxu0
        %v668 = vadd.f32 %v603, %v667
        %669 = vmatmul.f32.gmra.mxu0 %v238
        %v670 = vpop.f32.mrf.mxu0
        %v671 = vadd.f32 %v606, %v670
        %672 = vmatmul.f32.gmra.mxu0 %v242
        %v673 = vpop.f32.mrf.mxu0
        %v674 = vadd.f32 %v609, %v673
        %675 = vmatmul.f32.gmra.mxu0 %v246
        %v676 = vpop.f32.mrf.mxu0
        %v677 = vadd.f32 %v612, %v676
        %678 = vmatmul.f32.gmra.mxu0 %v250
        %v679 = vpop.f32.mrf.mxu0
        %v680 = vadd.f32 %v615, %v679
        %681 = vmatmul.f32.gmra.mxu0 %v254
        %v682 = vpop.f32.mrf.mxu0
        %v683 = vadd.f32 %v618, %v682
        %684 = vmatmul.f32.gmra.mxu0 %v258
        %v685 = vpop.f32.mrf.mxu0
        %v686 = vadd.f32 %v621, %v685
        %687 = vmatmul.f32.gmra.mxu0 %v262
        %v688 = vpop.f32.mrf.mxu0
        %v689 = vadd.f32 %v624, %v688
        %690 = vmatmul.f32.gmra.mxu0 %v266
        %v691 = vpop.f32.mrf.mxu0
        %v692 = vadd.f32 %v627, %v691
        %693 = vmatmul.f32.gmra.mxu0 %v270
        %v694 = vpop.f32.mrf.mxu0
        %v695 = vadd.f32 %v630, %v694
        %696 = vmatmul.f32.gmra.mxu0 %v274
        %v697 = vpop.f32.mrf.mxu0
        %v698 = vadd.f32 %v633, %v697
        %699 = vmatmul.f32.gmra.mxu0 %v278
        %v700 = vpop.f32.mrf.mxu0
        %v701 = vadd.f32 %v636, %v700
        %702 = vmatmul.f32.gmra.mxu0 %v282
        %v703 = vpop.f32.mrf.mxu0
        %v704 = vadd.f32 %v639, %v703
        %705 = vmatmul.f32.gmra.mxu0 %v286
        %v706 = vpop.f32.mrf.mxu0
        %v707 = vadd.f32 %v642, %v706
        %708 = vmatmul.f32.gmra.mxu0 %v290
        %v709 = vpop.f32.mrf.mxu0
        %v710 = vadd.f32 %v645, %v709
        %711 = vmatmul.f32.gmra.mxu0 %v294
        %v712 = vpop.f32.mrf.mxu0
        %v713 = vadd.f32 %v648, %v712
        %714 = vdwg.mxu0
        %715 = vmatpush.msra.mxu0 %v422
        %716 = vmatpush.msra.mxu0 %v420
        %717 = vmatpush.msra.mxu0 %v418
        %718 = vmatpush.msra.mxu0 %v416
        %719 = vmatpush.msra.mxu0 %v414
        %720 = vmatpush.msra.mxu0 %v412
        %721 = vmatpush.msra.mxu0 %v410
        %722 = vmatpush.msra.mxu0 %v408
        %723 = vmatpush.msra.mxu0 %v406
        %724 = vmatpush.msra.mxu0 %v404
        %725 = vmatpush.msra.mxu0 %v402
        %726 = vmatpush.msra.mxu0 %v400
        %727 = vmatpush.msra.mxu0 %v398
        %728 = vmatpush.msra.mxu0 %v396
        %729 = vmatpush.msra.mxu0 %v394
        %730 = vmatpush.msra.mxu0 %v392
        %731 = vmatmul.f32.gmra.mxu0 %v235
        %v732 = vpop.f32.mrf.mxu0
        %v733 = vadd.f32 %v668, %v732
        %734 = vmatmul.f32.gmra.mxu0 %v239
        %v735 = vpop.f32.mrf.mxu0
        %v736 = vadd.f32 %v671, %v735
        %737 = vmatmul.f32.gmra.mxu0 %v243
        %v738 = vpop.f32.mrf.mxu0
        %v739 = vadd.f32 %v674, %v738
        %740 = vmatmul.f32.gmra.mxu0 %v247
        %v741 = vpop.f32.mrf.mxu0
        %v742 = vadd.f32 %v677, %v741
        %743 = vmatmul.f32.gmra.mxu0 %v251
        %v744 = vpop.f32.mrf.mxu0
        %v745 = vadd.f32 %v680, %v744
        %746 = vmatmul.f32.gmra.mxu0 %v255
        %v747 = vpop.f32.mrf.mxu0
        %v748 = vadd.f32 %v683, %v747
        %749 = vmatmul.f32.gmra.mxu0 %v259
        %v750 = vpop.f32.mrf.mxu0
        %v751 = vadd.f32 %v686, %v750
        %752 = vmatmul.f32.gmra.mxu0 %v263
        %v753 = vpop.f32.mrf.mxu0
        %v754 = vadd.f32 %v689, %v753
        %755 = vmatmul.f32.gmra.mxu0 %v267
        %v756 = vpop.f32.mrf.mxu0
        %v757 = vadd.f32 %v692, %v756
        %758 = vmatmul.f32.gmra.mxu0 %v271
        %v759 = vpop.f32.mrf.mxu0
        %v760 = vadd.f32 %v695, %v759
        %761 = vmatmul.f32.gmra.mxu0 %v275
        %v762 = vpop.f32.mrf.mxu0
        %v763 = vadd.f32 %v698, %v762
        %764 = vmatmul.f32.gmra.mxu0 %v279
        %v765 = vpop.f32.mrf.mxu0
        %v766 = vadd.f32 %v701, %v765
        %767 = vmatmul.f32.gmra.mxu0 %v283
        %v768 = vpop.f32.mrf.mxu0
        %v769 = vadd.f32 %v704, %v768
        %770 = vmatmul.f32.gmra.mxu0 %v287
        %v771 = vpop.f32.mrf.mxu0
        %v772 = vadd.f32 %v707, %v771
        %773 = vmatmul.f32.gmra.mxu0 %v291
        %v774 = vpop.f32.mrf.mxu0
        %v775 = vadd.f32 %v710, %v774
        %776 = vmatmul.f32.gmra.mxu0 %v295
        %v777 = vpop.f32.mrf.mxu0
        %v778 = vadd.f32 %v713, %v777
        %779 = vdwg.mxu0
        %780 = vmatpush.msra.mxu0 %v327
        %781 = vmatpush.msra.mxu0 %v325
        %782 = vmatpush.msra.mxu0 %v323
        %783 = vmatpush.msra.mxu0 %v321
        %784 = vmatpush.msra.mxu0 %v319
        %785 = vmatpush.msra.mxu0 %v317
        %786 = vmatpush.msra.mxu0 %v315
        %787 = vmatpush.msra.mxu0 %v313
        %788 = vmatpush.msra.mxu0 %v311
        %789 = vmatpush.msra.mxu0 %v309
        %790 = vmatpush.msra.mxu0 %v307
        %791 = vmatpush.msra.mxu0 %v305
        %792 = vmatpush.msra.mxu0 %v303
        %793 = vmatpush.msra.mxu0 %v301
        %794 = vmatpush.msra.mxu0 %v299
        %795 = vmatpush.msra.mxu0 %v297
        %796 = vmatmul.f32.gmra.mxu0 %v232
        %v797 = vpop.f32.mrf.mxu0
        %v798 = vadd.f32 %v443, %v797
        %799 = vmatmul.f32.gmra.mxu0 %v236
        %v800 = vpop.f32.mrf.mxu0
        %v801 = vadd.f32 %v448, %v800
        %802 = vmatmul.f32.gmra.mxu0 %v240
        %v803 = vpop.f32.mrf.mxu0
        %v804 = vadd.f32 %v453, %v803
        %805 = vmatmul.f32.gmra.mxu0 %v244
        %v806 = vpop.f32.mrf.mxu0
        %v807 = vadd.f32 %v458, %v806
        %808 = vmatmul.f32.gmra.mxu0 %v248
        %v809 = vpop.f32.mrf.mxu0
        %v810 = vadd.f32 %v463, %v809
        %811 = vmatmul.f32.gmra.mxu0 %v252
        %v812 = vpop.f32.mrf.mxu0
        %v813 = vadd.f32 %v468, %v812
        %814 = vmatmul.f32.gmra.mxu0 %v256
        %v815 = vpop.f32.mrf.mxu0
        %v816 = vadd.f32 %v473, %v815
        %817 = vmatmul.f32.gmra.mxu0 %v260
        %v818 = vpop.f32.mrf.mxu0
        %v819 = vadd.f32 %v478, %v818
        %820 = vmatmul.f32.gmra.mxu0 %v264
        %v821 = vpop.f32.mrf.mxu0
        %v822 = vadd.f32 %v483, %v821
        %823 = vmatmul.f32.gmra.mxu0 %v268
        %v824 = vpop.f32.mrf.mxu0
        %v825 = vadd.f32 %v488, %v824
        %826 = vmatmul.f32.gmra.mxu0 %v272
        %v827 = vpop.f32.mrf.mxu0
        %v828 = vadd.f32 %v493, %v827
        %829 = vmatmul.f32.gmra.mxu0 %v276
        %v830 = vpop.f32.mrf.mxu0
        %v831 = vadd.f32 %v498, %v830
        %832 = vmatmul.f32.gmra.mxu0 %v280
        %v833 = vpop.f32.mrf.mxu0
        %v834 = vadd.f32 %v503, %v833
        %835 = vmatmul.f32.gmra.mxu0 %v284
        %v836 = vpop.f32.mrf.mxu0
        %v837 = vadd.f32 %v508, %v836
        %838 = vmatmul.f32.gmra.mxu0 %v288
        %v839 = vpop.f32.mrf.mxu0
        %v840 = vadd.f32 %v513, %v839
        %841 = vmatmul.f32.gmra.mxu0 %v292
        %v842 = vpop.f32.mrf.mxu0
        %v843 = vadd.f32 %v518, %v842
        %844 = vdwg.mxu0
        %845 = vmatpush.msra.mxu0 %v359
        %846 = vmatpush.msra.mxu0 %v357
        %847 = vmatpush.msra.mxu0 %v355
        %848 = vmatpush.msra.mxu0 %v353
        %849 = vmatpush.msra.mxu0 %v351
        %850 = vmatpush.msra.mxu0 %v349
        %851 = vmatpush.msra.mxu0 %v347
        %852 = vmatpush.msra.mxu0 %v345
        %853 = vmatpush.msra.mxu0 %v343
        %854 = vmatpush.msra.mxu0 %v341
        %855 = vmatpush.msra.mxu0 %v339
        %856 = vmatpush.msra.mxu0 %v337
        %857 = vmatpush.msra.mxu0 %v335
        %858 = vmatpush.msra.mxu0 %v333
        %859 = vmatpush.msra.mxu0 %v331
        %860 = vmatpush.msra.mxu0 %v329
        %861 = vmatmul.f32.gmra.mxu0 %v233
        %v862 = vpop.f32.mrf.mxu0
        %v863 = vadd.f32 %v798, %v862
        %864 = vmatmul.f32.gmra.mxu0 %v237
        %v865 = vpop.f32.mrf.mxu0
        %v866 = vadd.f32 %v801, %v865
        %867 = vmatmul.f32.gmra.mxu0 %v241
        %v868 = vpop.f32.mrf.mxu0
        %v869 = vadd.f32 %v804, %v868
        %870 = vmatmul.f32.gmra.mxu0 %v245
        %v871 = vpop.f32.mrf.mxu0
        %v872 = vadd.f32 %v807, %v871
        %873 = vmatmul.f32.gmra.mxu0 %v249
        %v874 = vpop.f32.mrf.mxu0
        %v875 = vadd.f32 %v810, %v874
        %876 = vmatmul.f32.gmra.mxu0 %v253
        %v877 = vpop.f32.mrf.mxu0
        %v878 = vadd.f32 %v813, %v877
        %879 = vmatmul.f32.gmra.mxu0 %v257
        %v880 = vpop.f32.mrf.mxu0
        %v881 = vadd.f32 %v816, %v880
        %882 = vmatmul.f32.gmra.mxu0 %v261
        %v883 = vpop.f32.mrf.mxu0
        %v884 = vadd.f32 %v819, %v883
        %885 = vmatmul.f32.gmra.mxu0 %v265
        %v886 = vpop.f32.mrf.mxu0
        %v887 = vadd.f32 %v822, %v886
        %888 = vmatmul.f32.gmra.mxu0 %v269
        %v889 = vpop.f32.mrf.mxu0
        %v890 = vadd.f32 %v825, %v889
        %891 = vmatmul.f32.gmra.mxu0 %v273
        %v892 = vpop.f32.mrf.mxu0
        %v893 = vadd.f32 %v828, %v892
        %894 = vmatmul.f32.gmra.mxu0 %v277
        %v895 = vpop.f32.mrf.mxu0
        %v896 = vadd.f32 %v831, %v895
        %897 = vmatmul.f32.gmra.mxu0 %v281
        %v898 = vpop.f32.mrf.mxu0
        %v899 = vadd.f32 %v834, %v898
        %900 = vmatmul.f32.gmra.mxu0 %v285
        %v901 = vpop.f32.mrf.mxu0
        %v902 = vadd.f32 %v837, %v901
        %903 = vmatmul.f32.gmra.mxu0 %v289
        %v904 = vpop.f32.mrf.mxu0
        %v905 = vadd.f32 %v840, %v904
        %906 = vmatmul.f32.gmra.mxu0 %v293
        %v907 = vpop.f32.mrf.mxu0
        %v908 = vadd.f32 %v843, %v907
        %909 = vdwg.mxu0
        %910 = vmatpush.msra.mxu0 %v391
        %911 = vmatpush.msra.mxu0 %v389
        %912 = vmatpush.msra.mxu0 %v387
        %913 = vmatpush.msra.mxu0 %v385
        %914 = vmatpush.msra.mxu0 %v383
        %915 = vmatpush.msra.mxu0 %v381
        %916 = vmatpush.msra.mxu0 %v379
        %917 = vmatpush.msra.mxu0 %v377
        %918 = vmatpush.msra.mxu0 %v375
        %919 = vmatpush.msra.mxu0 %v373
        %920 = vmatpush.msra.mxu0 %v371
        %921 = vmatpush.msra.mxu0 %v369
        %922 = vmatpush.msra.mxu0 %v367
        %923 = vmatpush.msra.mxu0 %v365
        %924 = vmatpush.msra.mxu0 %v363
        %925 = vmatpush.msra.mxu0 %v361
        %926 = vmatmul.f32.gmra.mxu0 %v234
        %v927 = vpop.f32.mrf.mxu0
        %v928 = vadd.f32 %v863, %v927
        %929 = vmatmul.f32.gmra.mxu0 %v238
        %v930 = vpop.f32.mrf.mxu0
        %v931 = vadd.f32 %v866, %v930
        %932 = vmatmul.f32.gmra.mxu0 %v242
        %v933 = vpop.f32.mrf.mxu0
        %v934 = vadd.f32 %v869, %v933
        %935 = vmatmul.f32.gmra.mxu0 %v246
        %v936 = vpop.f32.mrf.mxu0
        %v937 = vadd.f32 %v872, %v936
        %938 = vmatmul.f32.gmra.mxu0 %v250
        %v939 = vpop.f32.mrf.mxu0
        %v940 = vadd.f32 %v875, %v939
        %941 = vmatmul.f32.gmra.mxu0 %v254
        %v942 = vpop.f32.mrf.mxu0
        %v943 = vadd.f32 %v878, %v942
        %944 = vmatmul.f32.gmra.mxu0 %v258
        %v945 = vpop.f32.mrf.mxu0
        %v946 = vadd.f32 %v881, %v945
        %947 = vmatmul.f32.gmra.mxu0 %v262
        %v948 = vpop.f32.mrf.mxu0
        %v949 = vadd.f32 %v884, %v948
        %950 = vmatmul.f32.gmra.mxu0 %v266
        %v951 = vpop.f32.mrf.mxu0
        %v952 = vadd.f32 %v887, %v951
        %953 = vmatmul.f32.gmra.mxu0 %v270
        %v954 = vpop.f32.mrf.mxu0
        %v955 = vadd.f32 %v890, %v954
        %956 = vmatmul.f32.gmra.mxu0 %v274
        %v957 = vpop.f32.mrf.mxu0
        %v958 = vadd.f32 %v893, %v957
        %959 = vmatmul.f32.gmra.mxu0 %v278
        %v960 = vpop.f32.mrf.mxu0
        %v961 = vadd.f32 %v896, %v960
        %962 = vmatmul.f32.gmra.mxu0 %v282
        %v963 = vpop.f32.mrf.mxu0
        %v964 = vadd.f32 %v899, %v963
        %965 = vmatmul.f32.gmra.mxu0 %v286
        %v966 = vpop.f32.mrf.mxu0
        %v967 = vadd.f32 %v902, %v966
        %968 = vmatmul.f32.gmra.mxu0 %v290
        %v969 = vpop.f32.mrf.mxu0
        %v970 = vadd.f32 %v905, %v969
        %971 = vmatmul.f32.gmra.mxu0 %v294
        %v972 = vpop.f32.mrf.mxu0
        %v973 = vadd.f32 %v908, %v972
        %974 = vdwg.mxu0
        %975 = vmatpush.msra.mxu0 %v423
        %976 = vmatpush.msra.mxu0 %v421
        %977 = vmatpush.msra.mxu0 %v419
        %978 = vmatpush.msra.mxu0 %v417
        %979 = vmatpush.msra.mxu0 %v415
        %980 = vmatpush.msra.mxu0 %v413
        %981 = vmatpush.msra.mxu0 %v411
        %982 = vmatpush.msra.mxu0 %v409
        %983 = vmatpush.msra.mxu0 %v407
        %984 = vmatpush.msra.mxu0 %v405
        %985 = vmatpush.msra.mxu0 %v403
        %986 = vmatpush.msra.mxu0 %v401
        %987 = vmatpush.msra.mxu0 %v399
        %988 = vmatpush.msra.mxu0 %v397
        %989 = vmatpush.msra.mxu0 %v395
        %990 = vmatpush.msra.mxu0 %v393
        %991 = vmatmul.f32.gmra.mxu0 %v235
        %v992 = vpop.f32.mrf.mxu0
        %v993 = vadd.f32 %v928, %v992
        %994 = vmatmul.f32.gmra.mxu0 %v239
        %v995 = vpop.f32.mrf.mxu0
        %v996 = vadd.f32 %v931, %v995
        %997 = vmatmul.f32.gmra.mxu0 %v243
        %v998 = vpop.f32.mrf.mxu0
        %v999 = vadd.f32 %v934, %v998
        %1000 = vmatmul.f32.gmra.mxu0 %v247
        %v1001 = vpop.f32.mrf.mxu0
        %v1002 = vadd.f32 %v937, %v1001
        %1003 = vmatmul.f32.gmra.mxu0 %v251
        %v1004 = vpop.f32.mrf.mxu0
        %v1005 = vadd.f32 %v940, %v1004
        %1006 = vmatmul.f32.gmra.mxu0 %v255
        %v1007 = vpop.f32.mrf.mxu0
        %v1008 = vadd.f32 %v943, %v1007
        %1009 = vmatmul.f32.gmra.mxu0 %v259
        %v1010 = vpop.f32.mrf.mxu0
        %v1011 = vadd.f32 %v946, %v1010
        %1012 = vmatmul.f32.gmra.mxu0 %v263
        %v1013 = vpop.f32.mrf.mxu0
        %v1014 = vadd.f32 %v949, %v1013
        %1015 = vmatmul.f32.gmra.mxu0 %v267
        %v1016 = vpop.f32.mrf.mxu0
        %v1017 = vadd.f32 %v952, %v1016
        %1018 = vmatmul.f32.gmra.mxu0 %v271
        %v1019 = vpop.f32.mrf.mxu0
        %v1020 = vadd.f32 %v955, %v1019
        %1021 = vmatmul.f32.gmra.mxu0 %v275
        %v1022 = vpop.f32.mrf.mxu0
        %v1023 = vadd.f32 %v958, %v1022
        %1024 = vmatmul.f32.gmra.mxu0 %v279
        %v1025 = vpop.f32.mrf.mxu0
        %v1026 = vadd.f32 %v961, %v1025
        %1027 = vmatmul.f32.gmra.mxu0 %v283
        %v1028 = vpop.f32.mrf.mxu0
        %v1029 = vadd.f32 %v964, %v1028
        %1030 = vmatmul.f32.gmra.mxu0 %v287
        %v1031 = vpop.f32.mrf.mxu0
        %v1032 = vadd.f32 %v967, %v1031
        %1033 = vmatmul.f32.gmra.mxu0 %v291
        %v1034 = vpop.f32.mrf.mxu0
        %v1035 = vadd.f32 %v970, %v1034
        %1036 = vmatmul.f32.gmra.mxu0 %v295
        %v1037 = vpop.f32.mrf.mxu0
        %v1038 = vadd.f32 %v973, %v1037
        %1039 = vdwg.mxu0
        %v1040 = vld [vmem:[#allocation4] sm:$0xff]
        %v1041 = vld [vmem:[#allocation4 + $0x8] sm:$0xff]
        %v1042 = vld [vmem:[#allocation4 + $0x10] sm:$0xff]
        %v1043 = vld [vmem:[#allocation4 + $0x18] sm:$0xff]
        %v1044 = vld [vmem:[#allocation4 + $0x20] sm:$0xff]
        %v1045 = vld [vmem:[#allocation4 + $0x28] sm:$0xff]
        %v1046 = vld [vmem:[#allocation4 + $0x30] sm:$0xff]
        %v1047 = vld [vmem:[#allocation4 + $0x38] sm:$0xff]
        %v1048 = vld [vmem:[#allocation4 + $0x40] sm:$0xff]
        %v1049 = vld [vmem:[#allocation4 + $0x48] sm:$0xff]
        %v1050 = vld [vmem:[#allocation4 + $0x50] sm:$0xff]
        %v1051 = vld [vmem:[#allocation4 + $0x58] sm:$0xff]
        %v1052 = vld [vmem:[#allocation4 + $0x60] sm:$0xff]
        %v1053 = vld [vmem:[#allocation4 + $0x68] sm:$0xff]
        %v1054 = vld [vmem:[#allocation4 + $0x70] sm:$0xff]
        %v1055 = vld [vmem:[#allocation4 + $0x78] sm:$0xff]
        %v1056 = vld [vmem:[#allocation4 + $0x80] sm:$0xff]
        %v1057 = vld [vmem:[#allocation4 + $0x88] sm:$0xff]
        %v1058 = vld [vmem:[#allocation4 + $0x90] sm:$0xff]
        %v1059 = vld [vmem:[#allocation4 + $0x98] sm:$0xff]
        %v1060 = vld [vmem:[#allocation4 + $0xa0] sm:$0xff]
        %v1061 = vld [vmem:[#allocation4 + $0xa8] sm:$0xff]
        %v1062 = vld [vmem:[#allocation4 + $0xb0] sm:$0xff]
        %v1063 = vld [vmem:[#allocation4 + $0xb8] sm:$0xff]
        %v1064 = vld [vmem:[#allocation4 + $0xc0] sm:$0xff]
        %v1065 = vld [vmem:[#allocation4 + $0xc8] sm:$0xff]
        %v1066 = vld [vmem:[#allocation4 + $0xd0] sm:$0xff]
        %v1067 = vld [vmem:[#allocation4 + $0xd8] sm:$0xff]
        %v1068 = vld [vmem:[#allocation4 + $0xe0] sm:$0xff]
        %v1069 = vld [vmem:[#allocation4 + $0xe8] sm:$0xff]
        %v1070 = vld [vmem:[#allocation4 + $0xf0] sm:$0xff]
        %v1071 = vld [vmem:[#allocation4 + $0xf8] sm:$0xff]
        %v1072 = vld [vmem:[#allocation4 + $0x100] sm:$0xff]
        %v1073 = vld [vmem:[#allocation4 + $0x108] sm:$0xff]
        %v1074 = vld [vmem:[#allocation4 + $0x110] sm:$0xff]
        %v1075 = vld [vmem:[#allocation4 + $0x118] sm:$0xff]
        %v1076 = vld [vmem:[#allocation4 + $0x120] sm:$0xff]
        %v1077 = vld [vmem:[#allocation4 + $0x128] sm:$0xff]
        %v1078 = vld [vmem:[#allocation4 + $0x130] sm:$0xff]
        %v1079 = vld [vmem:[#allocation4 + $0x138] sm:$0xff]
        %v1080 = vld [vmem:[#allocation4 + $0x140] sm:$0xff]
        %v1081 = vld [vmem:[#allocation4 + $0x148] sm:$0xff]
        %v1082 = vld [vmem:[#allocation4 + $0x150] sm:$0xff]
        %v1083 = vld [vmem:[#allocation4 + $0x158] sm:$0xff]
        %v1084 = vld [vmem:[#allocation4 + $0x160] sm:$0xff]
        %v1085 = vld [vmem:[#allocation4 + $0x168] sm:$0xff]
        %v1086 = vld [vmem:[#allocation4 + $0x170] sm:$0xff]
        %v1087 = vld [vmem:[#allocation4 + $0x178] sm:$0xff]
        %v1088 = vld [vmem:[#allocation4 + $0x180] sm:$0xff]
        %v1089 = vld [vmem:[#allocation4 + $0x188] sm:$0xff]
        %v1090 = vld [vmem:[#allocation4 + $0x190] sm:$0xff]
        %v1091 = vld [vmem:[#allocation4 + $0x198] sm:$0xff]
        %v1092 = vld [vmem:[#allocation4 + $0x1a0] sm:$0xff]
        %v1093 = vld [vmem:[#allocation4 + $0x1a8] sm:$0xff]
        %v1094 = vld [vmem:[#allocation4 + $0x1b0] sm:$0xff]
        %v1095 = vld [vmem:[#allocation4 + $0x1b8] sm:$0xff]
        %v1096 = vld [vmem:[#allocation4 + $0x1c0] sm:$0xff]
        %v1097 = vld [vmem:[#allocation4 + $0x1c8] sm:$0xff]
        %v1098 = vld [vmem:[#allocation4 + $0x1d0] sm:$0xff]
        %v1099 = vld [vmem:[#allocation4 + $0x1d8] sm:$0xff]
        %v1100 = vld [vmem:[#allocation4 + $0x1e0] sm:$0xff]
        %v1101 = vld [vmem:[#allocation4 + $0x1e8] sm:$0xff]
        %v1102 = vld [vmem:[#allocation4 + $0x1f0] sm:$0xff]
        %v1103 = vld [vmem:[#allocation4 + $0x1f8] sm:$0xff]
        %v1104 = vld [vmem:[#allocation4 + $0x200] sm:$0xff]
        %v1105 = vld [vmem:[#allocation4 + $0x208] sm:$0xff]
        %v1106 = vld [vmem:[#allocation4 + $0x210] sm:$0xff]
        %v1107 = vld [vmem:[#allocation4 + $0x218] sm:$0xff]
        %v1108 = vld [vmem:[#allocation4 + $0x220] sm:$0xff]
        %v1109 = vld [vmem:[#allocation4 + $0x228] sm:$0xff]
        %v1110 = vld [vmem:[#allocation4 + $0x230] sm:$0xff]
        %v1111 = vld [vmem:[#allocation4 + $0x238] sm:$0xff]
        %v1112 = vld [vmem:[#allocation4 + $0x240] sm:$0xff]
        %v1113 = vld [vmem:[#allocation4 + $0x248] sm:$0xff]
        %v1114 = vld [vmem:[#allocation4 + $0x250] sm:$0xff]
        %v1115 = vld [vmem:[#allocation4 + $0x258] sm:$0xff]
        %v1116 = vld [vmem:[#allocation4 + $0x260] sm:$0xff]
        %v1117 = vld [vmem:[#allocation4 + $0x268] sm:$0xff]
        %v1118 = vld [vmem:[#allocation4 + $0x270] sm:$0xff]
        %v1119 = vld [vmem:[#allocation4 + $0x278] sm:$0xff]
        %v1120 = vld [vmem:[#allocation4 + $0x280] sm:$0xff]
        %v1121 = vld [vmem:[#allocation4 + $0x288] sm:$0xff]
        %v1122 = vld [vmem:[#allocation4 + $0x290] sm:$0xff]
        %v1123 = vld [vmem:[#allocation4 + $0x298] sm:$0xff]
        %v1124 = vld [vmem:[#allocation4 + $0x2a0] sm:$0xff]
        %v1125 = vld [vmem:[#allocation4 + $0x2a8] sm:$0xff]
        %v1126 = vld [vmem:[#allocation4 + $0x2b0] sm:$0xff]
        %v1127 = vld [vmem:[#allocation4 + $0x2b8] sm:$0xff]
        %v1128 = vld [vmem:[#allocation4 + $0x2c0] sm:$0xff]
        %v1129 = vld [vmem:[#allocation4 + $0x2c8] sm:$0xff]
        %v1130 = vld [vmem:[#allocation4 + $0x2d0] sm:$0xff]
        %v1131 = vld [vmem:[#allocation4 + $0x2d8] sm:$0xff]
        %v1132 = vld [vmem:[#allocation4 + $0x2e0] sm:$0xff]
        %v1133 = vld [vmem:[#allocation4 + $0x2e8] sm:$0xff]
        %v1134 = vld [vmem:[#allocation4 + $0x2f0] sm:$0xff]
        %v1135 = vld [vmem:[#allocation4 + $0x2f8] sm:$0xff]
        %v1136 = vld [vmem:[#allocation4 + $0x300] sm:$0xff]
        %v1137 = vld [vmem:[#allocation4 + $0x308] sm:$0xff]
        %v1138 = vld [vmem:[#allocation4 + $0x310] sm:$0xff]
        %v1139 = vld [vmem:[#allocation4 + $0x318] sm:$0xff]
        %v1140 = vld [vmem:[#allocation4 + $0x320] sm:$0xff]
        %v1141 = vld [vmem:[#allocation4 + $0x328] sm:$0xff]
        %v1142 = vld [vmem:[#allocation4 + $0x330] sm:$0xff]
        %v1143 = vld [vmem:[#allocation4 + $0x338] sm:$0xff]
        %v1144 = vld [vmem:[#allocation4 + $0x340] sm:$0xff]
        %v1145 = vld [vmem:[#allocation4 + $0x348] sm:$0xff]
        %v1146 = vld [vmem:[#allocation4 + $0x350] sm:$0xff]
        %v1147 = vld [vmem:[#allocation4 + $0x358] sm:$0xff]
        %v1148 = vld [vmem:[#allocation4 + $0x360] sm:$0xff]
        %v1149 = vld [vmem:[#allocation4 + $0x368] sm:$0xff]
        %v1150 = vld [vmem:[#allocation4 + $0x370] sm:$0xff]
        %v1151 = vld [vmem:[#allocation4 + $0x378] sm:$0xff]
        %v1152 = vld [vmem:[#allocation4 + $0x380] sm:$0xff]
        %v1153 = vld [vmem:[#allocation4 + $0x388] sm:$0xff]
        %v1154 = vld [vmem:[#allocation4 + $0x390] sm:$0xff]
        %v1155 = vld [vmem:[#allocation4 + $0x398] sm:$0xff]
        %v1156 = vld [vmem:[#allocation4 + $0x3a0] sm:$0xff]
        %v1157 = vld [vmem:[#allocation4 + $0x3a8] sm:$0xff]
        %v1158 = vld [vmem:[#allocation4 + $0x3b0] sm:$0xff]
        %v1159 = vld [vmem:[#allocation4 + $0x3b8] sm:$0xff]
        %v1160 = vld [vmem:[#allocation4 + $0x3c0] sm:$0xff]
        %v1161 = vld [vmem:[#allocation4 + $0x3c8] sm:$0xff]
        %v1162 = vld [vmem:[#allocation4 + $0x3d0] sm:$0xff]
        %v1163 = vld [vmem:[#allocation4 + $0x3d8] sm:$0xff]
        %v1164 = vld [vmem:[#allocation4 + $0x3e0] sm:$0xff]
        %v1165 = vld [vmem:[#allocation4 + $0x3e8] sm:$0xff]
        %v1166 = vld [vmem:[#allocation4 + $0x3f0] sm:$0xff]
        %v1167 = vld [vmem:[#allocation4 + $0x3f8] sm:$0xff]
        %v1168 = vld [vmem:[#allocation4 + $0x400] sm:$0xff]
        %v1169 = vld [vmem:[#allocation4 + $0x408] sm:$0xff]
        %v1170 = vld [vmem:[#allocation4 + $0x410] sm:$0xff]
        %v1171 = vld [vmem:[#allocation4 + $0x418] sm:$0xff]
        %v1172 = vld [vmem:[#allocation4 + $0x420] sm:$0xff]
        %v1173 = vld [vmem:[#allocation4 + $0x428] sm:$0xff]
        %v1174 = vld [vmem:[#allocation4 + $0x430] sm:$0xff]
        %v1175 = vld [vmem:[#allocation4 + $0x438] sm:$0xff]
        %v1176 = vld [vmem:[#allocation4 + $0x440] sm:$0xff]
        %v1177 = vld [vmem:[#allocation4 + $0x448] sm:$0xff]
        %v1178 = vld [vmem:[#allocation4 + $0x450] sm:$0xff]
        %v1179 = vld [vmem:[#allocation4 + $0x458] sm:$0xff]
        %v1180 = vld [vmem:[#allocation4 + $0x460] sm:$0xff]
        %v1181 = vld [vmem:[#allocation4 + $0x468] sm:$0xff]
        %v1182 = vld [vmem:[#allocation4 + $0x470] sm:$0xff]
        %v1183 = vld [vmem:[#allocation4 + $0x478] sm:$0xff]
        %v1184 = vld [vmem:[#allocation4 + $0x480] sm:$0xff]
        %v1185 = vld [vmem:[#allocation4 + $0x488] sm:$0xff]
        %v1186 = vld [vmem:[#allocation4 + $0x490] sm:$0xff]
        %v1187 = vld [vmem:[#allocation4 + $0x498] sm:$0xff]
        %v1188 = vld [vmem:[#allocation4 + $0x4a0] sm:$0xff]
        %v1189 = vld [vmem:[#allocation4 + $0x4a8] sm:$0xff]
        %v1190 = vld [vmem:[#allocation4 + $0x4b0] sm:$0xff]
        %v1191 = vld [vmem:[#allocation4 + $0x4b8] sm:$0xff]
        %v1192 = vld [vmem:[#allocation4 + $0x4c0] sm:$0xff]
        %v1193 = vld [vmem:[#allocation4 + $0x4c8] sm:$0xff]
        %v1194 = vld [vmem:[#allocation4 + $0x4d0] sm:$0xff]
        %v1195 = vld [vmem:[#allocation4 + $0x4d8] sm:$0xff]
        %v1196 = vld [vmem:[#allocation4 + $0x4e0] sm:$0xff]
        %v1197 = vld [vmem:[#allocation4 + $0x4e8] sm:$0xff]
        %v1198 = vld [vmem:[#allocation4 + $0x4f0] sm:$0xff]
        %v1199 = vld [vmem:[#allocation4 + $0x4f8] sm:$0xff]
        %v1200 = vld [vmem:[#allocation4 + $0x500] sm:$0xff]
        %v1201 = vld [vmem:[#allocation4 + $0x508] sm:$0xff]
        %v1202 = vld [vmem:[#allocation4 + $0x510] sm:$0xff]
        %v1203 = vld [vmem:[#allocation4 + $0x518] sm:$0xff]
        %v1204 = vld [vmem:[#allocation4 + $0x520] sm:$0xff]
        %v1205 = vld [vmem:[#allocation4 + $0x528] sm:$0xff]
        %v1206 = vld [vmem:[#allocation4 + $0x530] sm:$0xff]
        %v1207 = vld [vmem:[#allocation4 + $0x538] sm:$0xff]
        %v1208 = vld [vmem:[#allocation4 + $0x540] sm:$0xff]
        %v1209 = vld [vmem:[#allocation4 + $0x548] sm:$0xff]
        %v1210 = vld [vmem:[#allocation4 + $0x550] sm:$0xff]
        %v1211 = vld [vmem:[#allocation4 + $0x558] sm:$0xff]
        %v1212 = vld [vmem:[#allocation4 + $0x560] sm:$0xff]
        %v1213 = vld [vmem:[#allocation4 + $0x568] sm:$0xff]
        %v1214 = vld [vmem:[#allocation4 + $0x570] sm:$0xff]
        %v1215 = vld [vmem:[#allocation4 + $0x578] sm:$0xff]
        %v1216 = vld [vmem:[#allocation4 + $0x580] sm:$0xff]
        %v1217 = vld [vmem:[#allocation4 + $0x588] sm:$0xff]
        %v1218 = vld [vmem:[#allocation4 + $0x590] sm:$0xff]
        %v1219 = vld [vmem:[#allocation4 + $0x598] sm:$0xff]
        %v1220 = vld [vmem:[#allocation4 + $0x5a0] sm:$0xff]
        %v1221 = vld [vmem:[#allocation4 + $0x5a8] sm:$0xff]
        %v1222 = vld [vmem:[#allocation4 + $0x5b0] sm:$0xff]
        %v1223 = vld [vmem:[#allocation4 + $0x5b8] sm:$0xff]
        %v1224 = vld [vmem:[#allocation4 + $0x5c0] sm:$0xff]
        %v1225 = vld [vmem:[#allocation4 + $0x5c8] sm:$0xff]
        %v1226 = vld [vmem:[#allocation4 + $0x5d0] sm:$0xff]
        %v1227 = vld [vmem:[#allocation4 + $0x5d8] sm:$0xff]
        %v1228 = vld [vmem:[#allocation4 + $0x5e0] sm:$0xff]
        %v1229 = vld [vmem:[#allocation4 + $0x5e8] sm:$0xff]
        %v1230 = vld [vmem:[#allocation4 + $0x5f0] sm:$0xff]
        %v1231 = vld [vmem:[#allocation4 + $0x5f8] sm:$0xff]
        %v1232 = vld [vmem:[#allocation4 + $0x600] sm:$0xff]
        %v1233 = vld [vmem:[#allocation4 + $0x608] sm:$0xff]
        %v1234 = vld [vmem:[#allocation4 + $0x610] sm:$0xff]
        %v1235 = vld [vmem:[#allocation4 + $0x618] sm:$0xff]
        %v1236 = vld [vmem:[#allocation4 + $0x620] sm:$0xff]
        %v1237 = vld [vmem:[#allocation4 + $0x628] sm:$0xff]
        %v1238 = vld [vmem:[#allocation4 + $0x630] sm:$0xff]
        %v1239 = vld [vmem:[#allocation4 + $0x638] sm:$0xff]
        %v1240 = vld [vmem:[#allocation4 + $0x640] sm:$0xff]
        %v1241 = vld [vmem:[#allocation4 + $0x648] sm:$0xff]
        %v1242 = vld [vmem:[#allocation4 + $0x650] sm:$0xff]
        %v1243 = vld [vmem:[#allocation4 + $0x658] sm:$0xff]
        %v1244 = vld [vmem:[#allocation4 + $0x660] sm:$0xff]
        %v1245 = vld [vmem:[#allocation4 + $0x668] sm:$0xff]
        %v1246 = vld [vmem:[#allocation4 + $0x670] sm:$0xff]
        %v1247 = vld [vmem:[#allocation4 + $0x678] sm:$0xff]
        %v1248 = vld [vmem:[#allocation4 + $0x680] sm:$0xff]
        %v1249 = vld [vmem:[#allocation4 + $0x688] sm:$0xff]
        %v1250 = vld [vmem:[#allocation4 + $0x690] sm:$0xff]
        %v1251 = vld [vmem:[#allocation4 + $0x698] sm:$0xff]
        %v1252 = vld [vmem:[#allocation4 + $0x6a0] sm:$0xff]
        %v1253 = vld [vmem:[#allocation4 + $0x6a8] sm:$0xff]
        %v1254 = vld [vmem:[#allocation4 + $0x6b0] sm:$0xff]
        %v1255 = vld [vmem:[#allocation4 + $0x6b8] sm:$0xff]
        %v1256 = vld [vmem:[#allocation4 + $0x6c0] sm:$0xff]
        %v1257 = vld [vmem:[#allocation4 + $0x6c8] sm:$0xff]
        %v1258 = vld [vmem:[#allocation4 + $0x6d0] sm:$0xff]
        %v1259 = vld [vmem:[#allocation4 + $0x6d8] sm:$0xff]
        %v1260 = vld [vmem:[#allocation4 + $0x6e0] sm:$0xff]
        %v1261 = vld [vmem:[#allocation4 + $0x6e8] sm:$0xff]
        %v1262 = vld [vmem:[#allocation4 + $0x6f0] sm:$0xff]
        %v1263 = vld [vmem:[#allocation4 + $0x6f8] sm:$0xff]
        %v1264 = vld [vmem:[#allocation4 + $0x700] sm:$0xff]
        %v1265 = vld [vmem:[#allocation4 + $0x708] sm:$0xff]
        %v1266 = vld [vmem:[#allocation4 + $0x710] sm:$0xff]
        %v1267 = vld [vmem:[#allocation4 + $0x718] sm:$0xff]
        %v1268 = vld [vmem:[#allocation4 + $0x720] sm:$0xff]
        %v1269 = vld [vmem:[#allocation4 + $0x728] sm:$0xff]
        %v1270 = vld [vmem:[#allocation4 + $0x730] sm:$0xff]
        %v1271 = vld [vmem:[#allocation4 + $0x738] sm:$0xff]
        %v1272 = vld [vmem:[#allocation4 + $0x740] sm:$0xff]
        %v1273 = vld [vmem:[#allocation4 + $0x748] sm:$0xff]
        %v1274 = vld [vmem:[#allocation4 + $0x750] sm:$0xff]
        %v1275 = vld [vmem:[#allocation4 + $0x758] sm:$0xff]
        %v1276 = vld [vmem:[#allocation4 + $0x760] sm:$0xff]
        %v1277 = vld [vmem:[#allocation4 + $0x768] sm:$0xff]
        %v1278 = vld [vmem:[#allocation4 + $0x770] sm:$0xff]
        %v1279 = vld [vmem:[#allocation4 + $0x778] sm:$0xff]
        %v1280 = vld [vmem:[#allocation4 + $0x780] sm:$0xff]
        %v1281 = vld [vmem:[#allocation4 + $0x788] sm:$0xff]
        %v1282 = vld [vmem:[#allocation4 + $0x790] sm:$0xff]
        %v1283 = vld [vmem:[#allocation4 + $0x798] sm:$0xff]
        %v1284 = vld [vmem:[#allocation4 + $0x7a0] sm:$0xff]
        %v1285 = vld [vmem:[#allocation4 + $0x7a8] sm:$0xff]
        %v1286 = vld [vmem:[#allocation4 + $0x7b0] sm:$0xff]
        %v1287 = vld [vmem:[#allocation4 + $0x7b8] sm:$0xff]
        %v1288 = vld [vmem:[#allocation4 + $0x7c0] sm:$0xff]
        %v1289 = vld [vmem:[#allocation4 + $0x7c8] sm:$0xff]
        %v1290 = vld [vmem:[#allocation4 + $0x7d0] sm:$0xff]
        %v1291 = vld [vmem:[#allocation4 + $0x7d8] sm:$0xff]
        %v1292 = vld [vmem:[#allocation4 + $0x7e0] sm:$0xff]
        %v1293 = vld [vmem:[#allocation4 + $0x7e8] sm:$0xff]
        %v1294 = vld [vmem:[#allocation4 + $0x7f0] sm:$0xff]
        %v1295 = vld [vmem:[#allocation4 + $0x7f8] sm:$0xff]
        %v1296 = vld [vmem:[#allocation4 + $0x800] sm:$0xff]
        %v1297 = vld [vmem:[#allocation4 + $0x808] sm:$0xff]
        %v1298 = vld [vmem:[#allocation4 + $0x810] sm:$0xff]
        %v1299 = vld [vmem:[#allocation4 + $0x818] sm:$0xff]
        %v1300 = vld [vmem:[#allocation4 + $0x820] sm:$0xff]
        %v1301 = vld [vmem:[#allocation4 + $0x828] sm:$0xff]
        %v1302 = vld [vmem:[#allocation4 + $0x830] sm:$0xff]
        %v1303 = vld [vmem:[#allocation4 + $0x838] sm:$0xff]
        %v1304 = vld [vmem:[#allocation4 + $0x840] sm:$0xff]
        %v1305 = vld [vmem:[#allocation4 + $0x848] sm:$0xff]
        %v1306 = vld [vmem:[#allocation4 + $0x850] sm:$0xff]
        %v1307 = vld [vmem:[#allocation4 + $0x858] sm:$0xff]
        %v1308 = vld [vmem:[#allocation4 + $0x860] sm:$0xff]
        %v1309 = vld [vmem:[#allocation4 + $0x868] sm:$0xff]
        %v1310 = vld [vmem:[#allocation4 + $0x870] sm:$0xff]
        %v1311 = vld [vmem:[#allocation4 + $0x878] sm:$0xff]
        %v1312 = vld [vmem:[#allocation4 + $0x880] sm:$0xff]
        %v1313 = vld [vmem:[#allocation4 + $0x888] sm:$0xff]
        %v1314 = vld [vmem:[#allocation4 + $0x890] sm:$0xff]
        %v1315 = vld [vmem:[#allocation4 + $0x898] sm:$0xff]
        %v1316 = vld [vmem:[#allocation4 + $0x8a0] sm:$0xff]
        %v1317 = vld [vmem:[#allocation4 + $0x8a8] sm:$0xff]
        %v1318 = vld [vmem:[#allocation4 + $0x8b0] sm:$0xff]
        %v1319 = vld [vmem:[#allocation4 + $0x8b8] sm:$0xff]
        %v1320 = vld [vmem:[#allocation4 + $0x8c0] sm:$0xff]
        %v1321 = vld [vmem:[#allocation4 + $0x8c8] sm:$0xff]
        %v1322 = vld [vmem:[#allocation4 + $0x8d0] sm:$0xff]
        %v1323 = vld [vmem:[#allocation4 + $0x8d8] sm:$0xff]
        %v1324 = vld [vmem:[#allocation4 + $0x8e0] sm:$0xff]
        %v1325 = vld [vmem:[#allocation4 + $0x8e8] sm:$0xff]
        %v1326 = vld [vmem:[#allocation4 + $0x8f0] sm:$0xff]
        %v1327 = vld [vmem:[#allocation4 + $0x8f8] sm:$0xff]
        %v1328 = vld [vmem:[#allocation4 + $0x900] sm:$0xff]
        %v1329 = vld [vmem:[#allocation4 + $0x908] sm:$0xff]
        %v1330 = vld [vmem:[#allocation4 + $0x910] sm:$0xff]
        %v1331 = vld [vmem:[#allocation4 + $0x918] sm:$0xff]
        %v1332 = vld [vmem:[#allocation4 + $0x920] sm:$0xff]
        %v1333 = vld [vmem:[#allocation4 + $0x928] sm:$0xff]
        %v1334 = vld [vmem:[#allocation4 + $0x930] sm:$0xff]
        %v1335 = vld [vmem:[#allocation4 + $0x938] sm:$0xff]
        %v1336 = vld [vmem:[#allocation4 + $0x940] sm:$0xff]
        %v1337 = vld [vmem:[#allocation4 + $0x948] sm:$0xff]
        %v1338 = vld [vmem:[#allocation4 + $0x950] sm:$0xff]
        %v1339 = vld [vmem:[#allocation4 + $0x958] sm:$0xff]
        %v1340 = vld [vmem:[#allocation4 + $0x960] sm:$0xff]
        %v1341 = vld [vmem:[#allocation4 + $0x968] sm:$0xff]
        %v1342 = vld [vmem:[#allocation4 + $0x970] sm:$0xff]
        %v1343 = vld [vmem:[#allocation4 + $0x978] sm:$0xff]
        %v1344 = vld [vmem:[#allocation4 + $0x980] sm:$0xff]
        %v1345 = vld [vmem:[#allocation4 + $0x988] sm:$0xff]
        %v1346 = vld [vmem:[#allocation4 + $0x990] sm:$0xff]
        %v1347 = vld [vmem:[#allocation4 + $0x998] sm:$0xff]
        %v1348 = vld [vmem:[#allocation4 + $0x9a0] sm:$0xff]
        %v1349 = vld [vmem:[#allocation4 + $0x9a8] sm:$0xff]
        %v1350 = vld [vmem:[#allocation4 + $0x9b0] sm:$0xff]
        %v1351 = vld [vmem:[#allocation4 + $0x9b8] sm:$0xff]
        %v1352 = vld [vmem:[#allocation4 + $0x9c0] sm:$0xff]
        %v1353 = vld [vmem:[#allocation4 + $0x9c8] sm:$0xff]
        %v1354 = vld [vmem:[#allocation4 + $0x9d0] sm:$0xff]
        %v1355 = vld [vmem:[#allocation4 + $0x9d8] sm:$0xff]
        %v1356 = vld [vmem:[#allocation4 + $0x9e0] sm:$0xff]
        %v1357 = vld [vmem:[#allocation4 + $0x9e8] sm:$0xff]
        %v1358 = vld [vmem:[#allocation4 + $0x9f0] sm:$0xff]
        %v1359 = vld [vmem:[#allocation4 + $0x9f8] sm:$0xff]
        %v1360 = vld [vmem:[#allocation4 + $0xa00] sm:$0xff]
        %v1361 = vld [vmem:[#allocation4 + $0xa08] sm:$0xff]
        %v1362 = vld [vmem:[#allocation4 + $0xa10] sm:$0xff]
        %v1363 = vld [vmem:[#allocation4 + $0xa18] sm:$0xff]
        %v1364 = vld [vmem:[#allocation4 + $0xa20] sm:$0xff]
        %v1365 = vld [vmem:[#allocation4 + $0xa28] sm:$0xff]
        %v1366 = vld [vmem:[#allocation4 + $0xa30] sm:$0xff]
        %v1367 = vld [vmem:[#allocation4 + $0xa38] sm:$0xff]
        %v1368 = vld [vmem:[#allocation4 + $0xa40] sm:$0xff]
        %v1369 = vld [vmem:[#allocation4 + $0xa48] sm:$0xff]
        %v1370 = vld [vmem:[#allocation4 + $0xa50] sm:$0xff]
        %v1371 = vld [vmem:[#allocation4 + $0xa58] sm:$0xff]
        %v1372 = vld [vmem:[#allocation4 + $0xa60] sm:$0xff]
        %v1373 = vld [vmem:[#allocation4 + $0xa68] sm:$0xff]
        %v1374 = vld [vmem:[#allocation4 + $0xa70] sm:$0xff]
        %v1375 = vld [vmem:[#allocation4 + $0xa78] sm:$0xff]
        %v1376 = vld [vmem:[#allocation4 + $0xa80] sm:$0xff]
        %v1377 = vld [vmem:[#allocation4 + $0xa88] sm:$0xff]
        %v1378 = vld [vmem:[#allocation4 + $0xa90] sm:$0xff]
        %v1379 = vld [vmem:[#allocation4 + $0xa98] sm:$0xff]
        %v1380 = vld [vmem:[#allocation4 + $0xaa0] sm:$0xff]
        %v1381 = vld [vmem:[#allocation4 + $0xaa8] sm:$0xff]
        %v1382 = vld [vmem:[#allocation4 + $0xab0] sm:$0xff]
        %v1383 = vld [vmem:[#allocation4 + $0xab8] sm:$0xff]
        %v1384 = vld [vmem:[#allocation4 + $0xac0] sm:$0xff]
        %v1385 = vld [vmem:[#allocation4 + $0xac8] sm:$0xff]
        %v1386 = vld [vmem:[#allocation4 + $0xad0] sm:$0xff]
        %v1387 = vld [vmem:[#allocation4 + $0xad8] sm:$0xff]
        %v1388 = vld [vmem:[#allocation4 + $0xae0] sm:$0xff]
        %v1389 = vld [vmem:[#allocation4 + $0xae8] sm:$0xff]
        %v1390 = vld [vmem:[#allocation4 + $0xaf0] sm:$0xff]
        %v1391 = vld [vmem:[#allocation4 + $0xaf8] sm:$0xff]
        %v1392 = vld [vmem:[#allocation4 + $0xb00] sm:$0xff]
        %v1393 = vld [vmem:[#allocation4 + $0xb08] sm:$0xff]
        %v1394 = vld [vmem:[#allocation4 + $0xb10] sm:$0xff]
        %v1395 = vld [vmem:[#allocation4 + $0xb18] sm:$0xff]
        %v1396 = vld [vmem:[#allocation4 + $0xb20] sm:$0xff]
        %v1397 = vld [vmem:[#allocation4 + $0xb28] sm:$0xff]
        %v1398 = vld [vmem:[#allocation4 + $0xb30] sm:$0xff]
        %v1399 = vld [vmem:[#allocation4 + $0xb38] sm:$0xff]
        %v1400 = vld [vmem:[#allocation4 + $0xb40] sm:$0xff]
        %v1401 = vld [vmem:[#allocation4 + $0xb48] sm:$0xff]
        %v1402 = vld [vmem:[#allocation4 + $0xb50] sm:$0xff]
        %v1403 = vld [vmem:[#allocation4 + $0xb58] sm:$0xff]
        %v1404 = vld [vmem:[#allocation4 + $0xb60] sm:$0xff]
        %v1405 = vld [vmem:[#allocation4 + $0xb68] sm:$0xff]
        %v1406 = vld [vmem:[#allocation4 + $0xb70] sm:$0xff]
        %v1407 = vld [vmem:[#allocation4 + $0xb78] sm:$0xff]
        %v1408 = vld [vmem:[#allocation4 + $0xb80] sm:$0xff]
        %v1409 = vld [vmem:[#allocation4 + $0xb88] sm:$0xff]
        %v1410 = vld [vmem:[#allocation4 + $0xb90] sm:$0xff]
        %v1411 = vld [vmem:[#allocation4 + $0xb98] sm:$0xff]
        %v1412 = vld [vmem:[#allocation4 + $0xba0] sm:$0xff]
        %v1413 = vld [vmem:[#allocation4 + $0xba8] sm:$0xff]
        %v1414 = vld [vmem:[#allocation4 + $0xbb0] sm:$0xff]
        %v1415 = vld [vmem:[#allocation4 + $0xbb8] sm:$0xff]
        %v1416 = vld [vmem:[#allocation4 + $0xbc0] sm:$0xff]
        %v1417 = vld [vmem:[#allocation4 + $0xbc8] sm:$0xff]
        %v1418 = vld [vmem:[#allocation4 + $0xbd0] sm:$0xff]
        %v1419 = vld [vmem:[#allocation4 + $0xbd8] sm:$0xff]
        %v1420 = vld [vmem:[#allocation4 + $0xbe0] sm:$0xff]
        %v1421 = vld [vmem:[#allocation4 + $0xbe8] sm:$0xff]
        %v1422 = vld [vmem:[#allocation4 + $0xbf0] sm:$0xff]
        %v1423 = vld [vmem:[#allocation4 + $0xbf8] sm:$0xff]
        %v1424 = vld [vmem:[#allocation4 + $0xc00] sm:$0xff]
        %v1425 = vld [vmem:[#allocation4 + $0xc08] sm:$0xff]
        %v1426 = vld [vmem:[#allocation4 + $0xc10] sm:$0xff]
        %v1427 = vld [vmem:[#allocation4 + $0xc18] sm:$0xff]
        %v1428 = vld [vmem:[#allocation4 + $0xc20] sm:$0xff]
        %v1429 = vld [vmem:[#allocation4 + $0xc28] sm:$0xff]
        %v1430 = vld [vmem:[#allocation4 + $0xc30] sm:$0xff]
        %v1431 = vld [vmem:[#allocation4 + $0xc38] sm:$0xff]
        %v1432 = vld [vmem:[#allocation4 + $0xc40] sm:$0xff]
        %v1433 = vld [vmem:[#allocation4 + $0xc48] sm:$0xff]
        %v1434 = vld [vmem:[#allocation4 + $0xc50] sm:$0xff]
        %v1435 = vld [vmem:[#allocation4 + $0xc58] sm:$0xff]
        %v1436 = vld [vmem:[#allocation4 + $0xc60] sm:$0xff]
        %v1437 = vld [vmem:[#allocation4 + $0xc68] sm:$0xff]
        %v1438 = vld [vmem:[#allocation4 + $0xc70] sm:$0xff]
        %v1439 = vld [vmem:[#allocation4 + $0xc78] sm:$0xff]
        %v1440 = vld [vmem:[#allocation4 + $0xc80] sm:$0xff]
        %v1441 = vld [vmem:[#allocation4 + $0xc88] sm:$0xff]
        %v1442 = vld [vmem:[#allocation4 + $0xc90] sm:$0xff]
        %v1443 = vld [vmem:[#allocation4 + $0xc98] sm:$0xff]
        %v1444 = vld [vmem:[#allocation4 + $0xca0] sm:$0xff]
        %v1445 = vld [vmem:[#allocation4 + $0xca8] sm:$0xff]
        %v1446 = vld [vmem:[#allocation4 + $0xcb0] sm:$0xff]
        %v1447 = vld [vmem:[#allocation4 + $0xcb8] sm:$0xff]
        %v1448 = vld [vmem:[#allocation4 + $0xcc0] sm:$0xff]
        %v1449 = vld [vmem:[#allocation4 + $0xcc8] sm:$0xff]
        %v1450 = vld [vmem:[#allocation4 + $0xcd0] sm:$0xff]
        %v1451 = vld [vmem:[#allocation4 + $0xcd8] sm:$0xff]
        %v1452 = vld [vmem:[#allocation4 + $0xce0] sm:$0xff]
        %v1453 = vld [vmem:[#allocation4 + $0xce8] sm:$0xff]
        %v1454 = vld [vmem:[#allocation4 + $0xcf0] sm:$0xff]
        %v1455 = vld [vmem:[#allocation4 + $0xcf8] sm:$0xff]
        %v1456 = vld [vmem:[#allocation4 + $0xd00] sm:$0xff]
        %v1457 = vld [vmem:[#allocation4 + $0xd08] sm:$0xff]
        %v1458 = vld [vmem:[#allocation4 + $0xd10] sm:$0xff]
        %v1459 = vld [vmem:[#allocation4 + $0xd18] sm:$0xff]
        %v1460 = vld [vmem:[#allocation4 + $0xd20] sm:$0xff]
        %v1461 = vld [vmem:[#allocation4 + $0xd28] sm:$0xff]
        %v1462 = vld [vmem:[#allocation4 + $0xd30] sm:$0xff]
        %v1463 = vld [vmem:[#allocation4 + $0xd38] sm:$0xff]
        %v1464 = vld [vmem:[#allocation4 + $0xd40] sm:$0xff]
        %v1465 = vld [vmem:[#allocation4 + $0xd48] sm:$0xff]
        %v1466 = vld [vmem:[#allocation4 + $0xd50] sm:$0xff]
        %v1467 = vld [vmem:[#allocation4 + $0xd58] sm:$0xff]
        %v1468 = vld [vmem:[#allocation4 + $0xd60] sm:$0xff]
        %v1469 = vld [vmem:[#allocation4 + $0xd68] sm:$0xff]
        %v1470 = vld [vmem:[#allocation4 + $0xd70] sm:$0xff]
        %v1471 = vld [vmem:[#allocation4 + $0xd78] sm:$0xff]
        %v1472 = vld [vmem:[#allocation4 + $0xd80] sm:$0xff]
        %v1473 = vld [vmem:[#allocation4 + $0xd88] sm:$0xff]
        %v1474 = vld [vmem:[#allocation4 + $0xd90] sm:$0xff]
        %v1475 = vld [vmem:[#allocation4 + $0xd98] sm:$0xff]
        %v1476 = vld [vmem:[#allocation4 + $0xda0] sm:$0xff]
        %v1477 = vld [vmem:[#allocation4 + $0xda8] sm:$0xff]
        %v1478 = vld [vmem:[#allocation4 + $0xdb0] sm:$0xff]
        %v1479 = vld [vmem:[#allocation4 + $0xdb8] sm:$0xff]
        %v1480 = vld [vmem:[#allocation4 + $0xdc0] sm:$0xff]
        %v1481 = vld [vmem:[#allocation4 + $0xdc8] sm:$0xff]
        %v1482 = vld [vmem:[#allocation4 + $0xdd0] sm:$0xff]
        %v1483 = vld [vmem:[#allocation4 + $0xdd8] sm:$0xff]
        %v1484 = vld [vmem:[#allocation4 + $0xde0] sm:$0xff]
        %v1485 = vld [vmem:[#allocation4 + $0xde8] sm:$0xff]
        %v1486 = vld [vmem:[#allocation4 + $0xdf0] sm:$0xff]
        %v1487 = vld [vmem:[#allocation4 + $0xdf8] sm:$0xff]
        %v1488 = vld [vmem:[#allocation4 + $0xe00] sm:$0xff]
        %v1489 = vld [vmem:[#allocation4 + $0xe08] sm:$0xff]
        %v1490 = vld [vmem:[#allocation4 + $0xe10] sm:$0xff]
        %v1491 = vld [vmem:[#allocation4 + $0xe18] sm:$0xff]
        %v1492 = vld [vmem:[#allocation4 + $0xe20] sm:$0xff]
        %v1493 = vld [vmem:[#allocation4 + $0xe28] sm:$0xff]
        %v1494 = vld [vmem:[#allocation4 + $0xe30] sm:$0xff]
        %v1495 = vld [vmem:[#allocation4 + $0xe38] sm:$0xff]
        %v1496 = vld [vmem:[#allocation4 + $0xe40] sm:$0xff]
        %v1497 = vld [vmem:[#allocation4 + $0xe48] sm:$0xff]
        %v1498 = vld [vmem:[#allocation4 + $0xe50] sm:$0xff]
        %v1499 = vld [vmem:[#allocation4 + $0xe58] sm:$0xff]
        %v1500 = vld [vmem:[#allocation4 + $0xe60] sm:$0xff]
        %v1501 = vld [vmem:[#allocation4 + $0xe68] sm:$0xff]
        %v1502 = vld [vmem:[#allocation4 + $0xe70] sm:$0xff]
        %v1503 = vld [vmem:[#allocation4 + $0xe78] sm:$0xff]
        %v1504 = vld [vmem:[#allocation4 + $0xe80] sm:$0xff]
        %v1505 = vld [vmem:[#allocation4 + $0xe88] sm:$0xff]
        %v1506 = vld [vmem:[#allocation4 + $0xe90] sm:$0xff]
        %v1507 = vld [vmem:[#allocation4 + $0xe98] sm:$0xff]
        %v1508 = vld [vmem:[#allocation4 + $0xea0] sm:$0xff]
        %v1509 = vld [vmem:[#allocation4 + $0xea8] sm:$0xff]
        %v1510 = vld [vmem:[#allocation4 + $0xeb0] sm:$0xff]
        %v1511 = vld [vmem:[#allocation4 + $0xeb8] sm:$0xff]
        %v1512 = vld [vmem:[#allocation4 + $0xec0] sm:$0xff]
        %v1513 = vld [vmem:[#allocation4 + $0xec8] sm:$0xff]
        %v1514 = vld [vmem:[#allocation4 + $0xed0] sm:$0xff]
        %v1515 = vld [vmem:[#allocation4 + $0xed8] sm:$0xff]
        %v1516 = vld [vmem:[#allocation4 + $0xee0] sm:$0xff]
        %v1517 = vld [vmem:[#allocation4 + $0xee8] sm:$0xff]
        %v1518 = vld [vmem:[#allocation4 + $0xef0] sm:$0xff]
        %v1519 = vld [vmem:[#allocation4 + $0xef8] sm:$0xff]
        %v1520 = vld [vmem:[#allocation4 + $0xf00] sm:$0xff]
        %v1521 = vld [vmem:[#allocation4 + $0xf08] sm:$0xff]
        %v1522 = vld [vmem:[#allocation4 + $0xf10] sm:$0xff]
        %v1523 = vld [vmem:[#allocation4 + $0xf18] sm:$0xff]
        %v1524 = vld [vmem:[#allocation4 + $0xf20] sm:$0xff]
        %v1525 = vld [vmem:[#allocation4 + $0xf28] sm:$0xff]
        %v1526 = vld [vmem:[#allocation4 + $0xf30] sm:$0xff]
        %v1527 = vld [vmem:[#allocation4 + $0xf38] sm:$0xff]
        %v1528 = vld [vmem:[#allocation4 + $0xf40] sm:$0xff]
        %v1529 = vld [vmem:[#allocation4 + $0xf48] sm:$0xff]
        %v1530 = vld [vmem:[#allocation4 + $0xf50] sm:$0xff]
        %v1531 = vld [vmem:[#allocation4 + $0xf58] sm:$0xff]
        %v1532 = vld [vmem:[#allocation4 + $0xf60] sm:$0xff]
        %v1533 = vld [vmem:[#allocation4 + $0xf68] sm:$0xff]
        %v1534 = vld [vmem:[#allocation4 + $0xf70] sm:$0xff]
        %v1535 = vld [vmem:[#allocation4 + $0xf78] sm:$0xff]
        %v1536 = vld [vmem:[#allocation4 + $0xf80] sm:$0xff]
        %v1537 = vld [vmem:[#allocation4 + $0xf88] sm:$0xff]
        %v1538 = vld [vmem:[#allocation4 + $0xf90] sm:$0xff]
        %v1539 = vld [vmem:[#allocation4 + $0xf98] sm:$0xff]
        %v1540 = vld [vmem:[#allocation4 + $0xfa0] sm:$0xff]
        %v1541 = vld [vmem:[#allocation4 + $0xfa8] sm:$0xff]
        %v1542 = vld [vmem:[#allocation4 + $0xfb0] sm:$0xff]
        %v1543 = vld [vmem:[#allocation4 + $0xfb8] sm:$0xff]
        %v1544 = vld [vmem:[#allocation4 + $0xfc0] sm:$0xff]
        %v1545 = vld [vmem:[#allocation4 + $0xfc8] sm:$0xff]
        %v1546 = vld [vmem:[#allocation4 + $0xfd0] sm:$0xff]
        %v1547 = vld [vmem:[#allocation4 + $0xfd8] sm:$0xff]
        %v1548 = vld [vmem:[#allocation4 + $0xfe0] sm:$0xff]
        %v1549 = vld [vmem:[#allocation4 + $0xfe8] sm:$0xff]
        %v1550 = vld [vmem:[#allocation4 + $0xff0] sm:$0xff]
        %v1551 = vld [vmem:[#allocation4 + $0xff8] sm:$0xff]
        %v1552 = vld [vmem:[#allocation4 + $0x1000] sm:$0xff]
        %v1553 = vld [vmem:[#allocation4 + $0x1008] sm:$0xff]
        %v1554 = vld [vmem:[#allocation4 + $0x1010] sm:$0xff]
        %v1555 = vld [vmem:[#allocation4 + $0x1018] sm:$0xff]
        %v1556 = vld [vmem:[#allocation4 + $0x1020] sm:$0xff]
        %v1557 = vld [vmem:[#allocation4 + $0x1028] sm:$0xff]
        %v1558 = vld [vmem:[#allocation4 + $0x1030] sm:$0xff]
        %v1559 = vld [vmem:[#allocation4 + $0x1038] sm:$0xff]
        %v1560 = vld [vmem:[#allocation4 + $0x1040] sm:$0xff]
        %v1561 = vld [vmem:[#allocation4 + $0x1048] sm:$0xff]
        %v1562 = vld [vmem:[#allocation4 + $0x1050] sm:$0xff]
        %v1563 = vld [vmem:[#allocation4 + $0x1058] sm:$0xff]
        %v1564 = vld [vmem:[#allocation4 + $0x1060] sm:$0xff]
        %v1565 = vld [vmem:[#allocation4 + $0x1068] sm:$0xff]
        %v1566 = vld [vmem:[#allocation4 + $0x1070] sm:$0xff]
        %v1567 = vld [vmem:[#allocation4 + $0x1078] sm:$0xff]
        %v1568 = vld [vmem:[#allocation4 + $0x1080] sm:$0xff]
        %v1569 = vld [vmem:[#allocation4 + $0x1088] sm:$0xff]
        %v1570 = vld [vmem:[#allocation4 + $0x1090] sm:$0xff]
        %v1571 = vld [vmem:[#allocation4 + $0x1098] sm:$0xff]
        %v1572 = vld [vmem:[#allocation4 + $0x10a0] sm:$0xff]
        %v1573 = vld [vmem:[#allocation4 + $0x10a8] sm:$0xff]
        %v1574 = vld [vmem:[#allocation4 + $0x10b0] sm:$0xff]
        %v1575 = vld [vmem:[#allocation4 + $0x10b8] sm:$0xff]
        %v1576 = vld [vmem:[#allocation4 + $0x10c0] sm:$0xff]
        %v1577 = vld [vmem:[#allocation4 + $0x10c8] sm:$0xff]
        %v1578 = vld [vmem:[#allocation4 + $0x10d0] sm:$0xff]
        %v1579 = vld [vmem:[#allocation4 + $0x10d8] sm:$0xff]
        %v1580 = vld [vmem:[#allocation4 + $0x10e0] sm:$0xff]
        %v1581 = vld [vmem:[#allocation4 + $0x10e8] sm:$0xff]
        %v1582 = vld [vmem:[#allocation4 + $0x10f0] sm:$0xff]
        %v1583 = vld [vmem:[#allocation4 + $0x10f8] sm:$0xff]
        %v1584 = vld [vmem:[#allocation4 + $0x1100] sm:$0xff]
        %v1585 = vld [vmem:[#allocation4 + $0x1108] sm:$0xff]
        %v1586 = vld [vmem:[#allocation4 + $0x1110] sm:$0xff]
        %v1587 = vld [vmem:[#allocation4 + $0x1118] sm:$0xff]
        %v1588 = vld [vmem:[#allocation4 + $0x1120] sm:$0xff]
        %v1589 = vld [vmem:[#allocation4 + $0x1128] sm:$0xff]
        %v1590 = vld [vmem:[#allocation4 + $0x1130] sm:$0xff]
        %v1591 = vld [vmem:[#allocation4 + $0x1138] sm:$0xff]
        %v1592 = vld [vmem:[#allocation4 + $0x1140] sm:$0xff]
        %v1593 = vld [vmem:[#allocation4 + $0x1148] sm:$0xff]
        %v1594 = vld [vmem:[#allocation4 + $0x1150] sm:$0xff]
        %v1595 = vld [vmem:[#allocation4 + $0x1158] sm:$0xff]
        %v1596 = vld [vmem:[#allocation4 + $0x1160] sm:$0xff]
        %v1597 = vld [vmem:[#allocation4 + $0x1168] sm:$0xff]
        %v1598 = vld [vmem:[#allocation4 + $0x1170] sm:$0xff]
        %v1599 = vld [vmem:[#allocation4 + $0x1178] sm:$0xff]
        %v1600 = vld [vmem:[#allocation4 + $0x1180] sm:$0xff]
        %v1601 = vld [vmem:[#allocation4 + $0x1188] sm:$0xff]
        %v1602 = vld [vmem:[#allocation4 + $0x1190] sm:$0xff]
        %v1603 = vld [vmem:[#allocation4 + $0x1198] sm:$0xff]
        %v1604 = vld [vmem:[#allocation4 + $0x11a0] sm:$0xff]
        %v1605 = vld [vmem:[#allocation4 + $0x11a8] sm:$0xff]
        %v1606 = vld [vmem:[#allocation4 + $0x11b0] sm:$0xff]
        %v1607 = vld [vmem:[#allocation4 + $0x11b8] sm:$0xff]
        %v1608 = vld [vmem:[#allocation4 + $0x11c0] sm:$0xff]
        %v1609 = vld [vmem:[#allocation4 + $0x11c8] sm:$0xff]
        %v1610 = vld [vmem:[#allocation4 + $0x11d0] sm:$0xff]
        %v1611 = vld [vmem:[#allocation4 + $0x11d8] sm:$0xff]
        %v1612 = vld [vmem:[#allocation4 + $0x11e0] sm:$0xff]
        %v1613 = vld [vmem:[#allocation4 + $0x11e8] sm:$0xff]
        %v1614 = vld [vmem:[#allocation4 + $0x11f0] sm:$0xff]
        %v1615 = vld [vmem:[#allocation4 + $0x11f8] sm:$0xff]
        %v1616 = vld [vmem:[#allocation4 + $0x1200] sm:$0xff]
        %v1617 = vld [vmem:[#allocation4 + $0x1208] sm:$0xff]
        %v1618 = vld [vmem:[#allocation4 + $0x1210] sm:$0xff]
        %v1619 = vld [vmem:[#allocation4 + $0x1218] sm:$0xff]
        %v1620 = vld [vmem:[#allocation4 + $0x1220] sm:$0xff]
        %v1621 = vld [vmem:[#allocation4 + $0x1228] sm:$0xff]
        %v1622 = vld [vmem:[#allocation4 + $0x1230] sm:$0xff]
        %v1623 = vld [vmem:[#allocation4 + $0x1238] sm:$0xff]
        %v1624 = vld [vmem:[#allocation4 + $0x1240] sm:$0xff]
        %v1625 = vld [vmem:[#allocation4 + $0x1248] sm:$0xff]
        %v1626 = vld [vmem:[#allocation4 + $0x1250] sm:$0xff]
        %v1627 = vld [vmem:[#allocation4 + $0x1258] sm:$0xff]
        %v1628 = vld [vmem:[#allocation4 + $0x1260] sm:$0xff]
        %v1629 = vld [vmem:[#allocation4 + $0x1268] sm:$0xff]
        %v1630 = vld [vmem:[#allocation4 + $0x1270] sm:$0xff]
        %v1631 = vld [vmem:[#allocation4 + $0x1278] sm:$0xff]
        %v1632 = vld [vmem:[#allocation4 + $0x1280] sm:$0xff]
        %v1633 = vld [vmem:[#allocation4 + $0x1288] sm:$0xff]
        %v1634 = vld [vmem:[#allocation4 + $0x1290] sm:$0xff]
        %v1635 = vld [vmem:[#allocation4 + $0x1298] sm:$0xff]
        %v1636 = vld [vmem:[#allocation4 + $0x12a0] sm:$0xff]
        %v1637 = vld [vmem:[#allocation4 + $0x12a8] sm:$0xff]
        %v1638 = vld [vmem:[#allocation4 + $0x12b0] sm:$0xff]
        %v1639 = vld [vmem:[#allocation4 + $0x12b8] sm:$0xff]
        %v1640 = vld [vmem:[#allocation4 + $0x12c0] sm:$0xff]
        %v1641 = vld [vmem:[#allocation4 + $0x12c8] sm:$0xff]
        %v1642 = vld [vmem:[#allocation4 + $0x12d0] sm:$0xff]
        %v1643 = vld [vmem:[#allocation4 + $0x12d8] sm:$0xff]
        %v1644 = vld [vmem:[#allocation4 + $0x12e0] sm:$0xff]
        %v1645 = vld [vmem:[#allocation4 + $0x12e8] sm:$0xff]
        %v1646 = vld [vmem:[#allocation4 + $0x12f0] sm:$0xff]
        %v1647 = vld [vmem:[#allocation4 + $0x12f8] sm:$0xff]
        %v1648 = vld [vmem:[#allocation4 + $0x1300] sm:$0xff]
        %v1649 = vld [vmem:[#allocation4 + $0x1308] sm:$0xff]
        %v1650 = vld [vmem:[#allocation4 + $0x1310] sm:$0xff]
        %v1651 = vld [vmem:[#allocation4 + $0x1318] sm:$0xff]
        %v1652 = vld [vmem:[#allocation4 + $0x1320] sm:$0xff]
        %v1653 = vld [vmem:[#allocation4 + $0x1328] sm:$0xff]
        %v1654 = vld [vmem:[#allocation4 + $0x1330] sm:$0xff]
        %v1655 = vld [vmem:[#allocation4 + $0x1338] sm:$0xff]
        %v1656 = vld [vmem:[#allocation4 + $0x1340] sm:$0xff]
        %v1657 = vld [vmem:[#allocation4 + $0x1348] sm:$0xff]
        %v1658 = vld [vmem:[#allocation4 + $0x1350] sm:$0xff]
        %v1659 = vld [vmem:[#allocation4 + $0x1358] sm:$0xff]
        %v1660 = vld [vmem:[#allocation4 + $0x1360] sm:$0xff]
        %v1661 = vld [vmem:[#allocation4 + $0x1368] sm:$0xff]
        %v1662 = vld [vmem:[#allocation4 + $0x1370] sm:$0xff]
        %v1663 = vld [vmem:[#allocation4 + $0x1378] sm:$0xff]
        %v1664 = vld [vmem:[#allocation4 + $0x1380] sm:$0xff]
        %v1665 = vld [vmem:[#allocation4 + $0x1388] sm:$0xff]
        %v1666 = vld [vmem:[#allocation4 + $0x1390] sm:$0xff]
        %v1667 = vld [vmem:[#allocation4 + $0x1398] sm:$0xff]
        %v1668 = vld [vmem:[#allocation4 + $0x13a0] sm:$0xff]
        %v1669 = vld [vmem:[#allocation4 + $0x13a8] sm:$0xff]
        %v1670 = vld [vmem:[#allocation4 + $0x13b0] sm:$0xff]
        %v1671 = vld [vmem:[#allocation4 + $0x13b8] sm:$0xff]
        %v1672 = vld [vmem:[#allocation4 + $0x13c0] sm:$0xff]
        %v1673 = vld [vmem:[#allocation4 + $0x13c8] sm:$0xff]
        %v1674 = vld [vmem:[#allocation4 + $0x13d0] sm:$0xff]
        %v1675 = vld [vmem:[#allocation4 + $0x13d8] sm:$0xff]
        %v1676 = vld [vmem:[#allocation4 + $0x13e0] sm:$0xff]
        %v1677 = vld [vmem:[#allocation4 + $0x13e8] sm:$0xff]
        %v1678 = vld [vmem:[#allocation4 + $0x13f0] sm:$0xff]
        %v1679 = vld [vmem:[#allocation4 + $0x13f8] sm:$0xff]
        %v1680 = vld [vmem:[#allocation4 + $0x1400] sm:$0xff]
        %v1681 = vld [vmem:[#allocation4 + $0x1408] sm:$0xff]
        %v1682 = vld [vmem:[#allocation4 + $0x1410] sm:$0xff]
        %v1683 = vld [vmem:[#allocation4 + $0x1418] sm:$0xff]
        %v1684 = vld [vmem:[#allocation4 + $0x1420] sm:$0xff]
        %v1685 = vld [vmem:[#allocation4 + $0x1428] sm:$0xff]
        %v1686 = vld [vmem:[#allocation4 + $0x1430] sm:$0xff]
        %v1687 = vld [vmem:[#allocation4 + $0x1438] sm:$0xff]
        %v1688 = vld [vmem:[#allocation4 + $0x1440] sm:$0xff]
        %v1689 = vld [vmem:[#allocation4 + $0x1448] sm:$0xff]
        %v1690 = vld [vmem:[#allocation4 + $0x1450] sm:$0xff]
        %v1691 = vld [vmem:[#allocation4 + $0x1458] sm:$0xff]
        %v1692 = vld [vmem:[#allocation4 + $0x1460] sm:$0xff]
        %v1693 = vld [vmem:[#allocation4 + $0x1468] sm:$0xff]
        %v1694 = vld [vmem:[#allocation4 + $0x1470] sm:$0xff]
        %v1695 = vld [vmem:[#allocation4 + $0x1478] sm:$0xff]
        %v1696 = vld [vmem:[#allocation4 + $0x1480] sm:$0xff]
        %v1697 = vld [vmem:[#allocation4 + $0x1488] sm:$0xff]
        %v1698 = vld [vmem:[#allocation4 + $0x1490] sm:$0xff]
        %v1699 = vld [vmem:[#allocation4 + $0x1498] sm:$0xff]
        %v1700 = vld [vmem:[#allocation4 + $0x14a0] sm:$0xff]
        %v1701 = vld [vmem:[#allocation4 + $0x14a8] sm:$0xff]
        %v1702 = vld [vmem:[#allocation4 + $0x14b0] sm:$0xff]
        %v1703 = vld [vmem:[#allocation4 + $0x14b8] sm:$0xff]
        %v1704 = vld [vmem:[#allocation4 + $0x14c0] sm:$0xff]
        %v1705 = vld [vmem:[#allocation4 + $0x14c8] sm:$0xff]
        %v1706 = vld [vmem:[#allocation4 + $0x14d0] sm:$0xff]
        %v1707 = vld [vmem:[#allocation4 + $0x14d8] sm:$0xff]
        %v1708 = vld [vmem:[#allocation4 + $0x14e0] sm:$0xff]
        %v1709 = vld [vmem:[#allocation4 + $0x14e8] sm:$0xff]
        %v1710 = vld [vmem:[#allocation4 + $0x14f0] sm:$0xff]
        %v1711 = vld [vmem:[#allocation4 + $0x14f8] sm:$0xff]
        %v1712 = vld [vmem:[#allocation4 + $0x1500] sm:$0xff]
        %v1713 = vld [vmem:[#allocation4 + $0x1508] sm:$0xff]
        %v1714 = vld [vmem:[#allocation4 + $0x1510] sm:$0xff]
        %v1715 = vld [vmem:[#allocation4 + $0x1518] sm:$0xff]
        %v1716 = vld [vmem:[#allocation4 + $0x1520] sm:$0xff]
        %v1717 = vld [vmem:[#allocation4 + $0x1528] sm:$0xff]
        %v1718 = vld [vmem:[#allocation4 + $0x1530] sm:$0xff]
        %v1719 = vld [vmem:[#allocation4 + $0x1538] sm:$0xff]
        %v1720 = vld [vmem:[#allocation4 + $0x1540] sm:$0xff]
        %v1721 = vld [vmem:[#allocation4 + $0x1548] sm:$0xff]
        %v1722 = vld [vmem:[#allocation4 + $0x1550] sm:$0xff]
        %v1723 = vld [vmem:[#allocation4 + $0x1558] sm:$0xff]
        %v1724 = vld [vmem:[#allocation4 + $0x1560] sm:$0xff]
        %v1725 = vld [vmem:[#allocation4 + $0x1568] sm:$0xff]
        %v1726 = vld [vmem:[#allocation4 + $0x1570] sm:$0xff]
        %v1727 = vld [vmem:[#allocation4 + $0x1578] sm:$0xff]
        %v1728 = vld [vmem:[#allocation4 + $0x1580] sm:$0xff]
        %v1729 = vld [vmem:[#allocation4 + $0x1588] sm:$0xff]
        %v1730 = vld [vmem:[#allocation4 + $0x1590] sm:$0xff]
        %v1731 = vld [vmem:[#allocation4 + $0x1598] sm:$0xff]
        %v1732 = vld [vmem:[#allocation4 + $0x15a0] sm:$0xff]
        %v1733 = vld [vmem:[#allocation4 + $0x15a8] sm:$0xff]
        %v1734 = vld [vmem:[#allocation4 + $0x15b0] sm:$0xff]
        %v1735 = vld [vmem:[#allocation4 + $0x15b8] sm:$0xff]
        %v1736 = vld [vmem:[#allocation4 + $0x15c0] sm:$0xff]
        %v1737 = vld [vmem:[#allocation4 + $0x15c8] sm:$0xff]
        %v1738 = vld [vmem:[#allocation4 + $0x15d0] sm:$0xff]
        %v1739 = vld [vmem:[#allocation4 + $0x15d8] sm:$0xff]
        %v1740 = vld [vmem:[#allocation4 + $0x15e0] sm:$0xff]
        %v1741 = vld [vmem:[#allocation4 + $0x15e8] sm:$0xff]
        %v1742 = vld [vmem:[#allocation4 + $0x15f0] sm:$0xff]
        %v1743 = vld [vmem:[#allocation4 + $0x15f8] sm:$0xff]
        %v1744 = vld [vmem:[#allocation4 + $0x1600] sm:$0xff]
        %v1745 = vld [vmem:[#allocation4 + $0x1608] sm:$0xff]
        %v1746 = vld [vmem:[#allocation4 + $0x1610] sm:$0xff]
        %v1747 = vld [vmem:[#allocation4 + $0x1618] sm:$0xff]
        %v1748 = vld [vmem:[#allocation4 + $0x1620] sm:$0xff]
        %v1749 = vld [vmem:[#allocation4 + $0x1628] sm:$0xff]
        %v1750 = vld [vmem:[#allocation4 + $0x1630] sm:$0xff]
        %v1751 = vld [vmem:[#allocation4 + $0x1638] sm:$0xff]
        %v1752 = vld [vmem:[#allocation4 + $0x1640] sm:$0xff]
        %v1753 = vld [vmem:[#allocation4 + $0x1648] sm:$0xff]
        %v1754 = vld [vmem:[#allocation4 + $0x1650] sm:$0xff]
        %v1755 = vld [vmem:[#allocation4 + $0x1658] sm:$0xff]
        %v1756 = vld [vmem:[#allocation4 + $0x1660] sm:$0xff]
        %v1757 = vld [vmem:[#allocation4 + $0x1668] sm:$0xff]
        %v1758 = vld [vmem:[#allocation4 + $0x1670] sm:$0xff]
        %v1759 = vld [vmem:[#allocation4 + $0x1678] sm:$0xff]
        %v1760 = vld [vmem:[#allocation4 + $0x1680] sm:$0xff]
        %v1761 = vld [vmem:[#allocation4 + $0x1688] sm:$0xff]
        %v1762 = vld [vmem:[#allocation4 + $0x1690] sm:$0xff]
        %v1763 = vld [vmem:[#allocation4 + $0x1698] sm:$0xff]
        %v1764 = vld [vmem:[#allocation4 + $0x16a0] sm:$0xff]
        %v1765 = vld [vmem:[#allocation4 + $0x16a8] sm:$0xff]
        %v1766 = vld [vmem:[#allocation4 + $0x16b0] sm:$0xff]
        %v1767 = vld [vmem:[#allocation4 + $0x16b8] sm:$0xff]
        %v1768 = vld [vmem:[#allocation4 + $0x16c0] sm:$0xff]
        %v1769 = vld [vmem:[#allocation4 + $0x16c8] sm:$0xff]
        %v1770 = vld [vmem:[#allocation4 + $0x16d0] sm:$0xff]
        %v1771 = vld [vmem:[#allocation4 + $0x16d8] sm:$0xff]
        %v1772 = vld [vmem:[#allocation4 + $0x16e0] sm:$0xff]
        %v1773 = vld [vmem:[#allocation4 + $0x16e8] sm:$0xff]
        %v1774 = vld [vmem:[#allocation4 + $0x16f0] sm:$0xff]
        %v1775 = vld [vmem:[#allocation4 + $0x16f8] sm:$0xff]
        %v1776 = vld [vmem:[#allocation4 + $0x1700] sm:$0xff]
        %v1777 = vld [vmem:[#allocation4 + $0x1708] sm:$0xff]
        %v1778 = vld [vmem:[#allocation4 + $0x1710] sm:$0xff]
        %v1779 = vld [vmem:[#allocation4 + $0x1718] sm:$0xff]
        %v1780 = vld [vmem:[#allocation4 + $0x1720] sm:$0xff]
        %v1781 = vld [vmem:[#allocation4 + $0x1728] sm:$0xff]
        %v1782 = vld [vmem:[#allocation4 + $0x1730] sm:$0xff]
        %v1783 = vld [vmem:[#allocation4 + $0x1738] sm:$0xff]
        %v1784 = vld [vmem:[#allocation4 + $0x1740] sm:$0xff]
        %v1785 = vld [vmem:[#allocation4 + $0x1748] sm:$0xff]
        %v1786 = vld [vmem:[#allocation4 + $0x1750] sm:$0xff]
        %v1787 = vld [vmem:[#allocation4 + $0x1758] sm:$0xff]
        %v1788 = vld [vmem:[#allocation4 + $0x1760] sm:$0xff]
        %v1789 = vld [vmem:[#allocation4 + $0x1768] sm:$0xff]
        %v1790 = vld [vmem:[#allocation4 + $0x1770] sm:$0xff]
        %v1791 = vld [vmem:[#allocation4 + $0x1778] sm:$0xff]
        %v1792 = vld [vmem:[#allocation4 + $0x1780] sm:$0xff]
        %v1793 = vld [vmem:[#allocation4 + $0x1788] sm:$0xff]
        %v1794 = vld [vmem:[#allocation4 + $0x1790] sm:$0xff]
        %v1795 = vld [vmem:[#allocation4 + $0x1798] sm:$0xff]
        %v1796 = vld [vmem:[#allocation4 + $0x17a0] sm:$0xff]
        %v1797 = vld [vmem:[#allocation4 + $0x17a8] sm:$0xff]
        %v1798 = vld [vmem:[#allocation4 + $0x17b0] sm:$0xff]
        %v1799 = vld [vmem:[#allocation4 + $0x17b8] sm:$0xff]
        %v1800 = vld [vmem:[#allocation4 + $0x17c0] sm:$0xff]
        %v1801 = vld [vmem:[#allocation4 + $0x17c8] sm:$0xff]
        %v1802 = vld [vmem:[#allocation4 + $0x17d0] sm:$0xff]
        %v1803 = vld [vmem:[#allocation4 + $0x17d8] sm:$0xff]
        %v1804 = vld [vmem:[#allocation4 + $0x17e0] sm:$0xff]
        %v1805 = vld [vmem:[#allocation4 + $0x17e8] sm:$0xff]
        %v1806 = vld [vmem:[#allocation4 + $0x17f0] sm:$0xff]
        %v1807 = vld [vmem:[#allocation4 + $0x17f8] sm:$0xff]
        %v1808 = vld [vmem:[#allocation4 + $0x1800] sm:$0xff]
        %v1809 = vld [vmem:[#allocation4 + $0x1808] sm:$0xff]
        %v1810 = vld [vmem:[#allocation4 + $0x1810] sm:$0xff]
        %v1811 = vld [vmem:[#allocation4 + $0x1818] sm:$0xff]
        %v1812 = vld [vmem:[#allocation4 + $0x1820] sm:$0xff]
        %v1813 = vld [vmem:[#allocation4 + $0x1828] sm:$0xff]
        %v1814 = vld [vmem:[#allocation4 + $0x1830] sm:$0xff]
        %v1815 = vld [vmem:[#allocation4 + $0x1838] sm:$0xff]
        %v1816 = vld [vmem:[#allocation4 + $0x1840] sm:$0xff]
        %v1817 = vld [vmem:[#allocation4 + $0x1848] sm:$0xff]
        %v1818 = vld [vmem:[#allocation4 + $0x1850] sm:$0xff]
        %v1819 = vld [vmem:[#allocation4 + $0x1858] sm:$0xff]
        %v1820 = vld [vmem:[#allocation4 + $0x1860] sm:$0xff]
        %v1821 = vld [vmem:[#allocation4 + $0x1868] sm:$0xff]
        %v1822 = vld [vmem:[#allocation4 + $0x1870] sm:$0xff]
        %v1823 = vld [vmem:[#allocation4 + $0x1878] sm:$0xff]
        %v1824 = vld [vmem:[#allocation4 + $0x1880] sm:$0xff]
        %v1825 = vld [vmem:[#allocation4 + $0x1888] sm:$0xff]
        %v1826 = vld [vmem:[#allocation4 + $0x1890] sm:$0xff]
        %v1827 = vld [vmem:[#allocation4 + $0x1898] sm:$0xff]
        %v1828 = vld [vmem:[#allocation4 + $0x18a0] sm:$0xff]
        %v1829 = vld [vmem:[#allocation4 + $0x18a8] sm:$0xff]
        %v1830 = vld [vmem:[#allocation4 + $0x18b0] sm:$0xff]
        %v1831 = vld [vmem:[#allocation4 + $0x18b8] sm:$0xff]
        %v1832 = vld [vmem:[#allocation4 + $0x18c0] sm:$0xff]
        %v1833 = vld [vmem:[#allocation4 + $0x18c8] sm:$0xff]
        %v1834 = vld [vmem:[#allocation4 + $0x18d0] sm:$0xff]
        %v1835 = vld [vmem:[#allocation4 + $0x18d8] sm:$0xff]
        %v1836 = vld [vmem:[#allocation4 + $0x18e0] sm:$0xff]
        %v1837 = vld [vmem:[#allocation4 + $0x18e8] sm:$0xff]
        %v1838 = vld [vmem:[#allocation4 + $0x18f0] sm:$0xff]
        %v1839 = vld [vmem:[#allocation4 + $0x18f8] sm:$0xff]
        %v1840 = vld [vmem:[#allocation4 + $0x1900] sm:$0xff]
        %v1841 = vld [vmem:[#allocation4 + $0x1908] sm:$0xff]
        %v1842 = vld [vmem:[#allocation4 + $0x1910] sm:$0xff]
        %v1843 = vld [vmem:[#allocation4 + $0x1918] sm:$0xff]
        %v1844 = vld [vmem:[#allocation4 + $0x1920] sm:$0xff]
        %v1845 = vld [vmem:[#allocation4 + $0x1928] sm:$0xff]
        %v1846 = vld [vmem:[#allocation4 + $0x1930] sm:$0xff]
        %v1847 = vld [vmem:[#allocation4 + $0x1938] sm:$0xff]
        %v1848 = vld [vmem:[#allocation4 + $0x1940] sm:$0xff]
        %v1849 = vld [vmem:[#allocation4 + $0x1948] sm:$0xff]
        %v1850 = vld [vmem:[#allocation4 + $0x1950] sm:$0xff]
        %v1851 = vld [vmem:[#allocation4 + $0x1958] sm:$0xff]
        %v1852 = vld [vmem:[#allocation4 + $0x1960] sm:$0xff]
        %v1853 = vld [vmem:[#allocation4 + $0x1968] sm:$0xff]
        %v1854 = vld [vmem:[#allocation4 + $0x1970] sm:$0xff]
        %v1855 = vld [vmem:[#allocation4 + $0x1978] sm:$0xff]
        %v1856 = vld [vmem:[#allocation4 + $0x1980] sm:$0xff]
        %v1857 = vld [vmem:[#allocation4 + $0x1988] sm:$0xff]
        %v1858 = vld [vmem:[#allocation4 + $0x1990] sm:$0xff]
        %v1859 = vld [vmem:[#allocation4 + $0x1998] sm:$0xff]
        %v1860 = vld [vmem:[#allocation4 + $0x19a0] sm:$0xff]
        %v1861 = vld [vmem:[#allocation4 + $0x19a8] sm:$0xff]
        %v1862 = vld [vmem:[#allocation4 + $0x19b0] sm:$0xff]
        %v1863 = vld [vmem:[#allocation4 + $0x19b8] sm:$0xff]
        %v1864 = vld [vmem:[#allocation4 + $0x19c0] sm:$0xff]
        %v1865 = vld [vmem:[#allocation4 + $0x19c8] sm:$0xff]
        %v1866 = vld [vmem:[#allocation4 + $0x19d0] sm:$0xff]
        %v1867 = vld [vmem:[#allocation4 + $0x19d8] sm:$0xff]
        %v1868 = vld [vmem:[#allocation4 + $0x19e0] sm:$0xff]
        %v1869 = vld [vmem:[#allocation4 + $0x19e8] sm:$0xff]
        %v1870 = vld [vmem:[#allocation4 + $0x19f0] sm:$0xff]
        %v1871 = vld [vmem:[#allocation4 + $0x19f8] sm:$0xff]
        %v1872 = vld [vmem:[#allocation4 + $0x1a00] sm:$0xff]
        %v1873 = vld [vmem:[#allocation4 + $0x1a08] sm:$0xff]
        %v1874 = vld [vmem:[#allocation4 + $0x1a10] sm:$0xff]
        %v1875 = vld [vmem:[#allocation4 + $0x1a18] sm:$0xff]
        %v1876 = vld [vmem:[#allocation4 + $0x1a20] sm:$0xff]
        %v1877 = vld [vmem:[#allocation4 + $0x1a28] sm:$0xff]
        %v1878 = vld [vmem:[#allocation4 + $0x1a30] sm:$0xff]
        %v1879 = vld [vmem:[#allocation4 + $0x1a38] sm:$0xff]
        %v1880 = vld [vmem:[#allocation4 + $0x1a40] sm:$0xff]
        %v1881 = vld [vmem:[#allocation4 + $0x1a48] sm:$0xff]
        %v1882 = vld [vmem:[#allocation4 + $0x1a50] sm:$0xff]
        %v1883 = vld [vmem:[#allocation4 + $0x1a58] sm:$0xff]
        %v1884 = vld [vmem:[#allocation4 + $0x1a60] sm:$0xff]
        %v1885 = vld [vmem:[#allocation4 + $0x1a68] sm:$0xff]
        %v1886 = vld [vmem:[#allocation4 + $0x1a70] sm:$0xff]
        %v1887 = vld [vmem:[#allocation4 + $0x1a78] sm:$0xff]
        %v1888 = vld [vmem:[#allocation4 + $0x1a80] sm:$0xff]
        %v1889 = vld [vmem:[#allocation4 + $0x1a88] sm:$0xff]
        %v1890 = vld [vmem:[#allocation4 + $0x1a90] sm:$0xff]
        %v1891 = vld [vmem:[#allocation4 + $0x1a98] sm:$0xff]
        %v1892 = vld [vmem:[#allocation4 + $0x1aa0] sm:$0xff]
        %v1893 = vld [vmem:[#allocation4 + $0x1aa8] sm:$0xff]
        %v1894 = vld [vmem:[#allocation4 + $0x1ab0] sm:$0xff]
        %v1895 = vld [vmem:[#allocation4 + $0x1ab8] sm:$0xff]
        %v1896 = vld [vmem:[#allocation4 + $0x1ac0] sm:$0xff]
        %v1897 = vld [vmem:[#allocation4 + $0x1ac8] sm:$0xff]
        %v1898 = vld [vmem:[#allocation4 + $0x1ad0] sm:$0xff]
        %v1899 = vld [vmem:[#allocation4 + $0x1ad8] sm:$0xff]
        %v1900 = vld [vmem:[#allocation4 + $0x1ae0] sm:$0xff]
        %v1901 = vld [vmem:[#allocation4 + $0x1ae8] sm:$0xff]
        %v1902 = vld [vmem:[#allocation4 + $0x1af0] sm:$0xff]
        %v1903 = vld [vmem:[#allocation4 + $0x1af8] sm:$0xff]
        %v1904 = vld [vmem:[#allocation4 + $0x1b00] sm:$0xff]
        %v1905 = vld [vmem:[#allocation4 + $0x1b08] sm:$0xff]
        %v1906 = vld [vmem:[#allocation4 + $0x1b10] sm:$0xff]
        %v1907 = vld [vmem:[#allocation4 + $0x1b18] sm:$0xff]
        %v1908 = vld [vmem:[#allocation4 + $0x1b20] sm:$0xff]
        %v1909 = vld [vmem:[#allocation4 + $0x1b28] sm:$0xff]
        %v1910 = vld [vmem:[#allocation4 + $0x1b30] sm:$0xff]
        %v1911 = vld [vmem:[#allocation4 + $0x1b38] sm:$0xff]
        %v1912 = vld [vmem:[#allocation4 + $0x1b40] sm:$0xff]
        %v1913 = vld [vmem:[#allocation4 + $0x1b48] sm:$0xff]
        %v1914 = vld [vmem:[#allocation4 + $0x1b50] sm:$0xff]
        %v1915 = vld [vmem:[#allocation4 + $0x1b58] sm:$0xff]
        %v1916 = vld [vmem:[#allocation4 + $0x1b60] sm:$0xff]
        %v1917 = vld [vmem:[#allocation4 + $0x1b68] sm:$0xff]
        %v1918 = vld [vmem:[#allocation4 + $0x1b70] sm:$0xff]
        %v1919 = vld [vmem:[#allocation4 + $0x1b78] sm:$0xff]
        %v1920 = vld [vmem:[#allocation4 + $0x1b80] sm:$0xff]
        %v1921 = vld [vmem:[#allocation4 + $0x1b88] sm:$0xff]
        %v1922 = vld [vmem:[#allocation4 + $0x1b90] sm:$0xff]
        %v1923 = vld [vmem:[#allocation4 + $0x1b98] sm:$0xff]
        %v1924 = vld [vmem:[#allocation4 + $0x1ba0] sm:$0xff]
        %v1925 = vld [vmem:[#allocation4 + $0x1ba8] sm:$0xff]
        %v1926 = vld [vmem:[#allocation4 + $0x1bb0] sm:$0xff]
        %v1927 = vld [vmem:[#allocation4 + $0x1bb8] sm:$0xff]
        %v1928 = vld [vmem:[#allocation4 + $0x1bc0] sm:$0xff]
        %v1929 = vld [vmem:[#allocation4 + $0x1bc8] sm:$0xff]
        %v1930 = vld [vmem:[#allocation4 + $0x1bd0] sm:$0xff]
        %v1931 = vld [vmem:[#allocation4 + $0x1bd8] sm:$0xff]
        %v1932 = vld [vmem:[#allocation4 + $0x1be0] sm:$0xff]
        %v1933 = vld [vmem:[#allocation4 + $0x1be8] sm:$0xff]
        %v1934 = vld [vmem:[#allocation4 + $0x1bf0] sm:$0xff]
        %v1935 = vld [vmem:[#allocation4 + $0x1bf8] sm:$0xff]
        %v1936 = vld [vmem:[#allocation4 + $0x1c00] sm:$0xff]
        %v1937 = vld [vmem:[#allocation4 + $0x1c08] sm:$0xff]
        %v1938 = vld [vmem:[#allocation4 + $0x1c10] sm:$0xff]
        %v1939 = vld [vmem:[#allocation4 + $0x1c18] sm:$0xff]
        %v1940 = vld [vmem:[#allocation4 + $0x1c20] sm:$0xff]
        %v1941 = vld [vmem:[#allocation4 + $0x1c28] sm:$0xff]
        %v1942 = vld [vmem:[#allocation4 + $0x1c30] sm:$0xff]
        %v1943 = vld [vmem:[#allocation4 + $0x1c38] sm:$0xff]
        %v1944 = vld [vmem:[#allocation4 + $0x1c40] sm:$0xff]
        %v1945 = vld [vmem:[#allocation4 + $0x1c48] sm:$0xff]
        %v1946 = vld [vmem:[#allocation4 + $0x1c50] sm:$0xff]
        %v1947 = vld [vmem:[#allocation4 + $0x1c58] sm:$0xff]
        %v1948 = vld [vmem:[#allocation4 + $0x1c60] sm:$0xff]
        %v1949 = vld [vmem:[#allocation4 + $0x1c68] sm:$0xff]
        %v1950 = vld [vmem:[#allocation4 + $0x1c70] sm:$0xff]
        %v1951 = vld [vmem:[#allocation4 + $0x1c78] sm:$0xff]
        %v1952 = vld [vmem:[#allocation4 + $0x1c80] sm:$0xff]
        %v1953 = vld [vmem:[#allocation4 + $0x1c88] sm:$0xff]
        %v1954 = vld [vmem:[#allocation4 + $0x1c90] sm:$0xff]
        %v1955 = vld [vmem:[#allocation4 + $0x1c98] sm:$0xff]
        %v1956 = vld [vmem:[#allocation4 + $0x1ca0] sm:$0xff]
        %v1957 = vld [vmem:[#allocation4 + $0x1ca8] sm:$0xff]
        %v1958 = vld [vmem:[#allocation4 + $0x1cb0] sm:$0xff]
        %v1959 = vld [vmem:[#allocation4 + $0x1cb8] sm:$0xff]
        %v1960 = vld [vmem:[#allocation4 + $0x1cc0] sm:$0xff]
        %v1961 = vld [vmem:[#allocation4 + $0x1cc8] sm:$0xff]
        %v1962 = vld [vmem:[#allocation4 + $0x1cd0] sm:$0xff]
        %v1963 = vld [vmem:[#allocation4 + $0x1cd8] sm:$0xff]
        %v1964 = vld [vmem:[#allocation4 + $0x1ce0] sm:$0xff]
        %v1965 = vld [vmem:[#allocation4 + $0x1ce8] sm:$0xff]
        %v1966 = vld [vmem:[#allocation4 + $0x1cf0] sm:$0xff]
        %v1967 = vld [vmem:[#allocation4 + $0x1cf8] sm:$0xff]
        %v1968 = vld [vmem:[#allocation4 + $0x1d00] sm:$0xff]
        %v1969 = vld [vmem:[#allocation4 + $0x1d08] sm:$0xff]
        %v1970 = vld [vmem:[#allocation4 + $0x1d10] sm:$0xff]
        %v1971 = vld [vmem:[#allocation4 + $0x1d18] sm:$0xff]
        %v1972 = vld [vmem:[#allocation4 + $0x1d20] sm:$0xff]
        %v1973 = vld [vmem:[#allocation4 + $0x1d28] sm:$0xff]
        %v1974 = vld [vmem:[#allocation4 + $0x1d30] sm:$0xff]
        %v1975 = vld [vmem:[#allocation4 + $0x1d38] sm:$0xff]
        %v1976 = vld [vmem:[#allocation4 + $0x1d40] sm:$0xff]
        %v1977 = vld [vmem:[#allocation4 + $0x1d48] sm:$0xff]
        %v1978 = vld [vmem:[#allocation4 + $0x1d50] sm:$0xff]
        %v1979 = vld [vmem:[#allocation4 + $0x1d58] sm:$0xff]
        %v1980 = vld [vmem:[#allocation4 + $0x1d60] sm:$0xff]
        %v1981 = vld [vmem:[#allocation4 + $0x1d68] sm:$0xff]
        %v1982 = vld [vmem:[#allocation4 + $0x1d70] sm:$0xff]
        %v1983 = vld [vmem:[#allocation4 + $0x1d78] sm:$0xff]
        %v1984 = vld [vmem:[#allocation4 + $0x1d80] sm:$0xff]
        %v1985 = vld [vmem:[#allocation4 + $0x1d88] sm:$0xff]
        %v1986 = vld [vmem:[#allocation4 + $0x1d90] sm:$0xff]
        %v1987 = vld [vmem:[#allocation4 + $0x1d98] sm:$0xff]
        %v1988 = vld [vmem:[#allocation4 + $0x1da0] sm:$0xff]
        %v1989 = vld [vmem:[#allocation4 + $0x1da8] sm:$0xff]
        %v1990 = vld [vmem:[#allocation4 + $0x1db0] sm:$0xff]
        %v1991 = vld [vmem:[#allocation4 + $0x1db8] sm:$0xff]
        %v1992 = vld [vmem:[#allocation4 + $0x1dc0] sm:$0xff]
        %v1993 = vld [vmem:[#allocation4 + $0x1dc8] sm:$0xff]
        %v1994 = vld [vmem:[#allocation4 + $0x1dd0] sm:$0xff]
        %v1995 = vld [vmem:[#allocation4 + $0x1dd8] sm:$0xff]
        %v1996 = vld [vmem:[#allocation4 + $0x1de0] sm:$0xff]
        %v1997 = vld [vmem:[#allocation4 + $0x1de8] sm:$0xff]
        %v1998 = vld [vmem:[#allocation4 + $0x1df0] sm:$0xff]
        %v1999 = vld [vmem:[#allocation4 + $0x1df8] sm:$0xff]
        %v2000 = vld [vmem:[#allocation4 + $0x1e00] sm:$0xff]
        %v2001 = vld [vmem:[#allocation4 + $0x1e08] sm:$0xff]
        %v2002 = vld [vmem:[#allocation4 + $0x1e10] sm:$0xff]
        %v2003 = vld [vmem:[#allocation4 + $0x1e18] sm:$0xff]
        %v2004 = vld [vmem:[#allocation4 + $0x1e20] sm:$0xff]
        %v2005 = vld [vmem:[#allocation4 + $0x1e28] sm:$0xff]
        %v2006 = vld [vmem:[#allocation4 + $0x1e30] sm:$0xff]
        %v2007 = vld [vmem:[#allocation4 + $0x1e38] sm:$0xff]
        %v2008 = vld [vmem:[#allocation4 + $0x1e40] sm:$0xff]
        %v2009 = vld [vmem:[#allocation4 + $0x1e48] sm:$0xff]
        %v2010 = vld [vmem:[#allocation4 + $0x1e50] sm:$0xff]
        %v2011 = vld [vmem:[#allocation4 + $0x1e58] sm:$0xff]
        %v2012 = vld [vmem:[#allocation4 + $0x1e60] sm:$0xff]
        %v2013 = vld [vmem:[#allocation4 + $0x1e68] sm:$0xff]
        %v2014 = vld [vmem:[#allocation4 + $0x1e70] sm:$0xff]
        %v2015 = vld [vmem:[#allocation4 + $0x1e78] sm:$0xff]
        %v2016 = vld [vmem:[#allocation4 + $0x1e80] sm:$0xff]
        %v2017 = vld [vmem:[#allocation4 + $0x1e88] sm:$0xff]
        %v2018 = vld [vmem:[#allocation4 + $0x1e90] sm:$0xff]
        %v2019 = vld [vmem:[#allocation4 + $0x1e98] sm:$0xff]
        %v2020 = vld [vmem:[#allocation4 + $0x1ea0] sm:$0xff]
        %v2021 = vld [vmem:[#allocation4 + $0x1ea8] sm:$0xff]
        %v2022 = vld [vmem:[#allocation4 + $0x1eb0] sm:$0xff]
        %v2023 = vld [vmem:[#allocation4 + $0x1eb8] sm:$0xff]
        %v2024 = vld [vmem:[#allocation4 + $0x1ec0] sm:$0xff]
        %v2025 = vld [vmem:[#allocation4 + $0x1ec8] sm:$0xff]
        %v2026 = vld [vmem:[#allocation4 + $0x1ed0] sm:$0xff]
        %v2027 = vld [vmem:[#allocation4 + $0x1ed8] sm:$0xff]
        %v2028 = vld [vmem:[#allocation4 + $0x1ee0] sm:$0xff]
        %v2029 = vld [vmem:[#allocation4 + $0x1ee8] sm:$0xff]
        %v2030 = vld [vmem:[#allocation4 + $0x1ef0] sm:$0xff]
        %v2031 = vld [vmem:[#allocation4 + $0x1ef8] sm:$0xff]
        %v2032 = vld [vmem:[#allocation4 + $0x1f00] sm:$0xff]
        %v2033 = vld [vmem:[#allocation4 + $0x1f08] sm:$0xff]
        %v2034 = vld [vmem:[#allocation4 + $0x1f10] sm:$0xff]
        %v2035 = vld [vmem:[#allocation4 + $0x1f18] sm:$0xff]
        %v2036 = vld [vmem:[#allocation4 + $0x1f20] sm:$0xff]
        %v2037 = vld [vmem:[#allocation4 + $0x1f28] sm:$0xff]
        %v2038 = vld [vmem:[#allocation4 + $0x1f30] sm:$0xff]
        %v2039 = vld [vmem:[#allocation4 + $0x1f38] sm:$0xff]
        %v2040 = vld [vmem:[#allocation4 + $0x1f40] sm:$0xff]
        %v2041 = vld [vmem:[#allocation4 + $0x1f48] sm:$0xff]
        %v2042 = vld [vmem:[#allocation4 + $0x1f50] sm:$0xff]
        %v2043 = vld [vmem:[#allocation4 + $0x1f58] sm:$0xff]
        %v2044 = vld [vmem:[#allocation4 + $0x1f60] sm:$0xff]
        %v2045 = vld [vmem:[#allocation4 + $0x1f68] sm:$0xff]
        %v2046 = vld [vmem:[#allocation4 + $0x1f70] sm:$0xff]
        %v2047 = vld [vmem:[#allocation4 + $0x1f78] sm:$0xff]
        %v2048 = vld [vmem:[#allocation4 + $0x1f80] sm:$0xff]
        %v2049 = vld [vmem:[#allocation4 + $0x1f88] sm:$0xff]
        %v2050 = vld [vmem:[#allocation4 + $0x1f90] sm:$0xff]
        %v2051 = vld [vmem:[#allocation4 + $0x1f98] sm:$0xff]
        %v2052 = vld [vmem:[#allocation4 + $0x1fa0] sm:$0xff]
        %v2053 = vld [vmem:[#allocation4 + $0x1fa8] sm:$0xff]
        %v2054 = vld [vmem:[#allocation4 + $0x1fb0] sm:$0xff]
        %v2055 = vld [vmem:[#allocation4 + $0x1fb8] sm:$0xff]
        %v2056 = vld [vmem:[#allocation4 + $0x1fc0] sm:$0xff]
        %v2057 = vld [vmem:[#allocation4 + $0x1fc8] sm:$0xff]
        %v2058 = vld [vmem:[#allocation4 + $0x1fd0] sm:$0xff]
        %v2059 = vld [vmem:[#allocation4 + $0x1fd8] sm:$0xff]
        %v2060 = vld [vmem:[#allocation4 + $0x1fe0] sm:$0xff]
        %v2061 = vld [vmem:[#allocation4 + $0x1fe8] sm:$0xff]
        %v2062 = vld [vmem:[#allocation4 + $0x1ff0] sm:$0xff]
        %v2063 = vld [vmem:[#allocation4 + $0x1ff8] sm:$0xff]
        %2064 = vmatpush.msra.mxu0 %v1520
        %2065 = vmatpush.msra.mxu0 %v1488
        %2066 = vmatpush.msra.mxu0 %v1456
        %2067 = vmatpush.msra.mxu0 %v1424
        %2068 = vmatpush.msra.mxu0 %v1392
        %2069 = vmatpush.msra.mxu0 %v1360
        %2070 = vmatpush.msra.mxu0 %v1328
        %2071 = vmatpush.msra.mxu0 %v1296
        %2072 = vmatpush.msra.mxu0 %v1264
        %2073 = vmatpush.msra.mxu0 %v1232
        %2074 = vmatpush.msra.mxu0 %v1200
        %2075 = vmatpush.msra.mxu0 %v1168
        %2076 = vmatpush.msra.mxu0 %v1136
        %2077 = vmatpush.msra.mxu0 %v1104
        %2078 = vmatpush.msra.mxu0 %v1072
        %2079 = vmatpush.msra.mxu0 %v1040
        %2080 = vmatmul.f32.gmra.mxu0 %v733
        %v2081 = vpop.f32.mrf.mxu0
        %v2082 = vadd.f32 0.0, %v2081
        %2083 = vmatmul.f32.gmra.mxu0 %v736
        %v2084 = vpop.f32.mrf.mxu0
        %v2085 = vadd.f32 0.0, %v2084
        %2086 = vmatmul.f32.gmra.mxu0 %v739
        %v2087 = vpop.f32.mrf.mxu0
        %v2088 = vadd.f32 0.0, %v2087
        %2089 = vmatmul.f32.gmra.mxu0 %v742
        %v2090 = vpop.f32.mrf.mxu0
        %v2091 = vadd.f32 0.0, %v2090
        %2092 = vmatmul.f32.gmra.mxu0 %v745
        %v2093 = vpop.f32.mrf.mxu0
        %v2094 = vadd.f32 0.0, %v2093
        %2095 = vmatmul.f32.gmra.mxu0 %v748
        %v2096 = vpop.f32.mrf.mxu0
        %v2097 = vadd.f32 0.0, %v2096
        %2098 = vmatmul.f32.gmra.mxu0 %v751
        %v2099 = vpop.f32.mrf.mxu0
        %v2100 = vadd.f32 0.0, %v2099
        %2101 = vmatmul.f32.gmra.mxu0 %v754
        %v2102 = vpop.f32.mrf.mxu0
        %v2103 = vadd.f32 0.0, %v2102
        %2104 = vmatmul.f32.gmra.mxu0 %v757
        %v2105 = vpop.f32.mrf.mxu0
        %v2106 = vadd.f32 0.0, %v2105
        %2107 = vmatmul.f32.gmra.mxu0 %v760
        %v2108 = vpop.f32.mrf.mxu0
        %v2109 = vadd.f32 0.0, %v2108
        %2110 = vmatmul.f32.gmra.mxu0 %v763
        %v2111 = vpop.f32.mrf.mxu0
        %v2112 = vadd.f32 0.0, %v2111
        %2113 = vmatmul.f32.gmra.mxu0 %v766
        %v2114 = vpop.f32.mrf.mxu0
        %v2115 = vadd.f32 0.0, %v2114
        %2116 = vmatmul.f32.gmra.mxu0 %v769
        %v2117 = vpop.f32.mrf.mxu0
        %v2118 = vadd.f32 0.0, %v2117
        %2119 = vmatmul.f32.gmra.mxu0 %v772
        %v2120 = vpop.f32.mrf.mxu0
        %v2121 = vadd.f32 0.0, %v2120
        %2122 = vmatmul.f32.gmra.mxu0 %v775
        %v2123 = vpop.f32.mrf.mxu0
        %v2124 = vadd.f32 0.0, %v2123
        %2125 = vmatmul.f32.gmra.mxu0 %v778
        %v2126 = vpop.f32.mrf.mxu0
        %v2127 = vadd.f32 0.0, %v2126
        %2128 = vdwg.mxu0
        %2129 = vmatpush.msra.mxu0 %v2032
        %2130 = vmatpush.msra.mxu0 %v2000
        %2131 = vmatpush.msra.mxu0 %v1968
        %2132 = vmatpush.msra.mxu0 %v1936
        %2133 = vmatpush.msra.mxu0 %v1904
        %2134 = vmatpush.msra.mxu0 %v1872
        %2135 = vmatpush.msra.mxu0 %v1840
        %2136 = vmatpush.msra.mxu0 %v1808
        %2137 = vmatpush.msra.mxu0 %v1776
        %2138 = vmatpush.msra.mxu0 %v1744
        %2139 = vmatpush.msra.mxu0 %v1712
        %2140 = vmatpush.msra.mxu0 %v1680
        %2141 = vmatpush.msra.mxu0 %v1648
        %2142 = vmatpush.msra.mxu0 %v1616
        %2143 = vmatpush.msra.mxu0 %v1584
        %2144 = vmatpush.msra.mxu0 %v1552
        %2145 = vmatmul.f32.gmra.mxu0 %v993
        %v2146 = vpop.f32.mrf.mxu0
        %v2147 = vadd.f32 %v2082, %v2146
        %2148 = vmatmul.f32.gmra.mxu0 %v996
        %v2149 = vpop.f32.mrf.mxu0
        %v2150 = vadd.f32 %v2085, %v2149
        %2151 = vmatmul.f32.gmra.mxu0 %v999
        %v2152 = vpop.f32.mrf.mxu0
        %v2153 = vadd.f32 %v2088, %v2152
        %2154 = vmatmul.f32.gmra.mxu0 %v1002
        %v2155 = vpop.f32.mrf.mxu0
        %v2156 = vadd.f32 %v2091, %v2155
        %2157 = vmatmul.f32.gmra.mxu0 %v1005
        %v2158 = vpop.f32.mrf.mxu0
        %v2159 = vadd.f32 %v2094, %v2158
        %2160 = vmatmul.f32.gmra.mxu0 %v1008
        %v2161 = vpop.f32.mrf.mxu0
        %v2162 = vadd.f32 %v2097, %v2161
        %2163 = vmatmul.f32.gmra.mxu0 %v1011
        %v2164 = vpop.f32.mrf.mxu0
        %v2165 = vadd.f32 %v2100, %v2164
        %2166 = vmatmul.f32.gmra.mxu0 %v1014
        %v2167 = vpop.f32.mrf.mxu0
        %v2168 = vadd.f32 %v2103, %v2167
        %2169 = vmatmul.f32.gmra.mxu0 %v1017
        %v2170 = vpop.f32.mrf.mxu0
        %v2171 = vadd.f32 %v2106, %v2170
        %2172 = vmatmul.f32.gmra.mxu0 %v1020
        %v2173 = vpop.f32.mrf.mxu0
        %v2174 = vadd.f32 %v2109, %v2173
        %2175 = vmatmul.f32.gmra.mxu0 %v1023
        %v2176 = vpop.f32.mrf.mxu0
        %v2177 = vadd.f32 %v2112, %v2176
        %2178 = vmatmul.f32.gmra.mxu0 %v1026
        %v2179 = vpop.f32.mrf.mxu0
        %v2180 = vadd.f32 %v2115, %v2179
        %2181 = vmatmul.f32.gmra.mxu0 %v1029
        %v2182 = vpop.f32.mrf.mxu0
        %v2183 = vadd.f32 %v2118, %v2182
        %2184 = vmatmul.f32.gmra.mxu0 %v1032
        %v2185 = vpop.f32.mrf.mxu0
        %v2186 = vadd.f32 %v2121, %v2185
        %2187 = vmatmul.f32.gmra.mxu0 %v1035
        %v2188 = vpop.f32.mrf.mxu0
        %v2189 = vadd.f32 %v2124, %v2188
        %2190 = vmatmul.f32.gmra.mxu0 %v1038
        %v2191 = vpop.f32.mrf.mxu0
        %v2192 = vadd.f32 %v2127, %v2191
        %2193 = vdwg.mxu0
        %2194 = vmatpush.msra.mxu0 %v1521
        %2195 = vmatpush.msra.mxu0 %v1489
        %2196 = vmatpush.msra.mxu0 %v1457
        %2197 = vmatpush.msra.mxu0 %v1425
        %2198 = vmatpush.msra.mxu0 %v1393
        %2199 = vmatpush.msra.mxu0 %v1361
        %2200 = vmatpush.msra.mxu0 %v1329
        %2201 = vmatpush.msra.mxu0 %v1297
        %2202 = vmatpush.msra.mxu0 %v1265
        %2203 = vmatpush.msra.mxu0 %v1233
        %2204 = vmatpush.msra.mxu0 %v1201
        %2205 = vmatpush.msra.mxu0 %v1169
        %2206 = vmatpush.msra.mxu0 %v1137
        %2207 = vmatpush.msra.mxu0 %v1105
        %2208 = vmatpush.msra.mxu0 %v1073
        %2209 = vmatpush.msra.mxu0 %v1041
        %2210 = vmatmul.f32.gmra.mxu0 %v733
        %v2211 = vpop.f32.mrf.mxu0
        %v2212 = vadd.f32 0.0, %v2211
        %2213 = vmatmul.f32.gmra.mxu0 %v736
        %v2214 = vpop.f32.mrf.mxu0
        %v2215 = vadd.f32 0.0, %v2214
        %2216 = vmatmul.f32.gmra.mxu0 %v739
        %v2217 = vpop.f32.mrf.mxu0
        %v2218 = vadd.f32 0.0, %v2217
        %2219 = vmatmul.f32.gmra.mxu0 %v742
        %v2220 = vpop.f32.mrf.mxu0
        %v2221 = vadd.f32 0.0, %v2220
        %2222 = vmatmul.f32.gmra.mxu0 %v745
        %v2223 = vpop.f32.mrf.mxu0
        %v2224 = vadd.f32 0.0, %v2223
        %2225 = vmatmul.f32.gmra.mxu0 %v748
        %v2226 = vpop.f32.mrf.mxu0
        %v2227 = vadd.f32 0.0, %v2226
        %2228 = vmatmul.f32.gmra.mxu0 %v751
        %v2229 = vpop.f32.mrf.mxu0
        %v2230 = vadd.f32 0.0, %v2229
        %2231 = vmatmul.f32.gmra.mxu0 %v754
        %v2232 = vpop.f32.mrf.mxu0
        %v2233 = vadd.f32 0.0, %v2232
        %2234 = vmatmul.f32.gmra.mxu0 %v757
        %v2235 = vpop.f32.mrf.mxu0
        %v2236 = vadd.f32 0.0, %v2235
        %2237 = vmatmul.f32.gmra.mxu0 %v760
        %v2238 = vpop.f32.mrf.mxu0
        %v2239 = vadd.f32 0.0, %v2238
        %2240 = vmatmul.f32.gmra.mxu0 %v763
        %v2241 = vpop.f32.mrf.mxu0
        %v2242 = vadd.f32 0.0, %v2241
        %2243 = vmatmul.f32.gmra.mxu0 %v766
        %v2244 = vpop.f32.mrf.mxu0
        %v2245 = vadd.f32 0.0, %v2244
        %2246 = vmatmul.f32.gmra.mxu0 %v769
        %v2247 = vpop.f32.mrf.mxu0
        %v2248 = vadd.f32 0.0, %v2247
        %2249 = vmatmul.f32.gmra.mxu0 %v772
        %v2250 = vpop.f32.mrf.mxu0
        %v2251 = vadd.f32 0.0, %v2250
        %2252 = vmatmul.f32.gmra.mxu0 %v775
        %v2253 = vpop.f32.mrf.mxu0
        %v2254 = vadd.f32 0.0, %v2253
        %2255 = vmatmul.f32.gmra.mxu0 %v778
        %v2256 = vpop.f32.mrf.mxu0
        %v2257 = vadd.f32 0.0, %v2256
        %2258 = vdwg.mxu0
        %2259 = vmatpush.msra.mxu0 %v2033
        %2260 = vmatpush.msra.mxu0 %v2001
        %2261 = vmatpush.msra.mxu0 %v1969
        %2262 = vmatpush.msra.mxu0 %v1937
        %2263 = vmatpush.msra.mxu0 %v1905
        %2264 = vmatpush.msra.mxu0 %v1873
        %2265 = vmatpush.msra.mxu0 %v1841
        %2266 = vmatpush.msra.mxu0 %v1809
        %2267 = vmatpush.msra.mxu0 %v1777
        %2268 = vmatpush.msra.mxu0 %v1745
        %2269 = vmatpush.msra.mxu0 %v1713
        %2270 = vmatpush.msra.mxu0 %v1681
        %2271 = vmatpush.msra.mxu0 %v1649
        %2272 = vmatpush.msra.mxu0 %v1617
        %2273 = vmatpush.msra.mxu0 %v1585
        %2274 = vmatpush.msra.mxu0 %v1553
        %2275 = vmatmul.f32.gmra.mxu0 %v993
        %v2276 = vpop.f32.mrf.mxu0
        %v2277 = vadd.f32 %v2212, %v2276
        %2278 = vmatmul.f32.gmra.mxu0 %v996
        %v2279 = vpop.f32.mrf.mxu0
        %v2280 = vadd.f32 %v2215, %v2279
        %2281 = vmatmul.f32.gmra.mxu0 %v999
        %v2282 = vpop.f32.mrf.mxu0
        %v2283 = vadd.f32 %v2218, %v2282
        %2284 = vmatmul.f32.gmra.mxu0 %v1002
        %v2285 = vpop.f32.mrf.mxu0
        %v2286 = vadd.f32 %v2221, %v2285
        %2287 = vmatmul.f32.gmra.mxu0 %v1005
        %v2288 = vpop.f32.mrf.mxu0
        %v2289 = vadd.f32 %v2224, %v2288
        %2290 = vmatmul.f32.gmra.mxu0 %v1008
        %v2291 = vpop.f32.mrf.mxu0
        %v2292 = vadd.f32 %v2227, %v2291
        %2293 = vmatmul.f32.gmra.mxu0 %v1011
        %v2294 = vpop.f32.mrf.mxu0
        %v2295 = vadd.f32 %v2230, %v2294
        %2296 = vmatmul.f32.gmra.mxu0 %v1014
        %v2297 = vpop.f32.mrf.mxu0
        %v2298 = vadd.f32 %v2233, %v2297
        %2299 = vmatmul.f32.gmra.mxu0 %v1017
        %v2300 = vpop.f32.mrf.mxu0
        %v2301 = vadd.f32 %v2236, %v2300
        %2302 = vmatmul.f32.gmra.mxu0 %v1020
        %v2303 = vpop.f32.mrf.mxu0
        %v2304 = vadd.f32 %v2239, %v2303
        %2305 = vmatmul.f32.gmra.mxu0 %v1023
        %v2306 = vpop.f32.mrf.mxu0
        %v2307 = vadd.f32 %v2242, %v2306
        %2308 = vmatmul.f32.gmra.mxu0 %v1026
        %v2309 = vpop.f32.mrf.mxu0
        %v2310 = vadd.f32 %v2245, %v2309
        %2311 = vmatmul.f32.gmra.mxu0 %v1029
        %v2312 = vpop.f32.mrf.mxu0
        %v2313 = vadd.f32 %v2248, %v2312
        %2314 = vmatmul.f32.gmra.mxu0 %v1032
        %v2315 = vpop.f32.mrf.mxu0
        %v2316 = vadd.f32 %v2251, %v2315
        %2317 = vmatmul.f32.gmra.mxu0 %v1035
        %v2318 = vpop.f32.mrf.mxu0
        %v2319 = vadd.f32 %v2254, %v2318
        %2320 = vmatmul.f32.gmra.mxu0 %v1038
        %v2321 = vpop.f32.mrf.mxu0
        %v2322 = vadd.f32 %v2257, %v2321
        %2323 = vdwg.mxu0
        %2324 = vmatpush.msra.mxu0 %v1522
        %2325 = vmatpush.msra.mxu0 %v1490
        %2326 = vmatpush.msra.mxu0 %v1458
        %2327 = vmatpush.msra.mxu0 %v1426
        %2328 = vmatpush.msra.mxu0 %v1394
        %2329 = vmatpush.msra.mxu0 %v1362
        %2330 = vmatpush.msra.mxu0 %v1330
        %2331 = vmatpush.msra.mxu0 %v1298
        %2332 = vmatpush.msra.mxu0 %v1266
        %2333 = vmatpush.msra.mxu0 %v1234
        %2334 = vmatpush.msra.mxu0 %v1202
        %2335 = vmatpush.msra.mxu0 %v1170
        %2336 = vmatpush.msra.mxu0 %v1138
        %2337 = vmatpush.msra.mxu0 %v1106
        %2338 = vmatpush.msra.mxu0 %v1074
        %2339 = vmatpush.msra.mxu0 %v1042
        %2340 = vmatmul.f32.gmra.mxu0 %v733
        %v2341 = vpop.f32.mrf.mxu0
        %v2342 = vadd.f32 0.0, %v2341
        %2343 = vmatmul.f32.gmra.mxu0 %v736
        %v2344 = vpop.f32.mrf.mxu0
        %v2345 = vadd.f32 0.0, %v2344
        %2346 = vmatmul.f32.gmra.mxu0 %v739
        %v2347 = vpop.f32.mrf.mxu0
        %v2348 = vadd.f32 0.0, %v2347
        %2349 = vmatmul.f32.gmra.mxu0 %v742
        %v2350 = vpop.f32.mrf.mxu0
        %v2351 = vadd.f32 0.0, %v2350
        %2352 = vmatmul.f32.gmra.mxu0 %v745
        %v2353 = vpop.f32.mrf.mxu0
        %v2354 = vadd.f32 0.0, %v2353
        %2355 = vmatmul.f32.gmra.mxu0 %v748
        %v2356 = vpop.f32.mrf.mxu0
        %v2357 = vadd.f32 0.0, %v2356
        %2358 = vmatmul.f32.gmra.mxu0 %v751
        %v2359 = vpop.f32.mrf.mxu0
        %v2360 = vadd.f32 0.0, %v2359
        %2361 = vmatmul.f32.gmra.mxu0 %v754
        %v2362 = vpop.f32.mrf.mxu0
        %v2363 = vadd.f32 0.0, %v2362
        %2364 = vmatmul.f32.gmra.mxu0 %v757
        %v2365 = vpop.f32.mrf.mxu0
        %v2366 = vadd.f32 0.0, %v2365
        %2367 = vmatmul.f32.gmra.mxu0 %v760
        %v2368 = vpop.f32.mrf.mxu0
        %v2369 = vadd.f32 0.0, %v2368
        %2370 = vmatmul.f32.gmra.mxu0 %v763
        %v2371 = vpop.f32.mrf.mxu0
        %v2372 = vadd.f32 0.0, %v2371
        %2373 = vmatmul.f32.gmra.mxu0 %v766
        %v2374 = vpop.f32.mrf.mxu0
        %v2375 = vadd.f32 0.0, %v2374
        %2376 = vmatmul.f32.gmra.mxu0 %v769
        %v2377 = vpop.f32.mrf.mxu0
        %v2378 = vadd.f32 0.0, %v2377
        %2379 = vmatmul.f32.gmra.mxu0 %v772
        %v2380 = vpop.f32.mrf.mxu0
        %v2381 = vadd.f32 0.0, %v2380
        %2382 = vmatmul.f32.gmra.mxu0 %v775
        %v2383 = vpop.f32.mrf.mxu0
        %v2384 = vadd.f32 0.0, %v2383
        %2385 = vmatmul.f32.gmra.mxu0 %v778
        %v2386 = vpop.f32.mrf.mxu0
        %v2387 = vadd.f32 0.0, %v2386
        %2388 = vdwg.mxu0
        %2389 = vmatpush.msra.mxu0 %v2034
        %2390 = vmatpush.msra.mxu0 %v2002
        %2391 = vmatpush.msra.mxu0 %v1970
        %2392 = vmatpush.msra.mxu0 %v1938
        %2393 = vmatpush.msra.mxu0 %v1906
        %2394 = vmatpush.msra.mxu0 %v1874
        %2395 = vmatpush.msra.mxu0 %v1842
        %2396 = vmatpush.msra.mxu0 %v1810
        %2397 = vmatpush.msra.mxu0 %v1778
        %2398 = vmatpush.msra.mxu0 %v1746
        %2399 = vmatpush.msra.mxu0 %v1714
        %2400 = vmatpush.msra.mxu0 %v1682
        %2401 = vmatpush.msra.mxu0 %v1650
        %2402 = vmatpush.msra.mxu0 %v1618
        %2403 = vmatpush.msra.mxu0 %v1586
        %2404 = vmatpush.msra.mxu0 %v1554
        %2405 = vmatmul.f32.gmra.mxu0 %v993
        %v2406 = vpop.f32.mrf.mxu0
        %v2407 = vadd.f32 %v2342, %v2406
        %2408 = vmatmul.f32.gmra.mxu0 %v996
        %v2409 = vpop.f32.mrf.mxu0
        %v2410 = vadd.f32 %v2345, %v2409
        %2411 = vmatmul.f32.gmra.mxu0 %v999
        %v2412 = vpop.f32.mrf.mxu0
        %v2413 = vadd.f32 %v2348, %v2412
        %2414 = vmatmul.f32.gmra.mxu0 %v1002
        %v2415 = vpop.f32.mrf.mxu0
        %v2416 = vadd.f32 %v2351, %v2415
        %2417 = vmatmul.f32.gmra.mxu0 %v1005
        %v2418 = vpop.f32.mrf.mxu0
        %v2419 = vadd.f32 %v2354, %v2418
        %2420 = vmatmul.f32.gmra.mxu0 %v1008
        %v2421 = vpop.f32.mrf.mxu0
        %v2422 = vadd.f32 %v2357, %v2421
        %2423 = vmatmul.f32.gmra.mxu0 %v1011
        %v2424 = vpop.f32.mrf.mxu0
        %v2425 = vadd.f32 %v2360, %v2424
        %2426 = vmatmul.f32.gmra.mxu0 %v1014
        %v2427 = vpop.f32.mrf.mxu0
        %v2428 = vadd.f32 %v2363, %v2427
        %2429 = vmatmul.f32.gmra.mxu0 %v1017
        %v2430 = vpop.f32.mrf.mxu0
        %v2431 = vadd.f32 %v2366, %v2430
        %2432 = vmatmul.f32.gmra.mxu0 %v1020
        %v2433 = vpop.f32.mrf.mxu0
        %v2434 = vadd.f32 %v2369, %v2433
        %2435 = vmatmul.f32.gmra.mxu0 %v1023
        %v2436 = vpop.f32.mrf.mxu0
        %v2437 = vadd.f32 %v2372, %v2436
        %2438 = vmatmul.f32.gmra.mxu0 %v1026
        %v2439 = vpop.f32.mrf.mxu0
        %v2440 = vadd.f32 %v2375, %v2439
        %2441 = vmatmul.f32.gmra.mxu0 %v1029
        %v2442 = vpop.f32.mrf.mxu0
        %v2443 = vadd.f32 %v2378, %v2442
        %2444 = vmatmul.f32.gmra.mxu0 %v1032
        %v2445 = vpop.f32.mrf.mxu0
        %v2446 = vadd.f32 %v2381, %v2445
        %2447 = vmatmul.f32.gmra.mxu0 %v1035
        %v2448 = vpop.f32.mrf.mxu0
        %v2449 = vadd.f32 %v2384, %v2448
        %2450 = vmatmul.f32.gmra.mxu0 %v1038
        %v2451 = vpop.f32.mrf.mxu0
        %v2452 = vadd.f32 %v2387, %v2451
        %2453 = vdwg.mxu0
        %2454 = vmatpush.msra.mxu0 %v1523
        %2455 = vmatpush.msra.mxu0 %v1491
        %2456 = vmatpush.msra.mxu0 %v1459
        %2457 = vmatpush.msra.mxu0 %v1427
        %2458 = vmatpush.msra.mxu0 %v1395
        %2459 = vmatpush.msra.mxu0 %v1363
        %2460 = vmatpush.msra.mxu0 %v1331
        %2461 = vmatpush.msra.mxu0 %v1299
        %2462 = vmatpush.msra.mxu0 %v1267
        %2463 = vmatpush.msra.mxu0 %v1235
        %2464 = vmatpush.msra.mxu0 %v1203
        %2465 = vmatpush.msra.mxu0 %v1171
        %2466 = vmatpush.msra.mxu0 %v1139
        %2467 = vmatpush.msra.mxu0 %v1107
        %2468 = vmatpush.msra.mxu0 %v1075
        %2469 = vmatpush.msra.mxu0 %v1043
        %2470 = vmatmul.f32.gmra.mxu0 %v733
        %v2471 = vpop.f32.mrf.mxu0
        %v2472 = vadd.f32 0.0, %v2471
        %2473 = vmatmul.f32.gmra.mxu0 %v736
        %v2474 = vpop.f32.mrf.mxu0
        %v2475 = vadd.f32 0.0, %v2474
        %2476 = vmatmul.f32.gmra.mxu0 %v739
        %v2477 = vpop.f32.mrf.mxu0
        %v2478 = vadd.f32 0.0, %v2477
        %2479 = vmatmul.f32.gmra.mxu0 %v742
        %v2480 = vpop.f32.mrf.mxu0
        %v2481 = vadd.f32 0.0, %v2480
        %2482 = vmatmul.f32.gmra.mxu0 %v745
        %v2483 = vpop.f32.mrf.mxu0
        %v2484 = vadd.f32 0.0, %v2483
        %2485 = vmatmul.f32.gmra.mxu0 %v748
        %v2486 = vpop.f32.mrf.mxu0
        %v2487 = vadd.f32 0.0, %v2486
        %2488 = vmatmul.f32.gmra.mxu0 %v751
        %v2489 = vpop.f32.mrf.mxu0
        %v2490 = vadd.f32 0.0, %v2489
        %2491 = vmatmul.f32.gmra.mxu0 %v754
        %v2492 = vpop.f32.mrf.mxu0
        %v2493 = vadd.f32 0.0, %v2492
        %2494 = vmatmul.f32.gmra.mxu0 %v757
        %v2495 = vpop.f32.mrf.mxu0
        %v2496 = vadd.f32 0.0, %v2495
        %2497 = vmatmul.f32.gmra.mxu0 %v760
        %v2498 = vpop.f32.mrf.mxu0
        %v2499 = vadd.f32 0.0, %v2498
        %2500 = vmatmul.f32.gmra.mxu0 %v763
        %v2501 = vpop.f32.mrf.mxu0
        %v2502 = vadd.f32 0.0, %v2501
        %2503 = vmatmul.f32.gmra.mxu0 %v766
        %v2504 = vpop.f32.mrf.mxu0
        %v2505 = vadd.f32 0.0, %v2504
        %2506 = vmatmul.f32.gmra.mxu0 %v769
        %v2507 = vpop.f32.mrf.mxu0
        %v2508 = vadd.f32 0.0, %v2507
        %2509 = vmatmul.f32.gmra.mxu0 %v772
        %v2510 = vpop.f32.mrf.mxu0
        %v2511 = vadd.f32 0.0, %v2510
        %2512 = vmatmul.f32.gmra.mxu0 %v775
        %v2513 = vpop.f32.mrf.mxu0
        %v2514 = vadd.f32 0.0, %v2513
        %2515 = vmatmul.f32.gmra.mxu0 %v778
        %v2516 = vpop.f32.mrf.mxu0
        %v2517 = vadd.f32 0.0, %v2516
        %2518 = vdwg.mxu0
        %2519 = vmatpush.msra.mxu0 %v2035
        %2520 = vmatpush.msra.mxu0 %v2003
        %2521 = vmatpush.msra.mxu0 %v1971
        %2522 = vmatpush.msra.mxu0 %v1939
        %2523 = vmatpush.msra.mxu0 %v1907
        %2524 = vmatpush.msra.mxu0 %v1875
        %2525 = vmatpush.msra.mxu0 %v1843
        %2526 = vmatpush.msra.mxu0 %v1811
        %2527 = vmatpush.msra.mxu0 %v1779
        %2528 = vmatpush.msra.mxu0 %v1747
        %2529 = vmatpush.msra.mxu0 %v1715
        %2530 = vmatpush.msra.mxu0 %v1683
        %2531 = vmatpush.msra.mxu0 %v1651
        %2532 = vmatpush.msra.mxu0 %v1619
        %2533 = vmatpush.msra.mxu0 %v1587
        %2534 = vmatpush.msra.mxu0 %v1555
        %2535 = vmatmul.f32.gmra.mxu0 %v993
        %v2536 = vpop.f32.mrf.mxu0
        %v2537 = vadd.f32 %v2472, %v2536
        %2538 = vmatmul.f32.gmra.mxu0 %v996
        %v2539 = vpop.f32.mrf.mxu0
        %v2540 = vadd.f32 %v2475, %v2539
        %2541 = vmatmul.f32.gmra.mxu0 %v999
        %v2542 = vpop.f32.mrf.mxu0
        %v2543 = vadd.f32 %v2478, %v2542
        %2544 = vmatmul.f32.gmra.mxu0 %v1002
        %v2545 = vpop.f32.mrf.mxu0
        %v2546 = vadd.f32 %v2481, %v2545
        %2547 = vmatmul.f32.gmra.mxu0 %v1005
        %v2548 = vpop.f32.mrf.mxu0
        %v2549 = vadd.f32 %v2484, %v2548
        %2550 = vmatmul.f32.gmra.mxu0 %v1008
        %v2551 = vpop.f32.mrf.mxu0
        %v2552 = vadd.f32 %v2487, %v2551
        %2553 = vmatmul.f32.gmra.mxu0 %v1011
        %v2554 = vpop.f32.mrf.mxu0
        %v2555 = vadd.f32 %v2490, %v2554
        %2556 = vmatmul.f32.gmra.mxu0 %v1014
        %v2557 = vpop.f32.mrf.mxu0
        %v2558 = vadd.f32 %v2493, %v2557
        %2559 = vmatmul.f32.gmra.mxu0 %v1017
        %v2560 = vpop.f32.mrf.mxu0
        %v2561 = vadd.f32 %v2496, %v2560
        %2562 = vmatmul.f32.gmra.mxu0 %v1020
        %v2563 = vpop.f32.mrf.mxu0
        %v2564 = vadd.f32 %v2499, %v2563
        %2565 = vmatmul.f32.gmra.mxu0 %v1023
        %v2566 = vpop.f32.mrf.mxu0
        %v2567 = vadd.f32 %v2502, %v2566
        %2568 = vmatmul.f32.gmra.mxu0 %v1026
        %v2569 = vpop.f32.mrf.mxu0
        %v2570 = vadd.f32 %v2505, %v2569
        %2571 = vmatmul.f32.gmra.mxu0 %v1029
        %v2572 = vpop.f32.mrf.mxu0
        %v2573 = vadd.f32 %v2508, %v2572
        %2574 = vmatmul.f32.gmra.mxu0 %v1032
        %v2575 = vpop.f32.mrf.mxu0
        %v2576 = vadd.f32 %v2511, %v2575
        %2577 = vmatmul.f32.gmra.mxu0 %v1035
        %v2578 = vpop.f32.mrf.mxu0
        %v2579 = vadd.f32 %v2514, %v2578
        %2580 = vmatmul.f32.gmra.mxu0 %v1038
        %v2581 = vpop.f32.mrf.mxu0
        %v2582 = vadd.f32 %v2517, %v2581
        %2583 = vdwg.mxu0
        %2584 = vmatpush.msra.mxu0 %v1524
        %2585 = vmatpush.msra.mxu0 %v1492
        %2586 = vmatpush.msra.mxu0 %v1460
        %2587 = vmatpush.msra.mxu0 %v1428
        %2588 = vmatpush.msra.mxu0 %v1396
        %2589 = vmatpush.msra.mxu0 %v1364
        %2590 = vmatpush.msra.mxu0 %v1332
        %2591 = vmatpush.msra.mxu0 %v1300
        %2592 = vmatpush.msra.mxu0 %v1268
        %2593 = vmatpush.msra.mxu0 %v1236
        %2594 = vmatpush.msra.mxu0 %v1204
        %2595 = vmatpush.msra.mxu0 %v1172
        %2596 = vmatpush.msra.mxu0 %v1140
        %2597 = vmatpush.msra.mxu0 %v1108
        %2598 = vmatpush.msra.mxu0 %v1076
        %2599 = vmatpush.msra.mxu0 %v1044
        %2600 = vmatmul.f32.gmra.mxu0 %v733
        %v2601 = vpop.f32.mrf.mxu0
        %v2602 = vadd.f32 0.0, %v2601
        %2603 = vmatmul.f32.gmra.mxu0 %v736
        %v2604 = vpop.f32.mrf.mxu0
        %v2605 = vadd.f32 0.0, %v2604
        %2606 = vmatmul.f32.gmra.mxu0 %v739
        %v2607 = vpop.f32.mrf.mxu0
        %v2608 = vadd.f32 0.0, %v2607
        %2609 = vmatmul.f32.gmra.mxu0 %v742
        %v2610 = vpop.f32.mrf.mxu0
        %v2611 = vadd.f32 0.0, %v2610
        %2612 = vmatmul.f32.gmra.mxu0 %v745
        %v2613 = vpop.f32.mrf.mxu0
        %v2614 = vadd.f32 0.0, %v2613
        %2615 = vmatmul.f32.gmra.mxu0 %v748
        %v2616 = vpop.f32.mrf.mxu0
        %v2617 = vadd.f32 0.0, %v2616
        %2618 = vmatmul.f32.gmra.mxu0 %v751
        %v2619 = vpop.f32.mrf.mxu0
        %v2620 = vadd.f32 0.0, %v2619
        %2621 = vmatmul.f32.gmra.mxu0 %v754
        %v2622 = vpop.f32.mrf.mxu0
        %v2623 = vadd.f32 0.0, %v2622
        %2624 = vmatmul.f32.gmra.mxu0 %v757
        %v2625 = vpop.f32.mrf.mxu0
        %v2626 = vadd.f32 0.0, %v2625
        %2627 = vmatmul.f32.gmra.mxu0 %v760
        %v2628 = vpop.f32.mrf.mxu0
        %v2629 = vadd.f32 0.0, %v2628
        %2630 = vmatmul.f32.gmra.mxu0 %v763
        %v2631 = vpop.f32.mrf.mxu0
        %v2632 = vadd.f32 0.0, %v2631
        %2633 = vmatmul.f32.gmra.mxu0 %v766
        %v2634 = vpop.f32.mrf.mxu0
        %v2635 = vadd.f32 0.0, %v2634
        %2636 = vmatmul.f32.gmra.mxu0 %v769
        %v2637 = vpop.f32.mrf.mxu0
        %v2638 = vadd.f32 0.0, %v2637
        %2639 = vmatmul.f32.gmra.mxu0 %v772
        %v2640 = vpop.f32.mrf.mxu0
        %v2641 = vadd.f32 0.0, %v2640
        %2642 = vmatmul.f32.gmra.mxu0 %v775
        %v2643 = vpop.f32.mrf.mxu0
        %v2644 = vadd.f32 0.0, %v2643
        %2645 = vmatmul.f32.gmra.mxu0 %v778
        %v2646 = vpop.f32.mrf.mxu0
        %v2647 = vadd.f32 0.0, %v2646
        %2648 = vdwg.mxu0
        %2649 = vmatpush.msra.mxu0 %v2036
        %2650 = vmatpush.msra.mxu0 %v2004
        %2651 = vmatpush.msra.mxu0 %v1972
        %2652 = vmatpush.msra.mxu0 %v1940
        %2653 = vmatpush.msra.mxu0 %v1908
        %2654 = vmatpush.msra.mxu0 %v1876
        %2655 = vmatpush.msra.mxu0 %v1844
        %2656 = vmatpush.msra.mxu0 %v1812
        %2657 = vmatpush.msra.mxu0 %v1780
        %2658 = vmatpush.msra.mxu0 %v1748
        %2659 = vmatpush.msra.mxu0 %v1716
        %2660 = vmatpush.msra.mxu0 %v1684
        %2661 = vmatpush.msra.mxu0 %v1652
        %2662 = vmatpush.msra.mxu0 %v1620
        %2663 = vmatpush.msra.mxu0 %v1588
        %2664 = vmatpush.msra.mxu0 %v1556
        %2665 = vmatmul.f32.gmra.mxu0 %v993
        %v2666 = vpop.f32.mrf.mxu0
        %v2667 = vadd.f32 %v2602, %v2666
        %2668 = vmatmul.f32.gmra.mxu0 %v996
        %v2669 = vpop.f32.mrf.mxu0
        %v2670 = vadd.f32 %v2605, %v2669
        %2671 = vmatmul.f32.gmra.mxu0 %v999
        %v2672 = vpop.f32.mrf.mxu0
        %v2673 = vadd.f32 %v2608, %v2672
        %2674 = vmatmul.f32.gmra.mxu0 %v1002
        %v2675 = vpop.f32.mrf.mxu0
        %v2676 = vadd.f32 %v2611, %v2675
        %2677 = vmatmul.f32.gmra.mxu0 %v1005
        %v2678 = vpop.f32.mrf.mxu0
        %v2679 = vadd.f32 %v2614, %v2678
        %2680 = vmatmul.f32.gmra.mxu0 %v1008
        %v2681 = vpop.f32.mrf.mxu0
        %v2682 = vadd.f32 %v2617, %v2681
        %2683 = vmatmul.f32.gmra.mxu0 %v1011
        %v2684 = vpop.f32.mrf.mxu0
        %v2685 = vadd.f32 %v2620, %v2684
        %2686 = vmatmul.f32.gmra.mxu0 %v1014
        %v2687 = vpop.f32.mrf.mxu0
        %v2688 = vadd.f32 %v2623, %v2687
        %2689 = vmatmul.f32.gmra.mxu0 %v1017
        %v2690 = vpop.f32.mrf.mxu0
        %v2691 = vadd.f32 %v2626, %v2690
        %2692 = vmatmul.f32.gmra.mxu0 %v1020
        %v2693 = vpop.f32.mrf.mxu0
        %v2694 = vadd.f32 %v2629, %v2693
        %2695 = vmatmul.f32.gmra.mxu0 %v1023
        %v2696 = vpop.f32.mrf.mxu0
        %v2697 = vadd.f32 %v2632, %v2696
        %2698 = vmatmul.f32.gmra.mxu0 %v1026
        %v2699 = vpop.f32.mrf.mxu0
        %v2700 = vadd.f32 %v2635, %v2699
        %2701 = vmatmul.f32.gmra.mxu0 %v1029
        %v2702 = vpop.f32.mrf.mxu0
        %v2703 = vadd.f32 %v2638, %v2702
        %2704 = vmatmul.f32.gmra.mxu0 %v1032
        %v2705 = vpop.f32.mrf.mxu0
        %v2706 = vadd.f32 %v2641, %v2705
        %2707 = vmatmul.f32.gmra.mxu0 %v1035
        %v2708 = vpop.f32.mrf.mxu0
        %v2709 = vadd.f32 %v2644, %v2708
        %2710 = vmatmul.f32.gmra.mxu0 %v1038
        %v2711 = vpop.f32.mrf.mxu0
        %v2712 = vadd.f32 %v2647, %v2711
        %2713 = vdwg.mxu0
        %2714 = vmatpush.msra.mxu0 %v1525
        %2715 = vmatpush.msra.mxu0 %v1493
        %2716 = vmatpush.msra.mxu0 %v1461
        %2717 = vmatpush.msra.mxu0 %v1429
        %2718 = vmatpush.msra.mxu0 %v1397
        %2719 = vmatpush.msra.mxu0 %v1365
        %2720 = vmatpush.msra.mxu0 %v1333
        %2721 = vmatpush.msra.mxu0 %v1301
        %2722 = vmatpush.msra.mxu0 %v1269
        %2723 = vmatpush.msra.mxu0 %v1237
        %2724 = vmatpush.msra.mxu0 %v1205
        %2725 = vmatpush.msra.mxu0 %v1173
        %2726 = vmatpush.msra.mxu0 %v1141
        %2727 = vmatpush.msra.mxu0 %v1109
        %2728 = vmatpush.msra.mxu0 %v1077
        %2729 = vmatpush.msra.mxu0 %v1045
        %2730 = vmatmul.f32.gmra.mxu0 %v733
        %v2731 = vpop.f32.mrf.mxu0
        %v2732 = vadd.f32 0.0, %v2731
        %2733 = vmatmul.f32.gmra.mxu0 %v736
        %v2734 = vpop.f32.mrf.mxu0
        %v2735 = vadd.f32 0.0, %v2734
        %2736 = vmatmul.f32.gmra.mxu0 %v739
        %v2737 = vpop.f32.mrf.mxu0
        %v2738 = vadd.f32 0.0, %v2737
        %2739 = vmatmul.f32.gmra.mxu0 %v742
        %v2740 = vpop.f32.mrf.mxu0
        %v2741 = vadd.f32 0.0, %v2740
        %2742 = vmatmul.f32.gmra.mxu0 %v745
        %v2743 = vpop.f32.mrf.mxu0
        %v2744 = vadd.f32 0.0, %v2743
        %2745 = vmatmul.f32.gmra.mxu0 %v748
        %v2746 = vpop.f32.mrf.mxu0
        %v2747 = vadd.f32 0.0, %v2746
        %2748 = vmatmul.f32.gmra.mxu0 %v751
        %v2749 = vpop.f32.mrf.mxu0
        %v2750 = vadd.f32 0.0, %v2749
        %2751 = vmatmul.f32.gmra.mxu0 %v754
        %v2752 = vpop.f32.mrf.mxu0
        %v2753 = vadd.f32 0.0, %v2752
        %2754 = vmatmul.f32.gmra.mxu0 %v757
        %v2755 = vpop.f32.mrf.mxu0
        %v2756 = vadd.f32 0.0, %v2755
        %2757 = vmatmul.f32.gmra.mxu0 %v760
        %v2758 = vpop.f32.mrf.mxu0
        %v2759 = vadd.f32 0.0, %v2758
        %2760 = vmatmul.f32.gmra.mxu0 %v763
        %v2761 = vpop.f32.mrf.mxu0
        %v2762 = vadd.f32 0.0, %v2761
        %2763 = vmatmul.f32.gmra.mxu0 %v766
        %v2764 = vpop.f32.mrf.mxu0
        %v2765 = vadd.f32 0.0, %v2764
        %2766 = vmatmul.f32.gmra.mxu0 %v769
        %v2767 = vpop.f32.mrf.mxu0
        %v2768 = vadd.f32 0.0, %v2767
        %2769 = vmatmul.f32.gmra.mxu0 %v772
        %v2770 = vpop.f32.mrf.mxu0
        %v2771 = vadd.f32 0.0, %v2770
        %2772 = vmatmul.f32.gmra.mxu0 %v775
        %v2773 = vpop.f32.mrf.mxu0
        %v2774 = vadd.f32 0.0, %v2773
        %2775 = vmatmul.f32.gmra.mxu0 %v778
        %v2776 = vpop.f32.mrf.mxu0
        %v2777 = vadd.f32 0.0, %v2776
        %2778 = vdwg.mxu0
        %2779 = vmatpush.msra.mxu0 %v2037
        %2780 = vmatpush.msra.mxu0 %v2005
        %2781 = vmatpush.msra.mxu0 %v1973
        %2782 = vmatpush.msra.mxu0 %v1941
        %2783 = vmatpush.msra.mxu0 %v1909
        %2784 = vmatpush.msra.mxu0 %v1877
        %2785 = vmatpush.msra.mxu0 %v1845
        %2786 = vmatpush.msra.mxu0 %v1813
        %2787 = vmatpush.msra.mxu0 %v1781
        %2788 = vmatpush.msra.mxu0 %v1749
        %2789 = vmatpush.msra.mxu0 %v1717
        %2790 = vmatpush.msra.mxu0 %v1685
        %2791 = vmatpush.msra.mxu0 %v1653
        %2792 = vmatpush.msra.mxu0 %v1621
        %2793 = vmatpush.msra.mxu0 %v1589
        %2794 = vmatpush.msra.mxu0 %v1557
        %2795 = vmatmul.f32.gmra.mxu0 %v993
        %v2796 = vpop.f32.mrf.mxu0
        %v2797 = vadd.f32 %v2732, %v2796
        %2798 = vmatmul.f32.gmra.mxu0 %v996
        %v2799 = vpop.f32.mrf.mxu0
        %v2800 = vadd.f32 %v2735, %v2799
        %2801 = vmatmul.f32.gmra.mxu0 %v999
        %v2802 = vpop.f32.mrf.mxu0
        %v2803 = vadd.f32 %v2738, %v2802
        %2804 = vmatmul.f32.gmra.mxu0 %v1002
        %v2805 = vpop.f32.mrf.mxu0
        %v2806 = vadd.f32 %v2741, %v2805
        %2807 = vmatmul.f32.gmra.mxu0 %v1005
        %v2808 = vpop.f32.mrf.mxu0
        %v2809 = vadd.f32 %v2744, %v2808
        %2810 = vmatmul.f32.gmra.mxu0 %v1008
        %v2811 = vpop.f32.mrf.mxu0
        %v2812 = vadd.f32 %v2747, %v2811
        %2813 = vmatmul.f32.gmra.mxu0 %v1011
        %v2814 = vpop.f32.mrf.mxu0
        %v2815 = vadd.f32 %v2750, %v2814
        %2816 = vmatmul.f32.gmra.mxu0 %v1014
        %v2817 = vpop.f32.mrf.mxu0
        %v2818 = vadd.f32 %v2753, %v2817
        %2819 = vmatmul.f32.gmra.mxu0 %v1017
        %v2820 = vpop.f32.mrf.mxu0
        %v2821 = vadd.f32 %v2756, %v2820
        %2822 = vmatmul.f32.gmra.mxu0 %v1020
        %v2823 = vpop.f32.mrf.mxu0
        %v2824 = vadd.f32 %v2759, %v2823
        %2825 = vmatmul.f32.gmra.mxu0 %v1023
        %v2826 = vpop.f32.mrf.mxu0
        %v2827 = vadd.f32 %v2762, %v2826
        %2828 = vmatmul.f32.gmra.mxu0 %v1026
        %v2829 = vpop.f32.mrf.mxu0
        %v2830 = vadd.f32 %v2765, %v2829
        %2831 = vmatmul.f32.gmra.mxu0 %v1029
        %v2832 = vpop.f32.mrf.mxu0
        %v2833 = vadd.f32 %v2768, %v2832
        %2834 = vmatmul.f32.gmra.mxu0 %v1032
        %v2835 = vpop.f32.mrf.mxu0
        %v2836 = vadd.f32 %v2771, %v2835
        %2837 = vmatmul.f32.gmra.mxu0 %v1035
        %v2838 = vpop.f32.mrf.mxu0
        %v2839 = vadd.f32 %v2774, %v2838
        %2840 = vmatmul.f32.gmra.mxu0 %v1038
        %v2841 = vpop.f32.mrf.mxu0
        %v2842 = vadd.f32 %v2777, %v2841
        %2843 = vdwg.mxu0
        %2844 = vmatpush.msra.mxu0 %v1526
        %2845 = vmatpush.msra.mxu0 %v1494
        %2846 = vmatpush.msra.mxu0 %v1462
        %2847 = vmatpush.msra.mxu0 %v1430
        %2848 = vmatpush.msra.mxu0 %v1398
        %2849 = vmatpush.msra.mxu0 %v1366
        %2850 = vmatpush.msra.mxu0 %v1334
        %2851 = vmatpush.msra.mxu0 %v1302
        %2852 = vmatpush.msra.mxu0 %v1270
        %2853 = vmatpush.msra.mxu0 %v1238
        %2854 = vmatpush.msra.mxu0 %v1206
        %2855 = vmatpush.msra.mxu0 %v1174
        %2856 = vmatpush.msra.mxu0 %v1142
        %2857 = vmatpush.msra.mxu0 %v1110
        %2858 = vmatpush.msra.mxu0 %v1078
        %2859 = vmatpush.msra.mxu0 %v1046
        %2860 = vmatmul.f32.gmra.mxu0 %v733
        %v2861 = vpop.f32.mrf.mxu0
        %v2862 = vadd.f32 0.0, %v2861
        %2863 = vmatmul.f32.gmra.mxu0 %v736
        %v2864 = vpop.f32.mrf.mxu0
        %v2865 = vadd.f32 0.0, %v2864
        %2866 = vmatmul.f32.gmra.mxu0 %v739
        %v2867 = vpop.f32.mrf.mxu0
        %v2868 = vadd.f32 0.0, %v2867
        %2869 = vmatmul.f32.gmra.mxu0 %v742
        %v2870 = vpop.f32.mrf.mxu0
        %v2871 = vadd.f32 0.0, %v2870
        %2872 = vmatmul.f32.gmra.mxu0 %v745
        %v2873 = vpop.f32.mrf.mxu0
        %v2874 = vadd.f32 0.0, %v2873
        %2875 = vmatmul.f32.gmra.mxu0 %v748
        %v2876 = vpop.f32.mrf.mxu0
        %v2877 = vadd.f32 0.0, %v2876
        %2878 = vmatmul.f32.gmra.mxu0 %v751
        %v2879 = vpop.f32.mrf.mxu0
        %v2880 = vadd.f32 0.0, %v2879
        %2881 = vmatmul.f32.gmra.mxu0 %v754
        %v2882 = vpop.f32.mrf.mxu0
        %v2883 = vadd.f32 0.0, %v2882
        %2884 = vmatmul.f32.gmra.mxu0 %v757
        %v2885 = vpop.f32.mrf.mxu0
        %v2886 = vadd.f32 0.0, %v2885
        %2887 = vmatmul.f32.gmra.mxu0 %v760
        %v2888 = vpop.f32.mrf.mxu0
        %v2889 = vadd.f32 0.0, %v2888
        %2890 = vmatmul.f32.gmra.mxu0 %v763
        %v2891 = vpop.f32.mrf.mxu0
        %v2892 = vadd.f32 0.0, %v2891
        %2893 = vmatmul.f32.gmra.mxu0 %v766
        %v2894 = vpop.f32.mrf.mxu0
        %v2895 = vadd.f32 0.0, %v2894
        %2896 = vmatmul.f32.gmra.mxu0 %v769
        %v2897 = vpop.f32.mrf.mxu0
        %v2898 = vadd.f32 0.0, %v2897
        %2899 = vmatmul.f32.gmra.mxu0 %v772
        %v2900 = vpop.f32.mrf.mxu0
        %v2901 = vadd.f32 0.0, %v2900
        %2902 = vmatmul.f32.gmra.mxu0 %v775
        %v2903 = vpop.f32.mrf.mxu0
        %v2904 = vadd.f32 0.0, %v2903
        %2905 = vmatmul.f32.gmra.mxu0 %v778
        %v2906 = vpop.f32.mrf.mxu0
        %v2907 = vadd.f32 0.0, %v2906
        %2908 = vdwg.mxu0
        %2909 = vmatpush.msra.mxu0 %v2038
        %2910 = vmatpush.msra.mxu0 %v2006
        %2911 = vmatpush.msra.mxu0 %v1974
        %2912 = vmatpush.msra.mxu0 %v1942
        %2913 = vmatpush.msra.mxu0 %v1910
        %2914 = vmatpush.msra.mxu0 %v1878
        %2915 = vmatpush.msra.mxu0 %v1846
        %2916 = vmatpush.msra.mxu0 %v1814
        %2917 = vmatpush.msra.mxu0 %v1782
        %2918 = vmatpush.msra.mxu0 %v1750
        %2919 = vmatpush.msra.mxu0 %v1718
        %2920 = vmatpush.msra.mxu0 %v1686
        %2921 = vmatpush.msra.mxu0 %v1654
        %2922 = vmatpush.msra.mxu0 %v1622
        %2923 = vmatpush.msra.mxu0 %v1590
        %2924 = vmatpush.msra.mxu0 %v1558
        %2925 = vmatmul.f32.gmra.mxu0 %v993
        %v2926 = vpop.f32.mrf.mxu0
        %v2927 = vadd.f32 %v2862, %v2926
        %2928 = vmatmul.f32.gmra.mxu0 %v996
        %v2929 = vpop.f32.mrf.mxu0
        %v2930 = vadd.f32 %v2865, %v2929
        %2931 = vmatmul.f32.gmra.mxu0 %v999
        %v2932 = vpop.f32.mrf.mxu0
        %v2933 = vadd.f32 %v2868, %v2932
        %2934 = vmatmul.f32.gmra.mxu0 %v1002
        %v2935 = vpop.f32.mrf.mxu0
        %v2936 = vadd.f32 %v2871, %v2935
        %2937 = vmatmul.f32.gmra.mxu0 %v1005
        %v2938 = vpop.f32.mrf.mxu0
        %v2939 = vadd.f32 %v2874, %v2938
        %2940 = vmatmul.f32.gmra.mxu0 %v1008
        %v2941 = vpop.f32.mrf.mxu0
        %v2942 = vadd.f32 %v2877, %v2941
        %2943 = vmatmul.f32.gmra.mxu0 %v1011
        %v2944 = vpop.f32.mrf.mxu0
        %v2945 = vadd.f32 %v2880, %v2944
        %2946 = vmatmul.f32.gmra.mxu0 %v1014
        %v2947 = vpop.f32.mrf.mxu0
        %v2948 = vadd.f32 %v2883, %v2947
        %2949 = vmatmul.f32.gmra.mxu0 %v1017
        %v2950 = vpop.f32.mrf.mxu0
        %v2951 = vadd.f32 %v2886, %v2950
        %2952 = vmatmul.f32.gmra.mxu0 %v1020
        %v2953 = vpop.f32.mrf.mxu0
        %v2954 = vadd.f32 %v2889, %v2953
        %2955 = vmatmul.f32.gmra.mxu0 %v1023
        %v2956 = vpop.f32.mrf.mxu0
        %v2957 = vadd.f32 %v2892, %v2956
        %2958 = vmatmul.f32.gmra.mxu0 %v1026
        %v2959 = vpop.f32.mrf.mxu0
        %v2960 = vadd.f32 %v2895, %v2959
        %2961 = vmatmul.f32.gmra.mxu0 %v1029
        %v2962 = vpop.f32.mrf.mxu0
        %v2963 = vadd.f32 %v2898, %v2962
        %2964 = vmatmul.f32.gmra.mxu0 %v1032
        %v2965 = vpop.f32.mrf.mxu0
        %v2966 = vadd.f32 %v2901, %v2965
        %2967 = vmatmul.f32.gmra.mxu0 %v1035
        %v2968 = vpop.f32.mrf.mxu0
        %v2969 = vadd.f32 %v2904, %v2968
        %2970 = vmatmul.f32.gmra.mxu0 %v1038
        %v2971 = vpop.f32.mrf.mxu0
        %v2972 = vadd.f32 %v2907, %v2971
        %2973 = vdwg.mxu0
        %2974 = vmatpush.msra.mxu0 %v1527
        %2975 = vmatpush.msra.mxu0 %v1495
        %2976 = vmatpush.msra.mxu0 %v1463
        %2977 = vmatpush.msra.mxu0 %v1431
        %2978 = vmatpush.msra.mxu0 %v1399
        %2979 = vmatpush.msra.mxu0 %v1367
        %2980 = vmatpush.msra.mxu0 %v1335
        %2981 = vmatpush.msra.mxu0 %v1303
        %2982 = vmatpush.msra.mxu0 %v1271
        %2983 = vmatpush.msra.mxu0 %v1239
        %2984 = vmatpush.msra.mxu0 %v1207
        %2985 = vmatpush.msra.mxu0 %v1175
        %2986 = vmatpush.msra.mxu0 %v1143
        %2987 = vmatpush.msra.mxu0 %v1111
        %2988 = vmatpush.msra.mxu0 %v1079
        %2989 = vmatpush.msra.mxu0 %v1047
        %2990 = vmatmul.f32.gmra.mxu0 %v733
        %v2991 = vpop.f32.mrf.mxu0
        %v2992 = vadd.f32 0.0, %v2991
        %2993 = vmatmul.f32.gmra.mxu0 %v736
        %v2994 = vpop.f32.mrf.mxu0
        %v2995 = vadd.f32 0.0, %v2994
        %2996 = vmatmul.f32.gmra.mxu0 %v739
        %v2997 = vpop.f32.mrf.mxu0
        %v2998 = vadd.f32 0.0, %v2997
        %2999 = vmatmul.f32.gmra.mxu0 %v742
        %v3000 = vpop.f32.mrf.mxu0
        %v3001 = vadd.f32 0.0, %v3000
        %3002 = vmatmul.f32.gmra.mxu0 %v745
        %v3003 = vpop.f32.mrf.mxu0
        %v3004 = vadd.f32 0.0, %v3003
        %3005 = vmatmul.f32.gmra.mxu0 %v748
        %v3006 = vpop.f32.mrf.mxu0
        %v3007 = vadd.f32 0.0, %v3006
        %3008 = vmatmul.f32.gmra.mxu0 %v751
        %v3009 = vpop.f32.mrf.mxu0
        %v3010 = vadd.f32 0.0, %v3009
        %3011 = vmatmul.f32.gmra.mxu0 %v754
        %v3012 = vpop.f32.mrf.mxu0
        %v3013 = vadd.f32 0.0, %v3012
        %3014 = vmatmul.f32.gmra.mxu0 %v757
        %v3015 = vpop.f32.mrf.mxu0
        %v3016 = vadd.f32 0.0, %v3015
        %3017 = vmatmul.f32.gmra.mxu0 %v760
        %v3018 = vpop.f32.mrf.mxu0
        %v3019 = vadd.f32 0.0, %v3018
        %3020 = vmatmul.f32.gmra.mxu0 %v763
        %v3021 = vpop.f32.mrf.mxu0
        %v3022 = vadd.f32 0.0, %v3021
        %3023 = vmatmul.f32.gmra.mxu0 %v766
        %v3024 = vpop.f32.mrf.mxu0
        %v3025 = vadd.f32 0.0, %v3024
        %3026 = vmatmul.f32.gmra.mxu0 %v769
        %v3027 = vpop.f32.mrf.mxu0
        %v3028 = vadd.f32 0.0, %v3027
        %3029 = vmatmul.f32.gmra.mxu0 %v772
        %v3030 = vpop.f32.mrf.mxu0
        %v3031 = vadd.f32 0.0, %v3030
        %3032 = vmatmul.f32.gmra.mxu0 %v775
        %v3033 = vpop.f32.mrf.mxu0
        %v3034 = vadd.f32 0.0, %v3033
        %3035 = vmatmul.f32.gmra.mxu0 %v778
        %v3036 = vpop.f32.mrf.mxu0
        %v3037 = vadd.f32 0.0, %v3036
        %3038 = vdwg.mxu0
        %3039 = vmatpush.msra.mxu0 %v2039
        %3040 = vmatpush.msra.mxu0 %v2007
        %3041 = vmatpush.msra.mxu0 %v1975
        %3042 = vmatpush.msra.mxu0 %v1943
        %3043 = vmatpush.msra.mxu0 %v1911
        %3044 = vmatpush.msra.mxu0 %v1879
        %3045 = vmatpush.msra.mxu0 %v1847
        %3046 = vmatpush.msra.mxu0 %v1815
        %3047 = vmatpush.msra.mxu0 %v1783
        %3048 = vmatpush.msra.mxu0 %v1751
        %3049 = vmatpush.msra.mxu0 %v1719
        %3050 = vmatpush.msra.mxu0 %v1687
        %3051 = vmatpush.msra.mxu0 %v1655
        %3052 = vmatpush.msra.mxu0 %v1623
        %3053 = vmatpush.msra.mxu0 %v1591
        %3054 = vmatpush.msra.mxu0 %v1559
        %3055 = vmatmul.f32.gmra.mxu0 %v993
        %v3056 = vpop.f32.mrf.mxu0
        %v3057 = vadd.f32 %v2992, %v3056
        %3058 = vmatmul.f32.gmra.mxu0 %v996
        %v3059 = vpop.f32.mrf.mxu0
        %v3060 = vadd.f32 %v2995, %v3059
        %3061 = vmatmul.f32.gmra.mxu0 %v999
        %v3062 = vpop.f32.mrf.mxu0
        %v3063 = vadd.f32 %v2998, %v3062
        %3064 = vmatmul.f32.gmra.mxu0 %v1002
        %v3065 = vpop.f32.mrf.mxu0
        %v3066 = vadd.f32 %v3001, %v3065
        %3067 = vmatmul.f32.gmra.mxu0 %v1005
        %v3068 = vpop.f32.mrf.mxu0
        %v3069 = vadd.f32 %v3004, %v3068
        %3070 = vmatmul.f32.gmra.mxu0 %v1008
        %v3071 = vpop.f32.mrf.mxu0
        %v3072 = vadd.f32 %v3007, %v3071
        %3073 = vmatmul.f32.gmra.mxu0 %v1011
        %v3074 = vpop.f32.mrf.mxu0
        %v3075 = vadd.f32 %v3010, %v3074
        %3076 = vmatmul.f32.gmra.mxu0 %v1014
        %v3077 = vpop.f32.mrf.mxu0
        %v3078 = vadd.f32 %v3013, %v3077
        %3079 = vmatmul.f32.gmra.mxu0 %v1017
        %v3080 = vpop.f32.mrf.mxu0
        %v3081 = vadd.f32 %v3016, %v3080
        %3082 = vmatmul.f32.gmra.mxu0 %v1020
        %v3083 = vpop.f32.mrf.mxu0
        %v3084 = vadd.f32 %v3019, %v3083
        %3085 = vmatmul.f32.gmra.mxu0 %v1023
        %v3086 = vpop.f32.mrf.mxu0
        %v3087 = vadd.f32 %v3022, %v3086
        %3088 = vmatmul.f32.gmra.mxu0 %v1026
        %v3089 = vpop.f32.mrf.mxu0
        %v3090 = vadd.f32 %v3025, %v3089
        %3091 = vmatmul.f32.gmra.mxu0 %v1029
        %v3092 = vpop.f32.mrf.mxu0
        %v3093 = vadd.f32 %v3028, %v3092
        %3094 = vmatmul.f32.gmra.mxu0 %v1032
        %v3095 = vpop.f32.mrf.mxu0
        %v3096 = vadd.f32 %v3031, %v3095
        %3097 = vmatmul.f32.gmra.mxu0 %v1035
        %v3098 = vpop.f32.mrf.mxu0
        %v3099 = vadd.f32 %v3034, %v3098
        %3100 = vmatmul.f32.gmra.mxu0 %v1038
        %v3101 = vpop.f32.mrf.mxu0
        %v3102 = vadd.f32 %v3037, %v3101
        %3103 = vdwg.mxu0
        %3104 = vmatpush.msra.mxu0 %v1528
        %3105 = vmatpush.msra.mxu0 %v1496
        %3106 = vmatpush.msra.mxu0 %v1464
        %3107 = vmatpush.msra.mxu0 %v1432
        %3108 = vmatpush.msra.mxu0 %v1400
        %3109 = vmatpush.msra.mxu0 %v1368
        %3110 = vmatpush.msra.mxu0 %v1336
        %3111 = vmatpush.msra.mxu0 %v1304
        %3112 = vmatpush.msra.mxu0 %v1272
        %3113 = vmatpush.msra.mxu0 %v1240
        %3114 = vmatpush.msra.mxu0 %v1208
        %3115 = vmatpush.msra.mxu0 %v1176
        %3116 = vmatpush.msra.mxu0 %v1144
        %3117 = vmatpush.msra.mxu0 %v1112
        %3118 = vmatpush.msra.mxu0 %v1080
        %3119 = vmatpush.msra.mxu0 %v1048
        %3120 = vmatmul.f32.gmra.mxu0 %v733
        %v3121 = vpop.f32.mrf.mxu0
        %v3122 = vadd.f32 0.0, %v3121
        %3123 = vmatmul.f32.gmra.mxu0 %v736
        %v3124 = vpop.f32.mrf.mxu0
        %v3125 = vadd.f32 0.0, %v3124
        %3126 = vmatmul.f32.gmra.mxu0 %v739
        %v3127 = vpop.f32.mrf.mxu0
        %v3128 = vadd.f32 0.0, %v3127
        %3129 = vmatmul.f32.gmra.mxu0 %v742
        %v3130 = vpop.f32.mrf.mxu0
        %v3131 = vadd.f32 0.0, %v3130
        %3132 = vmatmul.f32.gmra.mxu0 %v745
        %v3133 = vpop.f32.mrf.mxu0
        %v3134 = vadd.f32 0.0, %v3133
        %3135 = vmatmul.f32.gmra.mxu0 %v748
        %v3136 = vpop.f32.mrf.mxu0
        %v3137 = vadd.f32 0.0, %v3136
        %3138 = vmatmul.f32.gmra.mxu0 %v751
        %v3139 = vpop.f32.mrf.mxu0
        %v3140 = vadd.f32 0.0, %v3139
        %3141 = vmatmul.f32.gmra.mxu0 %v754
        %v3142 = vpop.f32.mrf.mxu0
        %v3143 = vadd.f32 0.0, %v3142
        %3144 = vmatmul.f32.gmra.mxu0 %v757
        %v3145 = vpop.f32.mrf.mxu0
        %v3146 = vadd.f32 0.0, %v3145
        %3147 = vmatmul.f32.gmra.mxu0 %v760
        %v3148 = vpop.f32.mrf.mxu0
        %v3149 = vadd.f32 0.0, %v3148
        %3150 = vmatmul.f32.gmra.mxu0 %v763
        %v3151 = vpop.f32.mrf.mxu0
        %v3152 = vadd.f32 0.0, %v3151
        %3153 = vmatmul.f32.gmra.mxu0 %v766
        %v3154 = vpop.f32.mrf.mxu0
        %v3155 = vadd.f32 0.0, %v3154
        %3156 = vmatmul.f32.gmra.mxu0 %v769
        %v3157 = vpop.f32.mrf.mxu0
        %v3158 = vadd.f32 0.0, %v3157
        %3159 = vmatmul.f32.gmra.mxu0 %v772
        %v3160 = vpop.f32.mrf.mxu0
        %v3161 = vadd.f32 0.0, %v3160
        %3162 = vmatmul.f32.gmra.mxu0 %v775
        %v3163 = vpop.f32.mrf.mxu0
        %v3164 = vadd.f32 0.0, %v3163
        %3165 = vmatmul.f32.gmra.mxu0 %v778
        %v3166 = vpop.f32.mrf.mxu0
        %v3167 = vadd.f32 0.0, %v3166
        %3168 = vdwg.mxu0
        %3169 = vmatpush.msra.mxu0 %v2040
        %3170 = vmatpush.msra.mxu0 %v2008
        %3171 = vmatpush.msra.mxu0 %v1976
        %3172 = vmatpush.msra.mxu0 %v1944
        %3173 = vmatpush.msra.mxu0 %v1912
        %3174 = vmatpush.msra.mxu0 %v1880
        %3175 = vmatpush.msra.mxu0 %v1848
        %3176 = vmatpush.msra.mxu0 %v1816
        %3177 = vmatpush.msra.mxu0 %v1784
        %3178 = vmatpush.msra.mxu0 %v1752
        %3179 = vmatpush.msra.mxu0 %v1720
        %3180 = vmatpush.msra.mxu0 %v1688
        %3181 = vmatpush.msra.mxu0 %v1656
        %3182 = vmatpush.msra.mxu0 %v1624
        %3183 = vmatpush.msra.mxu0 %v1592
        %3184 = vmatpush.msra.mxu0 %v1560
        %3185 = vmatmul.f32.gmra.mxu0 %v993
        %v3186 = vpop.f32.mrf.mxu0
        %v3187 = vadd.f32 %v3122, %v3186
        %3188 = vmatmul.f32.gmra.mxu0 %v996
        %v3189 = vpop.f32.mrf.mxu0
        %v3190 = vadd.f32 %v3125, %v3189
        %3191 = vmatmul.f32.gmra.mxu0 %v999
        %v3192 = vpop.f32.mrf.mxu0
        %v3193 = vadd.f32 %v3128, %v3192
        %3194 = vmatmul.f32.gmra.mxu0 %v1002
        %v3195 = vpop.f32.mrf.mxu0
        %v3196 = vadd.f32 %v3131, %v3195
        %3197 = vmatmul.f32.gmra.mxu0 %v1005
        %v3198 = vpop.f32.mrf.mxu0
        %v3199 = vadd.f32 %v3134, %v3198
        %3200 = vmatmul.f32.gmra.mxu0 %v1008
        %v3201 = vpop.f32.mrf.mxu0
        %v3202 = vadd.f32 %v3137, %v3201
        %3203 = vmatmul.f32.gmra.mxu0 %v1011
        %v3204 = vpop.f32.mrf.mxu0
        %v3205 = vadd.f32 %v3140, %v3204
        %3206 = vmatmul.f32.gmra.mxu0 %v1014
        %v3207 = vpop.f32.mrf.mxu0
        %v3208 = vadd.f32 %v3143, %v3207
        %3209 = vmatmul.f32.gmra.mxu0 %v1017
        %v3210 = vpop.f32.mrf.mxu0
        %v3211 = vadd.f32 %v3146, %v3210
        %3212 = vmatmul.f32.gmra.mxu0 %v1020
        %v3213 = vpop.f32.mrf.mxu0
        %v3214 = vadd.f32 %v3149, %v3213
        %3215 = vmatmul.f32.gmra.mxu0 %v1023
        %v3216 = vpop.f32.mrf.mxu0
        %v3217 = vadd.f32 %v3152, %v3216
        %3218 = vmatmul.f32.gmra.mxu0 %v1026
        %v3219 = vpop.f32.mrf.mxu0
        %v3220 = vadd.f32 %v3155, %v3219
        %3221 = vmatmul.f32.gmra.mxu0 %v1029
        %v3222 = vpop.f32.mrf.mxu0
        %v3223 = vadd.f32 %v3158, %v3222
        %3224 = vmatmul.f32.gmra.mxu0 %v1032
        %v3225 = vpop.f32.mrf.mxu0
        %v3226 = vadd.f32 %v3161, %v3225
        %3227 = vmatmul.f32.gmra.mxu0 %v1035
        %v3228 = vpop.f32.mrf.mxu0
        %v3229 = vadd.f32 %v3164, %v3228
        %3230 = vmatmul.f32.gmra.mxu0 %v1038
        %v3231 = vpop.f32.mrf.mxu0
        %v3232 = vadd.f32 %v3167, %v3231
        %3233 = vdwg.mxu0
        %3234 = vmatpush.msra.mxu0 %v1529
        %3235 = vmatpush.msra.mxu0 %v1497
        %3236 = vmatpush.msra.mxu0 %v1465
        %3237 = vmatpush.msra.mxu0 %v1433
        %3238 = vmatpush.msra.mxu0 %v1401
        %3239 = vmatpush.msra.mxu0 %v1369
        %3240 = vmatpush.msra.mxu0 %v1337
        %3241 = vmatpush.msra.mxu0 %v1305
        %3242 = vmatpush.msra.mxu0 %v1273
        %3243 = vmatpush.msra.mxu0 %v1241
        %3244 = vmatpush.msra.mxu0 %v1209
        %3245 = vmatpush.msra.mxu0 %v1177
        %3246 = vmatpush.msra.mxu0 %v1145
        %3247 = vmatpush.msra.mxu0 %v1113
        %3248 = vmatpush.msra.mxu0 %v1081
        %3249 = vmatpush.msra.mxu0 %v1049
        %3250 = vmatmul.f32.gmra.mxu0 %v733
        %v3251 = vpop.f32.mrf.mxu0
        %v3252 = vadd.f32 0.0, %v3251
        %3253 = vmatmul.f32.gmra.mxu0 %v736
        %v3254 = vpop.f32.mrf.mxu0
        %v3255 = vadd.f32 0.0, %v3254
        %3256 = vmatmul.f32.gmra.mxu0 %v739
        %v3257 = vpop.f32.mrf.mxu0
        %v3258 = vadd.f32 0.0, %v3257
        %3259 = vmatmul.f32.gmra.mxu0 %v742
        %v3260 = vpop.f32.mrf.mxu0
        %v3261 = vadd.f32 0.0, %v3260
        %3262 = vmatmul.f32.gmra.mxu0 %v745
        %v3263 = vpop.f32.mrf.mxu0
        %v3264 = vadd.f32 0.0, %v3263
        %3265 = vmatmul.f32.gmra.mxu0 %v748
        %v3266 = vpop.f32.mrf.mxu0
        %v3267 = vadd.f32 0.0, %v3266
        %3268 = vmatmul.f32.gmra.mxu0 %v751
        %v3269 = vpop.f32.mrf.mxu0
        %v3270 = vadd.f32 0.0, %v3269
        %3271 = vmatmul.f32.gmra.mxu0 %v754
        %v3272 = vpop.f32.mrf.mxu0
        %v3273 = vadd.f32 0.0, %v3272
        %3274 = vmatmul.f32.gmra.mxu0 %v757
        %v3275 = vpop.f32.mrf.mxu0
        %v3276 = vadd.f32 0.0, %v3275
        %3277 = vmatmul.f32.gmra.mxu0 %v760
        %v3278 = vpop.f32.mrf.mxu0
        %v3279 = vadd.f32 0.0, %v3278
        %3280 = vmatmul.f32.gmra.mxu0 %v763
        %v3281 = vpop.f32.mrf.mxu0
        %v3282 = vadd.f32 0.0, %v3281
        %3283 = vmatmul.f32.gmra.mxu0 %v766
        %v3284 = vpop.f32.mrf.mxu0
        %v3285 = vadd.f32 0.0, %v3284
        %3286 = vmatmul.f32.gmra.mxu0 %v769
        %v3287 = vpop.f32.mrf.mxu0
        %v3288 = vadd.f32 0.0, %v3287
        %3289 = vmatmul.f32.gmra.mxu0 %v772
        %v3290 = vpop.f32.mrf.mxu0
        %v3291 = vadd.f32 0.0, %v3290
        %3292 = vmatmul.f32.gmra.mxu0 %v775
        %v3293 = vpop.f32.mrf.mxu0
        %v3294 = vadd.f32 0.0, %v3293
        %3295 = vmatmul.f32.gmra.mxu0 %v778
        %v3296 = vpop.f32.mrf.mxu0
        %v3297 = vadd.f32 0.0, %v3296
        %3298 = vdwg.mxu0
        %3299 = vmatpush.msra.mxu0 %v2041
        %3300 = vmatpush.msra.mxu0 %v2009
        %3301 = vmatpush.msra.mxu0 %v1977
        %3302 = vmatpush.msra.mxu0 %v1945
        %3303 = vmatpush.msra.mxu0 %v1913
        %3304 = vmatpush.msra.mxu0 %v1881
        %3305 = vmatpush.msra.mxu0 %v1849
        %3306 = vmatpush.msra.mxu0 %v1817
        %3307 = vmatpush.msra.mxu0 %v1785
        %3308 = vmatpush.msra.mxu0 %v1753
        %3309 = vmatpush.msra.mxu0 %v1721
        %3310 = vmatpush.msra.mxu0 %v1689
        %3311 = vmatpush.msra.mxu0 %v1657
        %3312 = vmatpush.msra.mxu0 %v1625
        %3313 = vmatpush.msra.mxu0 %v1593
        %3314 = vmatpush.msra.mxu0 %v1561
        %3315 = vmatmul.f32.gmra.mxu0 %v993
        %v3316 = vpop.f32.mrf.mxu0
        %v3317 = vadd.f32 %v3252, %v3316
        %3318 = vmatmul.f32.gmra.mxu0 %v996
        %v3319 = vpop.f32.mrf.mxu0
        %v3320 = vadd.f32 %v3255, %v3319
        %3321 = vmatmul.f32.gmra.mxu0 %v999
        %v3322 = vpop.f32.mrf.mxu0
        %v3323 = vadd.f32 %v3258, %v3322
        %3324 = vmatmul.f32.gmra.mxu0 %v1002
        %v3325 = vpop.f32.mrf.mxu0
        %v3326 = vadd.f32 %v3261, %v3325
        %3327 = vmatmul.f32.gmra.mxu0 %v1005
        %v3328 = vpop.f32.mrf.mxu0
        %v3329 = vadd.f32 %v3264, %v3328
        %3330 = vmatmul.f32.gmra.mxu0 %v1008
        %v3331 = vpop.f32.mrf.mxu0
        %v3332 = vadd.f32 %v3267, %v3331
        %3333 = vmatmul.f32.gmra.mxu0 %v1011
        %v3334 = vpop.f32.mrf.mxu0
        %v3335 = vadd.f32 %v3270, %v3334
        %3336 = vmatmul.f32.gmra.mxu0 %v1014
        %v3337 = vpop.f32.mrf.mxu0
        %v3338 = vadd.f32 %v3273, %v3337
        %3339 = vmatmul.f32.gmra.mxu0 %v1017
        %v3340 = vpop.f32.mrf.mxu0
        %v3341 = vadd.f32 %v3276, %v3340
        %3342 = vmatmul.f32.gmra.mxu0 %v1020
        %v3343 = vpop.f32.mrf.mxu0
        %v3344 = vadd.f32 %v3279, %v3343
        %3345 = vmatmul.f32.gmra.mxu0 %v1023
        %v3346 = vpop.f32.mrf.mxu0
        %v3347 = vadd.f32 %v3282, %v3346
        %3348 = vmatmul.f32.gmra.mxu0 %v1026
        %v3349 = vpop.f32.mrf.mxu0
        %v3350 = vadd.f32 %v3285, %v3349
        %3351 = vmatmul.f32.gmra.mxu0 %v1029
        %v3352 = vpop.f32.mrf.mxu0
        %v3353 = vadd.f32 %v3288, %v3352
        %3354 = vmatmul.f32.gmra.mxu0 %v1032
        %v3355 = vpop.f32.mrf.mxu0
        %v3356 = vadd.f32 %v3291, %v3355
        %3357 = vmatmul.f32.gmra.mxu0 %v1035
        %v3358 = vpop.f32.mrf.mxu0
        %v3359 = vadd.f32 %v3294, %v3358
        %3360 = vmatmul.f32.gmra.mxu0 %v1038
        %v3361 = vpop.f32.mrf.mxu0
        %v3362 = vadd.f32 %v3297, %v3361
        %3363 = vdwg.mxu0
        %3364 = vmatpush.msra.mxu0 %v1530
        %3365 = vmatpush.msra.mxu0 %v1498
        %3366 = vmatpush.msra.mxu0 %v1466
        %3367 = vmatpush.msra.mxu0 %v1434
        %3368 = vmatpush.msra.mxu0 %v1402
        %3369 = vmatpush.msra.mxu0 %v1370
        %3370 = vmatpush.msra.mxu0 %v1338
        %3371 = vmatpush.msra.mxu0 %v1306
        %3372 = vmatpush.msra.mxu0 %v1274
        %3373 = vmatpush.msra.mxu0 %v1242
        %3374 = vmatpush.msra.mxu0 %v1210
        %3375 = vmatpush.msra.mxu0 %v1178
        %3376 = vmatpush.msra.mxu0 %v1146
        %3377 = vmatpush.msra.mxu0 %v1114
        %3378 = vmatpush.msra.mxu0 %v1082
        %3379 = vmatpush.msra.mxu0 %v1050
        %3380 = vmatmul.f32.gmra.mxu0 %v733
        %v3381 = vpop.f32.mrf.mxu0
        %v3382 = vadd.f32 0.0, %v3381
        %3383 = vmatmul.f32.gmra.mxu0 %v736
        %v3384 = vpop.f32.mrf.mxu0
        %v3385 = vadd.f32 0.0, %v3384
        %3386 = vmatmul.f32.gmra.mxu0 %v739
        %v3387 = vpop.f32.mrf.mxu0
        %v3388 = vadd.f32 0.0, %v3387
        %3389 = vmatmul.f32.gmra.mxu0 %v742
        %v3390 = vpop.f32.mrf.mxu0
        %v3391 = vadd.f32 0.0, %v3390
        %3392 = vmatmul.f32.gmra.mxu0 %v745
        %v3393 = vpop.f32.mrf.mxu0
        %v3394 = vadd.f32 0.0, %v3393
        %3395 = vmatmul.f32.gmra.mxu0 %v748
        %v3396 = vpop.f32.mrf.mxu0
        %v3397 = vadd.f32 0.0, %v3396
        %3398 = vmatmul.f32.gmra.mxu0 %v751
        %v3399 = vpop.f32.mrf.mxu0
        %v3400 = vadd.f32 0.0, %v3399
        %3401 = vmatmul.f32.gmra.mxu0 %v754
        %v3402 = vpop.f32.mrf.mxu0
        %v3403 = vadd.f32 0.0, %v3402
        %3404 = vmatmul.f32.gmra.mxu0 %v757
        %v3405 = vpop.f32.mrf.mxu0
        %v3406 = vadd.f32 0.0, %v3405
        %3407 = vmatmul.f32.gmra.mxu0 %v760
        %v3408 = vpop.f32.mrf.mxu0
        %v3409 = vadd.f32 0.0, %v3408
        %3410 = vmatmul.f32.gmra.mxu0 %v763
        %v3411 = vpop.f32.mrf.mxu0
        %v3412 = vadd.f32 0.0, %v3411
        %3413 = vmatmul.f32.gmra.mxu0 %v766
        %v3414 = vpop.f32.mrf.mxu0
        %v3415 = vadd.f32 0.0, %v3414
        %3416 = vmatmul.f32.gmra.mxu0 %v769
        %v3417 = vpop.f32.mrf.mxu0
        %v3418 = vadd.f32 0.0, %v3417
        %3419 = vmatmul.f32.gmra.mxu0 %v772
        %v3420 = vpop.f32.mrf.mxu0
        %v3421 = vadd.f32 0.0, %v3420
        %3422 = vmatmul.f32.gmra.mxu0 %v775
        %v3423 = vpop.f32.mrf.mxu0
        %v3424 = vadd.f32 0.0, %v3423
        %3425 = vmatmul.f32.gmra.mxu0 %v778
        %v3426 = vpop.f32.mrf.mxu0
        %v3427 = vadd.f32 0.0, %v3426
        %3428 = vdwg.mxu0
        %3429 = vmatpush.msra.mxu0 %v2042
        %3430 = vmatpush.msra.mxu0 %v2010
        %3431 = vmatpush.msra.mxu0 %v1978
        %3432 = vmatpush.msra.mxu0 %v1946
        %3433 = vmatpush.msra.mxu0 %v1914
        %3434 = vmatpush.msra.mxu0 %v1882
        %3435 = vmatpush.msra.mxu0 %v1850
        %3436 = vmatpush.msra.mxu0 %v1818
        %3437 = vmatpush.msra.mxu0 %v1786
        %3438 = vmatpush.msra.mxu0 %v1754
        %3439 = vmatpush.msra.mxu0 %v1722
        %3440 = vmatpush.msra.mxu0 %v1690
        %3441 = vmatpush.msra.mxu0 %v1658
        %3442 = vmatpush.msra.mxu0 %v1626
        %3443 = vmatpush.msra.mxu0 %v1594
        %3444 = vmatpush.msra.mxu0 %v1562
        %3445 = vmatmul.f32.gmra.mxu0 %v993
        %v3446 = vpop.f32.mrf.mxu0
        %v3447 = vadd.f32 %v3382, %v3446
        %3448 = vmatmul.f32.gmra.mxu0 %v996
        %v3449 = vpop.f32.mrf.mxu0
        %v3450 = vadd.f32 %v3385, %v3449
        %3451 = vmatmul.f32.gmra.mxu0 %v999
        %v3452 = vpop.f32.mrf.mxu0
        %v3453 = vadd.f32 %v3388, %v3452
        %3454 = vmatmul.f32.gmra.mxu0 %v1002
        %v3455 = vpop.f32.mrf.mxu0
        %v3456 = vadd.f32 %v3391, %v3455
        %3457 = vmatmul.f32.gmra.mxu0 %v1005
        %v3458 = vpop.f32.mrf.mxu0
        %v3459 = vadd.f32 %v3394, %v3458
        %3460 = vmatmul.f32.gmra.mxu0 %v1008
        %v3461 = vpop.f32.mrf.mxu0
        %v3462 = vadd.f32 %v3397, %v3461
        %3463 = vmatmul.f32.gmra.mxu0 %v1011
        %v3464 = vpop.f32.mrf.mxu0
        %v3465 = vadd.f32 %v3400, %v3464
        %3466 = vmatmul.f32.gmra.mxu0 %v1014
        %v3467 = vpop.f32.mrf.mxu0
        %v3468 = vadd.f32 %v3403, %v3467
        %3469 = vmatmul.f32.gmra.mxu0 %v1017
        %v3470 = vpop.f32.mrf.mxu0
        %v3471 = vadd.f32 %v3406, %v3470
        %3472 = vmatmul.f32.gmra.mxu0 %v1020
        %v3473 = vpop.f32.mrf.mxu0
        %v3474 = vadd.f32 %v3409, %v3473
        %3475 = vmatmul.f32.gmra.mxu0 %v1023
        %v3476 = vpop.f32.mrf.mxu0
        %v3477 = vadd.f32 %v3412, %v3476
        %3478 = vmatmul.f32.gmra.mxu0 %v1026
        %v3479 = vpop.f32.mrf.mxu0
        %v3480 = vadd.f32 %v3415, %v3479
        %3481 = vmatmul.f32.gmra.mxu0 %v1029
        %v3482 = vpop.f32.mrf.mxu0
        %v3483 = vadd.f32 %v3418, %v3482
        %3484 = vmatmul.f32.gmra.mxu0 %v1032
        %v3485 = vpop.f32.mrf.mxu0
        %v3486 = vadd.f32 %v3421, %v3485
        %3487 = vmatmul.f32.gmra.mxu0 %v1035
        %v3488 = vpop.f32.mrf.mxu0
        %v3489 = vadd.f32 %v3424, %v3488
        %3490 = vmatmul.f32.gmra.mxu0 %v1038
        %v3491 = vpop.f32.mrf.mxu0
        %v3492 = vadd.f32 %v3427, %v3491
        %3493 = vdwg.mxu0
        %3494 = vmatpush.msra.mxu0 %v1531
        %3495 = vmatpush.msra.mxu0 %v1499
        %3496 = vmatpush.msra.mxu0 %v1467
        %3497 = vmatpush.msra.mxu0 %v1435
        %3498 = vmatpush.msra.mxu0 %v1403
        %3499 = vmatpush.msra.mxu0 %v1371
        %3500 = vmatpush.msra.mxu0 %v1339
        %3501 = vmatpush.msra.mxu0 %v1307
        %3502 = vmatpush.msra.mxu0 %v1275
        %3503 = vmatpush.msra.mxu0 %v1243
        %3504 = vmatpush.msra.mxu0 %v1211
        %3505 = vmatpush.msra.mxu0 %v1179
        %3506 = vmatpush.msra.mxu0 %v1147
        %3507 = vmatpush.msra.mxu0 %v1115
        %3508 = vmatpush.msra.mxu0 %v1083
        %3509 = vmatpush.msra.mxu0 %v1051
        %3510 = vmatmul.f32.gmra.mxu0 %v733
        %v3511 = vpop.f32.mrf.mxu0
        %v3512 = vadd.f32 0.0, %v3511
        %3513 = vmatmul.f32.gmra.mxu0 %v736
        %v3514 = vpop.f32.mrf.mxu0
        %v3515 = vadd.f32 0.0, %v3514
        %3516 = vmatmul.f32.gmra.mxu0 %v739
        %v3517 = vpop.f32.mrf.mxu0
        %v3518 = vadd.f32 0.0, %v3517
        %3519 = vmatmul.f32.gmra.mxu0 %v742
        %v3520 = vpop.f32.mrf.mxu0
        %v3521 = vadd.f32 0.0, %v3520
        %3522 = vmatmul.f32.gmra.mxu0 %v745
        %v3523 = vpop.f32.mrf.mxu0
        %v3524 = vadd.f32 0.0, %v3523
        %3525 = vmatmul.f32.gmra.mxu0 %v748
        %v3526 = vpop.f32.mrf.mxu0
        %v3527 = vadd.f32 0.0, %v3526
        %3528 = vmatmul.f32.gmra.mxu0 %v751
        %v3529 = vpop.f32.mrf.mxu0
        %v3530 = vadd.f32 0.0, %v3529
        %3531 = vmatmul.f32.gmra.mxu0 %v754
        %v3532 = vpop.f32.mrf.mxu0
        %v3533 = vadd.f32 0.0, %v3532
        %3534 = vmatmul.f32.gmra.mxu0 %v757
        %v3535 = vpop.f32.mrf.mxu0
        %v3536 = vadd.f32 0.0, %v3535
        %3537 = vmatmul.f32.gmra.mxu0 %v760
        %v3538 = vpop.f32.mrf.mxu0
        %v3539 = vadd.f32 0.0, %v3538
        %3540 = vmatmul.f32.gmra.mxu0 %v763
        %v3541 = vpop.f32.mrf.mxu0
        %v3542 = vadd.f32 0.0, %v3541
        %3543 = vmatmul.f32.gmra.mxu0 %v766
        %v3544 = vpop.f32.mrf.mxu0
        %v3545 = vadd.f32 0.0, %v3544
        %3546 = vmatmul.f32.gmra.mxu0 %v769
        %v3547 = vpop.f32.mrf.mxu0
        %v3548 = vadd.f32 0.0, %v3547
        %3549 = vmatmul.f32.gmra.mxu0 %v772
        %v3550 = vpop.f32.mrf.mxu0
        %v3551 = vadd.f32 0.0, %v3550
        %3552 = vmatmul.f32.gmra.mxu0 %v775
        %v3553 = vpop.f32.mrf.mxu0
        %v3554 = vadd.f32 0.0, %v3553
        %3555 = vmatmul.f32.gmra.mxu0 %v778
        %v3556 = vpop.f32.mrf.mxu0
        %v3557 = vadd.f32 0.0, %v3556
        %3558 = vdwg.mxu0
        %3559 = vmatpush.msra.mxu0 %v2043
        %3560 = vmatpush.msra.mxu0 %v2011
        %3561 = vmatpush.msra.mxu0 %v1979
        %3562 = vmatpush.msra.mxu0 %v1947
        %3563 = vmatpush.msra.mxu0 %v1915
        %3564 = vmatpush.msra.mxu0 %v1883
        %3565 = vmatpush.msra.mxu0 %v1851
        %3566 = vmatpush.msra.mxu0 %v1819
        %3567 = vmatpush.msra.mxu0 %v1787
        %3568 = vmatpush.msra.mxu0 %v1755
        %3569 = vmatpush.msra.mxu0 %v1723
        %3570 = vmatpush.msra.mxu0 %v1691
        %3571 = vmatpush.msra.mxu0 %v1659
        %3572 = vmatpush.msra.mxu0 %v1627
        %3573 = vmatpush.msra.mxu0 %v1595
        %3574 = vmatpush.msra.mxu0 %v1563
        %3575 = vmatmul.f32.gmra.mxu0 %v993
        %v3576 = vpop.f32.mrf.mxu0
        %v3577 = vadd.f32 %v3512, %v3576
        %3578 = vmatmul.f32.gmra.mxu0 %v996
        %v3579 = vpop.f32.mrf.mxu0
        %v3580 = vadd.f32 %v3515, %v3579
        %3581 = vmatmul.f32.gmra.mxu0 %v999
        %v3582 = vpop.f32.mrf.mxu0
        %v3583 = vadd.f32 %v3518, %v3582
        %3584 = vmatmul.f32.gmra.mxu0 %v1002
        %v3585 = vpop.f32.mrf.mxu0
        %v3586 = vadd.f32 %v3521, %v3585
        %3587 = vmatmul.f32.gmra.mxu0 %v1005
        %v3588 = vpop.f32.mrf.mxu0
        %v3589 = vadd.f32 %v3524, %v3588
        %3590 = vmatmul.f32.gmra.mxu0 %v1008
        %v3591 = vpop.f32.mrf.mxu0
        %v3592 = vadd.f32 %v3527, %v3591
        %3593 = vmatmul.f32.gmra.mxu0 %v1011
        %v3594 = vpop.f32.mrf.mxu0
        %v3595 = vadd.f32 %v3530, %v3594
        %3596 = vmatmul.f32.gmra.mxu0 %v1014
        %v3597 = vpop.f32.mrf.mxu0
        %v3598 = vadd.f32 %v3533, %v3597
        %3599 = vmatmul.f32.gmra.mxu0 %v1017
        %v3600 = vpop.f32.mrf.mxu0
        %v3601 = vadd.f32 %v3536, %v3600
        %3602 = vmatmul.f32.gmra.mxu0 %v1020
        %v3603 = vpop.f32.mrf.mxu0
        %v3604 = vadd.f32 %v3539, %v3603
        %3605 = vmatmul.f32.gmra.mxu0 %v1023
        %v3606 = vpop.f32.mrf.mxu0
        %v3607 = vadd.f32 %v3542, %v3606
        %3608 = vmatmul.f32.gmra.mxu0 %v1026
        %v3609 = vpop.f32.mrf.mxu0
        %v3610 = vadd.f32 %v3545, %v3609
        %3611 = vmatmul.f32.gmra.mxu0 %v1029
        %v3612 = vpop.f32.mrf.mxu0
        %v3613 = vadd.f32 %v3548, %v3612
        %3614 = vmatmul.f32.gmra.mxu0 %v1032
        %v3615 = vpop.f32.mrf.mxu0
        %v3616 = vadd.f32 %v3551, %v3615
        %3617 = vmatmul.f32.gmra.mxu0 %v1035
        %v3618 = vpop.f32.mrf.mxu0
        %v3619 = vadd.f32 %v3554, %v3618
        %3620 = vmatmul.f32.gmra.mxu0 %v1038
        %v3621 = vpop.f32.mrf.mxu0
        %v3622 = vadd.f32 %v3557, %v3621
        %3623 = vdwg.mxu0
        %3624 = vmatpush.msra.mxu0 %v1532
        %3625 = vmatpush.msra.mxu0 %v1500
        %3626 = vmatpush.msra.mxu0 %v1468
        %3627 = vmatpush.msra.mxu0 %v1436
        %3628 = vmatpush.msra.mxu0 %v1404
        %3629 = vmatpush.msra.mxu0 %v1372
        %3630 = vmatpush.msra.mxu0 %v1340
        %3631 = vmatpush.msra.mxu0 %v1308
        %3632 = vmatpush.msra.mxu0 %v1276
        %3633 = vmatpush.msra.mxu0 %v1244
        %3634 = vmatpush.msra.mxu0 %v1212
        %3635 = vmatpush.msra.mxu0 %v1180
        %3636 = vmatpush.msra.mxu0 %v1148
        %3637 = vmatpush.msra.mxu0 %v1116
        %3638 = vmatpush.msra.mxu0 %v1084
        %3639 = vmatpush.msra.mxu0 %v1052
        %3640 = vmatmul.f32.gmra.mxu0 %v733
        %v3641 = vpop.f32.mrf.mxu0
        %v3642 = vadd.f32 0.0, %v3641
        %3643 = vmatmul.f32.gmra.mxu0 %v736
        %v3644 = vpop.f32.mrf.mxu0
        %v3645 = vadd.f32 0.0, %v3644
        %3646 = vmatmul.f32.gmra.mxu0 %v739
        %v3647 = vpop.f32.mrf.mxu0
        %v3648 = vadd.f32 0.0, %v3647
        %3649 = vmatmul.f32.gmra.mxu0 %v742
        %v3650 = vpop.f32.mrf.mxu0
        %v3651 = vadd.f32 0.0, %v3650
        %3652 = vmatmul.f32.gmra.mxu0 %v745
        %v3653 = vpop.f32.mrf.mxu0
        %v3654 = vadd.f32 0.0, %v3653
        %3655 = vmatmul.f32.gmra.mxu0 %v748
        %v3656 = vpop.f32.mrf.mxu0
        %v3657 = vadd.f32 0.0, %v3656
        %3658 = vmatmul.f32.gmra.mxu0 %v751
        %v3659 = vpop.f32.mrf.mxu0
        %v3660 = vadd.f32 0.0, %v3659
        %3661 = vmatmul.f32.gmra.mxu0 %v754
        %v3662 = vpop.f32.mrf.mxu0
        %v3663 = vadd.f32 0.0, %v3662
        %3664 = vmatmul.f32.gmra.mxu0 %v757
        %v3665 = vpop.f32.mrf.mxu0
        %v3666 = vadd.f32 0.0, %v3665
        %3667 = vmatmul.f32.gmra.mxu0 %v760
        %v3668 = vpop.f32.mrf.mxu0
        %v3669 = vadd.f32 0.0, %v3668
        %3670 = vmatmul.f32.gmra.mxu0 %v763
        %v3671 = vpop.f32.mrf.mxu0
        %v3672 = vadd.f32 0.0, %v3671
        %3673 = vmatmul.f32.gmra.mxu0 %v766
        %v3674 = vpop.f32.mrf.mxu0
        %v3675 = vadd.f32 0.0, %v3674
        %3676 = vmatmul.f32.gmra.mxu0 %v769
        %v3677 = vpop.f32.mrf.mxu0
        %v3678 = vadd.f32 0.0, %v3677
        %3679 = vmatmul.f32.gmra.mxu0 %v772
        %v3680 = vpop.f32.mrf.mxu0
        %v3681 = vadd.f32 0.0, %v3680
        %3682 = vmatmul.f32.gmra.mxu0 %v775
        %v3683 = vpop.f32.mrf.mxu0
        %v3684 = vadd.f32 0.0, %v3683
        %3685 = vmatmul.f32.gmra.mxu0 %v778
        %v3686 = vpop.f32.mrf.mxu0
        %v3687 = vadd.f32 0.0, %v3686
        %3688 = vdwg.mxu0
        %3689 = vmatpush.msra.mxu0 %v2044
        %3690 = vmatpush.msra.mxu0 %v2012
        %3691 = vmatpush.msra.mxu0 %v1980
        %3692 = vmatpush.msra.mxu0 %v1948
        %3693 = vmatpush.msra.mxu0 %v1916
        %3694 = vmatpush.msra.mxu0 %v1884
        %3695 = vmatpush.msra.mxu0 %v1852
        %3696 = vmatpush.msra.mxu0 %v1820
        %3697 = vmatpush.msra.mxu0 %v1788
        %3698 = vmatpush.msra.mxu0 %v1756
        %3699 = vmatpush.msra.mxu0 %v1724
        %3700 = vmatpush.msra.mxu0 %v1692
        %3701 = vmatpush.msra.mxu0 %v1660
        %3702 = vmatpush.msra.mxu0 %v1628
        %3703 = vmatpush.msra.mxu0 %v1596
        %3704 = vmatpush.msra.mxu0 %v1564
        %3705 = vmatmul.f32.gmra.mxu0 %v993
        %v3706 = vpop.f32.mrf.mxu0
        %v3707 = vadd.f32 %v3642, %v3706
        %3708 = vmatmul.f32.gmra.mxu0 %v996
        %v3709 = vpop.f32.mrf.mxu0
        %v3710 = vadd.f32 %v3645, %v3709
        %3711 = vmatmul.f32.gmra.mxu0 %v999
        %v3712 = vpop.f32.mrf.mxu0
        %v3713 = vadd.f32 %v3648, %v3712
        %3714 = vmatmul.f32.gmra.mxu0 %v1002
        %v3715 = vpop.f32.mrf.mxu0
        %v3716 = vadd.f32 %v3651, %v3715
        %3717 = vmatmul.f32.gmra.mxu0 %v1005
        %v3718 = vpop.f32.mrf.mxu0
        %v3719 = vadd.f32 %v3654, %v3718
        %3720 = vmatmul.f32.gmra.mxu0 %v1008
        %v3721 = vpop.f32.mrf.mxu0
        %v3722 = vadd.f32 %v3657, %v3721
        %3723 = vmatmul.f32.gmra.mxu0 %v1011
        %v3724 = vpop.f32.mrf.mxu0
        %v3725 = vadd.f32 %v3660, %v3724
        %3726 = vmatmul.f32.gmra.mxu0 %v1014
        %v3727 = vpop.f32.mrf.mxu0
        %v3728 = vadd.f32 %v3663, %v3727
        %3729 = vmatmul.f32.gmra.mxu0 %v1017
        %v3730 = vpop.f32.mrf.mxu0
        %v3731 = vadd.f32 %v3666, %v3730
        %3732 = vmatmul.f32.gmra.mxu0 %v1020
        %v3733 = vpop.f32.mrf.mxu0
        %v3734 = vadd.f32 %v3669, %v3733
        %3735 = vmatmul.f32.gmra.mxu0 %v1023
        %v3736 = vpop.f32.mrf.mxu0
        %v3737 = vadd.f32 %v3672, %v3736
        %3738 = vmatmul.f32.gmra.mxu0 %v1026
        %v3739 = vpop.f32.mrf.mxu0
        %v3740 = vadd.f32 %v3675, %v3739
        %3741 = vmatmul.f32.gmra.mxu0 %v1029
        %v3742 = vpop.f32.mrf.mxu0
        %v3743 = vadd.f32 %v3678, %v3742
        %3744 = vmatmul.f32.gmra.mxu0 %v1032
        %v3745 = vpop.f32.mrf.mxu0
        %v3746 = vadd.f32 %v3681, %v3745
        %3747 = vmatmul.f32.gmra.mxu0 %v1035
        %v3748 = vpop.f32.mrf.mxu0
        %v3749 = vadd.f32 %v3684, %v3748
        %3750 = vmatmul.f32.gmra.mxu0 %v1038
        %v3751 = vpop.f32.mrf.mxu0
        %v3752 = vadd.f32 %v3687, %v3751
        %3753 = vdwg.mxu0
        %3754 = vmatpush.msra.mxu0 %v1533
        %3755 = vmatpush.msra.mxu0 %v1501
        %3756 = vmatpush.msra.mxu0 %v1469
        %3757 = vmatpush.msra.mxu0 %v1437
        %3758 = vmatpush.msra.mxu0 %v1405
        %3759 = vmatpush.msra.mxu0 %v1373
        %3760 = vmatpush.msra.mxu0 %v1341
        %3761 = vmatpush.msra.mxu0 %v1309
        %3762 = vmatpush.msra.mxu0 %v1277
        %3763 = vmatpush.msra.mxu0 %v1245
        %3764 = vmatpush.msra.mxu0 %v1213
        %3765 = vmatpush.msra.mxu0 %v1181
        %3766 = vmatpush.msra.mxu0 %v1149
        %3767 = vmatpush.msra.mxu0 %v1117
        %3768 = vmatpush.msra.mxu0 %v1085
        %3769 = vmatpush.msra.mxu0 %v1053
        %3770 = vmatmul.f32.gmra.mxu0 %v733
        %v3771 = vpop.f32.mrf.mxu0
        %v3772 = vadd.f32 0.0, %v3771
        %3773 = vmatmul.f32.gmra.mxu0 %v736
        %v3774 = vpop.f32.mrf.mxu0
        %v3775 = vadd.f32 0.0, %v3774
        %3776 = vmatmul.f32.gmra.mxu0 %v739
        %v3777 = vpop.f32.mrf.mxu0
        %v3778 = vadd.f32 0.0, %v3777
        %3779 = vmatmul.f32.gmra.mxu0 %v742
        %v3780 = vpop.f32.mrf.mxu0
        %v3781 = vadd.f32 0.0, %v3780
        %3782 = vmatmul.f32.gmra.mxu0 %v745
        %v3783 = vpop.f32.mrf.mxu0
        %v3784 = vadd.f32 0.0, %v3783
        %3785 = vmatmul.f32.gmra.mxu0 %v748
        %v3786 = vpop.f32.mrf.mxu0
        %v3787 = vadd.f32 0.0, %v3786
        %3788 = vmatmul.f32.gmra.mxu0 %v751
        %v3789 = vpop.f32.mrf.mxu0
        %v3790 = vadd.f32 0.0, %v3789
        %3791 = vmatmul.f32.gmra.mxu0 %v754
        %v3792 = vpop.f32.mrf.mxu0
        %v3793 = vadd.f32 0.0, %v3792
        %3794 = vmatmul.f32.gmra.mxu0 %v757
        %v3795 = vpop.f32.mrf.mxu0
        %v3796 = vadd.f32 0.0, %v3795
        %3797 = vmatmul.f32.gmra.mxu0 %v760
        %v3798 = vpop.f32.mrf.mxu0
        %v3799 = vadd.f32 0.0, %v3798
        %3800 = vmatmul.f32.gmra.mxu0 %v763
        %v3801 = vpop.f32.mrf.mxu0
        %v3802 = vadd.f32 0.0, %v3801
        %3803 = vmatmul.f32.gmra.mxu0 %v766
        %v3804 = vpop.f32.mrf.mxu0
        %v3805 = vadd.f32 0.0, %v3804
        %3806 = vmatmul.f32.gmra.mxu0 %v769
        %v3807 = vpop.f32.mrf.mxu0
        %v3808 = vadd.f32 0.0, %v3807
        %3809 = vmatmul.f32.gmra.mxu0 %v772
        %v3810 = vpop.f32.mrf.mxu0
        %v3811 = vadd.f32 0.0, %v3810
        %3812 = vmatmul.f32.gmra.mxu0 %v775
        %v3813 = vpop.f32.mrf.mxu0
        %v3814 = vadd.f32 0.0, %v3813
        %3815 = vmatmul.f32.gmra.mxu0 %v778
        %v3816 = vpop.f32.mrf.mxu0
        %v3817 = vadd.f32 0.0, %v3816
        %3818 = vdwg.mxu0
        %3819 = vmatpush.msra.mxu0 %v2045
        %3820 = vmatpush.msra.mxu0 %v2013
        %3821 = vmatpush.msra.mxu0 %v1981
        %3822 = vmatpush.msra.mxu0 %v1949
        %3823 = vmatpush.msra.mxu0 %v1917
        %3824 = vmatpush.msra.mxu0 %v1885
        %3825 = vmatpush.msra.mxu0 %v1853
        %3826 = vmatpush.msra.mxu0 %v1821
        %3827 = vmatpush.msra.mxu0 %v1789
        %3828 = vmatpush.msra.mxu0 %v1757
        %3829 = vmatpush.msra.mxu0 %v1725
        %3830 = vmatpush.msra.mxu0 %v1693
        %3831 = vmatpush.msra.mxu0 %v1661
        %3832 = vmatpush.msra.mxu0 %v1629
        %3833 = vmatpush.msra.mxu0 %v1597
        %3834 = vmatpush.msra.mxu0 %v1565
        %3835 = vmatmul.f32.gmra.mxu0 %v993
        %v3836 = vpop.f32.mrf.mxu0
        %v3837 = vadd.f32 %v3772, %v3836
        %3838 = vmatmul.f32.gmra.mxu0 %v996
        %v3839 = vpop.f32.mrf.mxu0
        %v3840 = vadd.f32 %v3775, %v3839
        %3841 = vmatmul.f32.gmra.mxu0 %v999
        %v3842 = vpop.f32.mrf.mxu0
        %v3843 = vadd.f32 %v3778, %v3842
        %3844 = vmatmul.f32.gmra.mxu0 %v1002
        %v3845 = vpop.f32.mrf.mxu0
        %v3846 = vadd.f32 %v3781, %v3845
        %3847 = vmatmul.f32.gmra.mxu0 %v1005
        %v3848 = vpop.f32.mrf.mxu0
        %v3849 = vadd.f32 %v3784, %v3848
        %3850 = vmatmul.f32.gmra.mxu0 %v1008
        %v3851 = vpop.f32.mrf.mxu0
        %v3852 = vadd.f32 %v3787, %v3851
        %3853 = vmatmul.f32.gmra.mxu0 %v1011
        %v3854 = vpop.f32.mrf.mxu0
        %v3855 = vadd.f32 %v3790, %v3854
        %3856 = vmatmul.f32.gmra.mxu0 %v1014
        %v3857 = vpop.f32.mrf.mxu0
        %v3858 = vadd.f32 %v3793, %v3857
        %3859 = vmatmul.f32.gmra.mxu0 %v1017
        %v3860 = vpop.f32.mrf.mxu0
        %v3861 = vadd.f32 %v3796, %v3860
        %3862 = vmatmul.f32.gmra.mxu0 %v1020
        %v3863 = vpop.f32.mrf.mxu0
        %v3864 = vadd.f32 %v3799, %v3863
        %3865 = vmatmul.f32.gmra.mxu0 %v1023
        %v3866 = vpop.f32.mrf.mxu0
        %v3867 = vadd.f32 %v3802, %v3866
        %3868 = vmatmul.f32.gmra.mxu0 %v1026
        %v3869 = vpop.f32.mrf.mxu0
        %v3870 = vadd.f32 %v3805, %v3869
        %3871 = vmatmul.f32.gmra.mxu0 %v1029
        %v3872 = vpop.f32.mrf.mxu0
        %v3873 = vadd.f32 %v3808, %v3872
        %3874 = vmatmul.f32.gmra.mxu0 %v1032
        %v3875 = vpop.f32.mrf.mxu0
        %v3876 = vadd.f32 %v3811, %v3875
        %3877 = vmatmul.f32.gmra.mxu0 %v1035
        %v3878 = vpop.f32.mrf.mxu0
        %v3879 = vadd.f32 %v3814, %v3878
        %3880 = vmatmul.f32.gmra.mxu0 %v1038
        %v3881 = vpop.f32.mrf.mxu0
        %v3882 = vadd.f32 %v3817, %v3881
        %3883 = vdwg.mxu0
        %3884 = vmatpush.msra.mxu0 %v1534
        %3885 = vmatpush.msra.mxu0 %v1502
        %3886 = vmatpush.msra.mxu0 %v1470
        %3887 = vmatpush.msra.mxu0 %v1438
        %3888 = vmatpush.msra.mxu0 %v1406
        %3889 = vmatpush.msra.mxu0 %v1374
        %3890 = vmatpush.msra.mxu0 %v1342
        %3891 = vmatpush.msra.mxu0 %v1310
        %3892 = vmatpush.msra.mxu0 %v1278
        %3893 = vmatpush.msra.mxu0 %v1246
        %3894 = vmatpush.msra.mxu0 %v1214
        %3895 = vmatpush.msra.mxu0 %v1182
        %3896 = vmatpush.msra.mxu0 %v1150
        %3897 = vmatpush.msra.mxu0 %v1118
        %3898 = vmatpush.msra.mxu0 %v1086
        %3899 = vmatpush.msra.mxu0 %v1054
        %3900 = vmatmul.f32.gmra.mxu0 %v733
        %v3901 = vpop.f32.mrf.mxu0
        %v3902 = vadd.f32 0.0, %v3901
        %3903 = vmatmul.f32.gmra.mxu0 %v736
        %v3904 = vpop.f32.mrf.mxu0
        %v3905 = vadd.f32 0.0, %v3904
        %3906 = vmatmul.f32.gmra.mxu0 %v739
        %v3907 = vpop.f32.mrf.mxu0
        %v3908 = vadd.f32 0.0, %v3907
        %3909 = vmatmul.f32.gmra.mxu0 %v742
        %v3910 = vpop.f32.mrf.mxu0
        %v3911 = vadd.f32 0.0, %v3910
        %3912 = vmatmul.f32.gmra.mxu0 %v745
        %v3913 = vpop.f32.mrf.mxu0
        %v3914 = vadd.f32 0.0, %v3913
        %3915 = vmatmul.f32.gmra.mxu0 %v748
        %v3916 = vpop.f32.mrf.mxu0
        %v3917 = vadd.f32 0.0, %v3916
        %3918 = vmatmul.f32.gmra.mxu0 %v751
        %v3919 = vpop.f32.mrf.mxu0
        %v3920 = vadd.f32 0.0, %v3919
        %3921 = vmatmul.f32.gmra.mxu0 %v754
        %v3922 = vpop.f32.mrf.mxu0
        %v3923 = vadd.f32 0.0, %v3922
        %3924 = vmatmul.f32.gmra.mxu0 %v757
        %v3925 = vpop.f32.mrf.mxu0
        %v3926 = vadd.f32 0.0, %v3925
        %3927 = vmatmul.f32.gmra.mxu0 %v760
        %v3928 = vpop.f32.mrf.mxu0
        %v3929 = vadd.f32 0.0, %v3928
        %3930 = vmatmul.f32.gmra.mxu0 %v763
        %v3931 = vpop.f32.mrf.mxu0
        %v3932 = vadd.f32 0.0, %v3931
        %3933 = vmatmul.f32.gmra.mxu0 %v766
        %v3934 = vpop.f32.mrf.mxu0
        %v3935 = vadd.f32 0.0, %v3934
        %3936 = vmatmul.f32.gmra.mxu0 %v769
        %v3937 = vpop.f32.mrf.mxu0
        %v3938 = vadd.f32 0.0, %v3937
        %3939 = vmatmul.f32.gmra.mxu0 %v772
        %v3940 = vpop.f32.mrf.mxu0
        %v3941 = vadd.f32 0.0, %v3940
        %3942 = vmatmul.f32.gmra.mxu0 %v775
        %v3943 = vpop.f32.mrf.mxu0
        %v3944 = vadd.f32 0.0, %v3943
        %3945 = vmatmul.f32.gmra.mxu0 %v778
        %v3946 = vpop.f32.mrf.mxu0
        %v3947 = vadd.f32 0.0, %v3946
        %3948 = vdwg.mxu0
        %3949 = vmatpush.msra.mxu0 %v2046
        %3950 = vmatpush.msra.mxu0 %v2014
        %3951 = vmatpush.msra.mxu0 %v1982
        %3952 = vmatpush.msra.mxu0 %v1950
        %3953 = vmatpush.msra.mxu0 %v1918
        %3954 = vmatpush.msra.mxu0 %v1886
        %3955 = vmatpush.msra.mxu0 %v1854
        %3956 = vmatpush.msra.mxu0 %v1822
        %3957 = vmatpush.msra.mxu0 %v1790
        %3958 = vmatpush.msra.mxu0 %v1758
        %3959 = vmatpush.msra.mxu0 %v1726
        %3960 = vmatpush.msra.mxu0 %v1694
        %3961 = vmatpush.msra.mxu0 %v1662
        %3962 = vmatpush.msra.mxu0 %v1630
        %3963 = vmatpush.msra.mxu0 %v1598
        %3964 = vmatpush.msra.mxu0 %v1566
        %3965 = vmatmul.f32.gmra.mxu0 %v993
        %v3966 = vpop.f32.mrf.mxu0
        %v3967 = vadd.f32 %v3902, %v3966
        %3968 = vmatmul.f32.gmra.mxu0 %v996
        %v3969 = vpop.f32.mrf.mxu0
        %v3970 = vadd.f32 %v3905, %v3969
        %3971 = vmatmul.f32.gmra.mxu0 %v999
        %v3972 = vpop.f32.mrf.mxu0
        %v3973 = vadd.f32 %v3908, %v3972
        %3974 = vmatmul.f32.gmra.mxu0 %v1002
        %v3975 = vpop.f32.mrf.mxu0
        %v3976 = vadd.f32 %v3911, %v3975
        %3977 = vmatmul.f32.gmra.mxu0 %v1005
        %v3978 = vpop.f32.mrf.mxu0
        %v3979 = vadd.f32 %v3914, %v3978
        %3980 = vmatmul.f32.gmra.mxu0 %v1008
        %v3981 = vpop.f32.mrf.mxu0
        %v3982 = vadd.f32 %v3917, %v3981
        %3983 = vmatmul.f32.gmra.mxu0 %v1011
        %v3984 = vpop.f32.mrf.mxu0
        %v3985 = vadd.f32 %v3920, %v3984
        %3986 = vmatmul.f32.gmra.mxu0 %v1014
        %v3987 = vpop.f32.mrf.mxu0
        %v3988 = vadd.f32 %v3923, %v3987
        %3989 = vmatmul.f32.gmra.mxu0 %v1017
        %v3990 = vpop.f32.mrf.mxu0
        %v3991 = vadd.f32 %v3926, %v3990
        %3992 = vmatmul.f32.gmra.mxu0 %v1020
        %v3993 = vpop.f32.mrf.mxu0
        %v3994 = vadd.f32 %v3929, %v3993
        %3995 = vmatmul.f32.gmra.mxu0 %v1023
        %v3996 = vpop.f32.mrf.mxu0
        %v3997 = vadd.f32 %v3932, %v3996
        %3998 = vmatmul.f32.gmra.mxu0 %v1026
        %v3999 = vpop.f32.mrf.mxu0
        %v4000 = vadd.f32 %v3935, %v3999
        %4001 = vmatmul.f32.gmra.mxu0 %v1029
        %v4002 = vpop.f32.mrf.mxu0
        %v4003 = vadd.f32 %v3938, %v4002
        %4004 = vmatmul.f32.gmra.mxu0 %v1032
        %v4005 = vpop.f32.mrf.mxu0
        %v4006 = vadd.f32 %v3941, %v4005
        %4007 = vmatmul.f32.gmra.mxu0 %v1035
        %v4008 = vpop.f32.mrf.mxu0
        %v4009 = vadd.f32 %v3944, %v4008
        %4010 = vmatmul.f32.gmra.mxu0 %v1038
        %v4011 = vpop.f32.mrf.mxu0
        %v4012 = vadd.f32 %v3947, %v4011
        %4013 = vdwg.mxu0
        %4014 = vmatpush.msra.mxu0 %v1535
        %4015 = vmatpush.msra.mxu0 %v1503
        %4016 = vmatpush.msra.mxu0 %v1471
        %4017 = vmatpush.msra.mxu0 %v1439
        %4018 = vmatpush.msra.mxu0 %v1407
        %4019 = vmatpush.msra.mxu0 %v1375
        %4020 = vmatpush.msra.mxu0 %v1343
        %4021 = vmatpush.msra.mxu0 %v1311
        %4022 = vmatpush.msra.mxu0 %v1279
        %4023 = vmatpush.msra.mxu0 %v1247
        %4024 = vmatpush.msra.mxu0 %v1215
        %4025 = vmatpush.msra.mxu0 %v1183
        %4026 = vmatpush.msra.mxu0 %v1151
        %4027 = vmatpush.msra.mxu0 %v1119
        %4028 = vmatpush.msra.mxu0 %v1087
        %4029 = vmatpush.msra.mxu0 %v1055
        %4030 = vmatmul.f32.gmra.mxu0 %v733
        %v4031 = vpop.f32.mrf.mxu0
        %v4032 = vadd.f32 0.0, %v4031
        %4033 = vmatmul.f32.gmra.mxu0 %v736
        %v4034 = vpop.f32.mrf.mxu0
        %v4035 = vadd.f32 0.0, %v4034
        %4036 = vmatmul.f32.gmra.mxu0 %v739
        %v4037 = vpop.f32.mrf.mxu0
        %v4038 = vadd.f32 0.0, %v4037
        %4039 = vmatmul.f32.gmra.mxu0 %v742
        %v4040 = vpop.f32.mrf.mxu0
        %v4041 = vadd.f32 0.0, %v4040
        %4042 = vmatmul.f32.gmra.mxu0 %v745
        %v4043 = vpop.f32.mrf.mxu0
        %v4044 = vadd.f32 0.0, %v4043
        %4045 = vmatmul.f32.gmra.mxu0 %v748
        %v4046 = vpop.f32.mrf.mxu0
        %v4047 = vadd.f32 0.0, %v4046
        %4048 = vmatmul.f32.gmra.mxu0 %v751
        %v4049 = vpop.f32.mrf.mxu0
        %v4050 = vadd.f32 0.0, %v4049
        %4051 = vmatmul.f32.gmra.mxu0 %v754
        %v4052 = vpop.f32.mrf.mxu0
        %v4053 = vadd.f32 0.0, %v4052
        %4054 = vmatmul.f32.gmra.mxu0 %v757
        %v4055 = vpop.f32.mrf.mxu0
        %v4056 = vadd.f32 0.0, %v4055
        %4057 = vmatmul.f32.gmra.mxu0 %v760
        %v4058 = vpop.f32.mrf.mxu0
        %v4059 = vadd.f32 0.0, %v4058
        %4060 = vmatmul.f32.gmra.mxu0 %v763
        %v4061 = vpop.f32.mrf.mxu0
        %v4062 = vadd.f32 0.0, %v4061
        %4063 = vmatmul.f32.gmra.mxu0 %v766
        %v4064 = vpop.f32.mrf.mxu0
        %v4065 = vadd.f32 0.0, %v4064
        %4066 = vmatmul.f32.gmra.mxu0 %v769
        %v4067 = vpop.f32.mrf.mxu0
        %v4068 = vadd.f32 0.0, %v4067
        %4069 = vmatmul.f32.gmra.mxu0 %v772
        %v4070 = vpop.f32.mrf.mxu0
        %v4071 = vadd.f32 0.0, %v4070
        %4072 = vmatmul.f32.gmra.mxu0 %v775
        %v4073 = vpop.f32.mrf.mxu0
        %v4074 = vadd.f32 0.0, %v4073
        %4075 = vmatmul.f32.gmra.mxu0 %v778
        %v4076 = vpop.f32.mrf.mxu0
        %v4077 = vadd.f32 0.0, %v4076
        %4078 = vdwg.mxu0
        %4079 = vmatpush.msra.mxu0 %v2047
        %4080 = vmatpush.msra.mxu0 %v2015
        %4081 = vmatpush.msra.mxu0 %v1983
        %4082 = vmatpush.msra.mxu0 %v1951
        %4083 = vmatpush.msra.mxu0 %v1919
        %4084 = vmatpush.msra.mxu0 %v1887
        %4085 = vmatpush.msra.mxu0 %v1855
        %4086 = vmatpush.msra.mxu0 %v1823
        %4087 = vmatpush.msra.mxu0 %v1791
        %4088 = vmatpush.msra.mxu0 %v1759
        %4089 = vmatpush.msra.mxu0 %v1727
        %4090 = vmatpush.msra.mxu0 %v1695
        %4091 = vmatpush.msra.mxu0 %v1663
        %4092 = vmatpush.msra.mxu0 %v1631
        %4093 = vmatpush.msra.mxu0 %v1599
        %4094 = vmatpush.msra.mxu0 %v1567
        %4095 = vmatmul.f32.gmra.mxu0 %v993
        %v4096 = vpop.f32.mrf.mxu0
        %v4097 = vadd.f32 %v4032, %v4096
        %4098 = vmatmul.f32.gmra.mxu0 %v996
        %v4099 = vpop.f32.mrf.mxu0
        %v4100 = vadd.f32 %v4035, %v4099
        %4101 = vmatmul.f32.gmra.mxu0 %v999
        %v4102 = vpop.f32.mrf.mxu0
        %v4103 = vadd.f32 %v4038, %v4102
        %4104 = vmatmul.f32.gmra.mxu0 %v1002
        %v4105 = vpop.f32.mrf.mxu0
        %v4106 = vadd.f32 %v4041, %v4105
        %4107 = vmatmul.f32.gmra.mxu0 %v1005
        %v4108 = vpop.f32.mrf.mxu0
        %v4109 = vadd.f32 %v4044, %v4108
        %4110 = vmatmul.f32.gmra.mxu0 %v1008
        %v4111 = vpop.f32.mrf.mxu0
        %v4112 = vadd.f32 %v4047, %v4111
        %4113 = vmatmul.f32.gmra.mxu0 %v1011
        %v4114 = vpop.f32.mrf.mxu0
        %v4115 = vadd.f32 %v4050, %v4114
        %4116 = vmatmul.f32.gmra.mxu0 %v1014
        %v4117 = vpop.f32.mrf.mxu0
        %v4118 = vadd.f32 %v4053, %v4117
        %4119 = vmatmul.f32.gmra.mxu0 %v1017
        %v4120 = vpop.f32.mrf.mxu0
        %v4121 = vadd.f32 %v4056, %v4120
        %4122 = vmatmul.f32.gmra.mxu0 %v1020
        %v4123 = vpop.f32.mrf.mxu0
        %v4124 = vadd.f32 %v4059, %v4123
        %4125 = vmatmul.f32.gmra.mxu0 %v1023
        %v4126 = vpop.f32.mrf.mxu0
        %v4127 = vadd.f32 %v4062, %v4126
        %4128 = vmatmul.f32.gmra.mxu0 %v1026
        %v4129 = vpop.f32.mrf.mxu0
        %v4130 = vadd.f32 %v4065, %v4129
        %4131 = vmatmul.f32.gmra.mxu0 %v1029
        %v4132 = vpop.f32.mrf.mxu0
        %v4133 = vadd.f32 %v4068, %v4132
        %4134 = vmatmul.f32.gmra.mxu0 %v1032
        %v4135 = vpop.f32.mrf.mxu0
        %v4136 = vadd.f32 %v4071, %v4135
        %4137 = vmatmul.f32.gmra.mxu0 %v1035
        %v4138 = vpop.f32.mrf.mxu0
        %v4139 = vadd.f32 %v4074, %v4138
        %4140 = vmatmul.f32.gmra.mxu0 %v1038
        %v4141 = vpop.f32.mrf.mxu0
        %v4142 = vadd.f32 %v4077, %v4141
        %4143 = vdwg.mxu0
        %4144 = vmatpush.msra.mxu0 %v1536
        %4145 = vmatpush.msra.mxu0 %v1504
        %4146 = vmatpush.msra.mxu0 %v1472
        %4147 = vmatpush.msra.mxu0 %v1440
        %4148 = vmatpush.msra.mxu0 %v1408
        %4149 = vmatpush.msra.mxu0 %v1376
        %4150 = vmatpush.msra.mxu0 %v1344
        %4151 = vmatpush.msra.mxu0 %v1312
        %4152 = vmatpush.msra.mxu0 %v1280
        %4153 = vmatpush.msra.mxu0 %v1248
        %4154 = vmatpush.msra.mxu0 %v1216
        %4155 = vmatpush.msra.mxu0 %v1184
        %4156 = vmatpush.msra.mxu0 %v1152
        %4157 = vmatpush.msra.mxu0 %v1120
        %4158 = vmatpush.msra.mxu0 %v1088
        %4159 = vmatpush.msra.mxu0 %v1056
        %4160 = vmatmul.f32.gmra.mxu0 %v733
        %v4161 = vpop.f32.mrf.mxu0
        %v4162 = vadd.f32 0.0, %v4161
        %4163 = vmatmul.f32.gmra.mxu0 %v736
        %v4164 = vpop.f32.mrf.mxu0
        %v4165 = vadd.f32 0.0, %v4164
        %4166 = vmatmul.f32.gmra.mxu0 %v739
        %v4167 = vpop.f32.mrf.mxu0
        %v4168 = vadd.f32 0.0, %v4167
        %4169 = vmatmul.f32.gmra.mxu0 %v742
        %v4170 = vpop.f32.mrf.mxu0
        %v4171 = vadd.f32 0.0, %v4170
        %4172 = vmatmul.f32.gmra.mxu0 %v745
        %v4173 = vpop.f32.mrf.mxu0
        %v4174 = vadd.f32 0.0, %v4173
        %4175 = vmatmul.f32.gmra.mxu0 %v748
        %v4176 = vpop.f32.mrf.mxu0
        %v4177 = vadd.f32 0.0, %v4176
        %4178 = vmatmul.f32.gmra.mxu0 %v751
        %v4179 = vpop.f32.mrf.mxu0
        %v4180 = vadd.f32 0.0, %v4179
        %4181 = vmatmul.f32.gmra.mxu0 %v754
        %v4182 = vpop.f32.mrf.mxu0
        %v4183 = vadd.f32 0.0, %v4182
        %4184 = vmatmul.f32.gmra.mxu0 %v757
        %v4185 = vpop.f32.mrf.mxu0
        %v4186 = vadd.f32 0.0, %v4185
        %4187 = vmatmul.f32.gmra.mxu0 %v760
        %v4188 = vpop.f32.mrf.mxu0
        %v4189 = vadd.f32 0.0, %v4188
        %4190 = vmatmul.f32.gmra.mxu0 %v763
        %v4191 = vpop.f32.mrf.mxu0
        %v4192 = vadd.f32 0.0, %v4191
        %4193 = vmatmul.f32.gmra.mxu0 %v766
        %v4194 = vpop.f32.mrf.mxu0
        %v4195 = vadd.f32 0.0, %v4194
        %4196 = vmatmul.f32.gmra.mxu0 %v769
        %v4197 = vpop.f32.mrf.mxu0
        %v4198 = vadd.f32 0.0, %v4197
        %4199 = vmatmul.f32.gmra.mxu0 %v772
        %v4200 = vpop.f32.mrf.mxu0
        %v4201 = vadd.f32 0.0, %v4200
        %4202 = vmatmul.f32.gmra.mxu0 %v775
        %v4203 = vpop.f32.mrf.mxu0
        %v4204 = vadd.f32 0.0, %v4203
        %4205 = vmatmul.f32.gmra.mxu0 %v778
        %v4206 = vpop.f32.mrf.mxu0
        %v4207 = vadd.f32 0.0, %v4206
        %4208 = vdwg.mxu0
        %4209 = vmatpush.msra.mxu0 %v2048
        %4210 = vmatpush.msra.mxu0 %v2016
        %4211 = vmatpush.msra.mxu0 %v1984
        %4212 = vmatpush.msra.mxu0 %v1952
        %4213 = vmatpush.msra.mxu0 %v1920
        %4214 = vmatpush.msra.mxu0 %v1888
        %4215 = vmatpush.msra.mxu0 %v1856
        %4216 = vmatpush.msra.mxu0 %v1824
        %4217 = vmatpush.msra.mxu0 %v1792
        %4218 = vmatpush.msra.mxu0 %v1760
        %4219 = vmatpush.msra.mxu0 %v1728
        %4220 = vmatpush.msra.mxu0 %v1696
        %4221 = vmatpush.msra.mxu0 %v1664
        %4222 = vmatpush.msra.mxu0 %v1632
        %4223 = vmatpush.msra.mxu0 %v1600
        %4224 = vmatpush.msra.mxu0 %v1568
        %4225 = vmatmul.f32.gmra.mxu0 %v993
        %v4226 = vpop.f32.mrf.mxu0
        %v4227 = vadd.f32 %v4162, %v4226
        %4228 = vmatmul.f32.gmra.mxu0 %v996
        %v4229 = vpop.f32.mrf.mxu0
        %v4230 = vadd.f32 %v4165, %v4229
        %4231 = vmatmul.f32.gmra.mxu0 %v999
        %v4232 = vpop.f32.mrf.mxu0
        %v4233 = vadd.f32 %v4168, %v4232
        %4234 = vmatmul.f32.gmra.mxu0 %v1002
        %v4235 = vpop.f32.mrf.mxu0
        %v4236 = vadd.f32 %v4171, %v4235
        %4237 = vmatmul.f32.gmra.mxu0 %v1005
        %v4238 = vpop.f32.mrf.mxu0
        %v4239 = vadd.f32 %v4174, %v4238
        %4240 = vmatmul.f32.gmra.mxu0 %v1008
        %v4241 = vpop.f32.mrf.mxu0
        %v4242 = vadd.f32 %v4177, %v4241
        %4243 = vmatmul.f32.gmra.mxu0 %v1011
        %v4244 = vpop.f32.mrf.mxu0
        %v4245 = vadd.f32 %v4180, %v4244
        %4246 = vmatmul.f32.gmra.mxu0 %v1014
        %v4247 = vpop.f32.mrf.mxu0
        %v4248 = vadd.f32 %v4183, %v4247
        %4249 = vmatmul.f32.gmra.mxu0 %v1017
        %v4250 = vpop.f32.mrf.mxu0
        %v4251 = vadd.f32 %v4186, %v4250
        %4252 = vmatmul.f32.gmra.mxu0 %v1020
        %v4253 = vpop.f32.mrf.mxu0
        %v4254 = vadd.f32 %v4189, %v4253
        %4255 = vmatmul.f32.gmra.mxu0 %v1023
        %v4256 = vpop.f32.mrf.mxu0
        %v4257 = vadd.f32 %v4192, %v4256
        %4258 = vmatmul.f32.gmra.mxu0 %v1026
        %v4259 = vpop.f32.mrf.mxu0
        %v4260 = vadd.f32 %v4195, %v4259
        %4261 = vmatmul.f32.gmra.mxu0 %v1029
        %v4262 = vpop.f32.mrf.mxu0
        %v4263 = vadd.f32 %v4198, %v4262
        %4264 = vmatmul.f32.gmra.mxu0 %v1032
        %v4265 = vpop.f32.mrf.mxu0
        %v4266 = vadd.f32 %v4201, %v4265
        %4267 = vmatmul.f32.gmra.mxu0 %v1035
        %v4268 = vpop.f32.mrf.mxu0
        %v4269 = vadd.f32 %v4204, %v4268
        %4270 = vmatmul.f32.gmra.mxu0 %v1038
        %v4271 = vpop.f32.mrf.mxu0
        %v4272 = vadd.f32 %v4207, %v4271
        %4273 = vdwg.mxu0
        %4274 = vmatpush.msra.mxu0 %v1537
        %4275 = vmatpush.msra.mxu0 %v1505
        %4276 = vmatpush.msra.mxu0 %v1473
        %4277 = vmatpush.msra.mxu0 %v1441
        %4278 = vmatpush.msra.mxu0 %v1409
        %4279 = vmatpush.msra.mxu0 %v1377
        %4280 = vmatpush.msra.mxu0 %v1345
        %4281 = vmatpush.msra.mxu0 %v1313
        %4282 = vmatpush.msra.mxu0 %v1281
        %4283 = vmatpush.msra.mxu0 %v1249
        %4284 = vmatpush.msra.mxu0 %v1217
        %4285 = vmatpush.msra.mxu0 %v1185
        %4286 = vmatpush.msra.mxu0 %v1153
        %4287 = vmatpush.msra.mxu0 %v1121
        %4288 = vmatpush.msra.mxu0 %v1089
        %4289 = vmatpush.msra.mxu0 %v1057
        %4290 = vmatmul.f32.gmra.mxu0 %v733
        %v4291 = vpop.f32.mrf.mxu0
        %v4292 = vadd.f32 0.0, %v4291
        %4293 = vmatmul.f32.gmra.mxu0 %v736
        %v4294 = vpop.f32.mrf.mxu0
        %v4295 = vadd.f32 0.0, %v4294
        %4296 = vmatmul.f32.gmra.mxu0 %v739
        %v4297 = vpop.f32.mrf.mxu0
        %v4298 = vadd.f32 0.0, %v4297
        %4299 = vmatmul.f32.gmra.mxu0 %v742
        %v4300 = vpop.f32.mrf.mxu0
        %v4301 = vadd.f32 0.0, %v4300
        %4302 = vmatmul.f32.gmra.mxu0 %v745
        %v4303 = vpop.f32.mrf.mxu0
        %v4304 = vadd.f32 0.0, %v4303
        %4305 = vmatmul.f32.gmra.mxu0 %v748
        %v4306 = vpop.f32.mrf.mxu0
        %v4307 = vadd.f32 0.0, %v4306
        %4308 = vmatmul.f32.gmra.mxu0 %v751
        %v4309 = vpop.f32.mrf.mxu0
        %v4310 = vadd.f32 0.0, %v4309
        %4311 = vmatmul.f32.gmra.mxu0 %v754
        %v4312 = vpop.f32.mrf.mxu0
        %v4313 = vadd.f32 0.0, %v4312
        %4314 = vmatmul.f32.gmra.mxu0 %v757
        %v4315 = vpop.f32.mrf.mxu0
        %v4316 = vadd.f32 0.0, %v4315
        %4317 = vmatmul.f32.gmra.mxu0 %v760
        %v4318 = vpop.f32.mrf.mxu0
        %v4319 = vadd.f32 0.0, %v4318
        %4320 = vmatmul.f32.gmra.mxu0 %v763
        %v4321 = vpop.f32.mrf.mxu0
        %v4322 = vadd.f32 0.0, %v4321
        %4323 = vmatmul.f32.gmra.mxu0 %v766
        %v4324 = vpop.f32.mrf.mxu0
        %v4325 = vadd.f32 0.0, %v4324
        %4326 = vmatmul.f32.gmra.mxu0 %v769
        %v4327 = vpop.f32.mrf.mxu0
        %v4328 = vadd.f32 0.0, %v4327
        %4329 = vmatmul.f32.gmra.mxu0 %v772
        %v4330 = vpop.f32.mrf.mxu0
        %v4331 = vadd.f32 0.0, %v4330
        %4332 = vmatmul.f32.gmra.mxu0 %v775
        %v4333 = vpop.f32.mrf.mxu0
        %v4334 = vadd.f32 0.0, %v4333
        %4335 = vmatmul.f32.gmra.mxu0 %v778
        %v4336 = vpop.f32.mrf.mxu0
        %v4337 = vadd.f32 0.0, %v4336
        %4338 = vdwg.mxu0
        %4339 = vmatpush.msra.mxu0 %v2049
        %4340 = vmatpush.msra.mxu0 %v2017
        %4341 = vmatpush.msra.mxu0 %v1985
        %4342 = vmatpush.msra.mxu0 %v1953
        %4343 = vmatpush.msra.mxu0 %v1921
        %4344 = vmatpush.msra.mxu0 %v1889
        %4345 = vmatpush.msra.mxu0 %v1857
        %4346 = vmatpush.msra.mxu0 %v1825
        %4347 = vmatpush.msra.mxu0 %v1793
        %4348 = vmatpush.msra.mxu0 %v1761
        %4349 = vmatpush.msra.mxu0 %v1729
        %4350 = vmatpush.msra.mxu0 %v1697
        %4351 = vmatpush.msra.mxu0 %v1665
        %4352 = vmatpush.msra.mxu0 %v1633
        %4353 = vmatpush.msra.mxu0 %v1601
        %4354 = vmatpush.msra.mxu0 %v1569
        %4355 = vmatmul.f32.gmra.mxu0 %v993
        %v4356 = vpop.f32.mrf.mxu0
        %v4357 = vadd.f32 %v4292, %v4356
        %4358 = vmatmul.f32.gmra.mxu0 %v996
        %v4359 = vpop.f32.mrf.mxu0
        %v4360 = vadd.f32 %v4295, %v4359
        %4361 = vmatmul.f32.gmra.mxu0 %v999
        %v4362 = vpop.f32.mrf.mxu0
        %v4363 = vadd.f32 %v4298, %v4362
        %4364 = vmatmul.f32.gmra.mxu0 %v1002
        %v4365 = vpop.f32.mrf.mxu0
        %v4366 = vadd.f32 %v4301, %v4365
        %4367 = vmatmul.f32.gmra.mxu0 %v1005
        %v4368 = vpop.f32.mrf.mxu0
        %v4369 = vadd.f32 %v4304, %v4368
        %4370 = vmatmul.f32.gmra.mxu0 %v1008
        %v4371 = vpop.f32.mrf.mxu0
        %v4372 = vadd.f32 %v4307, %v4371
        %4373 = vmatmul.f32.gmra.mxu0 %v1011
        %v4374 = vpop.f32.mrf.mxu0
        %v4375 = vadd.f32 %v4310, %v4374
        %4376 = vmatmul.f32.gmra.mxu0 %v1014
        %v4377 = vpop.f32.mrf.mxu0
        %v4378 = vadd.f32 %v4313, %v4377
        %4379 = vmatmul.f32.gmra.mxu0 %v1017
        %v4380 = vpop.f32.mrf.mxu0
        %v4381 = vadd.f32 %v4316, %v4380
        %4382 = vmatmul.f32.gmra.mxu0 %v1020
        %v4383 = vpop.f32.mrf.mxu0
        %v4384 = vadd.f32 %v4319, %v4383
        %4385 = vmatmul.f32.gmra.mxu0 %v1023
        %v4386 = vpop.f32.mrf.mxu0
        %v4387 = vadd.f32 %v4322, %v4386
        %4388 = vmatmul.f32.gmra.mxu0 %v1026
        %v4389 = vpop.f32.mrf.mxu0
        %v4390 = vadd.f32 %v4325, %v4389
        %4391 = vmatmul.f32.gmra.mxu0 %v1029
        %v4392 = vpop.f32.mrf.mxu0
        %v4393 = vadd.f32 %v4328, %v4392
        %4394 = vmatmul.f32.gmra.mxu0 %v1032
        %v4395 = vpop.f32.mrf.mxu0
        %v4396 = vadd.f32 %v4331, %v4395
        %4397 = vmatmul.f32.gmra.mxu0 %v1035
        %v4398 = vpop.f32.mrf.mxu0
        %v4399 = vadd.f32 %v4334, %v4398
        %4400 = vmatmul.f32.gmra.mxu0 %v1038
        %v4401 = vpop.f32.mrf.mxu0
        %v4402 = vadd.f32 %v4337, %v4401
        %4403 = vdwg.mxu0
        %4404 = vmatpush.msra.mxu0 %v1538
        %4405 = vmatpush.msra.mxu0 %v1506
        %4406 = vmatpush.msra.mxu0 %v1474
        %4407 = vmatpush.msra.mxu0 %v1442
        %4408 = vmatpush.msra.mxu0 %v1410
        %4409 = vmatpush.msra.mxu0 %v1378
        %4410 = vmatpush.msra.mxu0 %v1346
        %4411 = vmatpush.msra.mxu0 %v1314
        %4412 = vmatpush.msra.mxu0 %v1282
        %4413 = vmatpush.msra.mxu0 %v1250
        %4414 = vmatpush.msra.mxu0 %v1218
        %4415 = vmatpush.msra.mxu0 %v1186
        %4416 = vmatpush.msra.mxu0 %v1154
        %4417 = vmatpush.msra.mxu0 %v1122
        %4418 = vmatpush.msra.mxu0 %v1090
        %4419 = vmatpush.msra.mxu0 %v1058
        %4420 = vmatmul.f32.gmra.mxu0 %v733
        %v4421 = vpop.f32.mrf.mxu0
        %v4422 = vadd.f32 0.0, %v4421
        %4423 = vmatmul.f32.gmra.mxu0 %v736
        %v4424 = vpop.f32.mrf.mxu0
        %v4425 = vadd.f32 0.0, %v4424
        %4426 = vmatmul.f32.gmra.mxu0 %v739
        %v4427 = vpop.f32.mrf.mxu0
        %v4428 = vadd.f32 0.0, %v4427
        %4429 = vmatmul.f32.gmra.mxu0 %v742
        %v4430 = vpop.f32.mrf.mxu0
        %v4431 = vadd.f32 0.0, %v4430
        %4432 = vmatmul.f32.gmra.mxu0 %v745
        %v4433 = vpop.f32.mrf.mxu0
        %v4434 = vadd.f32 0.0, %v4433
        %4435 = vmatmul.f32.gmra.mxu0 %v748
        %v4436 = vpop.f32.mrf.mxu0
        %v4437 = vadd.f32 0.0, %v4436
        %4438 = vmatmul.f32.gmra.mxu0 %v751
        %v4439 = vpop.f32.mrf.mxu0
        %v4440 = vadd.f32 0.0, %v4439
        %4441 = vmatmul.f32.gmra.mxu0 %v754
        %v4442 = vpop.f32.mrf.mxu0
        %v4443 = vadd.f32 0.0, %v4442
        %4444 = vmatmul.f32.gmra.mxu0 %v757
        %v4445 = vpop.f32.mrf.mxu0
        %v4446 = vadd.f32 0.0, %v4445
        %4447 = vmatmul.f32.gmra.mxu0 %v760
        %v4448 = vpop.f32.mrf.mxu0
        %v4449 = vadd.f32 0.0, %v4448
        %4450 = vmatmul.f32.gmra.mxu0 %v763
        %v4451 = vpop.f32.mrf.mxu0
        %v4452 = vadd.f32 0.0, %v4451
        %4453 = vmatmul.f32.gmra.mxu0 %v766
        %v4454 = vpop.f32.mrf.mxu0
        %v4455 = vadd.f32 0.0, %v4454
        %4456 = vmatmul.f32.gmra.mxu0 %v769
        %v4457 = vpop.f32.mrf.mxu0
        %v4458 = vadd.f32 0.0, %v4457
        %4459 = vmatmul.f32.gmra.mxu0 %v772
        %v4460 = vpop.f32.mrf.mxu0
        %v4461 = vadd.f32 0.0, %v4460
        %4462 = vmatmul.f32.gmra.mxu0 %v775
        %v4463 = vpop.f32.mrf.mxu0
        %v4464 = vadd.f32 0.0, %v4463
        %4465 = vmatmul.f32.gmra.mxu0 %v778
        %v4466 = vpop.f32.mrf.mxu0
        %v4467 = vadd.f32 0.0, %v4466
        %4468 = vdwg.mxu0
        %4469 = vmatpush.msra.mxu0 %v2050
        %4470 = vmatpush.msra.mxu0 %v2018
        %4471 = vmatpush.msra.mxu0 %v1986
        %4472 = vmatpush.msra.mxu0 %v1954
        %4473 = vmatpush.msra.mxu0 %v1922
        %4474 = vmatpush.msra.mxu0 %v1890
        %4475 = vmatpush.msra.mxu0 %v1858
        %4476 = vmatpush.msra.mxu0 %v1826
        %4477 = vmatpush.msra.mxu0 %v1794
        %4478 = vmatpush.msra.mxu0 %v1762
        %4479 = vmatpush.msra.mxu0 %v1730
        %4480 = vmatpush.msra.mxu0 %v1698
        %4481 = vmatpush.msra.mxu0 %v1666
        %4482 = vmatpush.msra.mxu0 %v1634
        %4483 = vmatpush.msra.mxu0 %v1602
        %4484 = vmatpush.msra.mxu0 %v1570
        %4485 = vmatmul.f32.gmra.mxu0 %v993
        %v4486 = vpop.f32.mrf.mxu0
        %v4487 = vadd.f32 %v4422, %v4486
        %4488 = vmatmul.f32.gmra.mxu0 %v996
        %v4489 = vpop.f32.mrf.mxu0
        %v4490 = vadd.f32 %v4425, %v4489
        %4491 = vmatmul.f32.gmra.mxu0 %v999
        %v4492 = vpop.f32.mrf.mxu0
        %v4493 = vadd.f32 %v4428, %v4492
        %4494 = vmatmul.f32.gmra.mxu0 %v1002
        %v4495 = vpop.f32.mrf.mxu0
        %v4496 = vadd.f32 %v4431, %v4495
        %4497 = vmatmul.f32.gmra.mxu0 %v1005
        %v4498 = vpop.f32.mrf.mxu0
        %v4499 = vadd.f32 %v4434, %v4498
        %4500 = vmatmul.f32.gmra.mxu0 %v1008
        %v4501 = vpop.f32.mrf.mxu0
        %v4502 = vadd.f32 %v4437, %v4501
        %4503 = vmatmul.f32.gmra.mxu0 %v1011
        %v4504 = vpop.f32.mrf.mxu0
        %v4505 = vadd.f32 %v4440, %v4504
        %4506 = vmatmul.f32.gmra.mxu0 %v1014
        %v4507 = vpop.f32.mrf.mxu0
        %v4508 = vadd.f32 %v4443, %v4507
        %4509 = vmatmul.f32.gmra.mxu0 %v1017
        %v4510 = vpop.f32.mrf.mxu0
        %v4511 = vadd.f32 %v4446, %v4510
        %4512 = vmatmul.f32.gmra.mxu0 %v1020
        %v4513 = vpop.f32.mrf.mxu0
        %v4514 = vadd.f32 %v4449, %v4513
        %4515 = vmatmul.f32.gmra.mxu0 %v1023
        %v4516 = vpop.f32.mrf.mxu0
        %v4517 = vadd.f32 %v4452, %v4516
        %4518 = vmatmul.f32.gmra.mxu0 %v1026
        %v4519 = vpop.f32.mrf.mxu0
        %v4520 = vadd.f32 %v4455, %v4519
        %4521 = vmatmul.f32.gmra.mxu0 %v1029
        %v4522 = vpop.f32.mrf.mxu0
        %v4523 = vadd.f32 %v4458, %v4522
        %4524 = vmatmul.f32.gmra.mxu0 %v1032
        %v4525 = vpop.f32.mrf.mxu0
        %v4526 = vadd.f32 %v4461, %v4525
        %4527 = vmatmul.f32.gmra.mxu0 %v1035
        %v4528 = vpop.f32.mrf.mxu0
        %v4529 = vadd.f32 %v4464, %v4528
        %4530 = vmatmul.f32.gmra.mxu0 %v1038
        %v4531 = vpop.f32.mrf.mxu0
        %v4532 = vadd.f32 %v4467, %v4531
        %4533 = vdwg.mxu0
        %4534 = vmatpush.msra.mxu0 %v1539
        %4535 = vmatpush.msra.mxu0 %v1507
        %4536 = vmatpush.msra.mxu0 %v1475
        %4537 = vmatpush.msra.mxu0 %v1443
        %4538 = vmatpush.msra.mxu0 %v1411
        %4539 = vmatpush.msra.mxu0 %v1379
        %4540 = vmatpush.msra.mxu0 %v1347
        %4541 = vmatpush.msra.mxu0 %v1315
        %4542 = vmatpush.msra.mxu0 %v1283
        %4543 = vmatpush.msra.mxu0 %v1251
        %4544 = vmatpush.msra.mxu0 %v1219
        %4545 = vmatpush.msra.mxu0 %v1187
        %4546 = vmatpush.msra.mxu0 %v1155
        %4547 = vmatpush.msra.mxu0 %v1123
        %4548 = vmatpush.msra.mxu0 %v1091
        %4549 = vmatpush.msra.mxu0 %v1059
        %4550 = vmatmul.f32.gmra.mxu0 %v733
        %v4551 = vpop.f32.mrf.mxu0
        %v4552 = vadd.f32 0.0, %v4551
        %4553 = vmatmul.f32.gmra.mxu0 %v736
        %v4554 = vpop.f32.mrf.mxu0
        %v4555 = vadd.f32 0.0, %v4554
        %4556 = vmatmul.f32.gmra.mxu0 %v739
        %v4557 = vpop.f32.mrf.mxu0
        %v4558 = vadd.f32 0.0, %v4557
        %4559 = vmatmul.f32.gmra.mxu0 %v742
        %v4560 = vpop.f32.mrf.mxu0
        %v4561 = vadd.f32 0.0, %v4560
        %4562 = vmatmul.f32.gmra.mxu0 %v745
        %v4563 = vpop.f32.mrf.mxu0
        %v4564 = vadd.f32 0.0, %v4563
        %4565 = vmatmul.f32.gmra.mxu0 %v748
        %v4566 = vpop.f32.mrf.mxu0
        %v4567 = vadd.f32 0.0, %v4566
        %4568 = vmatmul.f32.gmra.mxu0 %v751
        %v4569 = vpop.f32.mrf.mxu0
        %v4570 = vadd.f32 0.0, %v4569
        %4571 = vmatmul.f32.gmra.mxu0 %v754
        %v4572 = vpop.f32.mrf.mxu0
        %v4573 = vadd.f32 0.0, %v4572
        %4574 = vmatmul.f32.gmra.mxu0 %v757
        %v4575 = vpop.f32.mrf.mxu0
        %v4576 = vadd.f32 0.0, %v4575
        %4577 = vmatmul.f32.gmra.mxu0 %v760
        %v4578 = vpop.f32.mrf.mxu0
        %v4579 = vadd.f32 0.0, %v4578
        %4580 = vmatmul.f32.gmra.mxu0 %v763
        %v4581 = vpop.f32.mrf.mxu0
        %v4582 = vadd.f32 0.0, %v4581
        %4583 = vmatmul.f32.gmra.mxu0 %v766
        %v4584 = vpop.f32.mrf.mxu0
        %v4585 = vadd.f32 0.0, %v4584
        %4586 = vmatmul.f32.gmra.mxu0 %v769
        %v4587 = vpop.f32.mrf.mxu0
        %v4588 = vadd.f32 0.0, %v4587
        %4589 = vmatmul.f32.gmra.mxu0 %v772
        %v4590 = vpop.f32.mrf.mxu0
        %v4591 = vadd.f32 0.0, %v4590
        %4592 = vmatmul.f32.gmra.mxu0 %v775
        %v4593 = vpop.f32.mrf.mxu0
        %v4594 = vadd.f32 0.0, %v4593
        %4595 = vmatmul.f32.gmra.mxu0 %v778
        %v4596 = vpop.f32.mrf.mxu0
        %v4597 = vadd.f32 0.0, %v4596
        %4598 = vdwg.mxu0
        %4599 = vmatpush.msra.mxu0 %v2051
        %4600 = vmatpush.msra.mxu0 %v2019
        %4601 = vmatpush.msra.mxu0 %v1987
        %4602 = vmatpush.msra.mxu0 %v1955
        %4603 = vmatpush.msra.mxu0 %v1923
        %4604 = vmatpush.msra.mxu0 %v1891
        %4605 = vmatpush.msra.mxu0 %v1859
        %4606 = vmatpush.msra.mxu0 %v1827
        %4607 = vmatpush.msra.mxu0 %v1795
        %4608 = vmatpush.msra.mxu0 %v1763
        %4609 = vmatpush.msra.mxu0 %v1731
        %4610 = vmatpush.msra.mxu0 %v1699
        %4611 = vmatpush.msra.mxu0 %v1667
        %4612 = vmatpush.msra.mxu0 %v1635
        %4613 = vmatpush.msra.mxu0 %v1603
        %4614 = vmatpush.msra.mxu0 %v1571
        %4615 = vmatmul.f32.gmra.mxu0 %v993
        %v4616 = vpop.f32.mrf.mxu0
        %v4617 = vadd.f32 %v4552, %v4616
        %4618 = vmatmul.f32.gmra.mxu0 %v996
        %v4619 = vpop.f32.mrf.mxu0
        %v4620 = vadd.f32 %v4555, %v4619
        %4621 = vmatmul.f32.gmra.mxu0 %v999
        %v4622 = vpop.f32.mrf.mxu0
        %v4623 = vadd.f32 %v4558, %v4622
        %4624 = vmatmul.f32.gmra.mxu0 %v1002
        %v4625 = vpop.f32.mrf.mxu0
        %v4626 = vadd.f32 %v4561, %v4625
        %4627 = vmatmul.f32.gmra.mxu0 %v1005
        %v4628 = vpop.f32.mrf.mxu0
        %v4629 = vadd.f32 %v4564, %v4628
        %4630 = vmatmul.f32.gmra.mxu0 %v1008
        %v4631 = vpop.f32.mrf.mxu0
        %v4632 = vadd.f32 %v4567, %v4631
        %4633 = vmatmul.f32.gmra.mxu0 %v1011
        %v4634 = vpop.f32.mrf.mxu0
        %v4635 = vadd.f32 %v4570, %v4634
        %4636 = vmatmul.f32.gmra.mxu0 %v1014
        %v4637 = vpop.f32.mrf.mxu0
        %v4638 = vadd.f32 %v4573, %v4637
        %4639 = vmatmul.f32.gmra.mxu0 %v1017
        %v4640 = vpop.f32.mrf.mxu0
        %v4641 = vadd.f32 %v4576, %v4640
        %4642 = vmatmul.f32.gmra.mxu0 %v1020
        %v4643 = vpop.f32.mrf.mxu0
        %v4644 = vadd.f32 %v4579, %v4643
        %4645 = vmatmul.f32.gmra.mxu0 %v1023
        %v4646 = vpop.f32.mrf.mxu0
        %v4647 = vadd.f32 %v4582, %v4646
        %4648 = vmatmul.f32.gmra.mxu0 %v1026
        %v4649 = vpop.f32.mrf.mxu0
        %v4650 = vadd.f32 %v4585, %v4649
        %4651 = vmatmul.f32.gmra.mxu0 %v1029
        %v4652 = vpop.f32.mrf.mxu0
        %v4653 = vadd.f32 %v4588, %v4652
        %4654 = vmatmul.f32.gmra.mxu0 %v1032
        %v4655 = vpop.f32.mrf.mxu0
        %v4656 = vadd.f32 %v4591, %v4655
        %4657 = vmatmul.f32.gmra.mxu0 %v1035
        %v4658 = vpop.f32.mrf.mxu0
        %v4659 = vadd.f32 %v4594, %v4658
        %4660 = vmatmul.f32.gmra.mxu0 %v1038
        %v4661 = vpop.f32.mrf.mxu0
        %v4662 = vadd.f32 %v4597, %v4661
        %4663 = vdwg.mxu0
        %4664 = vmatpush.msra.mxu0 %v1540
        %4665 = vmatpush.msra.mxu0 %v1508
        %4666 = vmatpush.msra.mxu0 %v1476
        %4667 = vmatpush.msra.mxu0 %v1444
        %4668 = vmatpush.msra.mxu0 %v1412
        %4669 = vmatpush.msra.mxu0 %v1380
        %4670 = vmatpush.msra.mxu0 %v1348
        %4671 = vmatpush.msra.mxu0 %v1316
        %4672 = vmatpush.msra.mxu0 %v1284
        %4673 = vmatpush.msra.mxu0 %v1252
        %4674 = vmatpush.msra.mxu0 %v1220
        %4675 = vmatpush.msra.mxu0 %v1188
        %4676 = vmatpush.msra.mxu0 %v1156
        %4677 = vmatpush.msra.mxu0 %v1124
        %4678 = vmatpush.msra.mxu0 %v1092
        %4679 = vmatpush.msra.mxu0 %v1060
        %4680 = vmatmul.f32.gmra.mxu0 %v733
        %v4681 = vpop.f32.mrf.mxu0
        %v4682 = vadd.f32 0.0, %v4681
        %4683 = vmatmul.f32.gmra.mxu0 %v736
        %v4684 = vpop.f32.mrf.mxu0
        %v4685 = vadd.f32 0.0, %v4684
        %4686 = vmatmul.f32.gmra.mxu0 %v739
        %v4687 = vpop.f32.mrf.mxu0
        %v4688 = vadd.f32 0.0, %v4687
        %4689 = vmatmul.f32.gmra.mxu0 %v742
        %v4690 = vpop.f32.mrf.mxu0
        %v4691 = vadd.f32 0.0, %v4690
        %4692 = vmatmul.f32.gmra.mxu0 %v745
        %v4693 = vpop.f32.mrf.mxu0
        %v4694 = vadd.f32 0.0, %v4693
        %4695 = vmatmul.f32.gmra.mxu0 %v748
        %v4696 = vpop.f32.mrf.mxu0
        %v4697 = vadd.f32 0.0, %v4696
        %4698 = vmatmul.f32.gmra.mxu0 %v751
        %v4699 = vpop.f32.mrf.mxu0
        %v4700 = vadd.f32 0.0, %v4699
        %4701 = vmatmul.f32.gmra.mxu0 %v754
        %v4702 = vpop.f32.mrf.mxu0
        %v4703 = vadd.f32 0.0, %v4702
        %4704 = vmatmul.f32.gmra.mxu0 %v757
        %v4705 = vpop.f32.mrf.mxu0
        %v4706 = vadd.f32 0.0, %v4705
        %4707 = vmatmul.f32.gmra.mxu0 %v760
        %v4708 = vpop.f32.mrf.mxu0
        %v4709 = vadd.f32 0.0, %v4708
        %4710 = vmatmul.f32.gmra.mxu0 %v763
        %v4711 = vpop.f32.mrf.mxu0
        %v4712 = vadd.f32 0.0, %v4711
        %4713 = vmatmul.f32.gmra.mxu0 %v766
        %v4714 = vpop.f32.mrf.mxu0
        %v4715 = vadd.f32 0.0, %v4714
        %4716 = vmatmul.f32.gmra.mxu0 %v769
        %v4717 = vpop.f32.mrf.mxu0
        %v4718 = vadd.f32 0.0, %v4717
        %4719 = vmatmul.f32.gmra.mxu0 %v772
        %v4720 = vpop.f32.mrf.mxu0
        %v4721 = vadd.f32 0.0, %v4720
        %4722 = vmatmul.f32.gmra.mxu0 %v775
        %v4723 = vpop.f32.mrf.mxu0
        %v4724 = vadd.f32 0.0, %v4723
        %4725 = vmatmul.f32.gmra.mxu0 %v778
        %v4726 = vpop.f32.mrf.mxu0
        %v4727 = vadd.f32 0.0, %v4726
        %4728 = vdwg.mxu0
        %4729 = vmatpush.msra.mxu0 %v2052
        %4730 = vmatpush.msra.mxu0 %v2020
        %4731 = vmatpush.msra.mxu0 %v1988
        %4732 = vmatpush.msra.mxu0 %v1956
        %4733 = vmatpush.msra.mxu0 %v1924
        %4734 = vmatpush.msra.mxu0 %v1892
        %4735 = vmatpush.msra.mxu0 %v1860
        %4736 = vmatpush.msra.mxu0 %v1828
        %4737 = vmatpush.msra.mxu0 %v1796
        %4738 = vmatpush.msra.mxu0 %v1764
        %4739 = vmatpush.msra.mxu0 %v1732
        %4740 = vmatpush.msra.mxu0 %v1700
        %4741 = vmatpush.msra.mxu0 %v1668
        %4742 = vmatpush.msra.mxu0 %v1636
        %4743 = vmatpush.msra.mxu0 %v1604
        %4744 = vmatpush.msra.mxu0 %v1572
        %4745 = vmatmul.f32.gmra.mxu0 %v993
        %v4746 = vpop.f32.mrf.mxu0
        %v4747 = vadd.f32 %v4682, %v4746
        %4748 = vmatmul.f32.gmra.mxu0 %v996
        %v4749 = vpop.f32.mrf.mxu0
        %v4750 = vadd.f32 %v4685, %v4749
        %4751 = vmatmul.f32.gmra.mxu0 %v999
        %v4752 = vpop.f32.mrf.mxu0
        %v4753 = vadd.f32 %v4688, %v4752
        %4754 = vmatmul.f32.gmra.mxu0 %v1002
        %v4755 = vpop.f32.mrf.mxu0
        %v4756 = vadd.f32 %v4691, %v4755
        %4757 = vmatmul.f32.gmra.mxu0 %v1005
        %v4758 = vpop.f32.mrf.mxu0
        %v4759 = vadd.f32 %v4694, %v4758
        %4760 = vmatmul.f32.gmra.mxu0 %v1008
        %v4761 = vpop.f32.mrf.mxu0
        %v4762 = vadd.f32 %v4697, %v4761
        %4763 = vmatmul.f32.gmra.mxu0 %v1011
        %v4764 = vpop.f32.mrf.mxu0
        %v4765 = vadd.f32 %v4700, %v4764
        %4766 = vmatmul.f32.gmra.mxu0 %v1014
        %v4767 = vpop.f32.mrf.mxu0
        %v4768 = vadd.f32 %v4703, %v4767
        %4769 = vmatmul.f32.gmra.mxu0 %v1017
        %v4770 = vpop.f32.mrf.mxu0
        %v4771 = vadd.f32 %v4706, %v4770
        %4772 = vmatmul.f32.gmra.mxu0 %v1020
        %v4773 = vpop.f32.mrf.mxu0
        %v4774 = vadd.f32 %v4709, %v4773
        %4775 = vmatmul.f32.gmra.mxu0 %v1023
        %v4776 = vpop.f32.mrf.mxu0
        %v4777 = vadd.f32 %v4712, %v4776
        %4778 = vmatmul.f32.gmra.mxu0 %v1026
        %v4779 = vpop.f32.mrf.mxu0
        %v4780 = vadd.f32 %v4715, %v4779
        %4781 = vmatmul.f32.gmra.mxu0 %v1029
        %v4782 = vpop.f32.mrf.mxu0
        %v4783 = vadd.f32 %v4718, %v4782
        %4784 = vmatmul.f32.gmra.mxu0 %v1032
        %v4785 = vpop.f32.mrf.mxu0
        %v4786 = vadd.f32 %v4721, %v4785
        %4787 = vmatmul.f32.gmra.mxu0 %v1035
        %v4788 = vpop.f32.mrf.mxu0
        %v4789 = vadd.f32 %v4724, %v4788
        %4790 = vmatmul.f32.gmra.mxu0 %v1038
        %v4791 = vpop.f32.mrf.mxu0
        %v4792 = vadd.f32 %v4727, %v4791
        %4793 = vdwg.mxu0
        %4794 = vmatpush.msra.mxu0 %v1541
        %4795 = vmatpush.msra.mxu0 %v1509
        %4796 = vmatpush.msra.mxu0 %v1477
        %4797 = vmatpush.msra.mxu0 %v1445
        %4798 = vmatpush.msra.mxu0 %v1413
        %4799 = vmatpush.msra.mxu0 %v1381
        %4800 = vmatpush.msra.mxu0 %v1349
        %4801 = vmatpush.msra.mxu0 %v1317
        %4802 = vmatpush.msra.mxu0 %v1285
        %4803 = vmatpush.msra.mxu0 %v1253
        %4804 = vmatpush.msra.mxu0 %v1221
        %4805 = vmatpush.msra.mxu0 %v1189
        %4806 = vmatpush.msra.mxu0 %v1157
        %4807 = vmatpush.msra.mxu0 %v1125
        %4808 = vmatpush.msra.mxu0 %v1093
        %4809 = vmatpush.msra.mxu0 %v1061
        %4810 = vmatmul.f32.gmra.mxu0 %v733
        %v4811 = vpop.f32.mrf.mxu0
        %v4812 = vadd.f32 0.0, %v4811
        %4813 = vmatmul.f32.gmra.mxu0 %v736
        %v4814 = vpop.f32.mrf.mxu0
        %v4815 = vadd.f32 0.0, %v4814
        %4816 = vmatmul.f32.gmra.mxu0 %v739
        %v4817 = vpop.f32.mrf.mxu0
        %v4818 = vadd.f32 0.0, %v4817
        %4819 = vmatmul.f32.gmra.mxu0 %v742
        %v4820 = vpop.f32.mrf.mxu0
        %v4821 = vadd.f32 0.0, %v4820
        %4822 = vmatmul.f32.gmra.mxu0 %v745
        %v4823 = vpop.f32.mrf.mxu0
        %v4824 = vadd.f32 0.0, %v4823
        %4825 = vmatmul.f32.gmra.mxu0 %v748
        %v4826 = vpop.f32.mrf.mxu0
        %v4827 = vadd.f32 0.0, %v4826
        %4828 = vmatmul.f32.gmra.mxu0 %v751
        %v4829 = vpop.f32.mrf.mxu0
        %v4830 = vadd.f32 0.0, %v4829
        %4831 = vmatmul.f32.gmra.mxu0 %v754
        %v4832 = vpop.f32.mrf.mxu0
        %v4833 = vadd.f32 0.0, %v4832
        %4834 = vmatmul.f32.gmra.mxu0 %v757
        %v4835 = vpop.f32.mrf.mxu0
        %v4836 = vadd.f32 0.0, %v4835
        %4837 = vmatmul.f32.gmra.mxu0 %v760
        %v4838 = vpop.f32.mrf.mxu0
        %v4839 = vadd.f32 0.0, %v4838
        %4840 = vmatmul.f32.gmra.mxu0 %v763
        %v4841 = vpop.f32.mrf.mxu0
        %v4842 = vadd.f32 0.0, %v4841
        %4843 = vmatmul.f32.gmra.mxu0 %v766
        %v4844 = vpop.f32.mrf.mxu0
        %v4845 = vadd.f32 0.0, %v4844
        %4846 = vmatmul.f32.gmra.mxu0 %v769
        %v4847 = vpop.f32.mrf.mxu0
        %v4848 = vadd.f32 0.0, %v4847
        %4849 = vmatmul.f32.gmra.mxu0 %v772
        %v4850 = vpop.f32.mrf.mxu0
        %v4851 = vadd.f32 0.0, %v4850
        %4852 = vmatmul.f32.gmra.mxu0 %v775
        %v4853 = vpop.f32.mrf.mxu0
        %v4854 = vadd.f32 0.0, %v4853
        %4855 = vmatmul.f32.gmra.mxu0 %v778
        %v4856 = vpop.f32.mrf.mxu0
        %v4857 = vadd.f32 0.0, %v4856
        %4858 = vdwg.mxu0
        %4859 = vmatpush.msra.mxu0 %v2053
        %4860 = vmatpush.msra.mxu0 %v2021
        %4861 = vmatpush.msra.mxu0 %v1989
        %4862 = vmatpush.msra.mxu0 %v1957
        %4863 = vmatpush.msra.mxu0 %v1925
        %4864 = vmatpush.msra.mxu0 %v1893
        %4865 = vmatpush.msra.mxu0 %v1861
        %4866 = vmatpush.msra.mxu0 %v1829
        %4867 = vmatpush.msra.mxu0 %v1797
        %4868 = vmatpush.msra.mxu0 %v1765
        %4869 = vmatpush.msra.mxu0 %v1733
        %4870 = vmatpush.msra.mxu0 %v1701
        %4871 = vmatpush.msra.mxu0 %v1669
        %4872 = vmatpush.msra.mxu0 %v1637
        %4873 = vmatpush.msra.mxu0 %v1605
        %4874 = vmatpush.msra.mxu0 %v1573
        %4875 = vmatmul.f32.gmra.mxu0 %v993
        %v4876 = vpop.f32.mrf.mxu0
        %v4877 = vadd.f32 %v4812, %v4876
        %4878 = vmatmul.f32.gmra.mxu0 %v996
        %v4879 = vpop.f32.mrf.mxu0
        %v4880 = vadd.f32 %v4815, %v4879
        %4881 = vmatmul.f32.gmra.mxu0 %v999
        %v4882 = vpop.f32.mrf.mxu0
        %v4883 = vadd.f32 %v4818, %v4882
        %4884 = vmatmul.f32.gmra.mxu0 %v1002
        %v4885 = vpop.f32.mrf.mxu0
        %v4886 = vadd.f32 %v4821, %v4885
        %4887 = vmatmul.f32.gmra.mxu0 %v1005
        %v4888 = vpop.f32.mrf.mxu0
        %v4889 = vadd.f32 %v4824, %v4888
        %4890 = vmatmul.f32.gmra.mxu0 %v1008
        %v4891 = vpop.f32.mrf.mxu0
        %v4892 = vadd.f32 %v4827, %v4891
        %4893 = vmatmul.f32.gmra.mxu0 %v1011
        %v4894 = vpop.f32.mrf.mxu0
        %v4895 = vadd.f32 %v4830, %v4894
        %4896 = vmatmul.f32.gmra.mxu0 %v1014
        %v4897 = vpop.f32.mrf.mxu0
        %v4898 = vadd.f32 %v4833, %v4897
        %4899 = vmatmul.f32.gmra.mxu0 %v1017
        %v4900 = vpop.f32.mrf.mxu0
        %v4901 = vadd.f32 %v4836, %v4900
        %4902 = vmatmul.f32.gmra.mxu0 %v1020
        %v4903 = vpop.f32.mrf.mxu0
        %v4904 = vadd.f32 %v4839, %v4903
        %4905 = vmatmul.f32.gmra.mxu0 %v1023
        %v4906 = vpop.f32.mrf.mxu0
        %v4907 = vadd.f32 %v4842, %v4906
        %4908 = vmatmul.f32.gmra.mxu0 %v1026
        %v4909 = vpop.f32.mrf.mxu0
        %v4910 = vadd.f32 %v4845, %v4909
        %4911 = vmatmul.f32.gmra.mxu0 %v1029
        %v4912 = vpop.f32.mrf.mxu0
        %v4913 = vadd.f32 %v4848, %v4912
        %4914 = vmatmul.f32.gmra.mxu0 %v1032
        %v4915 = vpop.f32.mrf.mxu0
        %v4916 = vadd.f32 %v4851, %v4915
        %4917 = vmatmul.f32.gmra.mxu0 %v1035
        %v4918 = vpop.f32.mrf.mxu0
        %v4919 = vadd.f32 %v4854, %v4918
        %4920 = vmatmul.f32.gmra.mxu0 %v1038
        %v4921 = vpop.f32.mrf.mxu0
        %v4922 = vadd.f32 %v4857, %v4921
        %4923 = vdwg.mxu0
        %4924 = vmatpush.msra.mxu0 %v1542
        %4925 = vmatpush.msra.mxu0 %v1510
        %4926 = vmatpush.msra.mxu0 %v1478
        %4927 = vmatpush.msra.mxu0 %v1446
        %4928 = vmatpush.msra.mxu0 %v1414
        %4929 = vmatpush.msra.mxu0 %v1382
        %4930 = vmatpush.msra.mxu0 %v1350
        %4931 = vmatpush.msra.mxu0 %v1318
        %4932 = vmatpush.msra.mxu0 %v1286
        %4933 = vmatpush.msra.mxu0 %v1254
        %4934 = vmatpush.msra.mxu0 %v1222
        %4935 = vmatpush.msra.mxu0 %v1190
        %4936 = vmatpush.msra.mxu0 %v1158
        %4937 = vmatpush.msra.mxu0 %v1126
        %4938 = vmatpush.msra.mxu0 %v1094
        %4939 = vmatpush.msra.mxu0 %v1062
        %4940 = vmatmul.f32.gmra.mxu0 %v733
        %v4941 = vpop.f32.mrf.mxu0
        %v4942 = vadd.f32 0.0, %v4941
        %4943 = vmatmul.f32.gmra.mxu0 %v736
        %v4944 = vpop.f32.mrf.mxu0
        %v4945 = vadd.f32 0.0, %v4944
        %4946 = vmatmul.f32.gmra.mxu0 %v739
        %v4947 = vpop.f32.mrf.mxu0
        %v4948 = vadd.f32 0.0, %v4947
        %4949 = vmatmul.f32.gmra.mxu0 %v742
        %v4950 = vpop.f32.mrf.mxu0
        %v4951 = vadd.f32 0.0, %v4950
        %4952 = vmatmul.f32.gmra.mxu0 %v745
        %v4953 = vpop.f32.mrf.mxu0
        %v4954 = vadd.f32 0.0, %v4953
        %4955 = vmatmul.f32.gmra.mxu0 %v748
        %v4956 = vpop.f32.mrf.mxu0
        %v4957 = vadd.f32 0.0, %v4956
        %4958 = vmatmul.f32.gmra.mxu0 %v751
        %v4959 = vpop.f32.mrf.mxu0
        %v4960 = vadd.f32 0.0, %v4959
        %4961 = vmatmul.f32.gmra.mxu0 %v754
        %v4962 = vpop.f32.mrf.mxu0
        %v4963 = vadd.f32 0.0, %v4962
        %4964 = vmatmul.f32.gmra.mxu0 %v757
        %v4965 = vpop.f32.mrf.mxu0
        %v4966 = vadd.f32 0.0, %v4965
        %4967 = vmatmul.f32.gmra.mxu0 %v760
        %v4968 = vpop.f32.mrf.mxu0
        %v4969 = vadd.f32 0.0, %v4968
        %4970 = vmatmul.f32.gmra.mxu0 %v763
        %v4971 = vpop.f32.mrf.mxu0
        %v4972 = vadd.f32 0.0, %v4971
        %4973 = vmatmul.f32.gmra.mxu0 %v766
        %v4974 = vpop.f32.mrf.mxu0
        %v4975 = vadd.f32 0.0, %v4974
        %4976 = vmatmul.f32.gmra.mxu0 %v769
        %v4977 = vpop.f32.mrf.mxu0
        %v4978 = vadd.f32 0.0, %v4977
        %4979 = vmatmul.f32.gmra.mxu0 %v772
        %v4980 = vpop.f32.mrf.mxu0
        %v4981 = vadd.f32 0.0, %v4980
        %4982 = vmatmul.f32.gmra.mxu0 %v775
        %v4983 = vpop.f32.mrf.mxu0
        %v4984 = vadd.f32 0.0, %v4983
        %4985 = vmatmul.f32.gmra.mxu0 %v778
        %v4986 = vpop.f32.mrf.mxu0
        %v4987 = vadd.f32 0.0, %v4986
        %4988 = vdwg.mxu0
        %4989 = vmatpush.msra.mxu0 %v2054
        %4990 = vmatpush.msra.mxu0 %v2022
        %4991 = vmatpush.msra.mxu0 %v1990
        %4992 = vmatpush.msra.mxu0 %v1958
        %4993 = vmatpush.msra.mxu0 %v1926
        %4994 = vmatpush.msra.mxu0 %v1894
        %4995 = vmatpush.msra.mxu0 %v1862
        %4996 = vmatpush.msra.mxu0 %v1830
        %4997 = vmatpush.msra.mxu0 %v1798
        %4998 = vmatpush.msra.mxu0 %v1766
        %4999 = vmatpush.msra.mxu0 %v1734
        %5000 = vmatpush.msra.mxu0 %v1702
        %5001 = vmatpush.msra.mxu0 %v1670
        %5002 = vmatpush.msra.mxu0 %v1638
        %5003 = vmatpush.msra.mxu0 %v1606
        %5004 = vmatpush.msra.mxu0 %v1574
        %5005 = vmatmul.f32.gmra.mxu0 %v993
        %v5006 = vpop.f32.mrf.mxu0
        %v5007 = vadd.f32 %v4942, %v5006
        %5008 = vmatmul.f32.gmra.mxu0 %v996
        %v5009 = vpop.f32.mrf.mxu0
        %v5010 = vadd.f32 %v4945, %v5009
        %5011 = vmatmul.f32.gmra.mxu0 %v999
        %v5012 = vpop.f32.mrf.mxu0
        %v5013 = vadd.f32 %v4948, %v5012
        %5014 = vmatmul.f32.gmra.mxu0 %v1002
        %v5015 = vpop.f32.mrf.mxu0
        %v5016 = vadd.f32 %v4951, %v5015
        %5017 = vmatmul.f32.gmra.mxu0 %v1005
        %v5018 = vpop.f32.mrf.mxu0
        %v5019 = vadd.f32 %v4954, %v5018
        %5020 = vmatmul.f32.gmra.mxu0 %v1008
        %v5021 = vpop.f32.mrf.mxu0
        %v5022 = vadd.f32 %v4957, %v5021
        %5023 = vmatmul.f32.gmra.mxu0 %v1011
        %v5024 = vpop.f32.mrf.mxu0
        %v5025 = vadd.f32 %v4960, %v5024
        %5026 = vmatmul.f32.gmra.mxu0 %v1014
        %v5027 = vpop.f32.mrf.mxu0
        %v5028 = vadd.f32 %v4963, %v5027
        %5029 = vmatmul.f32.gmra.mxu0 %v1017
        %v5030 = vpop.f32.mrf.mxu0
        %v5031 = vadd.f32 %v4966, %v5030
        %5032 = vmatmul.f32.gmra.mxu0 %v1020
        %v5033 = vpop.f32.mrf.mxu0
        %v5034 = vadd.f32 %v4969, %v5033
        %5035 = vmatmul.f32.gmra.mxu0 %v1023
        %v5036 = vpop.f32.mrf.mxu0
        %v5037 = vadd.f32 %v4972, %v5036
        %5038 = vmatmul.f32.gmra.mxu0 %v1026
        %v5039 = vpop.f32.mrf.mxu0
        %v5040 = vadd.f32 %v4975, %v5039
        %5041 = vmatmul.f32.gmra.mxu0 %v1029
        %v5042 = vpop.f32.mrf.mxu0
        %v5043 = vadd.f32 %v4978, %v5042
        %5044 = vmatmul.f32.gmra.mxu0 %v1032
        %v5045 = vpop.f32.mrf.mxu0
        %v5046 = vadd.f32 %v4981, %v5045
        %5047 = vmatmul.f32.gmra.mxu0 %v1035
        %v5048 = vpop.f32.mrf.mxu0
        %v5049 = vadd.f32 %v4984, %v5048
        %5050 = vmatmul.f32.gmra.mxu0 %v1038
        %v5051 = vpop.f32.mrf.mxu0
        %v5052 = vadd.f32 %v4987, %v5051
        %5053 = vdwg.mxu0
        %5054 = vmatpush.msra.mxu0 %v1543
        %5055 = vmatpush.msra.mxu0 %v1511
        %5056 = vmatpush.msra.mxu0 %v1479
        %5057 = vmatpush.msra.mxu0 %v1447
        %5058 = vmatpush.msra.mxu0 %v1415
        %5059 = vmatpush.msra.mxu0 %v1383
        %5060 = vmatpush.msra.mxu0 %v1351
        %5061 = vmatpush.msra.mxu0 %v1319
        %5062 = vmatpush.msra.mxu0 %v1287
        %5063 = vmatpush.msra.mxu0 %v1255
        %5064 = vmatpush.msra.mxu0 %v1223
        %5065 = vmatpush.msra.mxu0 %v1191
        %5066 = vmatpush.msra.mxu0 %v1159
        %5067 = vmatpush.msra.mxu0 %v1127
        %5068 = vmatpush.msra.mxu0 %v1095
        %5069 = vmatpush.msra.mxu0 %v1063
        %5070 = vmatmul.f32.gmra.mxu0 %v733
        %v5071 = vpop.f32.mrf.mxu0
        %v5072 = vadd.f32 0.0, %v5071
        %5073 = vmatmul.f32.gmra.mxu0 %v736
        %v5074 = vpop.f32.mrf.mxu0
        %v5075 = vadd.f32 0.0, %v5074
        %5076 = vmatmul.f32.gmra.mxu0 %v739
        %v5077 = vpop.f32.mrf.mxu0
        %v5078 = vadd.f32 0.0, %v5077
        %5079 = vmatmul.f32.gmra.mxu0 %v742
        %v5080 = vpop.f32.mrf.mxu0
        %v5081 = vadd.f32 0.0, %v5080
        %5082 = vmatmul.f32.gmra.mxu0 %v745
        %v5083 = vpop.f32.mrf.mxu0
        %v5084 = vadd.f32 0.0, %v5083
        %5085 = vmatmul.f32.gmra.mxu0 %v748
        %v5086 = vpop.f32.mrf.mxu0
        %v5087 = vadd.f32 0.0, %v5086
        %5088 = vmatmul.f32.gmra.mxu0 %v751
        %v5089 = vpop.f32.mrf.mxu0
        %v5090 = vadd.f32 0.0, %v5089
        %5091 = vmatmul.f32.gmra.mxu0 %v754
        %v5092 = vpop.f32.mrf.mxu0
        %v5093 = vadd.f32 0.0, %v5092
        %5094 = vmatmul.f32.gmra.mxu0 %v757
        %v5095 = vpop.f32.mrf.mxu0
        %v5096 = vadd.f32 0.0, %v5095
        %5097 = vmatmul.f32.gmra.mxu0 %v760
        %v5098 = vpop.f32.mrf.mxu0
        %v5099 = vadd.f32 0.0, %v5098
        %5100 = vmatmul.f32.gmra.mxu0 %v763
        %v5101 = vpop.f32.mrf.mxu0
        %v5102 = vadd.f32 0.0, %v5101
        %5103 = vmatmul.f32.gmra.mxu0 %v766
        %v5104 = vpop.f32.mrf.mxu0
        %v5105 = vadd.f32 0.0, %v5104
        %5106 = vmatmul.f32.gmra.mxu0 %v769
        %v5107 = vpop.f32.mrf.mxu0
        %v5108 = vadd.f32 0.0, %v5107
        %5109 = vmatmul.f32.gmra.mxu0 %v772
        %v5110 = vpop.f32.mrf.mxu0
        %v5111 = vadd.f32 0.0, %v5110
        %5112 = vmatmul.f32.gmra.mxu0 %v775
        %v5113 = vpop.f32.mrf.mxu0
        %v5114 = vadd.f32 0.0, %v5113
        %5115 = vmatmul.f32.gmra.mxu0 %v778
        %v5116 = vpop.f32.mrf.mxu0
        %v5117 = vadd.f32 0.0, %v5116
        %5118 = vdwg.mxu0
        %5119 = vmatpush.msra.mxu0 %v2055
        %5120 = vmatpush.msra.mxu0 %v2023
        %5121 = vmatpush.msra.mxu0 %v1991
        %5122 = vmatpush.msra.mxu0 %v1959
        %5123 = vmatpush.msra.mxu0 %v1927
        %5124 = vmatpush.msra.mxu0 %v1895
        %5125 = vmatpush.msra.mxu0 %v1863
        %5126 = vmatpush.msra.mxu0 %v1831
        %5127 = vmatpush.msra.mxu0 %v1799
        %5128 = vmatpush.msra.mxu0 %v1767
        %5129 = vmatpush.msra.mxu0 %v1735
        %5130 = vmatpush.msra.mxu0 %v1703
        %5131 = vmatpush.msra.mxu0 %v1671
        %5132 = vmatpush.msra.mxu0 %v1639
        %5133 = vmatpush.msra.mxu0 %v1607
        %5134 = vmatpush.msra.mxu0 %v1575
        %5135 = vmatmul.f32.gmra.mxu0 %v993
        %v5136 = vpop.f32.mrf.mxu0
        %v5137 = vadd.f32 %v5072, %v5136
        %5138 = vmatmul.f32.gmra.mxu0 %v996
        %v5139 = vpop.f32.mrf.mxu0
        %v5140 = vadd.f32 %v5075, %v5139
        %5141 = vmatmul.f32.gmra.mxu0 %v999
        %v5142 = vpop.f32.mrf.mxu0
        %v5143 = vadd.f32 %v5078, %v5142
        %5144 = vmatmul.f32.gmra.mxu0 %v1002
        %v5145 = vpop.f32.mrf.mxu0
        %v5146 = vadd.f32 %v5081, %v5145
        %5147 = vmatmul.f32.gmra.mxu0 %v1005
        %v5148 = vpop.f32.mrf.mxu0
        %v5149 = vadd.f32 %v5084, %v5148
        %5150 = vmatmul.f32.gmra.mxu0 %v1008
        %v5151 = vpop.f32.mrf.mxu0
        %v5152 = vadd.f32 %v5087, %v5151
        %5153 = vmatmul.f32.gmra.mxu0 %v1011
        %v5154 = vpop.f32.mrf.mxu0
        %v5155 = vadd.f32 %v5090, %v5154
        %5156 = vmatmul.f32.gmra.mxu0 %v1014
        %v5157 = vpop.f32.mrf.mxu0
        %v5158 = vadd.f32 %v5093, %v5157
        %5159 = vmatmul.f32.gmra.mxu0 %v1017
        %v5160 = vpop.f32.mrf.mxu0
        %v5161 = vadd.f32 %v5096, %v5160
        %5162 = vmatmul.f32.gmra.mxu0 %v1020
        %v5163 = vpop.f32.mrf.mxu0
        %v5164 = vadd.f32 %v5099, %v5163
        %5165 = vmatmul.f32.gmra.mxu0 %v1023
        %v5166 = vpop.f32.mrf.mxu0
        %v5167 = vadd.f32 %v5102, %v5166
        %5168 = vmatmul.f32.gmra.mxu0 %v1026
        %v5169 = vpop.f32.mrf.mxu0
        %v5170 = vadd.f32 %v5105, %v5169
        %5171 = vmatmul.f32.gmra.mxu0 %v1029
        %v5172 = vpop.f32.mrf.mxu0
        %v5173 = vadd.f32 %v5108, %v5172
        %5174 = vmatmul.f32.gmra.mxu0 %v1032
        %v5175 = vpop.f32.mrf.mxu0
        %v5176 = vadd.f32 %v5111, %v5175
        %5177 = vmatmul.f32.gmra.mxu0 %v1035
        %v5178 = vpop.f32.mrf.mxu0
        %v5179 = vadd.f32 %v5114, %v5178
        %5180 = vmatmul.f32.gmra.mxu0 %v1038
        %v5181 = vpop.f32.mrf.mxu0
        %v5182 = vadd.f32 %v5117, %v5181
        %5183 = vdwg.mxu0
        %5184 = vmatpush.msra.mxu0 %v1544
        %5185 = vmatpush.msra.mxu0 %v1512
        %5186 = vmatpush.msra.mxu0 %v1480
        %5187 = vmatpush.msra.mxu0 %v1448
        %5188 = vmatpush.msra.mxu0 %v1416
        %5189 = vmatpush.msra.mxu0 %v1384
        %5190 = vmatpush.msra.mxu0 %v1352
        %5191 = vmatpush.msra.mxu0 %v1320
        %5192 = vmatpush.msra.mxu0 %v1288
        %5193 = vmatpush.msra.mxu0 %v1256
        %5194 = vmatpush.msra.mxu0 %v1224
        %5195 = vmatpush.msra.mxu0 %v1192
        %5196 = vmatpush.msra.mxu0 %v1160
        %5197 = vmatpush.msra.mxu0 %v1128
        %5198 = vmatpush.msra.mxu0 %v1096
        %5199 = vmatpush.msra.mxu0 %v1064
        %5200 = vmatmul.f32.gmra.mxu0 %v733
        %v5201 = vpop.f32.mrf.mxu0
        %v5202 = vadd.f32 0.0, %v5201
        %5203 = vmatmul.f32.gmra.mxu0 %v736
        %v5204 = vpop.f32.mrf.mxu0
        %v5205 = vadd.f32 0.0, %v5204
        %5206 = vmatmul.f32.gmra.mxu0 %v739
        %v5207 = vpop.f32.mrf.mxu0
        %v5208 = vadd.f32 0.0, %v5207
        %5209 = vmatmul.f32.gmra.mxu0 %v742
        %v5210 = vpop.f32.mrf.mxu0
        %v5211 = vadd.f32 0.0, %v5210
        %5212 = vmatmul.f32.gmra.mxu0 %v745
        %v5213 = vpop.f32.mrf.mxu0
        %v5214 = vadd.f32 0.0, %v5213
        %5215 = vmatmul.f32.gmra.mxu0 %v748
        %v5216 = vpop.f32.mrf.mxu0
        %v5217 = vadd.f32 0.0, %v5216
        %5218 = vmatmul.f32.gmra.mxu0 %v751
        %v5219 = vpop.f32.mrf.mxu0
        %v5220 = vadd.f32 0.0, %v5219
        %5221 = vmatmul.f32.gmra.mxu0 %v754
        %v5222 = vpop.f32.mrf.mxu0
        %v5223 = vadd.f32 0.0, %v5222
        %5224 = vmatmul.f32.gmra.mxu0 %v757
        %v5225 = vpop.f32.mrf.mxu0
        %v5226 = vadd.f32 0.0, %v5225
        %5227 = vmatmul.f32.gmra.mxu0 %v760
        %v5228 = vpop.f32.mrf.mxu0
        %v5229 = vadd.f32 0.0, %v5228
        %5230 = vmatmul.f32.gmra.mxu0 %v763
        %v5231 = vpop.f32.mrf.mxu0
        %v5232 = vadd.f32 0.0, %v5231
        %5233 = vmatmul.f32.gmra.mxu0 %v766
        %v5234 = vpop.f32.mrf.mxu0
        %v5235 = vadd.f32 0.0, %v5234
        %5236 = vmatmul.f32.gmra.mxu0 %v769
        %v5237 = vpop.f32.mrf.mxu0
        %v5238 = vadd.f32 0.0, %v5237
        %5239 = vmatmul.f32.gmra.mxu0 %v772
        %v5240 = vpop.f32.mrf.mxu0
        %v5241 = vadd.f32 0.0, %v5240
        %5242 = vmatmul.f32.gmra.mxu0 %v775
        %v5243 = vpop.f32.mrf.mxu0
        %v5244 = vadd.f32 0.0, %v5243
        %5245 = vmatmul.f32.gmra.mxu0 %v778
        %v5246 = vpop.f32.mrf.mxu0
        %v5247 = vadd.f32 0.0, %v5246
        %5248 = vdwg.mxu0
        %5249 = vmatpush.msra.mxu0 %v2056
        %5250 = vmatpush.msra.mxu0 %v2024
        %5251 = vmatpush.msra.mxu0 %v1992
        %5252 = vmatpush.msra.mxu0 %v1960
        %5253 = vmatpush.msra.mxu0 %v1928
        %5254 = vmatpush.msra.mxu0 %v1896
        %5255 = vmatpush.msra.mxu0 %v1864
        %5256 = vmatpush.msra.mxu0 %v1832
        %5257 = vmatpush.msra.mxu0 %v1800
        %5258 = vmatpush.msra.mxu0 %v1768
        %5259 = vmatpush.msra.mxu0 %v1736
        %5260 = vmatpush.msra.mxu0 %v1704
        %5261 = vmatpush.msra.mxu0 %v1672
        %5262 = vmatpush.msra.mxu0 %v1640
        %5263 = vmatpush.msra.mxu0 %v1608
        %5264 = vmatpush.msra.mxu0 %v1576
        %5265 = vmatmul.f32.gmra.mxu0 %v993
        %v5266 = vpop.f32.mrf.mxu0
        %v5267 = vadd.f32 %v5202, %v5266
        %5268 = vmatmul.f32.gmra.mxu0 %v996
        %v5269 = vpop.f32.mrf.mxu0
        %v5270 = vadd.f32 %v5205, %v5269
        %5271 = vmatmul.f32.gmra.mxu0 %v999
        %v5272 = vpop.f32.mrf.mxu0
        %v5273 = vadd.f32 %v5208, %v5272
        %5274 = vmatmul.f32.gmra.mxu0 %v1002
        %v5275 = vpop.f32.mrf.mxu0
        %v5276 = vadd.f32 %v5211, %v5275
        %5277 = vmatmul.f32.gmra.mxu0 %v1005
        %v5278 = vpop.f32.mrf.mxu0
        %v5279 = vadd.f32 %v5214, %v5278
        %5280 = vmatmul.f32.gmra.mxu0 %v1008
        %v5281 = vpop.f32.mrf.mxu0
        %v5282 = vadd.f32 %v5217, %v5281
        %5283 = vmatmul.f32.gmra.mxu0 %v1011
        %v5284 = vpop.f32.mrf.mxu0
        %v5285 = vadd.f32 %v5220, %v5284
        %5286 = vmatmul.f32.gmra.mxu0 %v1014
        %v5287 = vpop.f32.mrf.mxu0
        %v5288 = vadd.f32 %v5223, %v5287
        %5289 = vmatmul.f32.gmra.mxu0 %v1017
        %v5290 = vpop.f32.mrf.mxu0
        %v5291 = vadd.f32 %v5226, %v5290
        %5292 = vmatmul.f32.gmra.mxu0 %v1020
        %v5293 = vpop.f32.mrf.mxu0
        %v5294 = vadd.f32 %v5229, %v5293
        %5295 = vmatmul.f32.gmra.mxu0 %v1023
        %v5296 = vpop.f32.mrf.mxu0
        %v5297 = vadd.f32 %v5232, %v5296
        %5298 = vmatmul.f32.gmra.mxu0 %v1026
        %v5299 = vpop.f32.mrf.mxu0
        %v5300 = vadd.f32 %v5235, %v5299
        %5301 = vmatmul.f32.gmra.mxu0 %v1029
        %v5302 = vpop.f32.mrf.mxu0
        %v5303 = vadd.f32 %v5238, %v5302
        %5304 = vmatmul.f32.gmra.mxu0 %v1032
        %v5305 = vpop.f32.mrf.mxu0
        %v5306 = vadd.f32 %v5241, %v5305
        %5307 = vmatmul.f32.gmra.mxu0 %v1035
        %v5308 = vpop.f32.mrf.mxu0
        %v5309 = vadd.f32 %v5244, %v5308
        %5310 = vmatmul.f32.gmra.mxu0 %v1038
        %v5311 = vpop.f32.mrf.mxu0
        %v5312 = vadd.f32 %v5247, %v5311
        %5313 = vdwg.mxu0
        %5314 = vmatpush.msra.mxu0 %v1545
        %5315 = vmatpush.msra.mxu0 %v1513
        %5316 = vmatpush.msra.mxu0 %v1481
        %5317 = vmatpush.msra.mxu0 %v1449
        %5318 = vmatpush.msra.mxu0 %v1417
        %5319 = vmatpush.msra.mxu0 %v1385
        %5320 = vmatpush.msra.mxu0 %v1353
        %5321 = vmatpush.msra.mxu0 %v1321
        %5322 = vmatpush.msra.mxu0 %v1289
        %5323 = vmatpush.msra.mxu0 %v1257
        %5324 = vmatpush.msra.mxu0 %v1225
        %5325 = vmatpush.msra.mxu0 %v1193
        %5326 = vmatpush.msra.mxu0 %v1161
        %5327 = vmatpush.msra.mxu0 %v1129
        %5328 = vmatpush.msra.mxu0 %v1097
        %5329 = vmatpush.msra.mxu0 %v1065
        %5330 = vmatmul.f32.gmra.mxu0 %v733
        %v5331 = vpop.f32.mrf.mxu0
        %v5332 = vadd.f32 0.0, %v5331
        %5333 = vmatmul.f32.gmra.mxu0 %v736
        %v5334 = vpop.f32.mrf.mxu0
        %v5335 = vadd.f32 0.0, %v5334
        %5336 = vmatmul.f32.gmra.mxu0 %v739
        %v5337 = vpop.f32.mrf.mxu0
        %v5338 = vadd.f32 0.0, %v5337
        %5339 = vmatmul.f32.gmra.mxu0 %v742
        %v5340 = vpop.f32.mrf.mxu0
        %v5341 = vadd.f32 0.0, %v5340
        %5342 = vmatmul.f32.gmra.mxu0 %v745
        %v5343 = vpop.f32.mrf.mxu0
        %v5344 = vadd.f32 0.0, %v5343
        %5345 = vmatmul.f32.gmra.mxu0 %v748
        %v5346 = vpop.f32.mrf.mxu0
        %v5347 = vadd.f32 0.0, %v5346
        %5348 = vmatmul.f32.gmra.mxu0 %v751
        %v5349 = vpop.f32.mrf.mxu0
        %v5350 = vadd.f32 0.0, %v5349
        %5351 = vmatmul.f32.gmra.mxu0 %v754
        %v5352 = vpop.f32.mrf.mxu0
        %v5353 = vadd.f32 0.0, %v5352
        %5354 = vmatmul.f32.gmra.mxu0 %v757
        %v5355 = vpop.f32.mrf.mxu0
        %v5356 = vadd.f32 0.0, %v5355
        %5357 = vmatmul.f32.gmra.mxu0 %v760
        %v5358 = vpop.f32.mrf.mxu0
        %v5359 = vadd.f32 0.0, %v5358
        %5360 = vmatmul.f32.gmra.mxu0 %v763
        %v5361 = vpop.f32.mrf.mxu0
        %v5362 = vadd.f32 0.0, %v5361
        %5363 = vmatmul.f32.gmra.mxu0 %v766
        %v5364 = vpop.f32.mrf.mxu0
        %v5365 = vadd.f32 0.0, %v5364
        %5366 = vmatmul.f32.gmra.mxu0 %v769
        %v5367 = vpop.f32.mrf.mxu0
        %v5368 = vadd.f32 0.0, %v5367
        %5369 = vmatmul.f32.gmra.mxu0 %v772
        %v5370 = vpop.f32.mrf.mxu0
        %v5371 = vadd.f32 0.0, %v5370
        %5372 = vmatmul.f32.gmra.mxu0 %v775
        %v5373 = vpop.f32.mrf.mxu0
        %v5374 = vadd.f32 0.0, %v5373
        %5375 = vmatmul.f32.gmra.mxu0 %v778
        %v5376 = vpop.f32.mrf.mxu0
        %v5377 = vadd.f32 0.0, %v5376
        %5378 = vdwg.mxu0
        %5379 = vmatpush.msra.mxu0 %v2057
        %5380 = vmatpush.msra.mxu0 %v2025
        %5381 = vmatpush.msra.mxu0 %v1993
        %5382 = vmatpush.msra.mxu0 %v1961
        %5383 = vmatpush.msra.mxu0 %v1929
        %5384 = vmatpush.msra.mxu0 %v1897
        %5385 = vmatpush.msra.mxu0 %v1865
        %5386 = vmatpush.msra.mxu0 %v1833
        %5387 = vmatpush.msra.mxu0 %v1801
        %5388 = vmatpush.msra.mxu0 %v1769
        %5389 = vmatpush.msra.mxu0 %v1737
        %5390 = vmatpush.msra.mxu0 %v1705
        %5391 = vmatpush.msra.mxu0 %v1673
        %5392 = vmatpush.msra.mxu0 %v1641
        %5393 = vmatpush.msra.mxu0 %v1609
        %5394 = vmatpush.msra.mxu0 %v1577
        %5395 = vmatmul.f32.gmra.mxu0 %v993
        %v5396 = vpop.f32.mrf.mxu0
        %v5397 = vadd.f32 %v5332, %v5396
        %5398 = vmatmul.f32.gmra.mxu0 %v996
        %v5399 = vpop.f32.mrf.mxu0
        %v5400 = vadd.f32 %v5335, %v5399
        %5401 = vmatmul.f32.gmra.mxu0 %v999
        %v5402 = vpop.f32.mrf.mxu0
        %v5403 = vadd.f32 %v5338, %v5402
        %5404 = vmatmul.f32.gmra.mxu0 %v1002
        %v5405 = vpop.f32.mrf.mxu0
        %v5406 = vadd.f32 %v5341, %v5405
        %5407 = vmatmul.f32.gmra.mxu0 %v1005
        %v5408 = vpop.f32.mrf.mxu0
        %v5409 = vadd.f32 %v5344, %v5408
        %5410 = vmatmul.f32.gmra.mxu0 %v1008
        %v5411 = vpop.f32.mrf.mxu0
        %v5412 = vadd.f32 %v5347, %v5411
        %5413 = vmatmul.f32.gmra.mxu0 %v1011
        %v5414 = vpop.f32.mrf.mxu0
        %v5415 = vadd.f32 %v5350, %v5414
        %5416 = vmatmul.f32.gmra.mxu0 %v1014
        %v5417 = vpop.f32.mrf.mxu0
        %v5418 = vadd.f32 %v5353, %v5417
        %5419 = vmatmul.f32.gmra.mxu0 %v1017
        %v5420 = vpop.f32.mrf.mxu0
        %v5421 = vadd.f32 %v5356, %v5420
        %5422 = vmatmul.f32.gmra.mxu0 %v1020
        %v5423 = vpop.f32.mrf.mxu0
        %v5424 = vadd.f32 %v5359, %v5423
        %5425 = vmatmul.f32.gmra.mxu0 %v1023
        %v5426 = vpop.f32.mrf.mxu0
        %v5427 = vadd.f32 %v5362, %v5426
        %5428 = vmatmul.f32.gmra.mxu0 %v1026
        %v5429 = vpop.f32.mrf.mxu0
        %v5430 = vadd.f32 %v5365, %v5429
        %5431 = vmatmul.f32.gmra.mxu0 %v1029
        %v5432 = vpop.f32.mrf.mxu0
        %v5433 = vadd.f32 %v5368, %v5432
        %5434 = vmatmul.f32.gmra.mxu0 %v1032
        %v5435 = vpop.f32.mrf.mxu0
        %v5436 = vadd.f32 %v5371, %v5435
        %5437 = vmatmul.f32.gmra.mxu0 %v1035
        %v5438 = vpop.f32.mrf.mxu0
        %v5439 = vadd.f32 %v5374, %v5438
        %5440 = vmatmul.f32.gmra.mxu0 %v1038
        %v5441 = vpop.f32.mrf.mxu0
        %v5442 = vadd.f32 %v5377, %v5441
        %5443 = vdwg.mxu0
        %5444 = vmatpush.msra.mxu0 %v1546
        %5445 = vmatpush.msra.mxu0 %v1514
        %5446 = vmatpush.msra.mxu0 %v1482
        %5447 = vmatpush.msra.mxu0 %v1450
        %5448 = vmatpush.msra.mxu0 %v1418
        %5449 = vmatpush.msra.mxu0 %v1386
        %5450 = vmatpush.msra.mxu0 %v1354
        %5451 = vmatpush.msra.mxu0 %v1322
        %5452 = vmatpush.msra.mxu0 %v1290
        %5453 = vmatpush.msra.mxu0 %v1258
        %5454 = vmatpush.msra.mxu0 %v1226
        %5455 = vmatpush.msra.mxu0 %v1194
        %5456 = vmatpush.msra.mxu0 %v1162
        %5457 = vmatpush.msra.mxu0 %v1130
        %5458 = vmatpush.msra.mxu0 %v1098
        %5459 = vmatpush.msra.mxu0 %v1066
        %5460 = vmatmul.f32.gmra.mxu0 %v733
        %v5461 = vpop.f32.mrf.mxu0
        %v5462 = vadd.f32 0.0, %v5461
        %5463 = vmatmul.f32.gmra.mxu0 %v736
        %v5464 = vpop.f32.mrf.mxu0
        %v5465 = vadd.f32 0.0, %v5464
        %5466 = vmatmul.f32.gmra.mxu0 %v739
        %v5467 = vpop.f32.mrf.mxu0
        %v5468 = vadd.f32 0.0, %v5467
        %5469 = vmatmul.f32.gmra.mxu0 %v742
        %v5470 = vpop.f32.mrf.mxu0
        %v5471 = vadd.f32 0.0, %v5470
        %5472 = vmatmul.f32.gmra.mxu0 %v745
        %v5473 = vpop.f32.mrf.mxu0
        %v5474 = vadd.f32 0.0, %v5473
        %5475 = vmatmul.f32.gmra.mxu0 %v748
        %v5476 = vpop.f32.mrf.mxu0
        %v5477 = vadd.f32 0.0, %v5476
        %5478 = vmatmul.f32.gmra.mxu0 %v751
        %v5479 = vpop.f32.mrf.mxu0
        %v5480 = vadd.f32 0.0, %v5479
        %5481 = vmatmul.f32.gmra.mxu0 %v754
        %v5482 = vpop.f32.mrf.mxu0
        %v5483 = vadd.f32 0.0, %v5482
        %5484 = vmatmul.f32.gmra.mxu0 %v757
        %v5485 = vpop.f32.mrf.mxu0
        %v5486 = vadd.f32 0.0, %v5485
        %5487 = vmatmul.f32.gmra.mxu0 %v760
        %v5488 = vpop.f32.mrf.mxu0
        %v5489 = vadd.f32 0.0, %v5488
        %5490 = vmatmul.f32.gmra.mxu0 %v763
        %v5491 = vpop.f32.mrf.mxu0
        %v5492 = vadd.f32 0.0, %v5491
        %5493 = vmatmul.f32.gmra.mxu0 %v766
        %v5494 = vpop.f32.mrf.mxu0
        %v5495 = vadd.f32 0.0, %v5494
        %5496 = vmatmul.f32.gmra.mxu0 %v769
        %v5497 = vpop.f32.mrf.mxu0
        %v5498 = vadd.f32 0.0, %v5497
        %5499 = vmatmul.f32.gmra.mxu0 %v772
        %v5500 = vpop.f32.mrf.mxu0
        %v5501 = vadd.f32 0.0, %v5500
        %5502 = vmatmul.f32.gmra.mxu0 %v775
        %v5503 = vpop.f32.mrf.mxu0
        %v5504 = vadd.f32 0.0, %v5503
        %5505 = vmatmul.f32.gmra.mxu0 %v778
        %v5506 = vpop.f32.mrf.mxu0
        %v5507 = vadd.f32 0.0, %v5506
        %5508 = vdwg.mxu0
        %5509 = vmatpush.msra.mxu0 %v2058
        %5510 = vmatpush.msra.mxu0 %v2026
        %5511 = vmatpush.msra.mxu0 %v1994
        %5512 = vmatpush.msra.mxu0 %v1962
        %5513 = vmatpush.msra.mxu0 %v1930
        %5514 = vmatpush.msra.mxu0 %v1898
        %5515 = vmatpush.msra.mxu0 %v1866
        %5516 = vmatpush.msra.mxu0 %v1834
        %5517 = vmatpush.msra.mxu0 %v1802
        %5518 = vmatpush.msra.mxu0 %v1770
        %5519 = vmatpush.msra.mxu0 %v1738
        %5520 = vmatpush.msra.mxu0 %v1706
        %5521 = vmatpush.msra.mxu0 %v1674
        %5522 = vmatpush.msra.mxu0 %v1642
        %5523 = vmatpush.msra.mxu0 %v1610
        %5524 = vmatpush.msra.mxu0 %v1578
        %5525 = vmatmul.f32.gmra.mxu0 %v993
        %v5526 = vpop.f32.mrf.mxu0
        %v5527 = vadd.f32 %v5462, %v5526
        %5528 = vmatmul.f32.gmra.mxu0 %v996
        %v5529 = vpop.f32.mrf.mxu0
        %v5530 = vadd.f32 %v5465, %v5529
        %5531 = vmatmul.f32.gmra.mxu0 %v999
        %v5532 = vpop.f32.mrf.mxu0
        %v5533 = vadd.f32 %v5468, %v5532
        %5534 = vmatmul.f32.gmra.mxu0 %v1002
        %v5535 = vpop.f32.mrf.mxu0
        %v5536 = vadd.f32 %v5471, %v5535
        %5537 = vmatmul.f32.gmra.mxu0 %v1005
        %v5538 = vpop.f32.mrf.mxu0
        %v5539 = vadd.f32 %v5474, %v5538
        %5540 = vmatmul.f32.gmra.mxu0 %v1008
        %v5541 = vpop.f32.mrf.mxu0
        %v5542 = vadd.f32 %v5477, %v5541
        %5543 = vmatmul.f32.gmra.mxu0 %v1011
        %v5544 = vpop.f32.mrf.mxu0
        %v5545 = vadd.f32 %v5480, %v5544
        %5546 = vmatmul.f32.gmra.mxu0 %v1014
        %v5547 = vpop.f32.mrf.mxu0
        %v5548 = vadd.f32 %v5483, %v5547
        %5549 = vmatmul.f32.gmra.mxu0 %v1017
        %v5550 = vpop.f32.mrf.mxu0
        %v5551 = vadd.f32 %v5486, %v5550
        %5552 = vmatmul.f32.gmra.mxu0 %v1020
        %v5553 = vpop.f32.mrf.mxu0
        %v5554 = vadd.f32 %v5489, %v5553
        %5555 = vmatmul.f32.gmra.mxu0 %v1023
        %v5556 = vpop.f32.mrf.mxu0
        %v5557 = vadd.f32 %v5492, %v5556
        %5558 = vmatmul.f32.gmra.mxu0 %v1026
        %v5559 = vpop.f32.mrf.mxu0
        %v5560 = vadd.f32 %v5495, %v5559
        %5561 = vmatmul.f32.gmra.mxu0 %v1029
        %v5562 = vpop.f32.mrf.mxu0
        %v5563 = vadd.f32 %v5498, %v5562
        %5564 = vmatmul.f32.gmra.mxu0 %v1032
        %v5565 = vpop.f32.mrf.mxu0
        %v5566 = vadd.f32 %v5501, %v5565
        %5567 = vmatmul.f32.gmra.mxu0 %v1035
        %v5568 = vpop.f32.mrf.mxu0
        %v5569 = vadd.f32 %v5504, %v5568
        %5570 = vmatmul.f32.gmra.mxu0 %v1038
        %v5571 = vpop.f32.mrf.mxu0
        %v5572 = vadd.f32 %v5507, %v5571
        %5573 = vdwg.mxu0
        %5574 = vmatpush.msra.mxu0 %v1547
        %5575 = vmatpush.msra.mxu0 %v1515
        %5576 = vmatpush.msra.mxu0 %v1483
        %5577 = vmatpush.msra.mxu0 %v1451
        %5578 = vmatpush.msra.mxu0 %v1419
        %5579 = vmatpush.msra.mxu0 %v1387
        %5580 = vmatpush.msra.mxu0 %v1355
        %5581 = vmatpush.msra.mxu0 %v1323
        %5582 = vmatpush.msra.mxu0 %v1291
        %5583 = vmatpush.msra.mxu0 %v1259
        %5584 = vmatpush.msra.mxu0 %v1227
        %5585 = vmatpush.msra.mxu0 %v1195
        %5586 = vmatpush.msra.mxu0 %v1163
        %5587 = vmatpush.msra.mxu0 %v1131
        %5588 = vmatpush.msra.mxu0 %v1099
        %5589 = vmatpush.msra.mxu0 %v1067
        %5590 = vmatmul.f32.gmra.mxu0 %v733
        %v5591 = vpop.f32.mrf.mxu0
        %v5592 = vadd.f32 0.0, %v5591
        %5593 = vmatmul.f32.gmra.mxu0 %v736
        %v5594 = vpop.f32.mrf.mxu0
        %v5595 = vadd.f32 0.0, %v5594
        %5596 = vmatmul.f32.gmra.mxu0 %v739
        %v5597 = vpop.f32.mrf.mxu0
        %v5598 = vadd.f32 0.0, %v5597
        %5599 = vmatmul.f32.gmra.mxu0 %v742
        %v5600 = vpop.f32.mrf.mxu0
        %v5601 = vadd.f32 0.0, %v5600
        %5602 = vmatmul.f32.gmra.mxu0 %v745
        %v5603 = vpop.f32.mrf.mxu0
        %v5604 = vadd.f32 0.0, %v5603
        %5605 = vmatmul.f32.gmra.mxu0 %v748
        %v5606 = vpop.f32.mrf.mxu0
        %v5607 = vadd.f32 0.0, %v5606
        %5608 = vmatmul.f32.gmra.mxu0 %v751
        %v5609 = vpop.f32.mrf.mxu0
        %v5610 = vadd.f32 0.0, %v5609
        %5611 = vmatmul.f32.gmra.mxu0 %v754
        %v5612 = vpop.f32.mrf.mxu0
        %v5613 = vadd.f32 0.0, %v5612
        %5614 = vmatmul.f32.gmra.mxu0 %v757
        %v5615 = vpop.f32.mrf.mxu0
        %v5616 = vadd.f32 0.0, %v5615
        %5617 = vmatmul.f32.gmra.mxu0 %v760
        %v5618 = vpop.f32.mrf.mxu0
        %v5619 = vadd.f32 0.0, %v5618
        %5620 = vmatmul.f32.gmra.mxu0 %v763
        %v5621 = vpop.f32.mrf.mxu0
        %v5622 = vadd.f32 0.0, %v5621
        %5623 = vmatmul.f32.gmra.mxu0 %v766
        %v5624 = vpop.f32.mrf.mxu0
        %v5625 = vadd.f32 0.0, %v5624
        %5626 = vmatmul.f32.gmra.mxu0 %v769
        %v5627 = vpop.f32.mrf.mxu0
        %v5628 = vadd.f32 0.0, %v5627
        %5629 = vmatmul.f32.gmra.mxu0 %v772
        %v5630 = vpop.f32.mrf.mxu0
        %v5631 = vadd.f32 0.0, %v5630
        %5632 = vmatmul.f32.gmra.mxu0 %v775
        %v5633 = vpop.f32.mrf.mxu0
        %v5634 = vadd.f32 0.0, %v5633
        %5635 = vmatmul.f32.gmra.mxu0 %v778
        %v5636 = vpop.f32.mrf.mxu0
        %v5637 = vadd.f32 0.0, %v5636
        %5638 = vdwg.mxu0
        %5639 = vmatpush.msra.mxu0 %v2059
        %5640 = vmatpush.msra.mxu0 %v2027
        %5641 = vmatpush.msra.mxu0 %v1995
        %5642 = vmatpush.msra.mxu0 %v1963
        %5643 = vmatpush.msra.mxu0 %v1931
        %5644 = vmatpush.msra.mxu0 %v1899
        %5645 = vmatpush.msra.mxu0 %v1867
        %5646 = vmatpush.msra.mxu0 %v1835
        %5647 = vmatpush.msra.mxu0 %v1803
        %5648 = vmatpush.msra.mxu0 %v1771
        %5649 = vmatpush.msra.mxu0 %v1739
        %5650 = vmatpush.msra.mxu0 %v1707
        %5651 = vmatpush.msra.mxu0 %v1675
        %5652 = vmatpush.msra.mxu0 %v1643
        %5653 = vmatpush.msra.mxu0 %v1611
        %5654 = vmatpush.msra.mxu0 %v1579
        %5655 = vmatmul.f32.gmra.mxu0 %v993
        %v5656 = vpop.f32.mrf.mxu0
        %v5657 = vadd.f32 %v5592, %v5656
        %5658 = vmatmul.f32.gmra.mxu0 %v996
        %v5659 = vpop.f32.mrf.mxu0
        %v5660 = vadd.f32 %v5595, %v5659
        %5661 = vmatmul.f32.gmra.mxu0 %v999
        %v5662 = vpop.f32.mrf.mxu0
        %v5663 = vadd.f32 %v5598, %v5662
        %5664 = vmatmul.f32.gmra.mxu0 %v1002
        %v5665 = vpop.f32.mrf.mxu0
        %v5666 = vadd.f32 %v5601, %v5665
        %5667 = vmatmul.f32.gmra.mxu0 %v1005
        %v5668 = vpop.f32.mrf.mxu0
        %v5669 = vadd.f32 %v5604, %v5668
        %5670 = vmatmul.f32.gmra.mxu0 %v1008
        %v5671 = vpop.f32.mrf.mxu0
        %v5672 = vadd.f32 %v5607, %v5671
        %5673 = vmatmul.f32.gmra.mxu0 %v1011
        %v5674 = vpop.f32.mrf.mxu0
        %v5675 = vadd.f32 %v5610, %v5674
        %5676 = vmatmul.f32.gmra.mxu0 %v1014
        %v5677 = vpop.f32.mrf.mxu0
        %v5678 = vadd.f32 %v5613, %v5677
        %5679 = vmatmul.f32.gmra.mxu0 %v1017
        %v5680 = vpop.f32.mrf.mxu0
        %v5681 = vadd.f32 %v5616, %v5680
        %5682 = vmatmul.f32.gmra.mxu0 %v1020
        %v5683 = vpop.f32.mrf.mxu0
        %v5684 = vadd.f32 %v5619, %v5683
        %5685 = vmatmul.f32.gmra.mxu0 %v1023
        %v5686 = vpop.f32.mrf.mxu0
        %v5687 = vadd.f32 %v5622, %v5686
        %5688 = vmatmul.f32.gmra.mxu0 %v1026
        %v5689 = vpop.f32.mrf.mxu0
        %v5690 = vadd.f32 %v5625, %v5689
        %5691 = vmatmul.f32.gmra.mxu0 %v1029
        %v5692 = vpop.f32.mrf.mxu0
        %v5693 = vadd.f32 %v5628, %v5692
        %5694 = vmatmul.f32.gmra.mxu0 %v1032
        %v5695 = vpop.f32.mrf.mxu0
        %v5696 = vadd.f32 %v5631, %v5695
        %5697 = vmatmul.f32.gmra.mxu0 %v1035
        %v5698 = vpop.f32.mrf.mxu0
        %v5699 = vadd.f32 %v5634, %v5698
        %5700 = vmatmul.f32.gmra.mxu0 %v1038
        %v5701 = vpop.f32.mrf.mxu0
        %v5702 = vadd.f32 %v5637, %v5701
        %5703 = vdwg.mxu0
        %5704 = vmatpush.msra.mxu0 %v1548
        %5705 = vmatpush.msra.mxu0 %v1516
        %5706 = vmatpush.msra.mxu0 %v1484
        %5707 = vmatpush.msra.mxu0 %v1452
        %5708 = vmatpush.msra.mxu0 %v1420
        %5709 = vmatpush.msra.mxu0 %v1388
        %5710 = vmatpush.msra.mxu0 %v1356
        %5711 = vmatpush.msra.mxu0 %v1324
        %5712 = vmatpush.msra.mxu0 %v1292
        %5713 = vmatpush.msra.mxu0 %v1260
        %5714 = vmatpush.msra.mxu0 %v1228
        %5715 = vmatpush.msra.mxu0 %v1196
        %5716 = vmatpush.msra.mxu0 %v1164
        %5717 = vmatpush.msra.mxu0 %v1132
        %5718 = vmatpush.msra.mxu0 %v1100
        %5719 = vmatpush.msra.mxu0 %v1068
        %5720 = vmatmul.f32.gmra.mxu0 %v733
        %v5721 = vpop.f32.mrf.mxu0
        %v5722 = vadd.f32 0.0, %v5721
        %5723 = vmatmul.f32.gmra.mxu0 %v736
        %v5724 = vpop.f32.mrf.mxu0
        %v5725 = vadd.f32 0.0, %v5724
        %5726 = vmatmul.f32.gmra.mxu0 %v739
        %v5727 = vpop.f32.mrf.mxu0
        %v5728 = vadd.f32 0.0, %v5727
        %5729 = vmatmul.f32.gmra.mxu0 %v742
        %v5730 = vpop.f32.mrf.mxu0
        %v5731 = vadd.f32 0.0, %v5730
        %5732 = vmatmul.f32.gmra.mxu0 %v745
        %v5733 = vpop.f32.mrf.mxu0
        %v5734 = vadd.f32 0.0, %v5733
        %5735 = vmatmul.f32.gmra.mxu0 %v748
        %v5736 = vpop.f32.mrf.mxu0
        %v5737 = vadd.f32 0.0, %v5736
        %5738 = vmatmul.f32.gmra.mxu0 %v751
        %v5739 = vpop.f32.mrf.mxu0
        %v5740 = vadd.f32 0.0, %v5739
        %5741 = vmatmul.f32.gmra.mxu0 %v754
        %v5742 = vpop.f32.mrf.mxu0
        %v5743 = vadd.f32 0.0, %v5742
        %5744 = vmatmul.f32.gmra.mxu0 %v757
        %v5745 = vpop.f32.mrf.mxu0
        %v5746 = vadd.f32 0.0, %v5745
        %5747 = vmatmul.f32.gmra.mxu0 %v760
        %v5748 = vpop.f32.mrf.mxu0
        %v5749 = vadd.f32 0.0, %v5748
        %5750 = vmatmul.f32.gmra.mxu0 %v763
        %v5751 = vpop.f32.mrf.mxu0
        %v5752 = vadd.f32 0.0, %v5751
        %5753 = vmatmul.f32.gmra.mxu0 %v766
        %v5754 = vpop.f32.mrf.mxu0
        %v5755 = vadd.f32 0.0, %v5754
        %5756 = vmatmul.f32.gmra.mxu0 %v769
        %v5757 = vpop.f32.mrf.mxu0
        %v5758 = vadd.f32 0.0, %v5757
        %5759 = vmatmul.f32.gmra.mxu0 %v772
        %v5760 = vpop.f32.mrf.mxu0
        %v5761 = vadd.f32 0.0, %v5760
        %5762 = vmatmul.f32.gmra.mxu0 %v775
        %v5763 = vpop.f32.mrf.mxu0
        %v5764 = vadd.f32 0.0, %v5763
        %5765 = vmatmul.f32.gmra.mxu0 %v778
        %v5766 = vpop.f32.mrf.mxu0
        %v5767 = vadd.f32 0.0, %v5766
        %5768 = vdwg.mxu0
        %5769 = vmatpush.msra.mxu0 %v2060
        %5770 = vmatpush.msra.mxu0 %v2028
        %5771 = vmatpush.msra.mxu0 %v1996
        %5772 = vmatpush.msra.mxu0 %v1964
        %5773 = vmatpush.msra.mxu0 %v1932
        %5774 = vmatpush.msra.mxu0 %v1900
        %5775 = vmatpush.msra.mxu0 %v1868
        %5776 = vmatpush.msra.mxu0 %v1836
        %5777 = vmatpush.msra.mxu0 %v1804
        %5778 = vmatpush.msra.mxu0 %v1772
        %5779 = vmatpush.msra.mxu0 %v1740
        %5780 = vmatpush.msra.mxu0 %v1708
        %5781 = vmatpush.msra.mxu0 %v1676
        %5782 = vmatpush.msra.mxu0 %v1644
        %5783 = vmatpush.msra.mxu0 %v1612
        %5784 = vmatpush.msra.mxu0 %v1580
        %5785 = vmatmul.f32.gmra.mxu0 %v993
        %v5786 = vpop.f32.mrf.mxu0
        %v5787 = vadd.f32 %v5722, %v5786
        %5788 = vmatmul.f32.gmra.mxu0 %v996
        %v5789 = vpop.f32.mrf.mxu0
        %v5790 = vadd.f32 %v5725, %v5789
        %5791 = vmatmul.f32.gmra.mxu0 %v999
        %v5792 = vpop.f32.mrf.mxu0
        %v5793 = vadd.f32 %v5728, %v5792
        %5794 = vmatmul.f32.gmra.mxu0 %v1002
        %v5795 = vpop.f32.mrf.mxu0
        %v5796 = vadd.f32 %v5731, %v5795
        %5797 = vmatmul.f32.gmra.mxu0 %v1005
        %v5798 = vpop.f32.mrf.mxu0
        %v5799 = vadd.f32 %v5734, %v5798
        %5800 = vmatmul.f32.gmra.mxu0 %v1008
        %v5801 = vpop.f32.mrf.mxu0
        %v5802 = vadd.f32 %v5737, %v5801
        %5803 = vmatmul.f32.gmra.mxu0 %v1011
        %v5804 = vpop.f32.mrf.mxu0
        %v5805 = vadd.f32 %v5740, %v5804
        %5806 = vmatmul.f32.gmra.mxu0 %v1014
        %v5807 = vpop.f32.mrf.mxu0
        %v5808 = vadd.f32 %v5743, %v5807
        %5809 = vmatmul.f32.gmra.mxu0 %v1017
        %v5810 = vpop.f32.mrf.mxu0
        %v5811 = vadd.f32 %v5746, %v5810
        %5812 = vmatmul.f32.gmra.mxu0 %v1020
        %v5813 = vpop.f32.mrf.mxu0
        %v5814 = vadd.f32 %v5749, %v5813
        %5815 = vmatmul.f32.gmra.mxu0 %v1023
        %v5816 = vpop.f32.mrf.mxu0
        %v5817 = vadd.f32 %v5752, %v5816
        %5818 = vmatmul.f32.gmra.mxu0 %v1026
        %v5819 = vpop.f32.mrf.mxu0
        %v5820 = vadd.f32 %v5755, %v5819
        %5821 = vmatmul.f32.gmra.mxu0 %v1029
        %v5822 = vpop.f32.mrf.mxu0
        %v5823 = vadd.f32 %v5758, %v5822
        %5824 = vmatmul.f32.gmra.mxu0 %v1032
        %v5825 = vpop.f32.mrf.mxu0
        %v5826 = vadd.f32 %v5761, %v5825
        %5827 = vmatmul.f32.gmra.mxu0 %v1035
        %v5828 = vpop.f32.mrf.mxu0
        %v5829 = vadd.f32 %v5764, %v5828
        %5830 = vmatmul.f32.gmra.mxu0 %v1038
        %v5831 = vpop.f32.mrf.mxu0
        %v5832 = vadd.f32 %v5767, %v5831
        %5833 = vdwg.mxu0
        %5834 = vmatpush.msra.mxu0 %v1549
        %5835 = vmatpush.msra.mxu0 %v1517
        %5836 = vmatpush.msra.mxu0 %v1485
        %5837 = vmatpush.msra.mxu0 %v1453
        %5838 = vmatpush.msra.mxu0 %v1421
        %5839 = vmatpush.msra.mxu0 %v1389
        %5840 = vmatpush.msra.mxu0 %v1357
        %5841 = vmatpush.msra.mxu0 %v1325
        %5842 = vmatpush.msra.mxu0 %v1293
        %5843 = vmatpush.msra.mxu0 %v1261
        %5844 = vmatpush.msra.mxu0 %v1229
        %5845 = vmatpush.msra.mxu0 %v1197
        %5846 = vmatpush.msra.mxu0 %v1165
        %5847 = vmatpush.msra.mxu0 %v1133
        %5848 = vmatpush.msra.mxu0 %v1101
        %5849 = vmatpush.msra.mxu0 %v1069
        %5850 = vmatmul.f32.gmra.mxu0 %v733
        %v5851 = vpop.f32.mrf.mxu0
        %v5852 = vadd.f32 0.0, %v5851
        %5853 = vmatmul.f32.gmra.mxu0 %v736
        %v5854 = vpop.f32.mrf.mxu0
        %v5855 = vadd.f32 0.0, %v5854
        %5856 = vmatmul.f32.gmra.mxu0 %v739
        %v5857 = vpop.f32.mrf.mxu0
        %v5858 = vadd.f32 0.0, %v5857
        %5859 = vmatmul.f32.gmra.mxu0 %v742
        %v5860 = vpop.f32.mrf.mxu0
        %v5861 = vadd.f32 0.0, %v5860
        %5862 = vmatmul.f32.gmra.mxu0 %v745
        %v5863 = vpop.f32.mrf.mxu0
        %v5864 = vadd.f32 0.0, %v5863
        %5865 = vmatmul.f32.gmra.mxu0 %v748
        %v5866 = vpop.f32.mrf.mxu0
        %v5867 = vadd.f32 0.0, %v5866
        %5868 = vmatmul.f32.gmra.mxu0 %v751
        %v5869 = vpop.f32.mrf.mxu0
        %v5870 = vadd.f32 0.0, %v5869
        %5871 = vmatmul.f32.gmra.mxu0 %v754
        %v5872 = vpop.f32.mrf.mxu0
        %v5873 = vadd.f32 0.0, %v5872
        %5874 = vmatmul.f32.gmra.mxu0 %v757
        %v5875 = vpop.f32.mrf.mxu0
        %v5876 = vadd.f32 0.0, %v5875
        %5877 = vmatmul.f32.gmra.mxu0 %v760
        %v5878 = vpop.f32.mrf.mxu0
        %v5879 = vadd.f32 0.0, %v5878
        %5880 = vmatmul.f32.gmra.mxu0 %v763
        %v5881 = vpop.f32.mrf.mxu0
        %v5882 = vadd.f32 0.0, %v5881
        %5883 = vmatmul.f32.gmra.mxu0 %v766
        %v5884 = vpop.f32.mrf.mxu0
        %v5885 = vadd.f32 0.0, %v5884
        %5886 = vmatmul.f32.gmra.mxu0 %v769
        %v5887 = vpop.f32.mrf.mxu0
        %v5888 = vadd.f32 0.0, %v5887
        %5889 = vmatmul.f32.gmra.mxu0 %v772
        %v5890 = vpop.f32.mrf.mxu0
        %v5891 = vadd.f32 0.0, %v5890
        %5892 = vmatmul.f32.gmra.mxu0 %v775
        %v5893 = vpop.f32.mrf.mxu0
        %v5894 = vadd.f32 0.0, %v5893
        %5895 = vmatmul.f32.gmra.mxu0 %v778
        %v5896 = vpop.f32.mrf.mxu0
        %v5897 = vadd.f32 0.0, %v5896
        %5898 = vdwg.mxu0
        %5899 = vmatpush.msra.mxu0 %v2061
        %5900 = vmatpush.msra.mxu0 %v2029
        %5901 = vmatpush.msra.mxu0 %v1997
        %5902 = vmatpush.msra.mxu0 %v1965
        %5903 = vmatpush.msra.mxu0 %v1933
        %5904 = vmatpush.msra.mxu0 %v1901
        %5905 = vmatpush.msra.mxu0 %v1869
        %5906 = vmatpush.msra.mxu0 %v1837
        %5907 = vmatpush.msra.mxu0 %v1805
        %5908 = vmatpush.msra.mxu0 %v1773
        %5909 = vmatpush.msra.mxu0 %v1741
        %5910 = vmatpush.msra.mxu0 %v1709
        %5911 = vmatpush.msra.mxu0 %v1677
        %5912 = vmatpush.msra.mxu0 %v1645
        %5913 = vmatpush.msra.mxu0 %v1613
        %5914 = vmatpush.msra.mxu0 %v1581
        %5915 = vmatmul.f32.gmra.mxu0 %v993
        %v5916 = vpop.f32.mrf.mxu0
        %v5917 = vadd.f32 %v5852, %v5916
        %5918 = vmatmul.f32.gmra.mxu0 %v996
        %v5919 = vpop.f32.mrf.mxu0
        %v5920 = vadd.f32 %v5855, %v5919
        %5921 = vmatmul.f32.gmra.mxu0 %v999
        %v5922 = vpop.f32.mrf.mxu0
        %v5923 = vadd.f32 %v5858, %v5922
        %5924 = vmatmul.f32.gmra.mxu0 %v1002
        %v5925 = vpop.f32.mrf.mxu0
        %v5926 = vadd.f32 %v5861, %v5925
        %5927 = vmatmul.f32.gmra.mxu0 %v1005
        %v5928 = vpop.f32.mrf.mxu0
        %v5929 = vadd.f32 %v5864, %v5928
        %5930 = vmatmul.f32.gmra.mxu0 %v1008
        %v5931 = vpop.f32.mrf.mxu0
        %v5932 = vadd.f32 %v5867, %v5931
        %5933 = vmatmul.f32.gmra.mxu0 %v1011
        %v5934 = vpop.f32.mrf.mxu0
        %v5935 = vadd.f32 %v5870, %v5934
        %5936 = vmatmul.f32.gmra.mxu0 %v1014
        %v5937 = vpop.f32.mrf.mxu0
        %v5938 = vadd.f32 %v5873, %v5937
        %5939 = vmatmul.f32.gmra.mxu0 %v1017
        %v5940 = vpop.f32.mrf.mxu0
        %v5941 = vadd.f32 %v5876, %v5940
        %5942 = vmatmul.f32.gmra.mxu0 %v1020
        %v5943 = vpop.f32.mrf.mxu0
        %v5944 = vadd.f32 %v5879, %v5943
        %5945 = vmatmul.f32.gmra.mxu0 %v1023
        %v5946 = vpop.f32.mrf.mxu0
        %v5947 = vadd.f32 %v5882, %v5946
        %5948 = vmatmul.f32.gmra.mxu0 %v1026
        %v5949 = vpop.f32.mrf.mxu0
        %v5950 = vadd.f32 %v5885, %v5949
        %5951 = vmatmul.f32.gmra.mxu0 %v1029
        %v5952 = vpop.f32.mrf.mxu0
        %v5953 = vadd.f32 %v5888, %v5952
        %5954 = vmatmul.f32.gmra.mxu0 %v1032
        %v5955 = vpop.f32.mrf.mxu0
        %v5956 = vadd.f32 %v5891, %v5955
        %5957 = vmatmul.f32.gmra.mxu0 %v1035
        %v5958 = vpop.f32.mrf.mxu0
        %v5959 = vadd.f32 %v5894, %v5958
        %5960 = vmatmul.f32.gmra.mxu0 %v1038
        %v5961 = vpop.f32.mrf.mxu0
        %v5962 = vadd.f32 %v5897, %v5961
        %5963 = vdwg.mxu0
        %5964 = vmatpush.msra.mxu0 %v1550
        %5965 = vmatpush.msra.mxu0 %v1518
        %5966 = vmatpush.msra.mxu0 %v1486
        %5967 = vmatpush.msra.mxu0 %v1454
        %5968 = vmatpush.msra.mxu0 %v1422
        %5969 = vmatpush.msra.mxu0 %v1390
        %5970 = vmatpush.msra.mxu0 %v1358
        %5971 = vmatpush.msra.mxu0 %v1326
        %5972 = vmatpush.msra.mxu0 %v1294
        %5973 = vmatpush.msra.mxu0 %v1262
        %5974 = vmatpush.msra.mxu0 %v1230
        %5975 = vmatpush.msra.mxu0 %v1198
        %5976 = vmatpush.msra.mxu0 %v1166
        %5977 = vmatpush.msra.mxu0 %v1134
        %5978 = vmatpush.msra.mxu0 %v1102
        %5979 = vmatpush.msra.mxu0 %v1070
        %5980 = vmatmul.f32.gmra.mxu0 %v733
        %v5981 = vpop.f32.mrf.mxu0
        %v5982 = vadd.f32 0.0, %v5981
        %5983 = vmatmul.f32.gmra.mxu0 %v736
        %v5984 = vpop.f32.mrf.mxu0
        %v5985 = vadd.f32 0.0, %v5984
        %5986 = vmatmul.f32.gmra.mxu0 %v739
        %v5987 = vpop.f32.mrf.mxu0
        %v5988 = vadd.f32 0.0, %v5987
        %5989 = vmatmul.f32.gmra.mxu0 %v742
        %v5990 = vpop.f32.mrf.mxu0
        %v5991 = vadd.f32 0.0, %v5990
        %5992 = vmatmul.f32.gmra.mxu0 %v745
        %v5993 = vpop.f32.mrf.mxu0
        %v5994 = vadd.f32 0.0, %v5993
        %5995 = vmatmul.f32.gmra.mxu0 %v748
        %v5996 = vpop.f32.mrf.mxu0
        %v5997 = vadd.f32 0.0, %v5996
        %5998 = vmatmul.f32.gmra.mxu0 %v751
        %v5999 = vpop.f32.mrf.mxu0
        %v6000 = vadd.f32 0.0, %v5999
        %6001 = vmatmul.f32.gmra.mxu0 %v754
        %v6002 = vpop.f32.mrf.mxu0
        %v6003 = vadd.f32 0.0, %v6002
        %6004 = vmatmul.f32.gmra.mxu0 %v757
        %v6005 = vpop.f32.mrf.mxu0
        %v6006 = vadd.f32 0.0, %v6005
        %6007 = vmatmul.f32.gmra.mxu0 %v760
        %v6008 = vpop.f32.mrf.mxu0
        %v6009 = vadd.f32 0.0, %v6008
        %6010 = vmatmul.f32.gmra.mxu0 %v763
        %v6011 = vpop.f32.mrf.mxu0
        %v6012 = vadd.f32 0.0, %v6011
        %6013 = vmatmul.f32.gmra.mxu0 %v766
        %v6014 = vpop.f32.mrf.mxu0
        %v6015 = vadd.f32 0.0, %v6014
        %6016 = vmatmul.f32.gmra.mxu0 %v769
        %v6017 = vpop.f32.mrf.mxu0
        %v6018 = vadd.f32 0.0, %v6017
        %6019 = vmatmul.f32.gmra.mxu0 %v772
        %v6020 = vpop.f32.mrf.mxu0
        %v6021 = vadd.f32 0.0, %v6020
        %6022 = vmatmul.f32.gmra.mxu0 %v775
        %v6023 = vpop.f32.mrf.mxu0
        %v6024 = vadd.f32 0.0, %v6023
        %6025 = vmatmul.f32.gmra.mxu0 %v778
        %v6026 = vpop.f32.mrf.mxu0
        %v6027 = vadd.f32 0.0, %v6026
        %6028 = vdwg.mxu0
        %6029 = vmatpush.msra.mxu0 %v2062
        %6030 = vmatpush.msra.mxu0 %v2030
        %6031 = vmatpush.msra.mxu0 %v1998
        %6032 = vmatpush.msra.mxu0 %v1966
        %6033 = vmatpush.msra.mxu0 %v1934
        %6034 = vmatpush.msra.mxu0 %v1902
        %6035 = vmatpush.msra.mxu0 %v1870
        %6036 = vmatpush.msra.mxu0 %v1838
        %6037 = vmatpush.msra.mxu0 %v1806
        %6038 = vmatpush.msra.mxu0 %v1774
        %6039 = vmatpush.msra.mxu0 %v1742
        %6040 = vmatpush.msra.mxu0 %v1710
        %6041 = vmatpush.msra.mxu0 %v1678
        %6042 = vmatpush.msra.mxu0 %v1646
        %6043 = vmatpush.msra.mxu0 %v1614
        %6044 = vmatpush.msra.mxu0 %v1582
        %6045 = vmatmul.f32.gmra.mxu0 %v993
        %v6046 = vpop.f32.mrf.mxu0
        %v6047 = vadd.f32 %v5982, %v6046
        %6048 = vmatmul.f32.gmra.mxu0 %v996
        %v6049 = vpop.f32.mrf.mxu0
        %v6050 = vadd.f32 %v5985, %v6049
        %6051 = vmatmul.f32.gmra.mxu0 %v999
        %v6052 = vpop.f32.mrf.mxu0
        %v6053 = vadd.f32 %v5988, %v6052
        %6054 = vmatmul.f32.gmra.mxu0 %v1002
        %v6055 = vpop.f32.mrf.mxu0
        %v6056 = vadd.f32 %v5991, %v6055
        %6057 = vmatmul.f32.gmra.mxu0 %v1005
        %v6058 = vpop.f32.mrf.mxu0
        %v6059 = vadd.f32 %v5994, %v6058
        %6060 = vmatmul.f32.gmra.mxu0 %v1008
        %v6061 = vpop.f32.mrf.mxu0
        %v6062 = vadd.f32 %v5997, %v6061
        %6063 = vmatmul.f32.gmra.mxu0 %v1011
        %v6064 = vpop.f32.mrf.mxu0
        %v6065 = vadd.f32 %v6000, %v6064
        %6066 = vmatmul.f32.gmra.mxu0 %v1014
        %v6067 = vpop.f32.mrf.mxu0
        %v6068 = vadd.f32 %v6003, %v6067
        %6069 = vmatmul.f32.gmra.mxu0 %v1017
        %v6070 = vpop.f32.mrf.mxu0
        %v6071 = vadd.f32 %v6006, %v6070
        %6072 = vmatmul.f32.gmra.mxu0 %v1020
        %v6073 = vpop.f32.mrf.mxu0
        %v6074 = vadd.f32 %v6009, %v6073
        %6075 = vmatmul.f32.gmra.mxu0 %v1023
        %v6076 = vpop.f32.mrf.mxu0
        %v6077 = vadd.f32 %v6012, %v6076
        %6078 = vmatmul.f32.gmra.mxu0 %v1026
        %v6079 = vpop.f32.mrf.mxu0
        %v6080 = vadd.f32 %v6015, %v6079
        %6081 = vmatmul.f32.gmra.mxu0 %v1029
        %v6082 = vpop.f32.mrf.mxu0
        %v6083 = vadd.f32 %v6018, %v6082
        %6084 = vmatmul.f32.gmra.mxu0 %v1032
        %v6085 = vpop.f32.mrf.mxu0
        %v6086 = vadd.f32 %v6021, %v6085
        %6087 = vmatmul.f32.gmra.mxu0 %v1035
        %v6088 = vpop.f32.mrf.mxu0
        %v6089 = vadd.f32 %v6024, %v6088
        %6090 = vmatmul.f32.gmra.mxu0 %v1038
        %v6091 = vpop.f32.mrf.mxu0
        %v6092 = vadd.f32 %v6027, %v6091
        %6093 = vdwg.mxu0
        %6094 = vmatpush.msra.mxu0 %v1551
        %6095 = vmatpush.msra.mxu0 %v1519
        %6096 = vmatpush.msra.mxu0 %v1487
        %6097 = vmatpush.msra.mxu0 %v1455
        %6098 = vmatpush.msra.mxu0 %v1423
        %6099 = vmatpush.msra.mxu0 %v1391
        %6100 = vmatpush.msra.mxu0 %v1359
        %6101 = vmatpush.msra.mxu0 %v1327
        %6102 = vmatpush.msra.mxu0 %v1295
        %6103 = vmatpush.msra.mxu0 %v1263
        %6104 = vmatpush.msra.mxu0 %v1231
        %6105 = vmatpush.msra.mxu0 %v1199
        %6106 = vmatpush.msra.mxu0 %v1167
        %6107 = vmatpush.msra.mxu0 %v1135
        %6108 = vmatpush.msra.mxu0 %v1103
        %6109 = vmatpush.msra.mxu0 %v1071
        %6110 = vmatmul.f32.gmra.mxu0 %v733
        %v6111 = vpop.f32.mrf.mxu0
        %v6112 = vadd.f32 0.0, %v6111
        %6113 = vmatmul.f32.gmra.mxu0 %v736
        %v6114 = vpop.f32.mrf.mxu0
        %v6115 = vadd.f32 0.0, %v6114
        %6116 = vmatmul.f32.gmra.mxu0 %v739
        %v6117 = vpop.f32.mrf.mxu0
        %v6118 = vadd.f32 0.0, %v6117
        %6119 = vmatmul.f32.gmra.mxu0 %v742
        %v6120 = vpop.f32.mrf.mxu0
        %v6121 = vadd.f32 0.0, %v6120
        %6122 = vmatmul.f32.gmra.mxu0 %v745
        %v6123 = vpop.f32.mrf.mxu0
        %v6124 = vadd.f32 0.0, %v6123
        %6125 = vmatmul.f32.gmra.mxu0 %v748
        %v6126 = vpop.f32.mrf.mxu0
        %v6127 = vadd.f32 0.0, %v6126
        %6128 = vmatmul.f32.gmra.mxu0 %v751
        %v6129 = vpop.f32.mrf.mxu0
        %v6130 = vadd.f32 0.0, %v6129
        %6131 = vmatmul.f32.gmra.mxu0 %v754
        %v6132 = vpop.f32.mrf.mxu0
        %v6133 = vadd.f32 0.0, %v6132
        %6134 = vmatmul.f32.gmra.mxu0 %v757
        %v6135 = vpop.f32.mrf.mxu0
        %v6136 = vadd.f32 0.0, %v6135
        %6137 = vmatmul.f32.gmra.mxu0 %v760
        %v6138 = vpop.f32.mrf.mxu0
        %v6139 = vadd.f32 0.0, %v6138
        %6140 = vmatmul.f32.gmra.mxu0 %v763
        %v6141 = vpop.f32.mrf.mxu0
        %v6142 = vadd.f32 0.0, %v6141
        %6143 = vmatmul.f32.gmra.mxu0 %v766
        %v6144 = vpop.f32.mrf.mxu0
        %v6145 = vadd.f32 0.0, %v6144
        %6146 = vmatmul.f32.gmra.mxu0 %v769
        %v6147 = vpop.f32.mrf.mxu0
        %v6148 = vadd.f32 0.0, %v6147
        %6149 = vmatmul.f32.gmra.mxu0 %v772
        %v6150 = vpop.f32.mrf.mxu0
        %v6151 = vadd.f32 0.0, %v6150
        %6152 = vmatmul.f32.gmra.mxu0 %v775
        %v6153 = vpop.f32.mrf.mxu0
        %v6154 = vadd.f32 0.0, %v6153
        %6155 = vmatmul.f32.gmra.mxu0 %v778
        %v6156 = vpop.f32.mrf.mxu0
        %v6157 = vadd.f32 0.0, %v6156
        %6158 = vdwg.mxu0
        %6159 = vmatpush.msra.mxu0 %v2063
        %6160 = vmatpush.msra.mxu0 %v2031
        %6161 = vmatpush.msra.mxu0 %v1999
        %6162 = vmatpush.msra.mxu0 %v1967
        %6163 = vmatpush.msra.mxu0 %v1935
        %6164 = vmatpush.msra.mxu0 %v1903
        %6165 = vmatpush.msra.mxu0 %v1871
        %6166 = vmatpush.msra.mxu0 %v1839
        %6167 = vmatpush.msra.mxu0 %v1807
        %6168 = vmatpush.msra.mxu0 %v1775
        %6169 = vmatpush.msra.mxu0 %v1743
        %6170 = vmatpush.msra.mxu0 %v1711
        %6171 = vmatpush.msra.mxu0 %v1679
        %6172 = vmatpush.msra.mxu0 %v1647
        %6173 = vmatpush.msra.mxu0 %v1615
        %6174 = vmatpush.msra.mxu0 %v1583
        %6175 = vmatmul.f32.gmra.mxu0 %v993
        %v6176 = vpop.f32.mrf.mxu0
        %v6177 = vadd.f32 %v6112, %v6176
        %6178 = vmatmul.f32.gmra.mxu0 %v996
        %v6179 = vpop.f32.mrf.mxu0
        %v6180 = vadd.f32 %v6115, %v6179
        %6181 = vmatmul.f32.gmra.mxu0 %v999
        %v6182 = vpop.f32.mrf.mxu0
        %v6183 = vadd.f32 %v6118, %v6182
        %6184 = vmatmul.f32.gmra.mxu0 %v1002
        %v6185 = vpop.f32.mrf.mxu0
        %v6186 = vadd.f32 %v6121, %v6185
        %6187 = vmatmul.f32.gmra.mxu0 %v1005
        %v6188 = vpop.f32.mrf.mxu0
        %v6189 = vadd.f32 %v6124, %v6188
        %6190 = vmatmul.f32.gmra.mxu0 %v1008
        %v6191 = vpop.f32.mrf.mxu0
        %v6192 = vadd.f32 %v6127, %v6191
        %6193 = vmatmul.f32.gmra.mxu0 %v1011
        %v6194 = vpop.f32.mrf.mxu0
        %v6195 = vadd.f32 %v6130, %v6194
        %6196 = vmatmul.f32.gmra.mxu0 %v1014
        %v6197 = vpop.f32.mrf.mxu0
        %v6198 = vadd.f32 %v6133, %v6197
        %6199 = vmatmul.f32.gmra.mxu0 %v1017
        %v6200 = vpop.f32.mrf.mxu0
        %v6201 = vadd.f32 %v6136, %v6200
        %6202 = vmatmul.f32.gmra.mxu0 %v1020
        %v6203 = vpop.f32.mrf.mxu0
        %v6204 = vadd.f32 %v6139, %v6203
        %6205 = vmatmul.f32.gmra.mxu0 %v1023
        %v6206 = vpop.f32.mrf.mxu0
        %v6207 = vadd.f32 %v6142, %v6206
        %6208 = vmatmul.f32.gmra.mxu0 %v1026
        %v6209 = vpop.f32.mrf.mxu0
        %v6210 = vadd.f32 %v6145, %v6209
        %6211 = vmatmul.f32.gmra.mxu0 %v1029
        %v6212 = vpop.f32.mrf.mxu0
        %v6213 = vadd.f32 %v6148, %v6212
        %6214 = vmatmul.f32.gmra.mxu0 %v1032
        %v6215 = vpop.f32.mrf.mxu0
        %v6216 = vadd.f32 %v6151, %v6215
        %6217 = vmatmul.f32.gmra.mxu0 %v1035
        %v6218 = vpop.f32.mrf.mxu0
        %v6219 = vadd.f32 %v6154, %v6218
        %6220 = vmatmul.f32.gmra.mxu0 %v1038
        %v6221 = vpop.f32.mrf.mxu0
        %v6222 = vadd.f32 %v6157, %v6221
        %6223 = vdwg.mxu0
        %6224 = vst [vmem:[%s231] sm:$0xff] %v2147
        %6225 = vst [vmem:[%s231 + $0x8] sm:$0xff] %v2277
        %6226 = vst [vmem:[%s231 + $0x10] sm:$0xff] %v2407
        %6227 = vst [vmem:[%s231 + $0x18] sm:$0xff] %v2537
        %6228 = vst [vmem:[%s231 + $0x20] sm:$0xff] %v2667
        %6229 = vst [vmem:[%s231 + $0x28] sm:$0xff] %v2797
        %6230 = vst [vmem:[%s231 + $0x30] sm:$0xff] %v2927
        %6231 = vst [vmem:[%s231 + $0x38] sm:$0xff] %v3057
        %6232 = vst [vmem:[%s231 + $0x40] sm:$0xff] %v3187
        %6233 = vst [vmem:[%s231 + $0x48] sm:$0xff] %v3317
        %6234 = vst [vmem:[%s231 + $0x50] sm:$0xff] %v3447
        %6235 = vst [vmem:[%s231 + $0x58] sm:$0xff] %v3577
        %6236 = vst [vmem:[%s231 + $0x60] sm:$0xff] %v3707
        %6237 = vst [vmem:[%s231 + $0x68] sm:$0xff] %v3837
        %6238 = vst [vmem:[%s231 + $0x70] sm:$0xff] %v3967
        %6239 = vst [vmem:[%s231 + $0x78] sm:$0xff] %v4097
        %6240 = vst [vmem:[%s231 + $0x80] sm:$0xff] %v4227
        %6241 = vst [vmem:[%s231 + $0x88] sm:$0xff] %v4357
        %6242 = vst [vmem:[%s231 + $0x90] sm:$0xff] %v4487
        %6243 = vst [vmem:[%s231 + $0x98] sm:$0xff] %v4617
        %6244 = vst [vmem:[%s231 + $0xa0] sm:$0xff] %v4747
        %6245 = vst [vmem:[%s231 + $0xa8] sm:$0xff] %v4877
        %6246 = vst [vmem:[%s231 + $0xb0] sm:$0xff] %v5007
        %6247 = vst [vmem:[%s231 + $0xb8] sm:$0xff] %v5137
        %6248 = vst [vmem:[%s231 + $0xc0] sm:$0xff] %v5267
        %6249 = vst [vmem:[%s231 + $0xc8] sm:$0xff] %v5397
        %6250 = vst [vmem:[%s231 + $0xd0] sm:$0xff] %v5527
        %6251 = vst [vmem:[%s231 + $0xd8] sm:$0xff] %v5657
        %6252 = vst [vmem:[%s231 + $0xe0] sm:$0xff] %v5787
        %6253 = vst [vmem:[%s231 + $0xe8] sm:$0xff] %v5917
        %6254 = vst [vmem:[%s231 + $0xf0] sm:$0xff] %v6047
        %6255 = vst [vmem:[%s231 + $0xf8] sm:$0xff] %v6177
        %6256 = vst [vmem:[%s231 + $0x100] sm:$0xff] %v2150
        %6257 = vst [vmem:[%s231 + $0x108] sm:$0xff] %v2280
        %6258 = vst [vmem:[%s231 + $0x110] sm:$0xff] %v2410
        %6259 = vst [vmem:[%s231 + $0x118] sm:$0xff] %v2540
        %6260 = vst [vmem:[%s231 + $0x120] sm:$0xff] %v2670
        %6261 = vst [vmem:[%s231 + $0x128] sm:$0xff] %v2800
        %6262 = vst [vmem:[%s231 + $0x130] sm:$0xff] %v2930
        %6263 = vst [vmem:[%s231 + $0x138] sm:$0xff] %v3060
        %6264 = vst [vmem:[%s231 + $0x140] sm:$0xff] %v3190
        %6265 = vst [vmem:[%s231 + $0x148] sm:$0xff] %v3320
        %6266 = vst [vmem:[%s231 + $0x150] sm:$0xff] %v3450
        %6267 = vst [vmem:[%s231 + $0x158] sm:$0xff] %v3580
        %6268 = vst [vmem:[%s231 + $0x160] sm:$0xff] %v3710
        %6269 = vst [vmem:[%s231 + $0x168] sm:$0xff] %v3840
        %6270 = vst [vmem:[%s231 + $0x170] sm:$0xff] %v3970
        %6271 = vst [vmem:[%s231 + $0x178] sm:$0xff] %v4100
        %6272 = vst [vmem:[%s231 + $0x180] sm:$0xff] %v4230
        %6273 = vst [vmem:[%s231 + $0x188] sm:$0xff] %v4360
        %6274 = vst [vmem:[%s231 + $0x190] sm:$0xff] %v4490
        %6275 = vst [vmem:[%s231 + $0x198] sm:$0xff] %v4620
        %6276 = vst [vmem:[%s231 + $0x1a0] sm:$0xff] %v4750
        %6277 = vst [vmem:[%s231 + $0x1a8] sm:$0xff] %v4880
        %6278 = vst [vmem:[%s231 + $0x1b0] sm:$0xff] %v5010
        %6279 = vst [vmem:[%s231 + $0x1b8] sm:$0xff] %v5140
        %6280 = vst [vmem:[%s231 + $0x1c0] sm:$0xff] %v5270
        %6281 = vst [vmem:[%s231 + $0x1c8] sm:$0xff] %v5400
        %6282 = vst [vmem:[%s231 + $0x1d0] sm:$0xff] %v5530
        %6283 = vst [vmem:[%s231 + $0x1d8] sm:$0xff] %v5660
        %6284 = vst [vmem:[%s231 + $0x1e0] sm:$0xff] %v5790
        %6285 = vst [vmem:[%s231 + $0x1e8] sm:$0xff] %v5920
        %6286 = vst [vmem:[%s231 + $0x1f0] sm:$0xff] %v6050
        %6287 = vst [vmem:[%s231 + $0x1f8] sm:$0xff] %v6180
        %6288 = vst [vmem:[%s231 + $0x200] sm:$0xff] %v2153
        %6289 = vst [vmem:[%s231 + $0x208] sm:$0xff] %v2283
        %6290 = vst [vmem:[%s231 + $0x210] sm:$0xff] %v2413
        %6291 = vst [vmem:[%s231 + $0x218] sm:$0xff] %v2543
        %6292 = vst [vmem:[%s231 + $0x220] sm:$0xff] %v2673
        %6293 = vst [vmem:[%s231 + $0x228] sm:$0xff] %v2803
        %6294 = vst [vmem:[%s231 + $0x230] sm:$0xff] %v2933
        %6295 = vst [vmem:[%s231 + $0x238] sm:$0xff] %v3063
        %6296 = vst [vmem:[%s231 + $0x240] sm:$0xff] %v3193
        %6297 = vst [vmem:[%s231 + $0x248] sm:$0xff] %v3323
        %6298 = vst [vmem:[%s231 + $0x250] sm:$0xff] %v3453
        %6299 = vst [vmem:[%s231 + $0x258] sm:$0xff] %v3583
        %6300 = vst [vmem:[%s231 + $0x260] sm:$0xff] %v3713
        %6301 = vst [vmem:[%s231 + $0x268] sm:$0xff] %v3843
        %6302 = vst [vmem:[%s231 + $0x270] sm:$0xff] %v3973
        %6303 = vst [vmem:[%s231 + $0x278] sm:$0xff] %v4103
        %6304 = vst [vmem:[%s231 + $0x280] sm:$0xff] %v4233
        %6305 = vst [vmem:[%s231 + $0x288] sm:$0xff] %v4363
        %6306 = vst [vmem:[%s231 + $0x290] sm:$0xff] %v4493
        %6307 = vst [vmem:[%s231 + $0x298] sm:$0xff] %v4623
        %6308 = vst [vmem:[%s231 + $0x2a0] sm:$0xff] %v4753
        %6309 = vst [vmem:[%s231 + $0x2a8] sm:$0xff] %v4883
        %6310 = vst [vmem:[%s231 + $0x2b0] sm:$0xff] %v5013
        %6311 = vst [vmem:[%s231 + $0x2b8] sm:$0xff] %v5143
        %6312 = vst [vmem:[%s231 + $0x2c0] sm:$0xff] %v5273
        %6313 = vst [vmem:[%s231 + $0x2c8] sm:$0xff] %v5403
        %6314 = vst [vmem:[%s231 + $0x2d0] sm:$0xff] %v5533
        %6315 = vst [vmem:[%s231 + $0x2d8] sm:$0xff] %v5663
        %6316 = vst [vmem:[%s231 + $0x2e0] sm:$0xff] %v5793
        %6317 = vst [vmem:[%s231 + $0x2e8] sm:$0xff] %v5923
        %6318 = vst [vmem:[%s231 + $0x2f0] sm:$0xff] %v6053
        %6319 = vst [vmem:[%s231 + $0x2f8] sm:$0xff] %v6183
        %6320 = vst [vmem:[%s231 + $0x300] sm:$0xff] %v2156
        %6321 = vst [vmem:[%s231 + $0x308] sm:$0xff] %v2286
        %6322 = vst [vmem:[%s231 + $0x310] sm:$0xff] %v2416
        %6323 = vst [vmem:[%s231 + $0x318] sm:$0xff] %v2546
        %6324 = vst [vmem:[%s231 + $0x320] sm:$0xff] %v2676
        %6325 = vst [vmem:[%s231 + $0x328] sm:$0xff] %v2806
        %6326 = vst [vmem:[%s231 + $0x330] sm:$0xff] %v2936
        %6327 = vst [vmem:[%s231 + $0x338] sm:$0xff] %v3066
        %6328 = vst [vmem:[%s231 + $0x340] sm:$0xff] %v3196
        %6329 = vst [vmem:[%s231 + $0x348] sm:$0xff] %v3326
        %6330 = vst [vmem:[%s231 + $0x350] sm:$0xff] %v3456
        %6331 = vst [vmem:[%s231 + $0x358] sm:$0xff] %v3586
        %6332 = vst [vmem:[%s231 + $0x360] sm:$0xff] %v3716
        %6333 = vst [vmem:[%s231 + $0x368] sm:$0xff] %v3846
        %6334 = vst [vmem:[%s231 + $0x370] sm:$0xff] %v3976
        %6335 = vst [vmem:[%s231 + $0x378] sm:$0xff] %v4106
        %6336 = vst [vmem:[%s231 + $0x380] sm:$0xff] %v4236
        %6337 = vst [vmem:[%s231 + $0x388] sm:$0xff] %v4366
        %6338 = vst [vmem:[%s231 + $0x390] sm:$0xff] %v4496
        %6339 = vst [vmem:[%s231 + $0x398] sm:$0xff] %v4626
        %6340 = vst [vmem:[%s231 + $0x3a0] sm:$0xff] %v4756
        %6341 = vst [vmem:[%s231 + $0x3a8] sm:$0xff] %v4886
        %6342 = vst [vmem:[%s231 + $0x3b0] sm:$0xff] %v5016
        %6343 = vst [vmem:[%s231 + $0x3b8] sm:$0xff] %v5146
        %6344 = vst [vmem:[%s231 + $0x3c0] sm:$0xff] %v5276
        %6345 = vst [vmem:[%s231 + $0x3c8] sm:$0xff] %v5406
        %6346 = vst [vmem:[%s231 + $0x3d0] sm:$0xff] %v5536
        %6347 = vst [vmem:[%s231 + $0x3d8] sm:$0xff] %v5666
        %6348 = vst [vmem:[%s231 + $0x3e0] sm:$0xff] %v5796
        %6349 = vst [vmem:[%s231 + $0x3e8] sm:$0xff] %v5926
        %6350 = vst [vmem:[%s231 + $0x3f0] sm:$0xff] %v6056
        %6351 = vst [vmem:[%s231 + $0x3f8] sm:$0xff] %v6186
        %6352 = vst [vmem:[%s231 + $0x400] sm:$0xff] %v2159
        %6353 = vst [vmem:[%s231 + $0x408] sm:$0xff] %v2289
        %6354 = vst [vmem:[%s231 + $0x410] sm:$0xff] %v2419
        %6355 = vst [vmem:[%s231 + $0x418] sm:$0xff] %v2549
        %6356 = vst [vmem:[%s231 + $0x420] sm:$0xff] %v2679
        %6357 = vst [vmem:[%s231 + $0x428] sm:$0xff] %v2809
        %6358 = vst [vmem:[%s231 + $0x430] sm:$0xff] %v2939
        %6359 = vst [vmem:[%s231 + $0x438] sm:$0xff] %v3069
        %6360 = vst [vmem:[%s231 + $0x440] sm:$0xff] %v3199
        %6361 = vst [vmem:[%s231 + $0x448] sm:$0xff] %v3329
        %6362 = vst [vmem:[%s231 + $0x450] sm:$0xff] %v3459
        %6363 = vst [vmem:[%s231 + $0x458] sm:$0xff] %v3589
        %6364 = vst [vmem:[%s231 + $0x460] sm:$0xff] %v3719
        %6365 = vst [vmem:[%s231 + $0x468] sm:$0xff] %v3849
        %6366 = vst [vmem:[%s231 + $0x470] sm:$0xff] %v3979
        %6367 = vst [vmem:[%s231 + $0x478] sm:$0xff] %v4109
        %6368 = vst [vmem:[%s231 + $0x480] sm:$0xff] %v4239
        %6369 = vst [vmem:[%s231 + $0x488] sm:$0xff] %v4369
        %6370 = vst [vmem:[%s231 + $0x490] sm:$0xff] %v4499
        %6371 = vst [vmem:[%s231 + $0x498] sm:$0xff] %v4629
        %6372 = vst [vmem:[%s231 + $0x4a0] sm:$0xff] %v4759
        %6373 = vst [vmem:[%s231 + $0x4a8] sm:$0xff] %v4889
        %6374 = vst [vmem:[%s231 + $0x4b0] sm:$0xff] %v5019
        %6375 = vst [vmem:[%s231 + $0x4b8] sm:$0xff] %v5149
        %6376 = vst [vmem:[%s231 + $0x4c0] sm:$0xff] %v5279
        %6377 = vst [vmem:[%s231 + $0x4c8] sm:$0xff] %v5409
        %6378 = vst [vmem:[%s231 + $0x4d0] sm:$0xff] %v5539
        %6379 = vst [vmem:[%s231 + $0x4d8] sm:$0xff] %v5669
        %6380 = vst [vmem:[%s231 + $0x4e0] sm:$0xff] %v5799
        %6381 = vst [vmem:[%s231 + $0x4e8] sm:$0xff] %v5929
        %6382 = vst [vmem:[%s231 + $0x4f0] sm:$0xff] %v6059
        %6383 = vst [vmem:[%s231 + $0x4f8] sm:$0xff] %v6189
        %6384 = vst [vmem:[%s231 + $0x500] sm:$0xff] %v2162
        %6385 = vst [vmem:[%s231 + $0x508] sm:$0xff] %v2292
        %6386 = vst [vmem:[%s231 + $0x510] sm:$0xff] %v2422
        %6387 = vst [vmem:[%s231 + $0x518] sm:$0xff] %v2552
        %6388 = vst [vmem:[%s231 + $0x520] sm:$0xff] %v2682
        %6389 = vst [vmem:[%s231 + $0x528] sm:$0xff] %v2812
        %6390 = vst [vmem:[%s231 + $0x530] sm:$0xff] %v2942
        %6391 = vst [vmem:[%s231 + $0x538] sm:$0xff] %v3072
        %6392 = vst [vmem:[%s231 + $0x540] sm:$0xff] %v3202
        %6393 = vst [vmem:[%s231 + $0x548] sm:$0xff] %v3332
        %6394 = vst [vmem:[%s231 + $0x550] sm:$0xff] %v3462
        %6395 = vst [vmem:[%s231 + $0x558] sm:$0xff] %v3592
        %6396 = vst [vmem:[%s231 + $0x560] sm:$0xff] %v3722
        %6397 = vst [vmem:[%s231 + $0x568] sm:$0xff] %v3852
        %6398 = vst [vmem:[%s231 + $0x570] sm:$0xff] %v3982
        %6399 = vst [vmem:[%s231 + $0x578] sm:$0xff] %v4112
        %6400 = vst [vmem:[%s231 + $0x580] sm:$0xff] %v4242
        %6401 = vst [vmem:[%s231 + $0x588] sm:$0xff] %v4372
        %6402 = vst [vmem:[%s231 + $0x590] sm:$0xff] %v4502
        %6403 = vst [vmem:[%s231 + $0x598] sm:$0xff] %v4632
        %6404 = vst [vmem:[%s231 + $0x5a0] sm:$0xff] %v4762
        %6405 = vst [vmem:[%s231 + $0x5a8] sm:$0xff] %v4892
        %6406 = vst [vmem:[%s231 + $0x5b0] sm:$0xff] %v5022
        %6407 = vst [vmem:[%s231 + $0x5b8] sm:$0xff] %v5152
        %6408 = vst [vmem:[%s231 + $0x5c0] sm:$0xff] %v5282
        %6409 = vst [vmem:[%s231 + $0x5c8] sm:$0xff] %v5412
        %6410 = vst [vmem:[%s231 + $0x5d0] sm:$0xff] %v5542
        %6411 = vst [vmem:[%s231 + $0x5d8] sm:$0xff] %v5672
        %6412 = vst [vmem:[%s231 + $0x5e0] sm:$0xff] %v5802
        %6413 = vst [vmem:[%s231 + $0x5e8] sm:$0xff] %v5932
        %6414 = vst [vmem:[%s231 + $0x5f0] sm:$0xff] %v6062
        %6415 = vst [vmem:[%s231 + $0x5f8] sm:$0xff] %v6192
        %6416 = vst [vmem:[%s231 + $0x600] sm:$0xff] %v2165
        %6417 = vst [vmem:[%s231 + $0x608] sm:$0xff] %v2295
        %6418 = vst [vmem:[%s231 + $0x610] sm:$0xff] %v2425
        %6419 = vst [vmem:[%s231 + $0x618] sm:$0xff] %v2555
        %6420 = vst [vmem:[%s231 + $0x620] sm:$0xff] %v2685
        %6421 = vst [vmem:[%s231 + $0x628] sm:$0xff] %v2815
        %6422 = vst [vmem:[%s231 + $0x630] sm:$0xff] %v2945
        %6423 = vst [vmem:[%s231 + $0x638] sm:$0xff] %v3075
        %6424 = vst [vmem:[%s231 + $0x640] sm:$0xff] %v3205
        %6425 = vst [vmem:[%s231 + $0x648] sm:$0xff] %v3335
        %6426 = vst [vmem:[%s231 + $0x650] sm:$0xff] %v3465
        %6427 = vst [vmem:[%s231 + $0x658] sm:$0xff] %v3595
        %6428 = vst [vmem:[%s231 + $0x660] sm:$0xff] %v3725
        %6429 = vst [vmem:[%s231 + $0x668] sm:$0xff] %v3855
        %6430 = vst [vmem:[%s231 + $0x670] sm:$0xff] %v3985
        %6431 = vst [vmem:[%s231 + $0x678] sm:$0xff] %v4115
        %6432 = vst [vmem:[%s231 + $0x680] sm:$0xff] %v4245
        %6433 = vst [vmem:[%s231 + $0x688] sm:$0xff] %v4375
        %6434 = vst [vmem:[%s231 + $0x690] sm:$0xff] %v4505
        %6435 = vst [vmem:[%s231 + $0x698] sm:$0xff] %v4635
        %6436 = vst [vmem:[%s231 + $0x6a0] sm:$0xff] %v4765
        %6437 = vst [vmem:[%s231 + $0x6a8] sm:$0xff] %v4895
        %6438 = vst [vmem:[%s231 + $0x6b0] sm:$0xff] %v5025
        %6439 = vst [vmem:[%s231 + $0x6b8] sm:$0xff] %v5155
        %6440 = vst [vmem:[%s231 + $0x6c0] sm:$0xff] %v5285
        %6441 = vst [vmem:[%s231 + $0x6c8] sm:$0xff] %v5415
        %6442 = vst [vmem:[%s231 + $0x6d0] sm:$0xff] %v5545
        %6443 = vst [vmem:[%s231 + $0x6d8] sm:$0xff] %v5675
        %6444 = vst [vmem:[%s231 + $0x6e0] sm:$0xff] %v5805
        %6445 = vst [vmem:[%s231 + $0x6e8] sm:$0xff] %v5935
        %6446 = vst [vmem:[%s231 + $0x6f0] sm:$0xff] %v6065
        %6447 = vst [vmem:[%s231 + $0x6f8] sm:$0xff] %v6195
        %6448 = vst [vmem:[%s231 + $0x700] sm:$0xff] %v2168
        %6449 = vst [vmem:[%s231 + $0x708] sm:$0xff] %v2298
        %6450 = vst [vmem:[%s231 + $0x710] sm:$0xff] %v2428
        %6451 = vst [vmem:[%s231 + $0x718] sm:$0xff] %v2558
        %6452 = vst [vmem:[%s231 + $0x720] sm:$0xff] %v2688
        %6453 = vst [vmem:[%s231 + $0x728] sm:$0xff] %v2818
        %6454 = vst [vmem:[%s231 + $0x730] sm:$0xff] %v2948
        %6455 = vst [vmem:[%s231 + $0x738] sm:$0xff] %v3078
        %6456 = vst [vmem:[%s231 + $0x740] sm:$0xff] %v3208
        %6457 = vst [vmem:[%s231 + $0x748] sm:$0xff] %v3338
        %6458 = vst [vmem:[%s231 + $0x750] sm:$0xff] %v3468
        %6459 = vst [vmem:[%s231 + $0x758] sm:$0xff] %v3598
        %6460 = vst [vmem:[%s231 + $0x760] sm:$0xff] %v3728
        %6461 = vst [vmem:[%s231 + $0x768] sm:$0xff] %v3858
        %6462 = vst [vmem:[%s231 + $0x770] sm:$0xff] %v3988
        %6463 = vst [vmem:[%s231 + $0x778] sm:$0xff] %v4118
        %6464 = vst [vmem:[%s231 + $0x780] sm:$0xff] %v4248
        %6465 = vst [vmem:[%s231 + $0x788] sm:$0xff] %v4378
        %6466 = vst [vmem:[%s231 + $0x790] sm:$0xff] %v4508
        %6467 = vst [vmem:[%s231 + $0x798] sm:$0xff] %v4638
        %6468 = vst [vmem:[%s231 + $0x7a0] sm:$0xff] %v4768
        %6469 = vst [vmem:[%s231 + $0x7a8] sm:$0xff] %v4898
        %6470 = vst [vmem:[%s231 + $0x7b0] sm:$0xff] %v5028
        %6471 = vst [vmem:[%s231 + $0x7b8] sm:$0xff] %v5158
        %6472 = vst [vmem:[%s231 + $0x7c0] sm:$0xff] %v5288
        %6473 = vst [vmem:[%s231 + $0x7c8] sm:$0xff] %v5418
        %6474 = vst [vmem:[%s231 + $0x7d0] sm:$0xff] %v5548
        %6475 = vst [vmem:[%s231 + $0x7d8] sm:$0xff] %v5678
        %6476 = vst [vmem:[%s231 + $0x7e0] sm:$0xff] %v5808
        %6477 = vst [vmem:[%s231 + $0x7e8] sm:$0xff] %v5938
        %6478 = vst [vmem:[%s231 + $0x7f0] sm:$0xff] %v6068
        %6479 = vst [vmem:[%s231 + $0x7f8] sm:$0xff] %v6198
        %6480 = vst [vmem:[%s231 + $0x800] sm:$0xff] %v2171
        %6481 = vst [vmem:[%s231 + $0x808] sm:$0xff] %v2301
        %6482 = vst [vmem:[%s231 + $0x810] sm:$0xff] %v2431
        %6483 = vst [vmem:[%s231 + $0x818] sm:$0xff] %v2561
        %6484 = vst [vmem:[%s231 + $0x820] sm:$0xff] %v2691
        %6485 = vst [vmem:[%s231 + $0x828] sm:$0xff] %v2821
        %6486 = vst [vmem:[%s231 + $0x830] sm:$0xff] %v2951
        %6487 = vst [vmem:[%s231 + $0x838] sm:$0xff] %v3081
        %6488 = vst [vmem:[%s231 + $0x840] sm:$0xff] %v3211
        %6489 = vst [vmem:[%s231 + $0x848] sm:$0xff] %v3341
        %6490 = vst [vmem:[%s231 + $0x850] sm:$0xff] %v3471
        %6491 = vst [vmem:[%s231 + $0x858] sm:$0xff] %v3601
        %6492 = vst [vmem:[%s231 + $0x860] sm:$0xff] %v3731
        %6493 = vst [vmem:[%s231 + $0x868] sm:$0xff] %v3861
        %6494 = vst [vmem:[%s231 + $0x870] sm:$0xff] %v3991
        %6495 = vst [vmem:[%s231 + $0x878] sm:$0xff] %v4121
        %6496 = vst [vmem:[%s231 + $0x880] sm:$0xff] %v4251
        %6497 = vst [vmem:[%s231 + $0x888] sm:$0xff] %v4381
        %6498 = vst [vmem:[%s231 + $0x890] sm:$0xff] %v4511
        %6499 = vst [vmem:[%s231 + $0x898] sm:$0xff] %v4641
        %6500 = vst [vmem:[%s231 + $0x8a0] sm:$0xff] %v4771
        %6501 = vst [vmem:[%s231 + $0x8a8] sm:$0xff] %v4901
        %6502 = vst [vmem:[%s231 + $0x8b0] sm:$0xff] %v5031
        %6503 = vst [vmem:[%s231 + $0x8b8] sm:$0xff] %v5161
        %6504 = vst [vmem:[%s231 + $0x8c0] sm:$0xff] %v5291
        %6505 = vst [vmem:[%s231 + $0x8c8] sm:$0xff] %v5421
        %6506 = vst [vmem:[%s231 + $0x8d0] sm:$0xff] %v5551
        %6507 = vst [vmem:[%s231 + $0x8d8] sm:$0xff] %v5681
        %6508 = vst [vmem:[%s231 + $0x8e0] sm:$0xff] %v5811
        %6509 = vst [vmem:[%s231 + $0x8e8] sm:$0xff] %v5941
        %6510 = vst [vmem:[%s231 + $0x8f0] sm:$0xff] %v6071
        %6511 = vst [vmem:[%s231 + $0x8f8] sm:$0xff] %v6201
        %6512 = vst [vmem:[%s231 + $0x900] sm:$0xff] %v2174
        %6513 = vst [vmem:[%s231 + $0x908] sm:$0xff] %v2304
        %6514 = vst [vmem:[%s231 + $0x910] sm:$0xff] %v2434
        %6515 = vst [vmem:[%s231 + $0x918] sm:$0xff] %v2564
        %6516 = vst [vmem:[%s231 + $0x920] sm:$0xff] %v2694
        %6517 = vst [vmem:[%s231 + $0x928] sm:$0xff] %v2824
        %6518 = vst [vmem:[%s231 + $0x930] sm:$0xff] %v2954
        %6519 = vst [vmem:[%s231 + $0x938] sm:$0xff] %v3084
        %6520 = vst [vmem:[%s231 + $0x940] sm:$0xff] %v3214
        %6521 = vst [vmem:[%s231 + $0x948] sm:$0xff] %v3344
        %6522 = vst [vmem:[%s231 + $0x950] sm:$0xff] %v3474
        %6523 = vst [vmem:[%s231 + $0x958] sm:$0xff] %v3604
        %6524 = vst [vmem:[%s231 + $0x960] sm:$0xff] %v3734
        %6525 = vst [vmem:[%s231 + $0x968] sm:$0xff] %v3864
        %6526 = vst [vmem:[%s231 + $0x970] sm:$0xff] %v3994
        %6527 = vst [vmem:[%s231 + $0x978] sm:$0xff] %v4124
        %6528 = vst [vmem:[%s231 + $0x980] sm:$0xff] %v4254
        %6529 = vst [vmem:[%s231 + $0x988] sm:$0xff] %v4384
        %6530 = vst [vmem:[%s231 + $0x990] sm:$0xff] %v4514
        %6531 = vst [vmem:[%s231 + $0x998] sm:$0xff] %v4644
        %6532 = vst [vmem:[%s231 + $0x9a0] sm:$0xff] %v4774
        %6533 = vst [vmem:[%s231 + $0x9a8] sm:$0xff] %v4904
        %6534 = vst [vmem:[%s231 + $0x9b0] sm:$0xff] %v5034
        %6535 = vst [vmem:[%s231 + $0x9b8] sm:$0xff] %v5164
        %6536 = vst [vmem:[%s231 + $0x9c0] sm:$0xff] %v5294
        %6537 = vst [vmem:[%s231 + $0x9c8] sm:$0xff] %v5424
        %6538 = vst [vmem:[%s231 + $0x9d0] sm:$0xff] %v5554
        %6539 = vst [vmem:[%s231 + $0x9d8] sm:$0xff] %v5684
        %6540 = vst [vmem:[%s231 + $0x9e0] sm:$0xff] %v5814
        %6541 = vst [vmem:[%s231 + $0x9e8] sm:$0xff] %v5944
        %6542 = vst [vmem:[%s231 + $0x9f0] sm:$0xff] %v6074
        %6543 = vst [vmem:[%s231 + $0x9f8] sm:$0xff] %v6204
        %6544 = vst [vmem:[%s231 + $0xa00] sm:$0xff] %v2177
        %6545 = vst [vmem:[%s231 + $0xa08] sm:$0xff] %v2307
        %6546 = vst [vmem:[%s231 + $0xa10] sm:$0xff] %v2437
        %6547 = vst [vmem:[%s231 + $0xa18] sm:$0xff] %v2567
        %6548 = vst [vmem:[%s231 + $0xa20] sm:$0xff] %v2697
        %6549 = vst [vmem:[%s231 + $0xa28] sm:$0xff] %v2827
        %6550 = vst [vmem:[%s231 + $0xa30] sm:$0xff] %v2957
        %6551 = vst [vmem:[%s231 + $0xa38] sm:$0xff] %v3087
        %6552 = vst [vmem:[%s231 + $0xa40] sm:$0xff] %v3217
        %6553 = vst [vmem:[%s231 + $0xa48] sm:$0xff] %v3347
        %6554 = vst [vmem:[%s231 + $0xa50] sm:$0xff] %v3477
        %6555 = vst [vmem:[%s231 + $0xa58] sm:$0xff] %v3607
        %6556 = vst [vmem:[%s231 + $0xa60] sm:$0xff] %v3737
        %6557 = vst [vmem:[%s231 + $0xa68] sm:$0xff] %v3867
        %6558 = vst [vmem:[%s231 + $0xa70] sm:$0xff] %v3997
        %6559 = vst [vmem:[%s231 + $0xa78] sm:$0xff] %v4127
        %6560 = vst [vmem:[%s231 + $0xa80] sm:$0xff] %v4257
        %6561 = vst [vmem:[%s231 + $0xa88] sm:$0xff] %v4387
        %6562 = vst [vmem:[%s231 + $0xa90] sm:$0xff] %v4517
        %6563 = vst [vmem:[%s231 + $0xa98] sm:$0xff] %v4647
        %6564 = vst [vmem:[%s231 + $0xaa0] sm:$0xff] %v4777
        %6565 = vst [vmem:[%s231 + $0xaa8] sm:$0xff] %v4907
        %6566 = vst [vmem:[%s231 + $0xab0] sm:$0xff] %v5037
        %6567 = vst [vmem:[%s231 + $0xab8] sm:$0xff] %v5167
        %6568 = vst [vmem:[%s231 + $0xac0] sm:$0xff] %v5297
        %6569 = vst [vmem:[%s231 + $0xac8] sm:$0xff] %v5427
        %6570 = vst [vmem:[%s231 + $0xad0] sm:$0xff] %v5557
        %6571 = vst [vmem:[%s231 + $0xad8] sm:$0xff] %v5687
        %6572 = vst [vmem:[%s231 + $0xae0] sm:$0xff] %v5817
        %6573 = vst [vmem:[%s231 + $0xae8] sm:$0xff] %v5947
        %6574 = vst [vmem:[%s231 + $0xaf0] sm:$0xff] %v6077
        %6575 = vst [vmem:[%s231 + $0xaf8] sm:$0xff] %v6207
        %6576 = vst [vmem:[%s231 + $0xb00] sm:$0xff] %v2180
        %6577 = vst [vmem:[%s231 + $0xb08] sm:$0xff] %v2310
        %6578 = vst [vmem:[%s231 + $0xb10] sm:$0xff] %v2440
        %6579 = vst [vmem:[%s231 + $0xb18] sm:$0xff] %v2570
        %6580 = vst [vmem:[%s231 + $0xb20] sm:$0xff] %v2700
        %6581 = vst [vmem:[%s231 + $0xb28] sm:$0xff] %v2830
        %6582 = vst [vmem:[%s231 + $0xb30] sm:$0xff] %v2960
        %6583 = vst [vmem:[%s231 + $0xb38] sm:$0xff] %v3090
        %6584 = vst [vmem:[%s231 + $0xb40] sm:$0xff] %v3220
        %6585 = vst [vmem:[%s231 + $0xb48] sm:$0xff] %v3350
        %6586 = vst [vmem:[%s231 + $0xb50] sm:$0xff] %v3480
        %6587 = vst [vmem:[%s231 + $0xb58] sm:$0xff] %v3610
        %6588 = vst [vmem:[%s231 + $0xb60] sm:$0xff] %v3740
        %6589 = vst [vmem:[%s231 + $0xb68] sm:$0xff] %v3870
        %6590 = vst [vmem:[%s231 + $0xb70] sm:$0xff] %v4000
        %6591 = vst [vmem:[%s231 + $0xb78] sm:$0xff] %v4130
        %6592 = vst [vmem:[%s231 + $0xb80] sm:$0xff] %v4260
        %6593 = vst [vmem:[%s231 + $0xb88] sm:$0xff] %v4390
        %6594 = vst [vmem:[%s231 + $0xb90] sm:$0xff] %v4520
        %6595 = vst [vmem:[%s231 + $0xb98] sm:$0xff] %v4650
        %6596 = vst [vmem:[%s231 + $0xba0] sm:$0xff] %v4780
        %6597 = vst [vmem:[%s231 + $0xba8] sm:$0xff] %v4910
        %6598 = vst [vmem:[%s231 + $0xbb0] sm:$0xff] %v5040
        %6599 = vst [vmem:[%s231 + $0xbb8] sm:$0xff] %v5170
        %6600 = vst [vmem:[%s231 + $0xbc0] sm:$0xff] %v5300
        %6601 = vst [vmem:[%s231 + $0xbc8] sm:$0xff] %v5430
        %6602 = vst [vmem:[%s231 + $0xbd0] sm:$0xff] %v5560
        %6603 = vst [vmem:[%s231 + $0xbd8] sm:$0xff] %v5690
        %6604 = vst [vmem:[%s231 + $0xbe0] sm:$0xff] %v5820
        %6605 = vst [vmem:[%s231 + $0xbe8] sm:$0xff] %v5950
        %6606 = vst [vmem:[%s231 + $0xbf0] sm:$0xff] %v6080
        %6607 = vst [vmem:[%s231 + $0xbf8] sm:$0xff] %v6210
        %6608 = vst [vmem:[%s231 + $0xc00] sm:$0xff] %v2183
        %6609 = vst [vmem:[%s231 + $0xc08] sm:$0xff] %v2313
        %6610 = vst [vmem:[%s231 + $0xc10] sm:$0xff] %v2443
        %6611 = vst [vmem:[%s231 + $0xc18] sm:$0xff] %v2573
        %6612 = vst [vmem:[%s231 + $0xc20] sm:$0xff] %v2703
        %6613 = vst [vmem:[%s231 + $0xc28] sm:$0xff] %v2833
        %6614 = vst [vmem:[%s231 + $0xc30] sm:$0xff] %v2963
        %6615 = vst [vmem:[%s231 + $0xc38] sm:$0xff] %v3093
        %6616 = vst [vmem:[%s231 + $0xc40] sm:$0xff] %v3223
        %6617 = vst [vmem:[%s231 + $0xc48] sm:$0xff] %v3353
        %6618 = vst [vmem:[%s231 + $0xc50] sm:$0xff] %v3483
        %6619 = vst [vmem:[%s231 + $0xc58] sm:$0xff] %v3613
        %6620 = vst [vmem:[%s231 + $0xc60] sm:$0xff] %v3743
        %6621 = vst [vmem:[%s231 + $0xc68] sm:$0xff] %v3873
        %6622 = vst [vmem:[%s231 + $0xc70] sm:$0xff] %v4003
        %6623 = vst [vmem:[%s231 + $0xc78] sm:$0xff] %v4133
        %6624 = vst [vmem:[%s231 + $0xc80] sm:$0xff] %v4263
        %6625 = vst [vmem:[%s231 + $0xc88] sm:$0xff] %v4393
        %6626 = vst [vmem:[%s231 + $0xc90] sm:$0xff] %v4523
        %6627 = vst [vmem:[%s231 + $0xc98] sm:$0xff] %v4653
        %6628 = vst [vmem:[%s231 + $0xca0] sm:$0xff] %v4783
        %6629 = vst [vmem:[%s231 + $0xca8] sm:$0xff] %v4913
        %6630 = vst [vmem:[%s231 + $0xcb0] sm:$0xff] %v5043
        %6631 = vst [vmem:[%s231 + $0xcb8] sm:$0xff] %v5173
        %6632 = vst [vmem:[%s231 + $0xcc0] sm:$0xff] %v5303
        %6633 = vst [vmem:[%s231 + $0xcc8] sm:$0xff] %v5433
        %6634 = vst [vmem:[%s231 + $0xcd0] sm:$0xff] %v5563
        %6635 = vst [vmem:[%s231 + $0xcd8] sm:$0xff] %v5693
        %6636 = vst [vmem:[%s231 + $0xce0] sm:$0xff] %v5823
        %6637 = vst [vmem:[%s231 + $0xce8] sm:$0xff] %v5953
        %6638 = vst [vmem:[%s231 + $0xcf0] sm:$0xff] %v6083
        %6639 = vst [vmem:[%s231 + $0xcf8] sm:$0xff] %v6213
        %6640 = vst [vmem:[%s231 + $0xd00] sm:$0xff] %v2186
        %6641 = vst [vmem:[%s231 + $0xd08] sm:$0xff] %v2316
        %6642 = vst [vmem:[%s231 + $0xd10] sm:$0xff] %v2446
        %6643 = vst [vmem:[%s231 + $0xd18] sm:$0xff] %v2576
        %6644 = vst [vmem:[%s231 + $0xd20] sm:$0xff] %v2706
        %6645 = vst [vmem:[%s231 + $0xd28] sm:$0xff] %v2836
        %6646 = vst [vmem:[%s231 + $0xd30] sm:$0xff] %v2966
        %6647 = vst [vmem:[%s231 + $0xd38] sm:$0xff] %v3096
        %6648 = vst [vmem:[%s231 + $0xd40] sm:$0xff] %v3226
        %6649 = vst [vmem:[%s231 + $0xd48] sm:$0xff] %v3356
        %6650 = vst [vmem:[%s231 + $0xd50] sm:$0xff] %v3486
        %6651 = vst [vmem:[%s231 + $0xd58] sm:$0xff] %v3616
        %6652 = vst [vmem:[%s231 + $0xd60] sm:$0xff] %v3746
        %6653 = vst [vmem:[%s231 + $0xd68] sm:$0xff] %v3876
        %6654 = vst [vmem:[%s231 + $0xd70] sm:$0xff] %v4006
        %6655 = vst [vmem:[%s231 + $0xd78] sm:$0xff] %v4136
        %6656 = vst [vmem:[%s231 + $0xd80] sm:$0xff] %v4266
        %6657 = vst [vmem:[%s231 + $0xd88] sm:$0xff] %v4396
        %6658 = vst [vmem:[%s231 + $0xd90] sm:$0xff] %v4526
        %6659 = vst [vmem:[%s231 + $0xd98] sm:$0xff] %v4656
        %6660 = vst [vmem:[%s231 + $0xda0] sm:$0xff] %v4786
        %6661 = vst [vmem:[%s231 + $0xda8] sm:$0xff] %v4916
        %6662 = vst [vmem:[%s231 + $0xdb0] sm:$0xff] %v5046
        %6663 = vst [vmem:[%s231 + $0xdb8] sm:$0xff] %v5176
        %6664 = vst [vmem:[%s231 + $0xdc0] sm:$0xff] %v5306
        %6665 = vst [vmem:[%s231 + $0xdc8] sm:$0xff] %v5436
        %6666 = vst [vmem:[%s231 + $0xdd0] sm:$0xff] %v5566
        %6667 = vst [vmem:[%s231 + $0xdd8] sm:$0xff] %v5696
        %6668 = vst [vmem:[%s231 + $0xde0] sm:$0xff] %v5826
        %6669 = vst [vmem:[%s231 + $0xde8] sm:$0xff] %v5956
        %6670 = vst [vmem:[%s231 + $0xdf0] sm:$0xff] %v6086
        %6671 = vst [vmem:[%s231 + $0xdf8] sm:$0xff] %v6216
        %6672 = vst [vmem:[%s231 + $0xe00] sm:$0xff] %v2189
        %6673 = vst [vmem:[%s231 + $0xe08] sm:$0xff] %v2319
        %6674 = vst [vmem:[%s231 + $0xe10] sm:$0xff] %v2449
        %6675 = vst [vmem:[%s231 + $0xe18] sm:$0xff] %v2579
        %6676 = vst [vmem:[%s231 + $0xe20] sm:$0xff] %v2709
        %6677 = vst [vmem:[%s231 + $0xe28] sm:$0xff] %v2839
        %6678 = vst [vmem:[%s231 + $0xe30] sm:$0xff] %v2969
        %6679 = vst [vmem:[%s231 + $0xe38] sm:$0xff] %v3099
        %6680 = vst [vmem:[%s231 + $0xe40] sm:$0xff] %v3229
        %6681 = vst [vmem:[%s231 + $0xe48] sm:$0xff] %v3359
        %6682 = vst [vmem:[%s231 + $0xe50] sm:$0xff] %v3489
        %6683 = vst [vmem:[%s231 + $0xe58] sm:$0xff] %v3619
        %6684 = vst [vmem:[%s231 + $0xe60] sm:$0xff] %v3749
        %6685 = vst [vmem:[%s231 + $0xe68] sm:$0xff] %v3879
        %6686 = vst [vmem:[%s231 + $0xe70] sm:$0xff] %v4009
        %6687 = vst [vmem:[%s231 + $0xe78] sm:$0xff] %v4139
        %6688 = vst [vmem:[%s231 + $0xe80] sm:$0xff] %v4269
        %6689 = vst [vmem:[%s231 + $0xe88] sm:$0xff] %v4399
        %6690 = vst [vmem:[%s231 + $0xe90] sm:$0xff] %v4529
        %6691 = vst [vmem:[%s231 + $0xe98] sm:$0xff] %v4659
        %6692 = vst [vmem:[%s231 + $0xea0] sm:$0xff] %v4789
        %6693 = vst [vmem:[%s231 + $0xea8] sm:$0xff] %v4919
        %6694 = vst [vmem:[%s231 + $0xeb0] sm:$0xff] %v5049
        %6695 = vst [vmem:[%s231 + $0xeb8] sm:$0xff] %v5179
        %6696 = vst [vmem:[%s231 + $0xec0] sm:$0xff] %v5309
        %6697 = vst [vmem:[%s231 + $0xec8] sm:$0xff] %v5439
        %6698 = vst [vmem:[%s231 + $0xed0] sm:$0xff] %v5569
        %6699 = vst [vmem:[%s231 + $0xed8] sm:$0xff] %v5699
        %6700 = vst [vmem:[%s231 + $0xee0] sm:$0xff] %v5829
        %6701 = vst [vmem:[%s231 + $0xee8] sm:$0xff] %v5959
        %6702 = vst [vmem:[%s231 + $0xef0] sm:$0xff] %v6089
        %6703 = vst [vmem:[%s231 + $0xef8] sm:$0xff] %v6219
        %6704 = vst [vmem:[%s231 + $0xf00] sm:$0xff] %v2192
        %6705 = vst [vmem:[%s231 + $0xf08] sm:$0xff] %v2322
        %6706 = vst [vmem:[%s231 + $0xf10] sm:$0xff] %v2452
        %6707 = vst [vmem:[%s231 + $0xf18] sm:$0xff] %v2582
        %6708 = vst [vmem:[%s231 + $0xf20] sm:$0xff] %v2712
        %6709 = vst [vmem:[%s231 + $0xf28] sm:$0xff] %v2842
        %6710 = vst [vmem:[%s231 + $0xf30] sm:$0xff] %v2972
        %6711 = vst [vmem:[%s231 + $0xf38] sm:$0xff] %v3102
        %6712 = vst [vmem:[%s231 + $0xf40] sm:$0xff] %v3232
        %6713 = vst [vmem:[%s231 + $0xf48] sm:$0xff] %v3362
        %6714 = vst [vmem:[%s231 + $0xf50] sm:$0xff] %v3492
        %6715 = vst [vmem:[%s231 + $0xf58] sm:$0xff] %v3622
        %6716 = vst [vmem:[%s231 + $0xf60] sm:$0xff] %v3752
        %6717 = vst [vmem:[%s231 + $0xf68] sm:$0xff] %v3882
        %6718 = vst [vmem:[%s231 + $0xf70] sm:$0xff] %v4012
        %6719 = vst [vmem:[%s231 + $0xf78] sm:$0xff] %v4142
        %6720 = vst [vmem:[%s231 + $0xf80] sm:$0xff] %v4272
        %6721 = vst [vmem:[%s231 + $0xf88] sm:$0xff] %v4402
        %6722 = vst [vmem:[%s231 + $0xf90] sm:$0xff] %v4532
        %6723 = vst [vmem:[%s231 + $0xf98] sm:$0xff] %v4662
        %6724 = vst [vmem:[%s231 + $0xfa0] sm:$0xff] %v4792
        %6725 = vst [vmem:[%s231 + $0xfa8] sm:$0xff] %v4922
        %6726 = vst [vmem:[%s231 + $0xfb0] sm:$0xff] %v5052
        %6727 = vst [vmem:[%s231 + $0xfb8] sm:$0xff] %v5182
        %6728 = vst [vmem:[%s231 + $0xfc0] sm:$0xff] %v5312
        %6729 = vst [vmem:[%s231 + $0xfc8] sm:$0xff] %v5442
        %6730 = vst [vmem:[%s231 + $0xfd0] sm:$0xff] %v5572
        %6731 = vst [vmem:[%s231 + $0xfd8] sm:$0xff] %v5702
        %6732 = vst [vmem:[%s231 + $0xfe0] sm:$0xff] %v5832
        %6733 = vst [vmem:[%s231 + $0xfe8] sm:$0xff] %v5962
        %6734 = vst [vmem:[%s231 + $0xff0] sm:$0xff] %v6092
        %6735 = vst [vmem:[%s231 + $0xff8] sm:$0xff] %v6222
        %p6736 = scmp.lt.s32.totalorder %s17, 1
        %s6737 = scalar_select %p6736, %s17, 1
        %s6738 = smul.addr %s6737, 512
        %s6739 = smul.addr %s6738, 8
        %s6740 = scalar_lea.vmem %s4, %s6739
        // Predicated region
        $region45: #{modified_pixelnerf_forward.1} parent=35 // pred_check
          %p6741 = pneg %p124
        $region46: #{modified_pixelnerf_forward.1} parent=35 // pred_check_branch
          %6743 = sbr.rel (%p6741) target = $region48
        $region47: #{modified_pixelnerf_forward.1} parent=35 // pred_region
          _
        $region48: #{modified_pixelnerf_forward.1} parent=35 // pred_fallthru
          _
      $region36: #{modified_pixelnerf_forward.1} parent=5 // pred_fallthru
        _
      %p6744 = scmp.le.s32.totalorder 2, %s12
      // Predicated region
      $region49: #{modified_pixelnerf_forward.1} parent=5 // pred_check
        %p6745 = pneg %p6744
      $region50: #{modified_pixelnerf_forward.1} parent=5 // pred_check_branch
        %6747 = sbr.rel (%p6745) target = $region52
      $region51: #{modified_pixelnerf_forward.1} parent=5 // pred_region
        %s6748 = ssub.s32 %s12, 2
        // Predicated region
        $region53: #{modified_pixelnerf_forward.1} parent=51 // pred_check
          %p6749 = pneg %p130
        $region54: #{modified_pixelnerf_forward.1} parent=51 // pred_check_branch
          %6751 = sbr.rel (%p6749) target = $region56
        $region55: #{modified_pixelnerf_forward.1} parent=51 // pred_region
          %p6752 = scmp.lt.s32.totalorder %s18, 1
          %s6753 = scalar_select %p6752, %s18, 1
          %s6754 = smul.addr %s6753, 512
          %s6755 = smul.addr %s6754, 8
          %s6756 = scalar_lea.vmem %s4, %s6755
        $region56: #{modified_pixelnerf_forward.1} parent=51 // pred_fallthru
          _
      $region52: #{modified_pixelnerf_forward.1} parent=5 // pred_fallthru
        _
    $region6: #{modified_pixelnerf_forward.1} parent=1 // loop_footer
      %s16 = sadd.s32 1, %s12
    $region7: #{modified_pixelnerf_forward.1} parent=1 // loop_footer_branch
      %11 = sbr.rel target = $region3
    $region8: #{modified_pixelnerf_forward.1} parent=1 // loop_exit
      _
    %6757 = vsyncpa [#allocation3], 1
    %s6758 = scalar_lea.sflag [#allocation3], 1
    %6759 = vsyncpa %s6758, 1
    %6760 = vsyncpa [#allocation5], 1

</llo_original>
